<compile_context>
chip_gen: v6e
topology: v6e:2x2x1
jax: 0.10.0
libtpu: 0.0.40
codegen_flags: <defaults>
</compile_context>

<pallas_src>
import functools

import jax
import jax.numpy as jnp
from jax import lax
from jax.experimental import pallas as pl
from jax.experimental.pallas import tpu as pltpu


def _layernorm(v, gamma, beta, eps=1e-5):
    # Two-pass (centred) variance: matches nn.LayerNorm numerics and avoids the
    # catastrophic-cancellation risk of the fused E[x^2] - mu^2 form.
    mu = jnp.mean(v, axis=-1, keepdims=True)
    c = v - mu
    var = jnp.mean(c * c, axis=-1, keepdims=True)
    return c * lax.rsqrt(var + eps) * gamma + beta


def _gelu(h, approx):
    if approx:
        # tanh-approx GELU: single EUP op, effectively free next to the MXU.
        return jax.nn.gelu(h, approximate=True)
    # nn.GELU() default (erf-based) — kept exact to preserve module numerics.
    return 0.5 * h * (1.0 + lax.erf(h * jnp.float32(0.7071067811865476)))


def double_mixer_kernel(
    x_ref, y_ref,            # (Bb, T, D) f32 activation blocks
    wf_ref, wr_ref,          # (T, T) bf16, pre-masked tril / triu(k=2)
    seqb_ref,                # (T, 2) f32: conv biases [bf | br]
    lnp_ref,                 # (8, D) f32: gf, betf, gr, betr, gp, betp, b2, pad
    w1_ref, b1_ref, w2_ref,  # (D, H) bf16, (1, H) f32, (H, D) bf16
    xo_ref, yo_ref,          # (Bb, T, D) f32 outputs (also the residual slab)
    wide_ref,                # VMEM scratch (T, Bb*D) bf16: wide MXU operand
    *, t_chunk, approx_gelu,
):
    Bb, T, D = x_ref.shape
    n_chunks = T // t_chunk

    # ---- Stage 1: sequence mixing --------------------------------------
    # Masked Conv1d(length, length, 1) == (T, T) matmul over the sequence
    # axis.  All Bb batch elements are packed along the lane axis of a bf16
    # scratch slab so each stream issues ONE (T, T) @ (T, Bb*D) MXU matmul.
    # Assembly is via lane-offset ref writes (bounded live ranges, no XLU
    # transpose, no value-land concatenate).
    def seq_mix(in_ref, out_ref, w_ref, g, beta, bias):
        for b in range(Bb):                        # Bb is small & static
            wide_ref[:, b * D:(b + 1) * D] = (
                _layernorm(in_ref[b], g, beta).astype(jnp.bfloat16))
        mixed = jnp.dot(w_ref[...], wide_ref[...],
                        preferred_element_type=jnp.float32)       # (T, Bb*D)
        for b in range(Bb):
            out_ref[b] = mixed[:, b * D:(b + 1) * D] + bias + in_ref[b]

    bias_f = jnp.broadcast_to(seqb_ref[:, 0:1], (T, D))   # hoisted broadcasts
    bias_r = jnp.broadcast_to(seqb_ref[:, 1:2], (T, D))
    seq_mix(x_ref, xo_ref, wf_ref, lnp_ref[0:1, :], lnp_ref[1:2, :], bias_f)
    seq_mix(y_ref, yo_ref, wr_ref, lnp_ref[2:3, :], lnp_ref[3:4, :], bias_r)

    # ---- Stage 2: shared patch LayerNorm + FeedForward + residual ------
    # The seq-mixed activations already live in the output refs, which double
    # as the residual slab: read a row chunk, LN + FF, write back in place.
    # Row-chunking caps the (rows, H) f32 intermediate so block_b can grow.
    gp, betp = lnp_ref[4:5, :], lnp_ref[5:6, :]
    b2 = lnp_ref[6:7, :]
    b1 = b1_ref[...]
    w1 = w1_ref[...]
    w2 = w2_ref[...]

    def ff_rows(ref, b, t0):
        res = ref[b, pl.ds(t0, t_chunk), :]                       # (Tc, D) f32
        zn = _layernorm(res, gp, betp).astype(jnp.bfloat16)
        h = jnp.dot(zn, w1, preferred_element_type=jnp.float32) + b1
        h = _gelu(h, approx_gelu).astype(jnp.bfloat16)
        ref[b, pl.ds(t0, t_chunk), :] = (
            jnp.dot(h, w2, preferred_element_type=jnp.float32) + b2 + res)

    for ref in (xo_ref, yo_ref):
        for b in range(Bb):
            if n_chunks <= 8:                      # short trip count: unroll
                for c in range(n_chunks):
                    ff_rows(ref, b, c * t_chunk)
            else:
                def body(c, carry, ref=ref, b=b):
                    ff_rows(ref, b, pl.multiple_of(c * t_chunk, t_chunk))
                    return carry
                lax.fori_loop(0, n_chunks, body, 0)


def _tpu_vmem_and_cores():
    """Best-effort generation query: (VMEM capacity bytes, TensorCores/chip)."""
    vmem = 64 << 20          # assume the smallest generation (v7x) if unknown
    cores = 1
    try:
        vmem = int(pltpu.get_tpu_info().vmem_capacity_bytes)
    except Exception:
        pass
    try:
        kind = jax.devices()[0].device_kind.lower()
        if "7" in kind or "v4" in kind:   # v7x / v4 megacore: 2 TCs per chip
            cores = 2
    except Exception:
        pass
    return vmem, cores


def double_mixer_block(x, y, params, *, block_b=None, t_chunk=None,
                       approx_gelu=False, interpret=False):
    # Mirror the module's 4-D flattening ('b p t f -> (b p) t f').
    if x.ndim == 4:
        b_, p_, t_, f_ = x.shape
        x = x.reshape(b_ * p_, t_, f_)
        y = y.reshape(b_ * p_, t_, f_)
    B, T, D = x.shape
    H = params["w1"].shape[-1]

    # forward() re-masks the conv weights every call.  Weights stored bf16
    # (full-rate MXU, half the weight VMEM); accumulation stays f32.
    wf = jnp.tril(params["wf"]).astype(jnp.bfloat16)
    wr = jnp.triu(params["wr"], k=2).astype(jnp.bfloat16)
    w1 = params["w1"].astype(jnp.bfloat16)
    w2 = params["w2"].astype(jnp.bfloat16)

    # Pack the ten tiny parameter vectors into two slabs (fewer BlockSpec
    # windows / DMA descriptors): (8, D) for the LN affines + b2, (T, 2) for
    # the two per-position conv biases; b1 stays (1, H).
    d_rows = jnp.stack([params[k].reshape(D).astype(jnp.float32)
                        for k in ("gf", "betf", "gr", "betr", "gp", "betp", "b2")])
    lnp = jnp.zeros((8, D), jnp.float32).at[:7].set(d_rows)
    seqb = jnp.stack([params["bf"].reshape(T).astype(jnp.float32),
                      params["br"].reshape(T).astype(jnp.float32)], axis=1)
    b1 = params["b1"].reshape(1, H).astype(jnp.float32)

    # --- generation-aware VMEM budget, FF row chunk and batch-block size ---
    vmem_cap, n_cores = _tpu_vmem_and_cores()
    budget = int(min(max(vmem_cap - (24 << 20), 16 << 20), 100 << 20))

    if t_chunk is None:
        t_chunk = max(d for d in range(1, T + 1) if T % d == 0 and d <= 512)
    assert T % t_chunk == 0

    weight_bytes = (2 * T * T + 2 * D * H) * 2 + (2 * T + 8 * D + H) * 4

    def step_bytes(bb):
        io = 4 * bb * T * D * 4 * 2          # x,y,xo,yo blocks, double-buffered
        slab = bb * T * D * 2                # bf16 wide-matmul scratch
        mix = 2 * bb * T * D * 4             # f32 wide-matmul result (+margin)
        ff = t_chunk * (6 * H + 18 * D)      # per-chunk FF intermediates
        return io + slab + mix + ff + weight_bytes + (2 << 20)

    if block_b is None:
        cands = [bb for bb in range(1, B + 1)
                 if B % bb == 0 and step_bytes(bb) <= int(0.8 * budget)]
        if not cands:
            cands = [1]
        if n_cores >= 2:
            # keep >= 2 grid steps so the "parallel" axis can feed both TCs
            multi = [bb for bb in cands if B // bb >= n_cores]
            block_b = max(multi) if multi else max(cands)
        else:
            # single TensorCore: fewer, larger grid steps win
            block_b = max(cands)
    assert B % block_b == 0
    grid = (B // block_b,)

    batched = lambda: pl.BlockSpec((block_b, T, D), lambda i: (i, 0, 0))

    def invariant(shape, single):
        if single:
            # grid-invariant operand: single VMEM buffer instead of the default 2
            return pl.BlockSpec(shape, lambda *_: (0,) * len(shape),
                                pipeline_mode=pl.Buffered(1))
        return pl.BlockSpec(shape, lambda *_: (0,) * len(shape))

    flops = B * (4 * T * T * D + 8 * T * D * H)
    transcendentals = 2 * B * T * H
    bytes_accessed = (4 * B * T * D * 4
                      + (2 * T * T + 2 * D * H) * 2
                      + (2 * T + 8 * D + H) * 4)

    kernel = functools.partial(double_mixer_kernel,
                               t_chunk=t_chunk, approx_gelu=approx_gelu)

    def run(single_buffer_weights):
        grid_spec = pltpu.PrefetchScalarGridSpec(
            num_scalar_prefetch=0,
            grid=grid,
            in_specs=[
                batched(), batched(),                                # x, y
                invariant((T, T), single_buffer_weights),            # wf
                invariant((T, T), single_buffer_weights),            # wr
                invariant((T, 2), single_buffer_weights),            # [bf | br]
                invariant((8, D), single_buffer_weights),            # LN + b2
                invariant((D, H), single_buffer_weights),            # w1
                invariant((1, H), single_buffer_weights),            # b1
                invariant((H, D), single_buffer_weights),            # w2
            ],
            out_specs=[batched(), batched()],
            scratch_shapes=[pltpu.VMEM((T, block_b * D), jnp.bfloat16)],
        )
        return pl.pallas_call(
            kernel,
            out_shape=(jax.ShapeDtypeStruct((B, T, D), jnp.float32),
                       jax.ShapeDtypeStruct((B, T, D), jnp.float32)),
            grid_spec=grid_spec,
            compiler_params=pltpu.CompilerParams(
                dimension_semantics=("parallel",),
                vmem_limit_bytes=budget),
            cost_estimate=pl.CostEstimate(flops=flops,
                                          transcendentals=transcendentals,
                                          bytes_accessed=bytes_accessed),
            interpret=interpret,
        )(x, y, wf, wr, seqb, lnp, w1, b1, w2)

    try:
        return run(True)
    except Exception:
        # Fallback for jax versions without BlockSpec(pipeline_mode=...):
        # default double-buffered invariants (correct, just more VMEM).
        return run(False)


def reference(x, y, p):
    def ln(v, g, b):
        mu = jnp.mean(v, axis=-1, keepdims=True)
        var = jnp.mean((v - mu) ** 2, axis=-1, keepdims=True)
        return (v - mu) / jnp.sqrt(var + 1e-5) * g + b

    def ff(v):
        h = v @ p["w1"] + p["b1"]
        h = 0.5 * h * (1.0 + lax.erf(h / jnp.sqrt(2.0)))
        return h @ p["w2"] + p["b2"]

    wf = jnp.tril(p["wf"])
    wr = jnp.triu(p["wr"], k=2)
    xn = ln(x, p["gf"], p["betf"])
    yn = ln(y, p["gr"], p["betr"])
    x = jnp.einsum("st,btd->bsd", wf, xn) + p["bf"][None] + x
    y = jnp.einsum("st,btd->bsd", wr, yn) + p["br"][None] + y
    xn = ln(x, p["gp"], p["betp"])
    yn = ln(y, p["gp"], p["betp"])
    return ff(xn) + x, ff(yn) + y


if __name__ == "__main__":
    # Small demo shapes consistent with the module (dim=512 in the spec; D=128
    # here keeps the lane axis dense while staying small).
    B, T, D = 4, 16, 128
    H = 4 * D                    # FeedForward expansion_factor = 4

    key = jax.random.PRNGKey(0)
    ks = jax.random.split(key, 16)

    # Conv1d(length, length, 1) weights as (T, T); masking (tril / triu(k=2))
    # is applied in the wrapper each call, mirroring the module's forward().
    wf = jax.random.normal(ks[0], (T, T), jnp.float32) * 0.1
    wr = jax.random.normal(ks[1], (T, T), jnp.float32) * 0.1
    bf = jax.random.normal(ks[2], (T,), jnp.float32) * 0.1
    br = jax.random.normal(ks[3], (T,), jnp.float32) * 0.1

    # LayerNorm affines, perturbed from the PyTorch 1/0 init so the check
    # actually exercises them.
    gf = 1.0 + 0.1 * jax.random.normal(ks[4], (D,), jnp.float32)
    betf = 0.05 * jax.random.normal(ks[5], (D,), jnp.float32)
    gr = 1.0 + 0.1 * jax.random.normal(ks[6], (D,), jnp.float32)
    betr = 0.05 * jax.random.normal(ks[7], (D,), jnp.float32)
    gp = 1.0 + 0.1 * jax.random.normal(ks[8], (D,), jnp.float32)
    betp = 0.05 * jax.random.normal(ks[9], (D,), jnp.float32)

    # FeedForward: Linear(D, H) then Linear(H, D); weights stored (in, out).
    w1 = jax.random.normal(ks[10], (D, H), jnp.float32) * (1.0 / jnp.sqrt(D))
    b1 = jax.random.normal(ks[11], (H,), jnp.float32) * 0.02
    w2 = jax.random.normal(ks[12], (H, D), jnp.float32) * (1.0 / jnp.sqrt(H))
    b2 = jax.random.normal(ks[13], (D,), jnp.float32) * 0.02

    params = dict(
        wf=wf, wr=wr, bf=bf.reshape(T, 1), br=br.reshape(T, 1),
        gf=gf, betf=betf, gr=gr, betr=betr, gp=gp, betp=betp,
        w1=w1, b1=b1, w2=w2, b2=b2,
    )

    x = jax.random.normal(ks[14], (B, T, D), jnp.float32)
    y = jax.random.normal(ks[15], (B, T, D), jnp.float32)

    xo, yo = double_mixer_block(x, y, params)
    jax.block_until_ready((xo, yo))

    # Correctness vs. a plain-JAX f32 reference using the same bf16-rounded
    # weights; tolerance covers the bf16 cast of matmul activations.
    p_ref = dict(params)
    for k in ("wf", "wr", "w1", "w2"):
        p_ref[k] = params[k].astype(jnp.bfloat16).astype(jnp.float32)
    xr, yr = reference(x, y, p_ref)
    assert jnp.allclose(xo, xr, rtol=5e-2, atol=5e-2), "x mismatch"
    assert jnp.allclose(yo, yr, rtol=5e-2, atol=5e-2), "y mismatch"

    print("KERNEL_OK")
</pallas_src>

<mosaic_0001>
module attributes {stable_mosaic.version = 11 : i64} {
  func.func @double_mixer_kernel(%arg0: i32, %arg1: memref<4x16x128xf32, #tpu.memory_space<vmem>>, %arg2: memref<4x16x128xf32, #tpu.memory_space<vmem>>, %arg3: memref<16x16xbf16, #tpu.memory_space<vmem>>, %arg4: memref<16x16xbf16, #tpu.memory_space<vmem>>, %arg5: memref<16x2xf32, #tpu.memory_space<vmem>>, %arg6: memref<8x128xf32, #tpu.memory_space<vmem>>, %arg7: memref<128x512xbf16, #tpu.memory_space<vmem>>, %arg8: memref<1x512xf32, #tpu.memory_space<vmem>>, %arg9: memref<512x128xbf16, #tpu.memory_space<vmem>>, %arg10: memref<4x16x128xf32, #tpu.memory_space<vmem>>, %arg11: memref<4x16x128xf32, #tpu.memory_space<vmem>>, %arg12: memref<16x512xbf16, #tpu.memory_space<vmem>>) attributes {dimension_semantics = [#tpu.dimension_semantics<parallel>], iteration_bounds = array<i64: 1>, scalar_prefetch = 0 : i64, scratch_operands = 1 : i64, tpu.core_type = #tpu.core_type<tc>, window_params = [{transform_indices = @transform_0, window_bounds = array<i64: 4, 16, 128>}, {transform_indices = @transform_1, window_bounds = array<i64: 4, 16, 128>}, {pipeline_mode = #tpu.pipeline_mode<synchronous>, transform_indices = @transform_2, window_bounds = array<i64: 16, 16>}, {pipeline_mode = #tpu.pipeline_mode<synchronous>, transform_indices = @transform_3, window_bounds = array<i64: 16, 16>}, {pipeline_mode = #tpu.pipeline_mode<synchronous>, transform_indices = @transform_4, window_bounds = array<i64: 16, 2>}, {pipeline_mode = #tpu.pipeline_mode<synchronous>, transform_indices = @transform_5, window_bounds = array<i64: 8, 128>}, {pipeline_mode = #tpu.pipeline_mode<synchronous>, transform_indices = @transform_6, window_bounds = array<i64: 128, 512>}, {pipeline_mode = #tpu.pipeline_mode<synchronous>, transform_indices = @transform_7, window_bounds = array<i64: 1, 512>}, {pipeline_mode = #tpu.pipeline_mode<synchronous>, transform_indices = @transform_8, window_bounds = array<i64: 512, 128>}, {transform_indices = @transform_9, window_bounds = array<i64: 4, 16, 128>}, {transform_indices = @transform_10, window_bounds = array<i64: 4, 16, 128>}]} {
    %c0 = arith.constant 0 : index
    %c0_0 = arith.constant 0 : index
    %0 = vector.load %arg5[%c0, %c0_0] : memref<16x2xf32, #tpu.memory_space<vmem>>, vector<16x1xf32>
    %1 = vector.shape_cast %0 : vector<16x1xf32> to vector<16x1xf32>
    %2 = vector.broadcast %1 : vector<16x1xf32> to vector<16x128xf32>
    %c0_1 = arith.constant 0 : index
    %c1 = arith.constant 1 : index
    %3 = vector.load %arg5[%c0_1, %c1] : memref<16x2xf32, #tpu.memory_space<vmem>>, vector<16x1xf32>
    %4 = vector.shape_cast %3 : vector<16x1xf32> to vector<16x1xf32>
    %5 = vector.broadcast %4 : vector<16x1xf32> to vector<16x128xf32>
    %c0_2 = arith.constant 0 : index
    %c0_3 = arith.constant 0 : index
    %6 = vector.load %arg6[%c0_2, %c0_3] : memref<8x128xf32, #tpu.memory_space<vmem>>, vector<1x128xf32>
    %c1_4 = arith.constant 1 : index
    %c0_5 = arith.constant 0 : index
    %7 = vector.load %arg6[%c1_4, %c0_5] : memref<8x128xf32, #tpu.memory_space<vmem>>, vector<1x128xf32>
    %c0_6 = arith.constant 0 : index
    %c0_7 = arith.constant 0 : index
    %c0_8 = arith.constant 0 : index
    %8 = vector.load %arg1[%c0_6, %c0_7, %c0_8] : memref<4x16x128xf32, #tpu.memory_space<vmem>>, vector<1x16x128xf32>
    %9 = vector.shape_cast %8 : vector<1x16x128xf32> to vector<16x128xf32>
    %cst = arith.constant dense<0.000000e+00> : vector<16xf32>
    %10 = vector.multi_reduction <add>, %9, %cst [1] : vector<16x128xf32> to vector<16xf32>
    %11 = vector.shape_cast %10 : vector<16xf32> to vector<16x1xf32>
    %cst_9 = arith.constant 1.280000e+02 : f32
    %12 = vector.broadcast %cst_9 : f32 to vector<16x1xf32>
    %13 = arith.divf %11, %12 : vector<16x1xf32>
    %14 = vector.broadcast %13 : vector<16x1xf32> to vector<16x128xf32>
    %15 = arith.subf %9, %14 : vector<16x128xf32>
    %16 = arith.mulf %15, %15 : vector<16x128xf32>
    %cst_10 = arith.constant dense<0.000000e+00> : vector<16xf32>
    %17 = vector.multi_reduction <add>, %16, %cst_10 [1] : vector<16x128xf32> to vector<16xf32>
    %18 = vector.shape_cast %17 : vector<16xf32> to vector<16x1xf32>
    %cst_11 = arith.constant 1.280000e+02 : f32
    %19 = vector.broadcast %cst_11 : f32 to vector<16x1xf32>
    %20 = arith.divf %18, %19 : vector<16x1xf32>
    %cst_12 = arith.constant 9.99999974E-6 : f32
    %21 = vector.broadcast %cst_12 : f32 to vector<16x1xf32>
    %22 = arith.addf %20, %21 : vector<16x1xf32>
    %23 = math.rsqrt %22 : vector<16x1xf32>
    %24 = vector.broadcast %23 : vector<16x1xf32> to vector<16x128xf32>
    %25 = arith.mulf %15, %24 : vector<16x128xf32>
    %26 = vector.broadcast %6 : vector<1x128xf32> to vector<16x128xf32>
    %27 = arith.mulf %25, %26 : vector<16x128xf32>
    %28 = vector.broadcast %7 : vector<1x128xf32> to vector<16x128xf32>
    %29 = arith.addf %27, %28 : vector<16x128xf32>
    %30 = arith.truncf %29 : vector<16x128xf32> to vector<16x128xbf16>
    %c0_13 = arith.constant 0 : index
    %c0_14 = arith.constant 0 : index
    %31 = vector.load %arg12[%c0_13, %c0_14] : memref<16x512xbf16, #tpu.memory_space<vmem>>, vector<16x128xbf16>
    tpu.vector_store %arg12[%c0_13, %c0_14], %30 {strides = array<i32>} : memref<16x512xbf16, #tpu.memory_space<vmem>>, vector<16x128xbf16>,
    %c1_15 = arith.constant 1 : index
    %c0_16 = arith.constant 0 : index
    %c0_17 = arith.constant 0 : index
    %32 = vector.load %arg1[%c1_15, %c0_16, %c0_17] : memref<4x16x128xf32, #tpu.memory_space<vmem>>, vector<1x16x128xf32>
    %33 = vector.shape_cast %32 : vector<1x16x128xf32> to vector<16x128xf32>
    %cst_18 = arith.constant dense<0.000000e+00> : vector<16xf32>
    %34 = vector.multi_reduction <add>, %33, %cst_18 [1] : vector<16x128xf32> to vector<16xf32>
    %35 = vector.shape_cast %34 : vector<16xf32> to vector<16x1xf32>
    %cst_19 = arith.constant 1.280000e+02 : f32
    %36 = vector.broadcast %cst_19 : f32 to vector<16x1xf32>
    %37 = arith.divf %35, %36 : vector<16x1xf32>
    %38 = vector.broadcast %37 : vector<16x1xf32> to vector<16x128xf32>
    %39 = arith.subf %33, %38 : vector<16x128xf32>
    %40 = arith.mulf %39, %39 : vector<16x128xf32>
    %cst_20 = arith.constant dense<0.000000e+00> : vector<16xf32>
    %41 = vector.multi_reduction <add>, %40, %cst_20 [1] : vector<16x128xf32> to vector<16xf32>
    %42 = vector.shape_cast %41 : vector<16xf32> to vector<16x1xf32>
    %cst_21 = arith.constant 1.280000e+02 : f32
    %43 = vector.broadcast %cst_21 : f32 to vector<16x1xf32>
    %44 = arith.divf %42, %43 : vector<16x1xf32>
    %cst_22 = arith.constant 9.99999974E-6 : f32
    %45 = vector.broadcast %cst_22 : f32 to vector<16x1xf32>
    %46 = arith.addf %44, %45 : vector<16x1xf32>
    %47 = math.rsqrt %46 : vector<16x1xf32>
    %48 = vector.broadcast %47 : vector<16x1xf32> to vector<16x128xf32>
    %49 = arith.mulf %39, %48 : vector<16x128xf32>
    %50 = vector.broadcast %6 : vector<1x128xf32> to vector<16x128xf32>
    %51 = arith.mulf %49, %50 : vector<16x128xf32>
    %52 = vector.broadcast %7 : vector<1x128xf32> to vector<16x128xf32>
    %53 = arith.addf %51, %52 : vector<16x128xf32>
    %54 = arith.truncf %53 : vector<16x128xf32> to vector<16x128xbf16>
    %c0_23 = arith.constant 0 : index
    %c128 = arith.constant 128 : index
    %55 = vector.load %arg12[%c0_23, %c128] : memref<16x512xbf16, #tpu.memory_space<vmem>>, vector<16x128xbf16>
    tpu.vector_store %arg12[%c0_23, %c128], %54 {strides = array<i32>} : memref<16x512xbf16, #tpu.memory_space<vmem>>, vector<16x128xbf16>,
    %c2 = arith.constant 2 : index
    %c0_24 = arith.constant 0 : index
    %c0_25 = arith.constant 0 : index
    %56 = vector.load %arg1[%c2, %c0_24, %c0_25] : memref<4x16x128xf32, #tpu.memory_space<vmem>>, vector<1x16x128xf32>
    %57 = vector.shape_cast %56 : vector<1x16x128xf32> to vector<16x128xf32>
    %cst_26 = arith.constant dense<0.000000e+00> : vector<16xf32>
    %58 = vector.multi_reduction <add>, %57, %cst_26 [1] : vector<16x128xf32> to vector<16xf32>
    %59 = vector.shape_cast %58 : vector<16xf32> to vector<16x1xf32>
    %cst_27 = arith.constant 1.280000e+02 : f32
    %60 = vector.broadcast %cst_27 : f32 to vector<16x1xf32>
    %61 = arith.divf %59, %60 : vector<16x1xf32>
    %62 = vector.broadcast %61 : vector<16x1xf32> to vector<16x128xf32>
    %63 = arith.subf %57, %62 : vector<16x128xf32>
    %64 = arith.mulf %63, %63 : vector<16x128xf32>
    %cst_28 = arith.constant dense<0.000000e+00> : vector<16xf32>
    %65 = vector.multi_reduction <add>, %64, %cst_28 [1] : vector<16x128xf32> to vector<16xf32>
    %66 = vector.shape_cast %65 : vector<16xf32> to vector<16x1xf32>
    %cst_29 = arith.constant 1.280000e+02 : f32
    %67 = vector.broadcast %cst_29 : f32 to vector<16x1xf32>
    %68 = arith.divf %66, %67 : vector<16x1xf32>
    %cst_30 = arith.constant 9.99999974E-6 : f32
    %69 = vector.broadcast %cst_30 : f32 to vector<16x1xf32>
    %70 = arith.addf %68, %69 : vector<16x1xf32>
    %71 = math.rsqrt %70 : vector<16x1xf32>
    %72 = vector.broadcast %71 : vector<16x1xf32> to vector<16x128xf32>
    %73 = arith.mulf %63, %72 : vector<16x128xf32>
    %74 = vector.broadcast %6 : vector<1x128xf32> to vector<16x128xf32>
    %75 = arith.mulf %73, %74 : vector<16x128xf32>
    %76 = vector.broadcast %7 : vector<1x128xf32> to vector<16x128xf32>
    %77 = arith.addf %75, %76 : vector<16x128xf32>
    %78 = arith.truncf %77 : vector<16x128xf32> to vector<16x128xbf16>
    %c0_31 = arith.constant 0 : index
    %c256 = arith.constant 256 : index
    %79 = vector.load %arg12[%c0_31, %c256] : memref<16x512xbf16, #tpu.memory_space<vmem>>, vector<16x128xbf16>
    tpu.vector_store %arg12[%c0_31, %c256], %78 {strides = array<i32>} : memref<16x512xbf16, #tpu.memory_space<vmem>>, vector<16x128xbf16>,
    %c3 = arith.constant 3 : index
    %c0_32 = arith.constant 0 : index
    %c0_33 = arith.constant 0 : index
    %80 = vector.load %arg1[%c3, %c0_32, %c0_33] : memref<4x16x128xf32, #tpu.memory_space<vmem>>, vector<1x16x128xf32>
    %81 = vector.shape_cast %80 : vector<1x16x128xf32> to vector<16x128xf32>
    %cst_34 = arith.constant dense<0.000000e+00> : vector<16xf32>
    %82 = vector.multi_reduction <add>, %81, %cst_34 [1] : vector<16x128xf32> to vector<16xf32>
    %83 = vector.shape_cast %82 : vector<16xf32> to vector<16x1xf32>
    %cst_35 = arith.constant 1.280000e+02 : f32
    %84 = vector.broadcast %cst_35 : f32 to vector<16x1xf32>
    %85 = arith.divf %83, %84 : vector<16x1xf32>
    %86 = vector.broadcast %85 : vector<16x1xf32> to vector<16x128xf32>
    %87 = arith.subf %81, %86 : vector<16x128xf32>
    %88 = arith.mulf %87, %87 : vector<16x128xf32>
    %cst_36 = arith.constant dense<0.000000e+00> : vector<16xf32>
    %89 = vector.multi_reduction <add>, %88, %cst_36 [1] : vector<16x128xf32> to vector<16xf32>
    %90 = vector.shape_cast %89 : vector<16xf32> to vector<16x1xf32>
    %cst_37 = arith.constant 1.280000e+02 : f32
    %91 = vector.broadcast %cst_37 : f32 to vector<16x1xf32>
    %92 = arith.divf %90, %91 : vector<16x1xf32>
    %cst_38 = arith.constant 9.99999974E-6 : f32
    %93 = vector.broadcast %cst_38 : f32 to vector<16x1xf32>
    %94 = arith.addf %92, %93 : vector<16x1xf32>
    %95 = math.rsqrt %94 : vector<16x1xf32>
    %96 = vector.broadcast %95 : vector<16x1xf32> to vector<16x128xf32>
    %97 = arith.mulf %87, %96 : vector<16x128xf32>
    %98 = vector.broadcast %6 : vector<1x128xf32> to vector<16x128xf32>
    %99 = arith.mulf %97, %98 : vector<16x128xf32>
    %100 = vector.broadcast %7 : vector<1x128xf32> to vector<16x128xf32>
    %101 = arith.addf %99, %100 : vector<16x128xf32>
    %102 = arith.truncf %101 : vector<16x128xf32> to vector<16x128xbf16>
    %c0_39 = arith.constant 0 : index
    %c384 = arith.constant 384 : index
    %103 = vector.load %arg12[%c0_39, %c384] : memref<16x512xbf16, #tpu.memory_space<vmem>>, vector<16x128xbf16>
    tpu.vector_store %arg12[%c0_39, %c384], %102 {strides = array<i32>} : memref<16x512xbf16, #tpu.memory_space<vmem>>, vector<16x128xbf16>,
    %c0_40 = arith.constant 0 : index
    %c0_41 = arith.constant 0 : index
    %104 = vector.load %arg3[%c0_40, %c0_41] : memref<16x16xbf16, #tpu.memory_space<vmem>>, vector<16x16xbf16>
    %c0_42 = arith.constant 0 : index
    %c0_43 = arith.constant 0 : index
    %105 = vector.load %arg12[%c0_42, %c0_43] : memref<16x512xbf16, #tpu.memory_space<vmem>>, vector<16x512xbf16>
    %cst_44 = arith.constant dense<0.000000e+00> : vector<16x512xf32>
    %106 = tpu.matmul %104, %105, %cst_44 {dimension_numbers = #tpu.dot_dimension_numbers<[1], [0], [0], [1], [0, 0, 1, 1], [], []>} : vector<16x16xbf16>, vector<16x512xbf16>, vector<16x512xf32> -> vector<16x512xf32>
    %107 = vector.extract_strided_slice %106 {offsets = [0, 0], sizes = [16, 128], strides = [1, 1]} : vector<16x512xf32> to vector<16x128xf32>
    %108 = arith.addf %107, %2 : vector<16x128xf32>
    %c0_45 = arith.constant 0 : index
    %c0_46 = arith.constant 0 : index
    %c0_47 = arith.constant 0 : index
    %109 = vector.load %arg1[%c0_45, %c0_46, %c0_47] : memref<4x16x128xf32, #tpu.memory_space<vmem>>, vector<1x16x128xf32>
    %110 = vector.shape_cast %109 : vector<1x16x128xf32> to vector<16x128xf32>
    %111 = arith.addf %108, %110 : vector<16x128xf32>
    %c0_48 = arith.constant 0 : index
    %c0_49 = arith.constant 0 : index
    %c0_50 = arith.constant 0 : index
    %112 = vector.load %arg10[%c0_48, %c0_49, %c0_50] : memref<4x16x128xf32, #tpu.memory_space<vmem>>, vector<1x16x128xf32>
    %113 = vector.shape_cast %112 : vector<1x16x128xf32> to vector<16x128xf32>
    %114 = vector.shape_cast %111 : vector<16x128xf32> to vector<1x16x128xf32>
    tpu.vector_store %arg10[%c0_48, %c0_49, %c0_50], %114 {strides = array<i32>} : memref<4x16x128xf32, #tpu.memory_space<vmem>>, vector<1x16x128xf32>,
    %115 = vector.extract_strided_slice %106 {offsets = [0, 128], sizes = [16, 128], strides = [1, 1]} : vector<16x512xf32> to vector<16x128xf32>
    %116 = arith.addf %115, %2 : vector<16x128xf32>
    %c1_51 = arith.constant 1 : index
    %c0_52 = arith.constant 0 : index
    %c0_53 = arith.constant 0 : index
    %117 = vector.load %arg1[%c1_51, %c0_52, %c0_53] : memref<4x16x128xf32, #tpu.memory_space<vmem>>, vector<1x16x128xf32>
    %118 = vector.shape_cast %117 : vector<1x16x128xf32> to vector<16x128xf32>
    %119 = arith.addf %116, %118 : vector<16x128xf32>
    %c1_54 = arith.constant 1 : index
    %c0_55 = arith.constant 0 : index
    %c0_56 = arith.constant 0 : index
    %120 = vector.load %arg10[%c1_54, %c0_55, %c0_56] : memref<4x16x128xf32, #tpu.memory_space<vmem>>, vector<1x16x128xf32>
    %121 = vector.shape_cast %120 : vector<1x16x128xf32> to vector<16x128xf32>
    %122 = vector.shape_cast %119 : vector<16x128xf32> to vector<1x16x128xf32>
    tpu.vector_store %arg10[%c1_54, %c0_55, %c0_56], %122 {strides = array<i32>} : memref<4x16x128xf32, #tpu.memory_space<vmem>>, vector<1x16x128xf32>,
    %123 = vector.extract_strided_slice %106 {offsets = [0, 256], sizes = [16, 128], strides = [1, 1]} : vector<16x512xf32> to vector<16x128xf32>
    %124 = arith.addf %123, %2 : vector<16x128xf32>
    %c2_57 = arith.constant 2 : index
    %c0_58 = arith.constant 0 : index
    %c0_59 = arith.constant 0 : index
    %125 = vector.load %arg1[%c2_57, %c0_58, %c0_59] : memref<4x16x128xf32, #tpu.memory_space<vmem>>, vector<1x16x128xf32>
    %126 = vector.shape_cast %125 : vector<1x16x128xf32> to vector<16x128xf32>
    %127 = arith.addf %124, %126 : vector<16x128xf32>
    %c2_60 = arith.constant 2 : index
    %c0_61 = arith.constant 0 : index
    %c0_62 = arith.constant 0 : index
    %128 = vector.load %arg10[%c2_60, %c0_61, %c0_62] : memref<4x16x128xf32, #tpu.memory_space<vmem>>, vector<1x16x128xf32>
    %129 = vector.shape_cast %128 : vector<1x16x128xf32> to vector<16x128xf32>
    %130 = vector.shape_cast %127 : vector<16x128xf32> to vector<1x16x128xf32>
    tpu.vector_store %arg10[%c2_60, %c0_61, %c0_62], %130 {strides = array<i32>} : memref<4x16x128xf32, #tpu.memory_space<vmem>>, vector<1x16x128xf32>,
    %131 = vector.extract_strided_slice %106 {offsets = [0, 384], sizes = [16, 128], strides = [1, 1]} : vector<16x512xf32> to vector<16x128xf32>
    %132 = arith.addf %131, %2 : vector<16x128xf32>
    %c3_63 = arith.constant 3 : index
    %c0_64 = arith.constant 0 : index
    %c0_65 = arith.constant 0 : index
    %133 = vector.load %arg1[%c3_63, %c0_64, %c0_65] : memref<4x16x128xf32, #tpu.memory_space<vmem>>, vector<1x16x128xf32>
    %134 = vector.shape_cast %133 : vector<1x16x128xf32> to vector<16x128xf32>
    %135 = arith.addf %132, %134 : vector<16x128xf32>
    %c3_66 = arith.constant 3 : index
    %c0_67 = arith.constant 0 : index
    %c0_68 = arith.constant 0 : index
    %136 = vector.load %arg10[%c3_66, %c0_67, %c0_68] : memref<4x16x128xf32, #tpu.memory_space<vmem>>, vector<1x16x128xf32>
    %137 = vector.shape_cast %136 : vector<1x16x128xf32> to vector<16x128xf32>
    %138 = vector.shape_cast %135 : vector<16x128xf32> to vector<1x16x128xf32>
    tpu.vector_store %arg10[%c3_66, %c0_67, %c0_68], %138 {strides = array<i32>} : memref<4x16x128xf32, #tpu.memory_space<vmem>>, vector<1x16x128xf32>,
    %c2_69 = arith.constant 2 : index
    %c0_70 = arith.constant 0 : index
    %139 = vector.load %arg6[%c2_69, %c0_70] : memref<8x128xf32, #tpu.memory_space<vmem>>, vector<1x128xf32>
    %c3_71 = arith.constant 3 : index
    %c0_72 = arith.constant 0 : index
    %140 = vector.load %arg6[%c3_71, %c0_72] : memref<8x128xf32, #tpu.memory_space<vmem>>, vector<1x128xf32>
    %c0_73 = arith.constant 0 : index
    %c0_74 = arith.constant 0 : index
    %c0_75 = arith.constant 0 : index
    %141 = vector.load %arg2[%c0_73, %c0_74, %c0_75] : memref<4x16x128xf32, #tpu.memory_space<vmem>>, vector<1x16x128xf32>
    %142 = vector.shape_cast %141 : vector<1x16x128xf32> to vector<16x128xf32>
    %cst_76 = arith.constant dense<0.000000e+00> : vector<16xf32>
    %143 = vector.multi_reduction <add>, %142, %cst_76 [1] : vector<16x128xf32> to vector<16xf32>
    %144 = vector.shape_cast %143 : vector<16xf32> to vector<16x1xf32>
    %cst_77 = arith.constant 1.280000e+02 : f32
    %145 = vector.broadcast %cst_77 : f32 to vector<16x1xf32>
    %146 = arith.divf %144, %145 : vector<16x1xf32>
    %147 = vector.broadcast %146 : vector<16x1xf32> to vector<16x128xf32>
    %148 = arith.subf %142, %147 : vector<16x128xf32>
    %149 = arith.mulf %148, %148 : vector<16x128xf32>
    %cst_78 = arith.constant dense<0.000000e+00> : vector<16xf32>
    %150 = vector.multi_reduction <add>, %149, %cst_78 [1] : vector<16x128xf32> to vector<16xf32>
    %151 = vector.shape_cast %150 : vector<16xf32> to vector<16x1xf32>
    %cst_79 = arith.constant 1.280000e+02 : f32
    %152 = vector.broadcast %cst_79 : f32 to vector<16x1xf32>
    %153 = arith.divf %151, %152 : vector<16x1xf32>
    %cst_80 = arith.constant 9.99999974E-6 : f32
    %154 = vector.broadcast %cst_80 : f32 to vector<16x1xf32>
    %155 = arith.addf %153, %154 : vector<16x1xf32>
    %156 = math.rsqrt %155 : vector<16x1xf32>
    %157 = vector.broadcast %156 : vector<16x1xf32> to vector<16x128xf32>
    %158 = arith.mulf %148, %157 : vector<16x128xf32>
    %159 = vector.broadcast %139 : vector<1x128xf32> to vector<16x128xf32>
    %160 = arith.mulf %158, %159 : vector<16x128xf32>
    %161 = vector.broadcast %140 : vector<1x128xf32> to vector<16x128xf32>
    %162 = arith.addf %160, %161 : vector<16x128xf32>
    %163 = arith.truncf %162 : vector<16x128xf32> to vector<16x128xbf16>
    %c0_81 = arith.constant 0 : index
    %c0_82 = arith.constant 0 : index
    %164 = vector.load %arg12[%c0_81, %c0_82] : memref<16x512xbf16, #tpu.memory_space<vmem>>, vector<16x128xbf16>
    tpu.vector_store %arg12[%c0_81, %c0_82], %163 {strides = array<i32>} : memref<16x512xbf16, #tpu.memory_space<vmem>>, vector<16x128xbf16>,
    %c1_83 = arith.constant 1 : index
    %c0_84 = arith.constant 0 : index
    %c0_85 = arith.constant 0 : index
    %165 = vector.load %arg2[%c1_83, %c0_84, %c0_85] : memref<4x16x128xf32, #tpu.memory_space<vmem>>, vector<1x16x128xf32>
    %166 = vector.shape_cast %165 : vector<1x16x128xf32> to vector<16x128xf32>
    %cst_86 = arith.constant dense<0.000000e+00> : vector<16xf32>
    %167 = vector.multi_reduction <add>, %166, %cst_86 [1] : vector<16x128xf32> to vector<16xf32>
    %168 = vector.shape_cast %167 : vector<16xf32> to vector<16x1xf32>
    %cst_87 = arith.constant 1.280000e+02 : f32
    %169 = vector.broadcast %cst_87 : f32 to vector<16x1xf32>
    %170 = arith.divf %168, %169 : vector<16x1xf32>
    %171 = vector.broadcast %170 : vector<16x1xf32> to vector<16x128xf32>
    %172 = arith.subf %166, %171 : vector<16x128xf32>
    %173 = arith.mulf %172, %172 : vector<16x128xf32>
    %cst_88 = arith.constant dense<0.000000e+00> : vector<16xf32>
    %174 = vector.multi_reduction <add>, %173, %cst_88 [1] : vector<16x128xf32> to vector<16xf32>
    %175 = vector.shape_cast %174 : vector<16xf32> to vector<16x1xf32>
    %cst_89 = arith.constant 1.280000e+02 : f32
    %176 = vector.broadcast %cst_89 : f32 to vector<16x1xf32>
    %177 = arith.divf %175, %176 : vector<16x1xf32>
    %cst_90 = arith.constant 9.99999974E-6 : f32
    %178 = vector.broadcast %cst_90 : f32 to vector<16x1xf32>
    %179 = arith.addf %177, %178 : vector<16x1xf32>
    %180 = math.rsqrt %179 : vector<16x1xf32>
    %181 = vector.broadcast %180 : vector<16x1xf32> to vector<16x128xf32>
    %182 = arith.mulf %172, %181 : vector<16x128xf32>
    %183 = vector.broadcast %139 : vector<1x128xf32> to vector<16x128xf32>
    %184 = arith.mulf %182, %183 : vector<16x128xf32>
    %185 = vector.broadcast %140 : vector<1x128xf32> to vector<16x128xf32>
    %186 = arith.addf %184, %185 : vector<16x128xf32>
    %187 = arith.truncf %186 : vector<16x128xf32> to vector<16x128xbf16>
    %c0_91 = arith.constant 0 : index
    %c128_92 = arith.constant 128 : index
    %188 = vector.load %arg12[%c0_91, %c128_92] : memref<16x512xbf16, #tpu.memory_space<vmem>>, vector<16x128xbf16>
    tpu.vector_store %arg12[%c0_91, %c128_92], %187 {strides = array<i32>} : memref<16x512xbf16, #tpu.memory_space<vmem>>, vector<16x128xbf16>,
    %c2_93 = arith.constant 2 : index
    %c0_94 = arith.constant 0 : index
    %c0_95 = arith.constant 0 : index
    %189 = vector.load %arg2[%c2_93, %c0_94, %c0_95] : memref<4x16x128xf32, #tpu.memory_space<vmem>>, vector<1x16x128xf32>
    %190 = vector.shape_cast %189 : vector<1x16x128xf32> to vector<16x128xf32>
    %cst_96 = arith.constant dense<0.000000e+00> : vector<16xf32>
    %191 = vector.multi_reduction <add>, %190, %cst_96 [1] : vector<16x128xf32> to vector<16xf32>
    %192 = vector.shape_cast %191 : vector<16xf32> to vector<16x1xf32>
    %cst_97 = arith.constant 1.280000e+02 : f32
    %193 = vector.broadcast %cst_97 : f32 to vector<16x1xf32>
    %194 = arith.divf %192, %193 : vector<16x1xf32>
    %195 = vector.broadcast %194 : vector<16x1xf32> to vector<16x128xf32>
    %196 = arith.subf %190, %195 : vector<16x128xf32>
    %197 = arith.mulf %196, %196 : vector<16x128xf32>
    %cst_98 = arith.constant dense<0.000000e+00> : vector<16xf32>
    %198 = vector.multi_reduction <add>, %197, %cst_98 [1] : vector<16x128xf32> to vector<16xf32>
    %199 = vector.shape_cast %198 : vector<16xf32> to vector<16x1xf32>
    %cst_99 = arith.constant 1.280000e+02 : f32
    %200 = vector.broadcast %cst_99 : f32 to vector<16x1xf32>
    %201 = arith.divf %199, %200 : vector<16x1xf32>
    %cst_100 = arith.constant 9.99999974E-6 : f32
    %202 = vector.broadcast %cst_100 : f32 to vector<16x1xf32>
    %203 = arith.addf %201, %202 : vector<16x1xf32>
    %204 = math.rsqrt %203 : vector<16x1xf32>
    %205 = vector.broadcast %204 : vector<16x1xf32> to vector<16x128xf32>
    %206 = arith.mulf %196, %205 : vector<16x128xf32>
    %207 = vector.broadcast %139 : vector<1x128xf32> to vector<16x128xf32>
    %208 = arith.mulf %206, %207 : vector<16x128xf32>
    %209 = vector.broadcast %140 : vector<1x128xf32> to vector<16x128xf32>
    %210 = arith.addf %208, %209 : vector<16x128xf32>
    %211 = arith.truncf %210 : vector<16x128xf32> to vector<16x128xbf16>
    %c0_101 = arith.constant 0 : index
    %c256_102 = arith.constant 256 : index
    %212 = vector.load %arg12[%c0_101, %c256_102] : memref<16x512xbf16, #tpu.memory_space<vmem>>, vector<16x128xbf16>
    tpu.vector_store %arg12[%c0_101, %c256_102], %211 {strides = array<i32>} : memref<16x512xbf16, #tpu.memory_space<vmem>>, vector<16x128xbf16>,
    %c3_103 = arith.constant 3 : index
    %c0_104 = arith.constant 0 : index
    %c0_105 = arith.constant 0 : index
    %213 = vector.load %arg2[%c3_103, %c0_104, %c0_105] : memref<4x16x128xf32, #tpu.memory_space<vmem>>, vector<1x16x128xf32>
    %214 = vector.shape_cast %213 : vector<1x16x128xf32> to vector<16x128xf32>
    %cst_106 = arith.constant dense<0.000000e+00> : vector<16xf32>
    %215 = vector.multi_reduction <add>, %214, %cst_106 [1] : vector<16x128xf32> to vector<16xf32>
    %216 = vector.shape_cast %215 : vector<16xf32> to vector<16x1xf32>
    %cst_107 = arith.constant 1.280000e+02 : f32
    %217 = vector.broadcast %cst_107 : f32 to vector<16x1xf32>
    %218 = arith.divf %216, %217 : vector<16x1xf32>
    %219 = vector.broadcast %218 : vector<16x1xf32> to vector<16x128xf32>
    %220 = arith.subf %214, %219 : vector<16x128xf32>
    %221 = arith.mulf %220, %220 : vector<16x128xf32>
    %cst_108 = arith.constant dense<0.000000e+00> : vector<16xf32>
    %222 = vector.multi_reduction <add>, %221, %cst_108 [1] : vector<16x128xf32> to vector<16xf32>
    %223 = vector.shape_cast %222 : vector<16xf32> to vector<16x1xf32>
    %cst_109 = arith.constant 1.280000e+02 : f32
    %224 = vector.broadcast %cst_109 : f32 to vector<16x1xf32>
    %225 = arith.divf %223, %224 : vector<16x1xf32>
    %cst_110 = arith.constant 9.99999974E-6 : f32
    %226 = vector.broadcast %cst_110 : f32 to vector<16x1xf32>
    %227 = arith.addf %225, %226 : vector<16x1xf32>
    %228 = math.rsqrt %227 : vector<16x1xf32>
    %229 = vector.broadcast %228 : vector<16x1xf32> to vector<16x128xf32>
    %230 = arith.mulf %220, %229 : vector<16x128xf32>
    %231 = vector.broadcast %139 : vector<1x128xf32> to vector<16x128xf32>
    %232 = arith.mulf %230, %231 : vector<16x128xf32>
    %233 = vector.broadcast %140 : vector<1x128xf32> to vector<16x128xf32>
    %234 = arith.addf %232, %233 : vector<16x128xf32>
    %235 = arith.truncf %234 : vector<16x128xf32> to vector<16x128xbf16>
    %c0_111 = arith.constant 0 : index
    %c384_112 = arith.constant 384 : index
    %236 = vector.load %arg12[%c0_111, %c384_112] : memref<16x512xbf16, #tpu.memory_space<vmem>>, vector<16x128xbf16>
    tpu.vector_store %arg12[%c0_111, %c384_112], %235 {strides = array<i32>} : memref<16x512xbf16, #tpu.memory_space<vmem>>, vector<16x128xbf16>,
    %c0_113 = arith.constant 0 : index
    %c0_114 = arith.constant 0 : index
    %237 = vector.load %arg4[%c0_113, %c0_114] : memref<16x16xbf16, #tpu.memory_space<vmem>>, vector<16x16xbf16>
    %c0_115 = arith.constant 0 : index
    %c0_116 = arith.constant 0 : index
    %238 = vector.load %arg12[%c0_115, %c0_116] : memref<16x512xbf16, #tpu.memory_space<vmem>>, vector<16x512xbf16>
    %cst_117 = arith.constant dense<0.000000e+00> : vector<16x512xf32>
    %239 = tpu.matmul %237, %238, %cst_117 {dimension_numbers = #tpu.dot_dimension_numbers<[1], [0], [0], [1], [0, 0, 1, 1], [], []>} : vector<16x16xbf16>, vector<16x512xbf16>, vector<16x512xf32> -> vector<16x512xf32>
    %240 = vector.extract_strided_slice %239 {offsets = [0, 0], sizes = [16, 128], strides = [1, 1]} : vector<16x512xf32> to vector<16x128xf32>
    %241 = arith.addf %240, %5 : vector<16x128xf32>
    %c0_118 = arith.constant 0 : index
    %c0_119 = arith.constant 0 : index
    %c0_120 = arith.constant 0 : index
    %242 = vector.load %arg2[%c0_118, %c0_119, %c0_120] : memref<4x16x128xf32, #tpu.memory_space<vmem>>, vector<1x16x128xf32>
    %243 = vector.shape_cast %242 : vector<1x16x128xf32> to vector<16x128xf32>
    %244 = arith.addf %241, %243 : vector<16x128xf32>
    %c0_121 = arith.constant 0 : index
    %c0_122 = arith.constant 0 : index
    %c0_123 = arith.constant 0 : index
    %245 = vector.load %arg11[%c0_121, %c0_122, %c0_123] : memref<4x16x128xf32, #tpu.memory_space<vmem>>, vector<1x16x128xf32>
    %246 = vector.shape_cast %245 : vector<1x16x128xf32> to vector<16x128xf32>
    %247 = vector.shape_cast %244 : vector<16x128xf32> to vector<1x16x128xf32>
    tpu.vector_store %arg11[%c0_121, %c0_122, %c0_123], %247 {strides = array<i32>} : memref<4x16x128xf32, #tpu.memory_space<vmem>>, vector<1x16x128xf32>,
    %248 = vector.extract_strided_slice %239 {offsets = [0, 128], sizes = [16, 128], strides = [1, 1]} : vector<16x512xf32> to vector<16x128xf32>
    %249 = arith.addf %248, %5 : vector<16x128xf32>
    %c1_124 = arith.constant 1 : index
    %c0_125 = arith.constant 0 : index
    %c0_126 = arith.constant 0 : index
    %250 = vector.load %arg2[%c1_124, %c0_125, %c0_126] : memref<4x16x128xf32, #tpu.memory_space<vmem>>, vector<1x16x128xf32>
    %251 = vector.shape_cast %250 : vector<1x16x128xf32> to vector<16x128xf32>
    %252 = arith.addf %249, %251 : vector<16x128xf32>
    %c1_127 = arith.constant 1 : index
    %c0_128 = arith.constant 0 : index
    %c0_129 = arith.constant 0 : index
    %253 = vector.load %arg11[%c1_127, %c0_128, %c0_129] : memref<4x16x128xf32, #tpu.memory_space<vmem>>, vector<1x16x128xf32>
    %254 = vector.shape_cast %253 : vector<1x16x128xf32> to vector<16x128xf32>
    %255 = vector.shape_cast %252 : vector<16x128xf32> to vector<1x16x128xf32>
    tpu.vector_store %arg11[%c1_127, %c0_128, %c0_129], %255 {strides = array<i32>} : memref<4x16x128xf32, #tpu.memory_space<vmem>>, vector<1x16x128xf32>,
    %256 = vector.extract_strided_slice %239 {offsets = [0, 256], sizes = [16, 128], strides = [1, 1]} : vector<16x512xf32> to vector<16x128xf32>
    %257 = arith.addf %256, %5 : vector<16x128xf32>
    %c2_130 = arith.constant 2 : index
    %c0_131 = arith.constant 0 : index
    %c0_132 = arith.constant 0 : index
    %258 = vector.load %arg2[%c2_130, %c0_131, %c0_132] : memref<4x16x128xf32, #tpu.memory_space<vmem>>, vector<1x16x128xf32>
    %259 = vector.shape_cast %258 : vector<1x16x128xf32> to vector<16x128xf32>
    %260 = arith.addf %257, %259 : vector<16x128xf32>
    %c2_133 = arith.constant 2 : index
    %c0_134 = arith.constant 0 : index
    %c0_135 = arith.constant 0 : index
    %261 = vector.load %arg11[%c2_133, %c0_134, %c0_135] : memref<4x16x128xf32, #tpu.memory_space<vmem>>, vector<1x16x128xf32>
    %262 = vector.shape_cast %261 : vector<1x16x128xf32> to vector<16x128xf32>
    %263 = vector.shape_cast %260 : vector<16x128xf32> to vector<1x16x128xf32>
    tpu.vector_store %arg11[%c2_133, %c0_134, %c0_135], %263 {strides = array<i32>} : memref<4x16x128xf32, #tpu.memory_space<vmem>>, vector<1x16x128xf32>,
    %264 = vector.extract_strided_slice %239 {offsets = [0, 384], sizes = [16, 128], strides = [1, 1]} : vector<16x512xf32> to vector<16x128xf32>
    %265 = arith.addf %264, %5 : vector<16x128xf32>
    %c3_136 = arith.constant 3 : index
    %c0_137 = arith.constant 0 : index
    %c0_138 = arith.constant 0 : index
    %266 = vector.load %arg2[%c3_136, %c0_137, %c0_138] : memref<4x16x128xf32, #tpu.memory_space<vmem>>, vector<1x16x128xf32>
    %267 = vector.shape_cast %266 : vector<1x16x128xf32> to vector<16x128xf32>
    %268 = arith.addf %265, %267 : vector<16x128xf32>
    %c3_139 = arith.constant 3 : index
    %c0_140 = arith.constant 0 : index
    %c0_141 = arith.constant 0 : index
    %269 = vector.load %arg11[%c3_139, %c0_140, %c0_141] : memref<4x16x128xf32, #tpu.memory_space<vmem>>, vector<1x16x128xf32>
    %270 = vector.shape_cast %269 : vector<1x16x128xf32> to vector<16x128xf32>
    %271 = vector.shape_cast %268 : vector<16x128xf32> to vector<1x16x128xf32>
    tpu.vector_store %arg11[%c3_139, %c0_140, %c0_141], %271 {strides = array<i32>} : memref<4x16x128xf32, #tpu.memory_space<vmem>>, vector<1x16x128xf32>,
    %c4 = arith.constant 4 : index
    %c0_142 = arith.constant 0 : index
    %272 = vector.load %arg6[%c4, %c0_142] : memref<8x128xf32, #tpu.memory_space<vmem>>, vector<1x128xf32>
    %c5 = arith.constant 5 : index
    %c0_143 = arith.constant 0 : index
    %273 = vector.load %arg6[%c5, %c0_143] : memref<8x128xf32, #tpu.memory_space<vmem>>, vector<1x128xf32>
    %c6 = arith.constant 6 : index
    %c0_144 = arith.constant 0 : index
    %274 = vector.load %arg6[%c6, %c0_144] : memref<8x128xf32, #tpu.memory_space<vmem>>, vector<1x128xf32>
    %c0_145 = arith.constant 0 : index
    %c0_146 = arith.constant 0 : index
    %275 = vector.load %arg8[%c0_145, %c0_146] : memref<1x512xf32, #tpu.memory_space<vmem>>, vector<1x512xf32>
    %c0_147 = arith.constant 0 : index
    %c0_148 = arith.constant 0 : index
    %276 = vector.load %arg7[%c0_147, %c0_148] : memref<128x512xbf16, #tpu.memory_space<vmem>>, vector<128x512xbf16>
    %c0_149 = arith.constant 0 : index
    %c0_150 = arith.constant 0 : index
    %277 = vector.load %arg9[%c0_149, %c0_150] : memref<512x128xbf16, #tpu.memory_space<vmem>>, vector<512x128xbf16>
    %c0_151 = arith.constant 0 : index
    %c0_152 = arith.constant 0 : index
    %c0_153 = arith.constant 0 : index
    %278 = vector.load %arg10[%c0_151, %c0_152, %c0_153] : memref<4x16x128xf32, #tpu.memory_space<vmem>>, vector<1x16x128xf32>
    %279 = vector.shape_cast %278 : vector<1x16x128xf32> to vector<16x128xf32>
    %cst_154 = arith.constant dense<0.000000e+00> : vector<16xf32>
    %280 = vector.multi_reduction <add>, %279, %cst_154 [1] : vector<16x128xf32> to vector<16xf32>
    %281 = vector.shape_cast %280 : vector<16xf32> to vector<16x1xf32>
    %cst_155 = arith.constant 1.280000e+02 : f32
    %282 = vector.broadcast %cst_155 : f32 to vector<16x1xf32>
    %283 = arith.divf %281, %282 : vector<16x1xf32>
    %284 = vector.broadcast %283 : vector<16x1xf32> to vector<16x128xf32>
    %285 = arith.subf %279, %284 : vector<16x128xf32>
    %286 = arith.mulf %285, %285 : vector<16x128xf32>
    %cst_156 = arith.constant dense<0.000000e+00> : vector<16xf32>
    %287 = vector.multi_reduction <add>, %286, %cst_156 [1] : vector<16x128xf32> to vector<16xf32>
    %288 = vector.shape_cast %287 : vector<16xf32> to vector<16x1xf32>
    %cst_157 = arith.constant 1.280000e+02 : f32
    %289 = vector.broadcast %cst_157 : f32 to vector<16x1xf32>
    %290 = arith.divf %288, %289 : vector<16x1xf32>
    %cst_158 = arith.constant 9.99999974E-6 : f32
    %291 = vector.broadcast %cst_158 : f32 to vector<16x1xf32>
    %292 = arith.addf %290, %291 : vector<16x1xf32>
    %293 = math.rsqrt %292 : vector<16x1xf32>
    %294 = vector.broadcast %293 : vector<16x1xf32> to vector<16x128xf32>
    %295 = arith.mulf %285, %294 : vector<16x128xf32>
    %296 = vector.broadcast %272 : vector<1x128xf32> to vector<16x128xf32>
    %297 = arith.mulf %295, %296 : vector<16x128xf32>
    %298 = vector.broadcast %273 : vector<1x128xf32> to vector<16x128xf32>
    %299 = arith.addf %297, %298 : vector<16x128xf32>
    %300 = arith.truncf %299 : vector<16x128xf32> to vector<16x128xbf16>
    %cst_159 = arith.constant dense<0.000000e+00> : vector<16x512xf32>
    %301 = tpu.matmul %300, %276, %cst_159 {dimension_numbers = #tpu.dot_dimension_numbers<[1], [0], [0], [1], [0, 0, 1, 1], [], []>} : vector<16x128xbf16>, vector<128x512xbf16>, vector<16x512xf32> -> vector<16x512xf32>
    %302 = vector.broadcast %275 : vector<1x512xf32> to vector<16x512xf32>
    %303 = arith.addf %301, %302 : vector<16x512xf32>
    %cst_160 = arith.constant 5.000000e-01 : f32
    %304 = vector.broadcast %cst_160 : f32 to vector<16x512xf32>
    %305 = arith.mulf %304, %303 : vector<16x512xf32>
    %cst_161 = arith.constant 0.707106769 : f32
    %306 = vector.broadcast %cst_161 : f32 to vector<16x512xf32>
    %307 = arith.mulf %303, %306 : vector<16x512xf32>
    %308 = math.erf %307 : vector<16x512xf32>
    %cst_162 = arith.constant 1.000000e+00 : f32
    %309 = vector.broadcast %cst_162 : f32 to vector<16x512xf32>
    %310 = arith.addf %309, %308 : vector<16x512xf32>
    %311 = arith.mulf %305, %310 : vector<16x512xf32>
    %312 = arith.truncf %311 : vector<16x512xf32> to vector<16x512xbf16>
    %cst_163 = arith.constant dense<0.000000e+00> : vector<16x128xf32>
    %313 = tpu.matmul %312, %277, %cst_163 {dimension_numbers = #tpu.dot_dimension_numbers<[1], [0], [0], [1], [0, 0, 1, 1], [], []>} : vector<16x512xbf16>, vector<512x128xbf16>, vector<16x128xf32> -> vector<16x128xf32>
    %314 = vector.broadcast %274 : vector<1x128xf32> to vector<16x128xf32>
    %315 = arith.addf %313, %314 : vector<16x128xf32>
    %316 = arith.addf %315, %279 : vector<16x128xf32>
    %c0_164 = arith.constant 0 : index
    %c0_165 = arith.constant 0 : index
    %c0_166 = arith.constant 0 : index
    %317 = vector.load %arg10[%c0_164, %c0_165, %c0_166] : memref<4x16x128xf32, #tpu.memory_space<vmem>>, vector<1x16x128xf32>
    %318 = vector.shape_cast %317 : vector<1x16x128xf32> to vector<16x128xf32>
    %319 = vector.shape_cast %316 : vector<16x128xf32> to vector<1x16x128xf32>
    tpu.vector_store %arg10[%c0_164, %c0_165, %c0_166], %319 {strides = array<i32>} : memref<4x16x128xf32, #tpu.memory_space<vmem>>, vector<1x16x128xf32>,
    %c1_167 = arith.constant 1 : index
    %c0_168 = arith.constant 0 : index
    %c0_169 = arith.constant 0 : index
    %320 = vector.load %arg10[%c1_167, %c0_168, %c0_169] : memref<4x16x128xf32, #tpu.memory_space<vmem>>, vector<1x16x128xf32>
    %321 = vector.shape_cast %320 : vector<1x16x128xf32> to vector<16x128xf32>
    %cst_170 = arith.constant dense<0.000000e+00> : vector<16xf32>
    %322 = vector.multi_reduction <add>, %321, %cst_170 [1] : vector<16x128xf32> to vector<16xf32>
    %323 = vector.shape_cast %322 : vector<16xf32> to vector<16x1xf32>
    %cst_171 = arith.constant 1.280000e+02 : f32
    %324 = vector.broadcast %cst_171 : f32 to vector<16x1xf32>
    %325 = arith.divf %323, %324 : vector<16x1xf32>
    %326 = vector.broadcast %325 : vector<16x1xf32> to vector<16x128xf32>
    %327 = arith.subf %321, %326 : vector<16x128xf32>
    %328 = arith.mulf %327, %327 : vector<16x128xf32>
    %cst_172 = arith.constant dense<0.000000e+00> : vector<16xf32>
    %329 = vector.multi_reduction <add>, %328, %cst_172 [1] : vector<16x128xf32> to vector<16xf32>
    %330 = vector.shape_cast %329 : vector<16xf32> to vector<16x1xf32>
    %cst_173 = arith.constant 1.280000e+02 : f32
    %331 = vector.broadcast %cst_173 : f32 to vector<16x1xf32>
    %332 = arith.divf %330, %331 : vector<16x1xf32>
    %cst_174 = arith.constant 9.99999974E-6 : f32
    %333 = vector.broadcast %cst_174 : f32 to vector<16x1xf32>
    %334 = arith.addf %332, %333 : vector<16x1xf32>
    %335 = math.rsqrt %334 : vector<16x1xf32>
    %336 = vector.broadcast %335 : vector<16x1xf32> to vector<16x128xf32>
    %337 = arith.mulf %327, %336 : vector<16x128xf32>
    %338 = vector.broadcast %272 : vector<1x128xf32> to vector<16x128xf32>
    %339 = arith.mulf %337, %338 : vector<16x128xf32>
    %340 = vector.broadcast %273 : vector<1x128xf32> to vector<16x128xf32>
    %341 = arith.addf %339, %340 : vector<16x128xf32>
    %342 = arith.truncf %341 : vector<16x128xf32> to vector<16x128xbf16>
    %cst_175 = arith.constant dense<0.000000e+00> : vector<16x512xf32>
    %343 = tpu.matmul %342, %276, %cst_175 {dimension_numbers = #tpu.dot_dimension_numbers<[1], [0], [0], [1], [0, 0, 1, 1], [], []>} : vector<16x128xbf16>, vector<128x512xbf16>, vector<16x512xf32> -> vector<16x512xf32>
    %344 = vector.broadcast %275 : vector<1x512xf32> to vector<16x512xf32>
    %345 = arith.addf %343, %344 : vector<16x512xf32>
    %cst_176 = arith.constant 5.000000e-01 : f32
    %346 = vector.broadcast %cst_176 : f32 to vector<16x512xf32>
    %347 = arith.mulf %346, %345 : vector<16x512xf32>
    %cst_177 = arith.constant 0.707106769 : f32
    %348 = vector.broadcast %cst_177 : f32 to vector<16x512xf32>
    %349 = arith.mulf %345, %348 : vector<16x512xf32>
    %350 = math.erf %349 : vector<16x512xf32>
    %cst_178 = arith.constant 1.000000e+00 : f32
    %351 = vector.broadcast %cst_178 : f32 to vector<16x512xf32>
    %352 = arith.addf %351, %350 : vector<16x512xf32>
    %353 = arith.mulf %347, %352 : vector<16x512xf32>
    %354 = arith.truncf %353 : vector<16x512xf32> to vector<16x512xbf16>
    %cst_179 = arith.constant dense<0.000000e+00> : vector<16x128xf32>
    %355 = tpu.matmul %354, %277, %cst_179 {dimension_numbers = #tpu.dot_dimension_numbers<[1], [0], [0], [1], [0, 0, 1, 1], [], []>} : vector<16x512xbf16>, vector<512x128xbf16>, vector<16x128xf32> -> vector<16x128xf32>
    %356 = vector.broadcast %274 : vector<1x128xf32> to vector<16x128xf32>
    %357 = arith.addf %355, %356 : vector<16x128xf32>
    %358 = arith.addf %357, %321 : vector<16x128xf32>
    %c1_180 = arith.constant 1 : index
    %c0_181 = arith.constant 0 : index
    %c0_182 = arith.constant 0 : index
    %359 = vector.load %arg10[%c1_180, %c0_181, %c0_182] : memref<4x16x128xf32, #tpu.memory_space<vmem>>, vector<1x16x128xf32>
    %360 = vector.shape_cast %359 : vector<1x16x128xf32> to vector<16x128xf32>
    %361 = vector.shape_cast %358 : vector<16x128xf32> to vector<1x16x128xf32>
    tpu.vector_store %arg10[%c1_180, %c0_181, %c0_182], %361 {strides = array<i32>} : memref<4x16x128xf32, #tpu.memory_space<vmem>>, vector<1x16x128xf32>,
    %c2_183 = arith.constant 2 : index
    %c0_184 = arith.constant 0 : index
    %c0_185 = arith.constant 0 : index
    %362 = vector.load %arg10[%c2_183, %c0_184, %c0_185] : memref<4x16x128xf32, #tpu.memory_space<vmem>>, vector<1x16x128xf32>
    %363 = vector.shape_cast %362 : vector<1x16x128xf32> to vector<16x128xf32>
    %cst_186 = arith.constant dense<0.000000e+00> : vector<16xf32>
    %364 = vector.multi_reduction <add>, %363, %cst_186 [1] : vector<16x128xf32> to vector<16xf32>
    %365 = vector.shape_cast %364 : vector<16xf32> to vector<16x1xf32>
    %cst_187 = arith.constant 1.280000e+02 : f32
    %366 = vector.broadcast %cst_187 : f32 to vector<16x1xf32>
    %367 = arith.divf %365, %366 : vector<16x1xf32>
    %368 = vector.broadcast %367 : vector<16x1xf32> to vector<16x128xf32>
    %369 = arith.subf %363, %368 : vector<16x128xf32>
    %370 = arith.mulf %369, %369 : vector<16x128xf32>
    %cst_188 = arith.constant dense<0.000000e+00> : vector<16xf32>
    %371 = vector.multi_reduction <add>, %370, %cst_188 [1] : vector<16x128xf32> to vector<16xf32>
    %372 = vector.shape_cast %371 : vector<16xf32> to vector<16x1xf32>
    %cst_189 = arith.constant 1.280000e+02 : f32
    %373 = vector.broadcast %cst_189 : f32 to vector<16x1xf32>
    %374 = arith.divf %372, %373 : vector<16x1xf32>
    %cst_190 = arith.constant 9.99999974E-6 : f32
    %375 = vector.broadcast %cst_190 : f32 to vector<16x1xf32>
    %376 = arith.addf %374, %375 : vector<16x1xf32>
    %377 = math.rsqrt %376 : vector<16x1xf32>
    %378 = vector.broadcast %377 : vector<16x1xf32> to vector<16x128xf32>
    %379 = arith.mulf %369, %378 : vector<16x128xf32>
    %380 = vector.broadcast %272 : vector<1x128xf32> to vector<16x128xf32>
    %381 = arith.mulf %379, %380 : vector<16x128xf32>
    %382 = vector.broadcast %273 : vector<1x128xf32> to vector<16x128xf32>
    %383 = arith.addf %381, %382 : vector<16x128xf32>
    %384 = arith.truncf %383 : vector<16x128xf32> to vector<16x128xbf16>
    %cst_191 = arith.constant dense<0.000000e+00> : vector<16x512xf32>
    %385 = tpu.matmul %384, %276, %cst_191 {dimension_numbers = #tpu.dot_dimension_numbers<[1], [0], [0], [1], [0, 0, 1, 1], [], []>} : vector<16x128xbf16>, vector<128x512xbf16>, vector<16x512xf32> -> vector<16x512xf32>
    %386 = vector.broadcast %275 : vector<1x512xf32> to vector<16x512xf32>
    %387 = arith.addf %385, %386 : vector<16x512xf32>
    %cst_192 = arith.constant 5.000000e-01 : f32
    %388 = vector.broadcast %cst_192 : f32 to vector<16x512xf32>
    %389 = arith.mulf %388, %387 : vector<16x512xf32>
    %cst_193 = arith.constant 0.707106769 : f32
    %390 = vector.broadcast %cst_193 : f32 to vector<16x512xf32>
    %391 = arith.mulf %387, %390 : vector<16x512xf32>
    %392 = math.erf %391 : vector<16x512xf32>
    %cst_194 = arith.constant 1.000000e+00 : f32
    %393 = vector.broadcast %cst_194 : f32 to vector<16x512xf32>
    %394 = arith.addf %393, %392 : vector<16x512xf32>
    %395 = arith.mulf %389, %394 : vector<16x512xf32>
    %396 = arith.truncf %395 : vector<16x512xf32> to vector<16x512xbf16>
    %cst_195 = arith.constant dense<0.000000e+00> : vector<16x128xf32>
    %397 = tpu.matmul %396, %277, %cst_195 {dimension_numbers = #tpu.dot_dimension_numbers<[1], [0], [0], [1], [0, 0, 1, 1], [], []>} : vector<16x512xbf16>, vector<512x128xbf16>, vector<16x128xf32> -> vector<16x128xf32>
    %398 = vector.broadcast %274 : vector<1x128xf32> to vector<16x128xf32>
    %399 = arith.addf %397, %398 : vector<16x128xf32>
    %400 = arith.addf %399, %363 : vector<16x128xf32>
    %c2_196 = arith.constant 2 : index
    %c0_197 = arith.constant 0 : index
    %c0_198 = arith.constant 0 : index
    %401 = vector.load %arg10[%c2_196, %c0_197, %c0_198] : memref<4x16x128xf32, #tpu.memory_space<vmem>>, vector<1x16x128xf32>
    %402 = vector.shape_cast %401 : vector<1x16x128xf32> to vector<16x128xf32>
    %403 = vector.shape_cast %400 : vector<16x128xf32> to vector<1x16x128xf32>
    tpu.vector_store %arg10[%c2_196, %c0_197, %c0_198], %403 {strides = array<i32>} : memref<4x16x128xf32, #tpu.memory_space<vmem>>, vector<1x16x128xf32>,
    %c3_199 = arith.constant 3 : index
    %c0_200 = arith.constant 0 : index
    %c0_201 = arith.constant 0 : index
    %404 = vector.load %arg10[%c3_199, %c0_200, %c0_201] : memref<4x16x128xf32, #tpu.memory_space<vmem>>, vector<1x16x128xf32>
    %405 = vector.shape_cast %404 : vector<1x16x128xf32> to vector<16x128xf32>
    %cst_202 = arith.constant dense<0.000000e+00> : vector<16xf32>
    %406 = vector.multi_reduction <add>, %405, %cst_202 [1] : vector<16x128xf32> to vector<16xf32>
    %407 = vector.shape_cast %406 : vector<16xf32> to vector<16x1xf32>
    %cst_203 = arith.constant 1.280000e+02 : f32
    %408 = vector.broadcast %cst_203 : f32 to vector<16x1xf32>
    %409 = arith.divf %407, %408 : vector<16x1xf32>
    %410 = vector.broadcast %409 : vector<16x1xf32> to vector<16x128xf32>
    %411 = arith.subf %405, %410 : vector<16x128xf32>
    %412 = arith.mulf %411, %411 : vector<16x128xf32>
    %cst_204 = arith.constant dense<0.000000e+00> : vector<16xf32>
    %413 = vector.multi_reduction <add>, %412, %cst_204 [1] : vector<16x128xf32> to vector<16xf32>
    %414 = vector.shape_cast %413 : vector<16xf32> to vector<16x1xf32>
    %cst_205 = arith.constant 1.280000e+02 : f32
    %415 = vector.broadcast %cst_205 : f32 to vector<16x1xf32>
    %416 = arith.divf %414, %415 : vector<16x1xf32>
    %cst_206 = arith.constant 9.99999974E-6 : f32
    %417 = vector.broadcast %cst_206 : f32 to vector<16x1xf32>
    %418 = arith.addf %416, %417 : vector<16x1xf32>
    %419 = math.rsqrt %418 : vector<16x1xf32>
    %420 = vector.broadcast %419 : vector<16x1xf32> to vector<16x128xf32>
    %421 = arith.mulf %411, %420 : vector<16x128xf32>
    %422 = vector.broadcast %272 : vector<1x128xf32> to vector<16x128xf32>
    %423 = arith.mulf %421, %422 : vector<16x128xf32>
    %424 = vector.broadcast %273 : vector<1x128xf32> to vector<16x128xf32>
    %425 = arith.addf %423, %424 : vector<16x128xf32>
    %426 = arith.truncf %425 : vector<16x128xf32> to vector<16x128xbf16>
    %cst_207 = arith.constant dense<0.000000e+00> : vector<16x512xf32>
    %427 = tpu.matmul %426, %276, %cst_207 {dimension_numbers = #tpu.dot_dimension_numbers<[1], [0], [0], [1], [0, 0, 1, 1], [], []>} : vector<16x128xbf16>, vector<128x512xbf16>, vector<16x512xf32> -> vector<16x512xf32>
    %428 = vector.broadcast %275 : vector<1x512xf32> to vector<16x512xf32>
    %429 = arith.addf %427, %428 : vector<16x512xf32>
    %cst_208 = arith.constant 5.000000e-01 : f32
    %430 = vector.broadcast %cst_208 : f32 to vector<16x512xf32>
    %431 = arith.mulf %430, %429 : vector<16x512xf32>
    %cst_209 = arith.constant 0.707106769 : f32
    %432 = vector.broadcast %cst_209 : f32 to vector<16x512xf32>
    %433 = arith.mulf %429, %432 : vector<16x512xf32>
    %434 = math.erf %433 : vector<16x512xf32>
    %cst_210 = arith.constant 1.000000e+00 : f32
    %435 = vector.broadcast %cst_210 : f32 to vector<16x512xf32>
    %436 = arith.addf %435, %434 : vector<16x512xf32>
    %437 = arith.mulf %431, %436 : vector<16x512xf32>
    %438 = arith.truncf %437 : vector<16x512xf32> to vector<16x512xbf16>
    %cst_211 = arith.constant dense<0.000000e+00> : vector<16x128xf32>
    %439 = tpu.matmul %438, %277, %cst_211 {dimension_numbers = #tpu.dot_dimension_numbers<[1], [0], [0], [1], [0, 0, 1, 1], [], []>} : vector<16x512xbf16>, vector<512x128xbf16>, vector<16x128xf32> -> vector<16x128xf32>
    %440 = vector.broadcast %274 : vector<1x128xf32> to vector<16x128xf32>
    %441 = arith.addf %439, %440 : vector<16x128xf32>
    %442 = arith.addf %441, %405 : vector<16x128xf32>
    %c3_212 = arith.constant 3 : index
    %c0_213 = arith.constant 0 : index
    %c0_214 = arith.constant 0 : index
    %443 = vector.load %arg10[%c3_212, %c0_213, %c0_214] : memref<4x16x128xf32, #tpu.memory_space<vmem>>, vector<1x16x128xf32>
    %444 = vector.shape_cast %443 : vector<1x16x128xf32> to vector<16x128xf32>
    %445 = vector.shape_cast %442 : vector<16x128xf32> to vector<1x16x128xf32>
    tpu.vector_store %arg10[%c3_212, %c0_213, %c0_214], %445 {strides = array<i32>} : memref<4x16x128xf32, #tpu.memory_space<vmem>>, vector<1x16x128xf32>,
    %c0_215 = arith.constant 0 : index
    %c0_216 = arith.constant 0 : index
    %c0_217 = arith.constant 0 : index
    %446 = vector.load %arg11[%c0_215, %c0_216, %c0_217] : memref<4x16x128xf32, #tpu.memory_space<vmem>>, vector<1x16x128xf32>
    %447 = vector.shape_cast %446 : vector<1x16x128xf32> to vector<16x128xf32>
    %cst_218 = arith.constant dense<0.000000e+00> : vector<16xf32>
    %448 = vector.multi_reduction <add>, %447, %cst_218 [1] : vector<16x128xf32> to vector<16xf32>
    %449 = vector.shape_cast %448 : vector<16xf32> to vector<16x1xf32>
    %cst_219 = arith.constant 1.280000e+02 : f32
    %450 = vector.broadcast %cst_219 : f32 to vector<16x1xf32>
    %451 = arith.divf %449, %450 : vector<16x1xf32>
    %452 = vector.broadcast %451 : vector<16x1xf32> to vector<16x128xf32>
    %453 = arith.subf %447, %452 : vector<16x128xf32>
    %454 = arith.mulf %453, %453 : vector<16x128xf32>
    %cst_220 = arith.constant dense<0.000000e+00> : vector<16xf32>
    %455 = vector.multi_reduction <add>, %454, %cst_220 [1] : vector<16x128xf32> to vector<16xf32>
    %456 = vector.shape_cast %455 : vector<16xf32> to vector<16x1xf32>
    %cst_221 = arith.constant 1.280000e+02 : f32
    %457 = vector.broadcast %cst_221 : f32 to vector<16x1xf32>
    %458 = arith.divf %456, %457 : vector<16x1xf32>
    %cst_222 = arith.constant 9.99999974E-6 : f32
    %459 = vector.broadcast %cst_222 : f32 to vector<16x1xf32>
    %460 = arith.addf %458, %459 : vector<16x1xf32>
    %461 = math.rsqrt %460 : vector<16x1xf32>
    %462 = vector.broadcast %461 : vector<16x1xf32> to vector<16x128xf32>
    %463 = arith.mulf %453, %462 : vector<16x128xf32>
    %464 = vector.broadcast %272 : vector<1x128xf32> to vector<16x128xf32>
    %465 = arith.mulf %463, %464 : vector<16x128xf32>
    %466 = vector.broadcast %273 : vector<1x128xf32> to vector<16x128xf32>
    %467 = arith.addf %465, %466 : vector<16x128xf32>
    %468 = arith.truncf %467 : vector<16x128xf32> to vector<16x128xbf16>
    %cst_223 = arith.constant dense<0.000000e+00> : vector<16x512xf32>
    %469 = tpu.matmul %468, %276, %cst_223 {dimension_numbers = #tpu.dot_dimension_numbers<[1], [0], [0], [1], [0, 0, 1, 1], [], []>} : vector<16x128xbf16>, vector<128x512xbf16>, vector<16x512xf32> -> vector<16x512xf32>
    %470 = vector.broadcast %275 : vector<1x512xf32> to vector<16x512xf32>
    %471 = arith.addf %469, %470 : vector<16x512xf32>
    %cst_224 = arith.constant 5.000000e-01 : f32
    %472 = vector.broadcast %cst_224 : f32 to vector<16x512xf32>
    %473 = arith.mulf %472, %471 : vector<16x512xf32>
    %cst_225 = arith.constant 0.707106769 : f32
    %474 = vector.broadcast %cst_225 : f32 to vector<16x512xf32>
    %475 = arith.mulf %471, %474 : vector<16x512xf32>
    %476 = math.erf %475 : vector<16x512xf32>
    %cst_226 = arith.constant 1.000000e+00 : f32
    %477 = vector.broadcast %cst_226 : f32 to vector<16x512xf32>
    %478 = arith.addf %477, %476 : vector<16x512xf32>
    %479 = arith.mulf %473, %478 : vector<16x512xf32>
    %480 = arith.truncf %479 : vector<16x512xf32> to vector<16x512xbf16>
    %cst_227 = arith.constant dense<0.000000e+00> : vector<16x128xf32>
    %481 = tpu.matmul %480, %277, %cst_227 {dimension_numbers = #tpu.dot_dimension_numbers<[1], [0], [0], [1], [0, 0, 1, 1], [], []>} : vector<16x512xbf16>, vector<512x128xbf16>, vector<16x128xf32> -> vector<16x128xf32>
    %482 = vector.broadcast %274 : vector<1x128xf32> to vector<16x128xf32>
    %483 = arith.addf %481, %482 : vector<16x128xf32>
    %484 = arith.addf %483, %447 : vector<16x128xf32>
    %c0_228 = arith.constant 0 : index
    %c0_229 = arith.constant 0 : index
    %c0_230 = arith.constant 0 : index
    %485 = vector.load %arg11[%c0_228, %c0_229, %c0_230] : memref<4x16x128xf32, #tpu.memory_space<vmem>>, vector<1x16x128xf32>
    %486 = vector.shape_cast %485 : vector<1x16x128xf32> to vector<16x128xf32>
    %487 = vector.shape_cast %484 : vector<16x128xf32> to vector<1x16x128xf32>
    tpu.vector_store %arg11[%c0_228, %c0_229, %c0_230], %487 {strides = array<i32>} : memref<4x16x128xf32, #tpu.memory_space<vmem>>, vector<1x16x128xf32>,
    %c1_231 = arith.constant 1 : index
    %c0_232 = arith.constant 0 : index
    %c0_233 = arith.constant 0 : index
    %488 = vector.load %arg11[%c1_231, %c0_232, %c0_233] : memref<4x16x128xf32, #tpu.memory_space<vmem>>, vector<1x16x128xf32>
    %489 = vector.shape_cast %488 : vector<1x16x128xf32> to vector<16x128xf32>
    %cst_234 = arith.constant dense<0.000000e+00> : vector<16xf32>
    %490 = vector.multi_reduction <add>, %489, %cst_234 [1] : vector<16x128xf32> to vector<16xf32>
    %491 = vector.shape_cast %490 : vector<16xf32> to vector<16x1xf32>
    %cst_235 = arith.constant 1.280000e+02 : f32
    %492 = vector.broadcast %cst_235 : f32 to vector<16x1xf32>
    %493 = arith.divf %491, %492 : vector<16x1xf32>
    %494 = vector.broadcast %493 : vector<16x1xf32> to vector<16x128xf32>
    %495 = arith.subf %489, %494 : vector<16x128xf32>
    %496 = arith.mulf %495, %495 : vector<16x128xf32>
    %cst_236 = arith.constant dense<0.000000e+00> : vector<16xf32>
    %497 = vector.multi_reduction <add>, %496, %cst_236 [1] : vector<16x128xf32> to vector<16xf32>
    %498 = vector.shape_cast %497 : vector<16xf32> to vector<16x1xf32>
    %cst_237 = arith.constant 1.280000e+02 : f32
    %499 = vector.broadcast %cst_237 : f32 to vector<16x1xf32>
    %500 = arith.divf %498, %499 : vector<16x1xf32>
    %cst_238 = arith.constant 9.99999974E-6 : f32
    %501 = vector.broadcast %cst_238 : f32 to vector<16x1xf32>
    %502 = arith.addf %500, %501 : vector<16x1xf32>
    %503 = math.rsqrt %502 : vector<16x1xf32>
    %504 = vector.broadcast %503 : vector<16x1xf32> to vector<16x128xf32>
    %505 = arith.mulf %495, %504 : vector<16x128xf32>
    %506 = vector.broadcast %272 : vector<1x128xf32> to vector<16x128xf32>
    %507 = arith.mulf %505, %506 : vector<16x128xf32>
    %508 = vector.broadcast %273 : vector<1x128xf32> to vector<16x128xf32>
    %509 = arith.addf %507, %508 : vector<16x128xf32>
    %510 = arith.truncf %509 : vector<16x128xf32> to vector<16x128xbf16>
    %cst_239 = arith.constant dense<0.000000e+00> : vector<16x512xf32>
    %511 = tpu.matmul %510, %276, %cst_239 {dimension_numbers = #tpu.dot_dimension_numbers<[1], [0], [0], [1], [0, 0, 1, 1], [], []>} : vector<16x128xbf16>, vector<128x512xbf16>, vector<16x512xf32> -> vector<16x512xf32>
    %512 = vector.broadcast %275 : vector<1x512xf32> to vector<16x512xf32>
    %513 = arith.addf %511, %512 : vector<16x512xf32>
    %cst_240 = arith.constant 5.000000e-01 : f32
    %514 = vector.broadcast %cst_240 : f32 to vector<16x512xf32>
    %515 = arith.mulf %514, %513 : vector<16x512xf32>
    %cst_241 = arith.constant 0.707106769 : f32
    %516 = vector.broadcast %cst_241 : f32 to vector<16x512xf32>
    %517 = arith.mulf %513, %516 : vector<16x512xf32>
    %518 = math.erf %517 : vector<16x512xf32>
    %cst_242 = arith.constant 1.000000e+00 : f32
    %519 = vector.broadcast %cst_242 : f32 to vector<16x512xf32>
    %520 = arith.addf %519, %518 : vector<16x512xf32>
    %521 = arith.mulf %515, %520 : vector<16x512xf32>
    %522 = arith.truncf %521 : vector<16x512xf32> to vector<16x512xbf16>
    %cst_243 = arith.constant dense<0.000000e+00> : vector<16x128xf32>
    %523 = tpu.matmul %522, %277, %cst_243 {dimension_numbers = #tpu.dot_dimension_numbers<[1], [0], [0], [1], [0, 0, 1, 1], [], []>} : vector<16x512xbf16>, vector<512x128xbf16>, vector<16x128xf32> -> vector<16x128xf32>
    %524 = vector.broadcast %274 : vector<1x128xf32> to vector<16x128xf32>
    %525 = arith.addf %523, %524 : vector<16x128xf32>
    %526 = arith.addf %525, %489 : vector<16x128xf32>
    %c1_244 = arith.constant 1 : index
    %c0_245 = arith.constant 0 : index
    %c0_246 = arith.constant 0 : index
    %527 = vector.load %arg11[%c1_244, %c0_245, %c0_246] : memref<4x16x128xf32, #tpu.memory_space<vmem>>, vector<1x16x128xf32>
    %528 = vector.shape_cast %527 : vector<1x16x128xf32> to vector<16x128xf32>
    %529 = vector.shape_cast %526 : vector<16x128xf32> to vector<1x16x128xf32>
    tpu.vector_store %arg11[%c1_244, %c0_245, %c0_246], %529 {strides = array<i32>} : memref<4x16x128xf32, #tpu.memory_space<vmem>>, vector<1x16x128xf32>,
    %c2_247 = arith.constant 2 : index
    %c0_248 = arith.constant 0 : index
    %c0_249 = arith.constant 0 : index
    %530 = vector.load %arg11[%c2_247, %c0_248, %c0_249] : memref<4x16x128xf32, #tpu.memory_space<vmem>>, vector<1x16x128xf32>
    %531 = vector.shape_cast %530 : vector<1x16x128xf32> to vector<16x128xf32>
    %cst_250 = arith.constant dense<0.000000e+00> : vector<16xf32>
    %532 = vector.multi_reduction <add>, %531, %cst_250 [1] : vector<16x128xf32> to vector<16xf32>
    %533 = vector.shape_cast %532 : vector<16xf32> to vector<16x1xf32>
    %cst_251 = arith.constant 1.280000e+02 : f32
    %534 = vector.broadcast %cst_251 : f32 to vector<16x1xf32>
    %535 = arith.divf %533, %534 : vector<16x1xf32>
    %536 = vector.broadcast %535 : vector<16x1xf32> to vector<16x128xf32>
    %537 = arith.subf %531, %536 : vector<16x128xf32>
    %538 = arith.mulf %537, %537 : vector<16x128xf32>
    %cst_252 = arith.constant dense<0.000000e+00> : vector<16xf32>
    %539 = vector.multi_reduction <add>, %538, %cst_252 [1] : vector<16x128xf32> to vector<16xf32>
    %540 = vector.shape_cast %539 : vector<16xf32> to vector<16x1xf32>
    %cst_253 = arith.constant 1.280000e+02 : f32
    %541 = vector.broadcast %cst_253 : f32 to vector<16x1xf32>
    %542 = arith.divf %540, %541 : vector<16x1xf32>
    %cst_254 = arith.constant 9.99999974E-6 : f32
    %543 = vector.broadcast %cst_254 : f32 to vector<16x1xf32>
    %544 = arith.addf %542, %543 : vector<16x1xf32>
    %545 = math.rsqrt %544 : vector<16x1xf32>
    %546 = vector.broadcast %545 : vector<16x1xf32> to vector<16x128xf32>
    %547 = arith.mulf %537, %546 : vector<16x128xf32>
    %548 = vector.broadcast %272 : vector<1x128xf32> to vector<16x128xf32>
    %549 = arith.mulf %547, %548 : vector<16x128xf32>
    %550 = vector.broadcast %273 : vector<1x128xf32> to vector<16x128xf32>
    %551 = arith.addf %549, %550 : vector<16x128xf32>
    %552 = arith.truncf %551 : vector<16x128xf32> to vector<16x128xbf16>
    %cst_255 = arith.constant dense<0.000000e+00> : vector<16x512xf32>
    %553 = tpu.matmul %552, %276, %cst_255 {dimension_numbers = #tpu.dot_dimension_numbers<[1], [0], [0], [1], [0, 0, 1, 1], [], []>} : vector<16x128xbf16>, vector<128x512xbf16>, vector<16x512xf32> -> vector<16x512xf32>
    %554 = vector.broadcast %275 : vector<1x512xf32> to vector<16x512xf32>
    %555 = arith.addf %553, %554 : vector<16x512xf32>
    %cst_256 = arith.constant 5.000000e-01 : f32
    %556 = vector.broadcast %cst_256 : f32 to vector<16x512xf32>
    %557 = arith.mulf %556, %555 : vector<16x512xf32>
    %cst_257 = arith.constant 0.707106769 : f32
    %558 = vector.broadcast %cst_257 : f32 to vector<16x512xf32>
    %559 = arith.mulf %555, %558 : vector<16x512xf32>
    %560 = math.erf %559 : vector<16x512xf32>
    %cst_258 = arith.constant 1.000000e+00 : f32
    %561 = vector.broadcast %cst_258 : f32 to vector<16x512xf32>
    %562 = arith.addf %561, %560 : vector<16x512xf32>
    %563 = arith.mulf %557, %562 : vector<16x512xf32>
    %564 = arith.truncf %563 : vector<16x512xf32> to vector<16x512xbf16>
    %cst_259 = arith.constant dense<0.000000e+00> : vector<16x128xf32>
    %565 = tpu.matmul %564, %277, %cst_259 {dimension_numbers = #tpu.dot_dimension_numbers<[1], [0], [0], [1], [0, 0, 1, 1], [], []>} : vector<16x512xbf16>, vector<512x128xbf16>, vector<16x128xf32> -> vector<16x128xf32>
    %566 = vector.broadcast %274 : vector<1x128xf32> to vector<16x128xf32>
    %567 = arith.addf %565, %566 : vector<16x128xf32>
    %568 = arith.addf %567, %531 : vector<16x128xf32>
    %c2_260 = arith.constant 2 : index
    %c0_261 = arith.constant 0 : index
    %c0_262 = arith.constant 0 : index
    %569 = vector.load %arg11[%c2_260, %c0_261, %c0_262] : memref<4x16x128xf32, #tpu.memory_space<vmem>>, vector<1x16x128xf32>
    %570 = vector.shape_cast %569 : vector<1x16x128xf32> to vector<16x128xf32>
    %571 = vector.shape_cast %568 : vector<16x128xf32> to vector<1x16x128xf32>
    tpu.vector_store %arg11[%c2_260, %c0_261, %c0_262], %571 {strides = array<i32>} : memref<4x16x128xf32, #tpu.memory_space<vmem>>, vector<1x16x128xf32>,
    %c3_263 = arith.constant 3 : index
    %c0_264 = arith.constant 0 : index
    %c0_265 = arith.constant 0 : index
    %572 = vector.load %arg11[%c3_263, %c0_264, %c0_265] : memref<4x16x128xf32, #tpu.memory_space<vmem>>, vector<1x16x128xf32>
    %573 = vector.shape_cast %572 : vector<1x16x128xf32> to vector<16x128xf32>
    %cst_266 = arith.constant dense<0.000000e+00> : vector<16xf32>
    %574 = vector.multi_reduction <add>, %573, %cst_266 [1] : vector<16x128xf32> to vector<16xf32>
    %575 = vector.shape_cast %574 : vector<16xf32> to vector<16x1xf32>
    %cst_267 = arith.constant 1.280000e+02 : f32
    %576 = vector.broadcast %cst_267 : f32 to vector<16x1xf32>
    %577 = arith.divf %575, %576 : vector<16x1xf32>
    %578 = vector.broadcast %577 : vector<16x1xf32> to vector<16x128xf32>
    %579 = arith.subf %573, %578 : vector<16x128xf32>
    %580 = arith.mulf %579, %579 : vector<16x128xf32>
    %cst_268 = arith.constant dense<0.000000e+00> : vector<16xf32>
    %581 = vector.multi_reduction <add>, %580, %cst_268 [1] : vector<16x128xf32> to vector<16xf32>
    %582 = vector.shape_cast %581 : vector<16xf32> to vector<16x1xf32>
    %cst_269 = arith.constant 1.280000e+02 : f32
    %583 = vector.broadcast %cst_269 : f32 to vector<16x1xf32>
    %584 = arith.divf %582, %583 : vector<16x1xf32>
    %cst_270 = arith.constant 9.99999974E-6 : f32
    %585 = vector.broadcast %cst_270 : f32 to vector<16x1xf32>
    %586 = arith.addf %584, %585 : vector<16x1xf32>
    %587 = math.rsqrt %586 : vector<16x1xf32>
    %588 = vector.broadcast %587 : vector<16x1xf32> to vector<16x128xf32>
    %589 = arith.mulf %579, %588 : vector<16x128xf32>
    %590 = vector.broadcast %272 : vector<1x128xf32> to vector<16x128xf32>
    %591 = arith.mulf %589, %590 : vector<16x128xf32>
    %592 = vector.broadcast %273 : vector<1x128xf32> to vector<16x128xf32>
    %593 = arith.addf %591, %592 : vector<16x128xf32>
    %594 = arith.truncf %593 : vector<16x128xf32> to vector<16x128xbf16>
    %cst_271 = arith.constant dense<0.000000e+00> : vector<16x512xf32>
    %595 = tpu.matmul %594, %276, %cst_271 {dimension_numbers = #tpu.dot_dimension_numbers<[1], [0], [0], [1], [0, 0, 1, 1], [], []>} : vector<16x128xbf16>, vector<128x512xbf16>, vector<16x512xf32> -> vector<16x512xf32>
    %596 = vector.broadcast %275 : vector<1x512xf32> to vector<16x512xf32>
    %597 = arith.addf %595, %596 : vector<16x512xf32>
    %cst_272 = arith.constant 5.000000e-01 : f32
    %598 = vector.broadcast %cst_272 : f32 to vector<16x512xf32>
    %599 = arith.mulf %598, %597 : vector<16x512xf32>
    %cst_273 = arith.constant 0.707106769 : f32
    %600 = vector.broadcast %cst_273 : f32 to vector<16x512xf32>
    %601 = arith.mulf %597, %600 : vector<16x512xf32>
    %602 = math.erf %601 : vector<16x512xf32>
    %cst_274 = arith.constant 1.000000e+00 : f32
    %603 = vector.broadcast %cst_274 : f32 to vector<16x512xf32>
    %604 = arith.addf %603, %602 : vector<16x512xf32>
    %605 = arith.mulf %599, %604 : vector<16x512xf32>
    %606 = arith.truncf %605 : vector<16x512xf32> to vector<16x512xbf16>
    %cst_275 = arith.constant dense<0.000000e+00> : vector<16x128xf32>
    %607 = tpu.matmul %606, %277, %cst_275 {dimension_numbers = #tpu.dot_dimension_numbers<[1], [0], [0], [1], [0, 0, 1, 1], [], []>} : vector<16x512xbf16>, vector<512x128xbf16>, vector<16x128xf32> -> vector<16x128xf32>
    %608 = vector.broadcast %274 : vector<1x128xf32> to vector<16x128xf32>
    %609 = arith.addf %607, %608 : vector<16x128xf32>
    %610 = arith.addf %609, %573 : vector<16x128xf32>
    %c3_276 = arith.constant 3 : index
    %c0_277 = arith.constant 0 : index
    %c0_278 = arith.constant 0 : index
    %611 = vector.load %arg11[%c3_276, %c0_277, %c0_278] : memref<4x16x128xf32, #tpu.memory_space<vmem>>, vector<1x16x128xf32>
    %612 = vector.shape_cast %611 : vector<1x16x128xf32> to vector<16x128xf32>
    %613 = vector.shape_cast %610 : vector<16x128xf32> to vector<1x16x128xf32>
    tpu.vector_store %arg11[%c3_276, %c0_277, %c0_278], %613 {strides = array<i32>} : memref<4x16x128xf32, #tpu.memory_space<vmem>>, vector<1x16x128xf32>,
    return
  }
  func.func @transform_0(%arg0: i32) -> (i32, i32, i32) {
    %c0_i32 = arith.constant 0 : i32
    %c0_i32_0 = arith.constant 0 : i32
    %c0_i32_1 = arith.constant 0 : i32
    return %arg0, %c0_i32, %c0_i32_0 : i32, i32, i32
  }
  func.func @transform_1(%arg0: i32) -> (i32, i32, i32) {
    %c0_i32 = arith.constant 0 : i32
    %c0_i32_0 = arith.constant 0 : i32
    %c0_i32_1 = arith.constant 0 : i32
    return %arg0, %c0_i32, %c0_i32_0 : i32, i32, i32
  }
  func.func @transform_2(%arg0: i32) -> (i32, i32) {
    %c0_i32 = arith.constant 0 : i32
    %c0_i32_0 = arith.constant 0 : i32
    %c0_i32_1 = arith.constant 0 : i32
    return %c0_i32, %c0_i32_0 : i32, i32
  }
  func.func @transform_3(%arg0: i32) -> (i32, i32) {
    %c0_i32 = arith.constant 0 : i32
    %c0_i32_0 = arith.constant 0 : i32
    %c0_i32_1 = arith.constant 0 : i32
    return %c0_i32, %c0_i32_0 : i32, i32
  }
  func.func @transform_4(%arg0: i32) -> (i32, i32) {
    %c0_i32 = arith.constant 0 : i32
    %c0_i32_0 = arith.constant 0 : i32
    %c0_i32_1 = arith.constant 0 : i32
    return %c0_i32, %c0_i32_0 : i32, i32
  }
  func.func @transform_5(%arg0: i32) -> (i32, i32) {
    %c0_i32 = arith.constant 0 : i32
    %c0_i32_0 = arith.constant 0 : i32
    %c0_i32_1 = arith.constant 0 : i32
    return %c0_i32, %c0_i32_0 : i32, i32
  }
  func.func @transform_6(%arg0: i32) -> (i32, i32) {
    %c0_i32 = arith.constant 0 : i32
    %c0_i32_0 = arith.constant 0 : i32
    %c0_i32_1 = arith.constant 0 : i32
    return %c0_i32, %c0_i32_0 : i32, i32
  }
  func.func @transform_7(%arg0: i32) -> (i32, i32) {
    %c0_i32 = arith.constant 0 : i32
    %c0_i32_0 = arith.constant 0 : i32
    %c0_i32_1 = arith.constant 0 : i32
    return %c0_i32, %c0_i32_0 : i32, i32
  }
  func.func @transform_8(%arg0: i32) -> (i32, i32) {
    %c0_i32 = arith.constant 0 : i32
    %c0_i32_0 = arith.constant 0 : i32
    %c0_i32_1 = arith.constant 0 : i32
    return %c0_i32, %c0_i32_0 : i32, i32
  }
  func.func @transform_9(%arg0: i32) -> (i32, i32, i32) {
    %c0_i32 = arith.constant 0 : i32
    %c0_i32_0 = arith.constant 0 : i32
    %c0_i32_1 = arith.constant 0 : i32
    return %arg0, %c0_i32, %c0_i32_0 : i32, i32, i32
  }
  func.func @transform_10(%arg0: i32) -> (i32, i32, i32) {
    %c0_i32 = arith.constant 0 : i32
    %c0_i32_0 = arith.constant 0 : i32
    %c0_i32_1 = arith.constant 0 : i32
    return %arg0, %c0_i32, %c0_i32_0 : i32, i32, i32
  }
}

module attributes {stable_mosaic.version = 11 : i64} {
  func.func @double_mixer_kernel(%arg0: i32, %arg1: memref<4x16x128xf32, #tpu.memory_space<vmem>>, %arg2: memref<4x16x128xf32, #tpu.memory_space<vmem>>, %arg3: memref<16x16xbf16, #tpu.memory_space<vmem>>, %arg4: memref<16x16xbf16, #tpu.memory_space<vmem>>, %arg5: memref<16x2xf32, #tpu.memory_space<vmem>>, %arg6: memref<8x128xf32, #tpu.memory_space<vmem>>, %arg7: memref<128x512xbf16, #tpu.memory_space<vmem>>, %arg8: memref<1x512xf32, #tpu.memory_space<vmem>>, %arg9: memref<512x128xbf16, #tpu.memory_space<vmem>>, %arg10: memref<4x16x128xf32, #tpu.memory_space<vmem>>, %arg11: memref<4x16x128xf32, #tpu.memory_space<vmem>>, %arg12: memref<16x512xbf16, #tpu.memory_space<vmem>>) attributes {dimension_semantics = [#tpu.dimension_semantics<parallel>], iteration_bounds = array<i64: 1>, scalar_prefetch = 0 : i64, scratch_operands = 1 : i64, tpu.core_type = #tpu.core_type<tc>, window_params = [{transform_indices = @transform_0, window_bounds = array<i64: 4, 16, 128>}, {transform_indices = @transform_1, window_bounds = array<i64: 4, 16, 128>}, {pipeline_mode = #tpu.pipeline_mode<synchronous>, transform_indices = @transform_2, window_bounds = array<i64: 16, 16>}, {pipeline_mode = #tpu.pipeline_mode<synchronous>, transform_indices = @transform_3, window_bounds = array<i64: 16, 16>}, {pipeline_mode = #tpu.pipeline_mode<synchronous>, transform_indices = @transform_4, window_bounds = array<i64: 16, 2>}, {pipeline_mode = #tpu.pipeline_mode<synchronous>, transform_indices = @transform_5, window_bounds = array<i64: 8, 128>}, {pipeline_mode = #tpu.pipeline_mode<synchronous>, transform_indices = @transform_6, window_bounds = array<i64: 128, 512>}, {pipeline_mode = #tpu.pipeline_mode<synchronous>, transform_indices = @transform_7, window_bounds = array<i64: 1, 512>}, {pipeline_mode = #tpu.pipeline_mode<synchronous>, transform_indices = @transform_8, window_bounds = array<i64: 512, 128>}, {transform_indices = @transform_9, window_bounds = array<i64: 4, 16, 128>}, {transform_indices = @transform_10, window_bounds = array<i64: 4, 16, 128>}]} {
    %c0 = arith.constant 0 : index
    %c0_0 = arith.constant 0 : index
    %0 = vector.load %arg5[%c0, %c0_0] : memref<16x2xf32, #tpu.memory_space<vmem>>, vector<16x1xf32>
    %1 = vector.shape_cast %0 : vector<16x1xf32> to vector<16x1xf32>
    %2 = vector.broadcast %1 : vector<16x1xf32> to vector<16x128xf32>
    %c0_1 = arith.constant 0 : index
    %c1 = arith.constant 1 : index
    %3 = vector.load %arg5[%c0_1, %c1] : memref<16x2xf32, #tpu.memory_space<vmem>>, vector<16x1xf32>
    %4 = vector.shape_cast %3 : vector<16x1xf32> to vector<16x1xf32>
    %5 = vector.broadcast %4 : vector<16x1xf32> to vector<16x128xf32>
    %c0_2 = arith.constant 0 : index
    %c0_3 = arith.constant 0 : index
    %6 = vector.load %arg6[%c0_2, %c0_3] : memref<8x128xf32, #tpu.memory_space<vmem>>, vector<1x128xf32>
    %c1_4 = arith.constant 1 : index
    %c0_5 = arith.constant 0 : index
    %7 = vector.load %arg6[%c1_4, %c0_5] : memref<8x128xf32, #tpu.memory_space<vmem>>, vector<1x128xf32>
    %c0_6 = arith.constant 0 : index
    %c0_7 = arith.constant 0 : index
    %c0_8 = arith.constant 0 : index
    %8 = vector.load %arg1[%c0_6, %c0_7, %c0_8] : memref<4x16x128xf32, #tpu.memory_space<vmem>>, vector<1x16x128xf32>
    %9 = vector.shape_cast %8 : vector<1x16x128xf32> to vector<16x128xf32>
    %cst = arith.constant dense<0.000000e+00> : vector<16xf32>
    %10 = vector.multi_reduction <add>, %9, %cst [1] : vector<16x128xf32> to vector<16xf32>
    %11 = vector.shape_cast %10 : vector<16xf32> to vector<16x1xf32>
    %cst_9 = arith.constant 1.280000e+02 : f32
    %12 = vector.broadcast %cst_9 : f32 to vector<16x1xf32>
    %13 = arith.divf %11, %12 : vector<16x1xf32>
    %14 = vector.broadcast %13 : vector<16x1xf32> to vector<16x128xf32>
    %15 = arith.subf %9, %14 : vector<16x128xf32>
    %16 = arith.mulf %15, %15 : vector<16x128xf32>
    %cst_10 = arith.constant dense<0.000000e+00> : vector<16xf32>
    %17 = vector.multi_reduction <add>, %16, %cst_10 [1] : vector<16x128xf32> to vector<16xf32>
    %18 = vector.shape_cast %17 : vector<16xf32> to vector<16x1xf32>
    %cst_11 = arith.constant 1.280000e+02 : f32
    %19 = vector.broadcast %cst_11 : f32 to vector<16x1xf32>
    %20 = arith.divf %18, %19 : vector<16x1xf32>
    %cst_12 = arith.constant 9.99999974E-6 : f32
    %21 = vector.broadcast %cst_12 : f32 to vector<16x1xf32>
    %22 = arith.addf %20, %21 : vector<16x1xf32>
    %23 = math.rsqrt %22 : vector<16x1xf32>
    %24 = vector.broadcast %23 : vector<16x1xf32> to vector<16x128xf32>
    %25 = arith.mulf %15, %24 : vector<16x128xf32>
    %26 = vector.broadcast %6 : vector<1x128xf32> to vector<16x128xf32>
    %27 = arith.mulf %25, %26 : vector<16x128xf32>
    %28 = vector.broadcast %7 : vector<1x128xf32> to vector<16x128xf32>
    %29 = arith.addf %27, %28 : vector<16x128xf32>
    %30 = arith.truncf %29 : vector<16x128xf32> to vector<16x128xbf16>
    %c0_13 = arith.constant 0 : index
    %c0_14 = arith.constant 0 : index
    %31 = vector.load %arg12[%c0_13, %c0_14] : memref<16x512xbf16, #tpu.memory_space<vmem>>, vector<16x128xbf16>
    tpu.vector_store %arg12[%c0_13, %c0_14], %30 {strides = array<i32>} : memref<16x512xbf16, #tpu.memory_space<vmem>>, vector<16x128xbf16>,
    %c1_15 = arith.constant 1 : index
    %c0_16 = arith.constant 0 : index
    %c0_17 = arith.constant 0 : index
    %32 = vector.load %arg1[%c1_15, %c0_16, %c0_17] : memref<4x16x128xf32, #tpu.memory_space<vmem>>, vector<1x16x128xf32>
    %33 = vector.shape_cast %32 : vector<1x16x128xf32> to vector<16x128xf32>
    %cst_18 = arith.constant dense<0.000000e+00> : vector<16xf32>
    %34 = vector.multi_reduction <add>, %33, %cst_18 [1] : vector<16x128xf32> to vector<16xf32>
    %35 = vector.shape_cast %34 : vector<16xf32> to vector<16x1xf32>
    %cst_19 = arith.constant 1.280000e+02 : f32
    %36 = vector.broadcast %cst_19 : f32 to vector<16x1xf32>
    %37 = arith.divf %35, %36 : vector<16x1xf32>
    %38 = vector.broadcast %37 : vector<16x1xf32> to vector<16x128xf32>
    %39 = arith.subf %33, %38 : vector<16x128xf32>
    %40 = arith.mulf %39, %39 : vector<16x128xf32>
    %cst_20 = arith.constant dense<0.000000e+00> : vector<16xf32>
    %41 = vector.multi_reduction <add>, %40, %cst_20 [1] : vector<16x128xf32> to vector<16xf32>
    %42 = vector.shape_cast %41 : vector<16xf32> to vector<16x1xf32>
    %cst_21 = arith.constant 1.280000e+02 : f32
    %43 = vector.broadcast %cst_21 : f32 to vector<16x1xf32>
    %44 = arith.divf %42, %43 : vector<16x1xf32>
    %cst_22 = arith.constant 9.99999974E-6 : f32
    %45 = vector.broadcast %cst_22 : f32 to vector<16x1xf32>
    %46 = arith.addf %44, %45 : vector<16x1xf32>
    %47 = math.rsqrt %46 : vector<16x1xf32>
    %48 = vector.broadcast %47 : vector<16x1xf32> to vector<16x128xf32>
    %49 = arith.mulf %39, %48 : vector<16x128xf32>
    %50 = vector.broadcast %6 : vector<1x128xf32> to vector<16x128xf32>
    %51 = arith.mulf %49, %50 : vector<16x128xf32>
    %52 = vector.broadcast %7 : vector<1x128xf32> to vector<16x128xf32>
    %53 = arith.addf %51, %52 : vector<16x128xf32>
    %54 = arith.truncf %53 : vector<16x128xf32> to vector<16x128xbf16>
    %c0_23 = arith.constant 0 : index
    %c128 = arith.constant 128 : index
    %55 = vector.load %arg12[%c0_23, %c128] : memref<16x512xbf16, #tpu.memory_space<vmem>>, vector<16x128xbf16>
    tpu.vector_store %arg12[%c0_23, %c128], %54 {strides = array<i32>} : memref<16x512xbf16, #tpu.memory_space<vmem>>, vector<16x128xbf16>,
    %c2 = arith.constant 2 : index
    %c0_24 = arith.constant 0 : index
    %c0_25 = arith.constant 0 : index
    %56 = vector.load %arg1[%c2, %c0_24, %c0_25] : memref<4x16x128xf32, #tpu.memory_space<vmem>>, vector<1x16x128xf32>
    %57 = vector.shape_cast %56 : vector<1x16x128xf32> to vector<16x128xf32>
    %cst_26 = arith.constant dense<0.000000e+00> : vector<16xf32>
    %58 = vector.multi_reduction <add>, %57, %cst_26 [1] : vector<16x128xf32> to vector<16xf32>
    %59 = vector.shape_cast %58 : vector<16xf32> to vector<16x1xf32>
    %cst_27 = arith.constant 1.280000e+02 : f32
    %60 = vector.broadcast %cst_27 : f32 to vector<16x1xf32>
    %61 = arith.divf %59, %60 : vector<16x1xf32>
    %62 = vector.broadcast %61 : vector<16x1xf32> to vector<16x128xf32>
    %63 = arith.subf %57, %62 : vector<16x128xf32>
    %64 = arith.mulf %63, %63 : vector<16x128xf32>
    %cst_28 = arith.constant dense<0.000000e+00> : vector<16xf32>
    %65 = vector.multi_reduction <add>, %64, %cst_28 [1] : vector<16x128xf32> to vector<16xf32>
    %66 = vector.shape_cast %65 : vector<16xf32> to vector<16x1xf32>
    %cst_29 = arith.constant 1.280000e+02 : f32
    %67 = vector.broadcast %cst_29 : f32 to vector<16x1xf32>
    %68 = arith.divf %66, %67 : vector<16x1xf32>
    %cst_30 = arith.constant 9.99999974E-6 : f32
    %69 = vector.broadcast %cst_30 : f32 to vector<16x1xf32>
    %70 = arith.addf %68, %69 : vector<16x1xf32>
    %71 = math.rsqrt %70 : vector<16x1xf32>
    %72 = vector.broadcast %71 : vector<16x1xf32> to vector<16x128xf32>
    %73 = arith.mulf %63, %72 : vector<16x128xf32>
    %74 = vector.broadcast %6 : vector<1x128xf32> to vector<16x128xf32>
    %75 = arith.mulf %73, %74 : vector<16x128xf32>
    %76 = vector.broadcast %7 : vector<1x128xf32> to vector<16x128xf32>
    %77 = arith.addf %75, %76 : vector<16x128xf32>
    %78 = arith.truncf %77 : vector<16x128xf32> to vector<16x128xbf16>
    %c0_31 = arith.constant 0 : index
    %c256 = arith.constant 256 : index
    %79 = vector.load %arg12[%c0_31, %c256] : memref<16x512xbf16, #tpu.memory_space<vmem>>, vector<16x128xbf16>
    tpu.vector_store %arg12[%c0_31, %c256], %78 {strides = array<i32>} : memref<16x512xbf16, #tpu.memory_space<vmem>>, vector<16x128xbf16>,
    %c3 = arith.constant 3 : index
    %c0_32 = arith.constant 0 : index
    %c0_33 = arith.constant 0 : index
    %80 = vector.load %arg1[%c3, %c0_32, %c0_33] : memref<4x16x128xf32, #tpu.memory_space<vmem>>, vector<1x16x128xf32>
    %81 = vector.shape_cast %80 : vector<1x16x128xf32> to vector<16x128xf32>
    %cst_34 = arith.constant dense<0.000000e+00> : vector<16xf32>
    %82 = vector.multi_reduction <add>, %81, %cst_34 [1] : vector<16x128xf32> to vector<16xf32>
    %83 = vector.shape_cast %82 : vector<16xf32> to vector<16x1xf32>
    %cst_35 = arith.constant 1.280000e+02 : f32
    %84 = vector.broadcast %cst_35 : f32 to vector<16x1xf32>
    %85 = arith.divf %83, %84 : vector<16x1xf32>
    %86 = vector.broadcast %85 : vector<16x1xf32> to vector<16x128xf32>
    %87 = arith.subf %81, %86 : vector<16x128xf32>
    %88 = arith.mulf %87, %87 : vector<16x128xf32>
    %cst_36 = arith.constant dense<0.000000e+00> : vector<16xf32>
    %89 = vector.multi_reduction <add>, %88, %cst_36 [1] : vector<16x128xf32> to vector<16xf32>
    %90 = vector.shape_cast %89 : vector<16xf32> to vector<16x1xf32>
    %cst_37 = arith.constant 1.280000e+02 : f32
    %91 = vector.broadcast %cst_37 : f32 to vector<16x1xf32>
    %92 = arith.divf %90, %91 : vector<16x1xf32>
    %cst_38 = arith.constant 9.99999974E-6 : f32
    %93 = vector.broadcast %cst_38 : f32 to vector<16x1xf32>
    %94 = arith.addf %92, %93 : vector<16x1xf32>
    %95 = math.rsqrt %94 : vector<16x1xf32>
    %96 = vector.broadcast %95 : vector<16x1xf32> to vector<16x128xf32>
    %97 = arith.mulf %87, %96 : vector<16x128xf32>
    %98 = vector.broadcast %6 : vector<1x128xf32> to vector<16x128xf32>
    %99 = arith.mulf %97, %98 : vector<16x128xf32>
    %100 = vector.broadcast %7 : vector<1x128xf32> to vector<16x128xf32>
    %101 = arith.addf %99, %100 : vector<16x128xf32>
    %102 = arith.truncf %101 : vector<16x128xf32> to vector<16x128xbf16>
    %c0_39 = arith.constant 0 : index
    %c384 = arith.constant 384 : index
    %103 = vector.load %arg12[%c0_39, %c384] : memref<16x512xbf16, #tpu.memory_space<vmem>>, vector<16x128xbf16>
    tpu.vector_store %arg12[%c0_39, %c384], %102 {strides = array<i32>} : memref<16x512xbf16, #tpu.memory_space<vmem>>, vector<16x128xbf16>,
    %c0_40 = arith.constant 0 : index
    %c0_41 = arith.constant 0 : index
    %104 = vector.load %arg3[%c0_40, %c0_41] : memref<16x16xbf16, #tpu.memory_space<vmem>>, vector<16x16xbf16>
    %c0_42 = arith.constant 0 : index
    %c0_43 = arith.constant 0 : index
    %105 = vector.load %arg12[%c0_42, %c0_43] : memref<16x512xbf16, #tpu.memory_space<vmem>>, vector<16x512xbf16>
    %cst_44 = arith.constant dense<0.000000e+00> : vector<16x512xf32>
    %106 = tpu.matmul %104, %105, %cst_44 {dimension_numbers = #tpu.dot_dimension_numbers<[1], [0], [0], [1], [0, 0, 1, 1], [], []>} : vector<16x16xbf16>, vector<16x512xbf16>, vector<16x512xf32> -> vector<16x512xf32>
    %107 = vector.extract_strided_slice %106 {offsets = [0, 0], sizes = [16, 128], strides = [1, 1]} : vector<16x512xf32> to vector<16x128xf32>
    %108 = arith.addf %107, %2 : vector<16x128xf32>
    %c0_45 = arith.constant 0 : index
    %c0_46 = arith.constant 0 : index
    %c0_47 = arith.constant 0 : index
    %109 = vector.load %arg1[%c0_45, %c0_46, %c0_47] : memref<4x16x128xf32, #tpu.memory_space<vmem>>, vector<1x16x128xf32>
    %110 = vector.shape_cast %109 : vector<1x16x128xf32> to vector<16x128xf32>
    %111 = arith.addf %108, %110 : vector<16x128xf32>
    %c0_48 = arith.constant 0 : index
    %c0_49 = arith.constant 0 : index
    %c0_50 = arith.constant 0 : index
    %112 = vector.load %arg10[%c0_48, %c0_49, %c0_50] : memref<4x16x128xf32, #tpu.memory_space<vmem>>, vector<1x16x128xf32>
    %113 = vector.shape_cast %112 : vector<1x16x128xf32> to vector<16x128xf32>
    %114 = vector.shape_cast %111 : vector<16x128xf32> to vector<1x16x128xf32>
    tpu.vector_store %arg10[%c0_48, %c0_49, %c0_50], %114 {strides = array<i32>} : memref<4x16x128xf32, #tpu.memory_space<vmem>>, vector<1x16x128xf32>,
    %115 = vector.extract_strided_slice %106 {offsets = [0, 128], sizes = [16, 128], strides = [1, 1]} : vector<16x512xf32> to vector<16x128xf32>
    %116 = arith.addf %115, %2 : vector<16x128xf32>
    %c1_51 = arith.constant 1 : index
    %c0_52 = arith.constant 0 : index
    %c0_53 = arith.constant 0 : index
    %117 = vector.load %arg1[%c1_51, %c0_52, %c0_53] : memref<4x16x128xf32, #tpu.memory_space<vmem>>, vector<1x16x128xf32>
    %118 = vector.shape_cast %117 : vector<1x16x128xf32> to vector<16x128xf32>
    %119 = arith.addf %116, %118 : vector<16x128xf32>
    %c1_54 = arith.constant 1 : index
    %c0_55 = arith.constant 0 : index
    %c0_56 = arith.constant 0 : index
    %120 = vector.load %arg10[%c1_54, %c0_55, %c0_56] : memref<4x16x128xf32, #tpu.memory_space<vmem>>, vector<1x16x128xf32>
    %121 = vector.shape_cast %120 : vector<1x16x128xf32> to vector<16x128xf32>
    %122 = vector.shape_cast %119 : vector<16x128xf32> to vector<1x16x128xf32>
    tpu.vector_store %arg10[%c1_54, %c0_55, %c0_56], %122 {strides = array<i32>} : memref<4x16x128xf32, #tpu.memory_space<vmem>>, vector<1x16x128xf32>,
    %123 = vector.extract_strided_slice %106 {offsets = [0, 256], sizes = [16, 128], strides = [1, 1]} : vector<16x512xf32> to vector<16x128xf32>
    %124 = arith.addf %123, %2 : vector<16x128xf32>
    %c2_57 = arith.constant 2 : index
    %c0_58 = arith.constant 0 : index
    %c0_59 = arith.constant 0 : index
    %125 = vector.load %arg1[%c2_57, %c0_58, %c0_59] : memref<4x16x128xf32, #tpu.memory_space<vmem>>, vector<1x16x128xf32>
    %126 = vector.shape_cast %125 : vector<1x16x128xf32> to vector<16x128xf32>
    %127 = arith.addf %124, %126 : vector<16x128xf32>
    %c2_60 = arith.constant 2 : index
    %c0_61 = arith.constant 0 : index
    %c0_62 = arith.constant 0 : index
    %128 = vector.load %arg10[%c2_60, %c0_61, %c0_62] : memref<4x16x128xf32, #tpu.memory_space<vmem>>, vector<1x16x128xf32>
    %129 = vector.shape_cast %128 : vector<1x16x128xf32> to vector<16x128xf32>
    %130 = vector.shape_cast %127 : vector<16x128xf32> to vector<1x16x128xf32>
    tpu.vector_store %arg10[%c2_60, %c0_61, %c0_62], %130 {strides = array<i32>} : memref<4x16x128xf32, #tpu.memory_space<vmem>>, vector<1x16x128xf32>,
    %131 = vector.extract_strided_slice %106 {offsets = [0, 384], sizes = [16, 128], strides = [1, 1]} : vector<16x512xf32> to vector<16x128xf32>
    %132 = arith.addf %131, %2 : vector<16x128xf32>
    %c3_63 = arith.constant 3 : index
    %c0_64 = arith.constant 0 : index
    %c0_65 = arith.constant 0 : index
    %133 = vector.load %arg1[%c3_63, %c0_64, %c0_65] : memref<4x16x128xf32, #tpu.memory_space<vmem>>, vector<1x16x128xf32>
    %134 = vector.shape_cast %133 : vector<1x16x128xf32> to vector<16x128xf32>
    %135 = arith.addf %132, %134 : vector<16x128xf32>
    %c3_66 = arith.constant 3 : index
    %c0_67 = arith.constant 0 : index
    %c0_68 = arith.constant 0 : index
    %136 = vector.load %arg10[%c3_66, %c0_67, %c0_68] : memref<4x16x128xf32, #tpu.memory_space<vmem>>, vector<1x16x128xf32>
    %137 = vector.shape_cast %136 : vector<1x16x128xf32> to vector<16x128xf32>
    %138 = vector.shape_cast %135 : vector<16x128xf32> to vector<1x16x128xf32>
    tpu.vector_store %arg10[%c3_66, %c0_67, %c0_68], %138 {strides = array<i32>} : memref<4x16x128xf32, #tpu.memory_space<vmem>>, vector<1x16x128xf32>,
    %c2_69 = arith.constant 2 : index
    %c0_70 = arith.constant 0 : index
    %139 = vector.load %arg6[%c2_69, %c0_70] : memref<8x128xf32, #tpu.memory_space<vmem>>, vector<1x128xf32>
    %c3_71 = arith.constant 3 : index
    %c0_72 = arith.constant 0 : index
    %140 = vector.load %arg6[%c3_71, %c0_72] : memref<8x128xf32, #tpu.memory_space<vmem>>, vector<1x128xf32>
    %c0_73 = arith.constant 0 : index
    %c0_74 = arith.constant 0 : index
    %c0_75 = arith.constant 0 : index
    %141 = vector.load %arg2[%c0_73, %c0_74, %c0_75] : memref<4x16x128xf32, #tpu.memory_space<vmem>>, vector<1x16x128xf32>
    %142 = vector.shape_cast %141 : vector<1x16x128xf32> to vector<16x128xf32>
    %cst_76 = arith.constant dense<0.000000e+00> : vector<16xf32>
    %143 = vector.multi_reduction <add>, %142, %cst_76 [1] : vector<16x128xf32> to vector<16xf32>
    %144 = vector.shape_cast %143 : vector<16xf32> to vector<16x1xf32>
    %cst_77 = arith.constant 1.280000e+02 : f32
    %145 = vector.broadcast %cst_77 : f32 to vector<16x1xf32>
    %146 = arith.divf %144, %145 : vector<16x1xf32>
    %147 = vector.broadcast %146 : vector<16x1xf32> to vector<16x128xf32>
    %148 = arith.subf %142, %147 : vector<16x128xf32>
    %149 = arith.mulf %148, %148 : vector<16x128xf32>
    %cst_78 = arith.constant dense<0.000000e+00> : vector<16xf32>
    %150 = vector.multi_reduction <add>, %149, %cst_78 [1] : vector<16x128xf32> to vector<16xf32>
    %151 = vector.shape_cast %150 : vector<16xf32> to vector<16x1xf32>
    %cst_79 = arith.constant 1.280000e+02 : f32
    %152 = vector.broadcast %cst_79 : f32 to vector<16x1xf32>
    %153 = arith.divf %151, %152 : vector<16x1xf32>
    %cst_80 = arith.constant 9.99999974E-6 : f32
    %154 = vector.broadcast %cst_80 : f32 to vector<16x1xf32>
    %155 = arith.addf %153, %154 : vector<16x1xf32>
    %156 = math.rsqrt %155 : vector<16x1xf32>
    %157 = vector.broadcast %156 : vector<16x1xf32> to vector<16x128xf32>
    %158 = arith.mulf %148, %157 : vector<16x128xf32>
    %159 = vector.broadcast %139 : vector<1x128xf32> to vector<16x128xf32>
    %160 = arith.mulf %158, %159 : vector<16x128xf32>
    %161 = vector.broadcast %140 : vector<1x128xf32> to vector<16x128xf32>
    %162 = arith.addf %160, %161 : vector<16x128xf32>
    %163 = arith.truncf %162 : vector<16x128xf32> to vector<16x128xbf16>
    %c0_81 = arith.constant 0 : index
    %c0_82 = arith.constant 0 : index
    %164 = vector.load %arg12[%c0_81, %c0_82] : memref<16x512xbf16, #tpu.memory_space<vmem>>, vector<16x128xbf16>
    tpu.vector_store %arg12[%c0_81, %c0_82], %163 {strides = array<i32>} : memref<16x512xbf16, #tpu.memory_space<vmem>>, vector<16x128xbf16>,
    %c1_83 = arith.constant 1 : index
    %c0_84 = arith.constant 0 : index
    %c0_85 = arith.constant 0 : index
    %165 = vector.load %arg2[%c1_83, %c0_84, %c0_85] : memref<4x16x128xf32, #tpu.memory_space<vmem>>, vector<1x16x128xf32>
    %166 = vector.shape_cast %165 : vector<1x16x128xf32> to vector<16x128xf32>
    %cst_86 = arith.constant dense<0.000000e+00> : vector<16xf32>
    %167 = vector.multi_reduction <add>, %166, %cst_86 [1] : vector<16x128xf32> to vector<16xf32>
    %168 = vector.shape_cast %167 : vector<16xf32> to vector<16x1xf32>
    %cst_87 = arith.constant 1.280000e+02 : f32
    %169 = vector.broadcast %cst_87 : f32 to vector<16x1xf32>
    %170 = arith.divf %168, %169 : vector<16x1xf32>
    %171 = vector.broadcast %170 : vector<16x1xf32> to vector<16x128xf32>
    %172 = arith.subf %166, %171 : vector<16x128xf32>
    %173 = arith.mulf %172, %172 : vector<16x128xf32>
    %cst_88 = arith.constant dense<0.000000e+00> : vector<16xf32>
    %174 = vector.multi_reduction <add>, %173, %cst_88 [1] : vector<16x128xf32> to vector<16xf32>
    %175 = vector.shape_cast %174 : vector<16xf32> to vector<16x1xf32>
    %cst_89 = arith.constant 1.280000e+02 : f32
    %176 = vector.broadcast %cst_89 : f32 to vector<16x1xf32>
    %177 = arith.divf %175, %176 : vector<16x1xf32>
    %cst_90 = arith.constant 9.99999974E-6 : f32
    %178 = vector.broadcast %cst_90 : f32 to vector<16x1xf32>
    %179 = arith.addf %177, %178 : vector<16x1xf32>
    %180 = math.rsqrt %179 : vector<16x1xf32>
    %181 = vector.broadcast %180 : vector<16x1xf32> to vector<16x128xf32>
    %182 = arith.mulf %172, %181 : vector<16x128xf32>
    %183 = vector.broadcast %139 : vector<1x128xf32> to vector<16x128xf32>
    %184 = arith.mulf %182, %183 : vector<16x128xf32>
    %185 = vector.broadcast %140 : vector<1x128xf32> to vector<16x128xf32>
    %186 = arith.addf %184, %185 : vector<16x128xf32>
    %187 = arith.truncf %186 : vector<16x128xf32> to vector<16x128xbf16>
    %c0_91 = arith.constant 0 : index
    %c128_92 = arith.constant 128 : index
    %188 = vector.load %arg12[%c0_91, %c128_92] : memref<16x512xbf16, #tpu.memory_space<vmem>>, vector<16x128xbf16>
    tpu.vector_store %arg12[%c0_91, %c128_92], %187 {strides = array<i32>} : memref<16x512xbf16, #tpu.memory_space<vmem>>, vector<16x128xbf16>,
    %c2_93 = arith.constant 2 : index
    %c0_94 = arith.constant 0 : index
    %c0_95 = arith.constant 0 : index
    %189 = vector.load %arg2[%c2_93, %c0_94, %c0_95] : memref<4x16x128xf32, #tpu.memory_space<vmem>>, vector<1x16x128xf32>
    %190 = vector.shape_cast %189 : vector<1x16x128xf32> to vector<16x128xf32>
    %cst_96 = arith.constant dense<0.000000e+00> : vector<16xf32>
    %191 = vector.multi_reduction <add>, %190, %cst_96 [1] : vector<16x128xf32> to vector<16xf32>
    %192 = vector.shape_cast %191 : vector<16xf32> to vector<16x1xf32>
    %cst_97 = arith.constant 1.280000e+02 : f32
    %193 = vector.broadcast %cst_97 : f32 to vector<16x1xf32>
    %194 = arith.divf %192, %193 : vector<16x1xf32>
    %195 = vector.broadcast %194 : vector<16x1xf32> to vector<16x128xf32>
    %196 = arith.subf %190, %195 : vector<16x128xf32>
    %197 = arith.mulf %196, %196 : vector<16x128xf32>
    %cst_98 = arith.constant dense<0.000000e+00> : vector<16xf32>
    %198 = vector.multi_reduction <add>, %197, %cst_98 [1] : vector<16x128xf32> to vector<16xf32>
    %199 = vector.shape_cast %198 : vector<16xf32> to vector<16x1xf32>
    %cst_99 = arith.constant 1.280000e+02 : f32
    %200 = vector.broadcast %cst_99 : f32 to vector<16x1xf32>
    %201 = arith.divf %199, %200 : vector<16x1xf32>
    %cst_100 = arith.constant 9.99999974E-6 : f32
    %202 = vector.broadcast %cst_100 : f32 to vector<16x1xf32>
    %203 = arith.addf %201, %202 : vector<16x1xf32>
    %204 = math.rsqrt %203 : vector<16x1xf32>
    %205 = vector.broadcast %204 : vector<16x1xf32> to vector<16x128xf32>
    %206 = arith.mulf %196, %205 : vector<16x128xf32>
    %207 = vector.broadcast %139 : vector<1x128xf32> to vector<16x128xf32>
    %208 = arith.mulf %206, %207 : vector<16x128xf32>
    %209 = vector.broadcast %140 : vector<1x128xf32> to vector<16x128xf32>
    %210 = arith.addf %208, %209 : vector<16x128xf32>
    %211 = arith.truncf %210 : vector<16x128xf32> to vector<16x128xbf16>
    %c0_101 = arith.constant 0 : index
    %c256_102 = arith.constant 256 : index
    %212 = vector.load %arg12[%c0_101, %c256_102] : memref<16x512xbf16, #tpu.memory_space<vmem>>, vector<16x128xbf16>
    tpu.vector_store %arg12[%c0_101, %c256_102], %211 {strides = array<i32>} : memref<16x512xbf16, #tpu.memory_space<vmem>>, vector<16x128xbf16>,
    %c3_103 = arith.constant 3 : index
    %c0_104 = arith.constant 0 : index
    %c0_105 = arith.constant 0 : index
    %213 = vector.load %arg2[%c3_103, %c0_104, %c0_105] : memref<4x16x128xf32, #tpu.memory_space<vmem>>, vector<1x16x128xf32>
    %214 = vector.shape_cast %213 : vector<1x16x128xf32> to vector<16x128xf32>
    %cst_106 = arith.constant dense<0.000000e+00> : vector<16xf32>
    %215 = vector.multi_reduction <add>, %214, %cst_106 [1] : vector<16x128xf32> to vector<16xf32>
    %216 = vector.shape_cast %215 : vector<16xf32> to vector<16x1xf32>
    %cst_107 = arith.constant 1.280000e+02 : f32
    %217 = vector.broadcast %cst_107 : f32 to vector<16x1xf32>
    %218 = arith.divf %216, %217 : vector<16x1xf32>
    %219 = vector.broadcast %218 : vector<16x1xf32> to vector<16x128xf32>
    %220 = arith.subf %214, %219 : vector<16x128xf32>
    %221 = arith.mulf %220, %220 : vector<16x128xf32>
    %cst_108 = arith.constant dense<0.000000e+00> : vector<16xf32>
    %222 = vector.multi_reduction <add>, %221, %cst_108 [1] : vector<16x128xf32> to vector<16xf32>
    %223 = vector.shape_cast %222 : vector<16xf32> to vector<16x1xf32>
    %cst_109 = arith.constant 1.280000e+02 : f32
    %224 = vector.broadcast %cst_109 : f32 to vector<16x1xf32>
    %225 = arith.divf %223, %224 : vector<16x1xf32>
    %cst_110 = arith.constant 9.99999974E-6 : f32
    %226 = vector.broadcast %cst_110 : f32 to vector<16x1xf32>
    %227 = arith.addf %225, %226 : vector<16x1xf32>
    %228 = math.rsqrt %227 : vector<16x1xf32>
    %229 = vector.broadcast %228 : vector<16x1xf32> to vector<16x128xf32>
    %230 = arith.mulf %220, %229 : vector<16x128xf32>
    %231 = vector.broadcast %139 : vector<1x128xf32> to vector<16x128xf32>
    %232 = arith.mulf %230, %231 : vector<16x128xf32>
    %233 = vector.broadcast %140 : vector<1x128xf32> to vector<16x128xf32>
    %234 = arith.addf %232, %233 : vector<16x128xf32>
    %235 = arith.truncf %234 : vector<16x128xf32> to vector<16x128xbf16>
    %c0_111 = arith.constant 0 : index
    %c384_112 = arith.constant 384 : index
    %236 = vector.load %arg12[%c0_111, %c384_112] : memref<16x512xbf16, #tpu.memory_space<vmem>>, vector<16x128xbf16>
    tpu.vector_store %arg12[%c0_111, %c384_112], %235 {strides = array<i32>} : memref<16x512xbf16, #tpu.memory_space<vmem>>, vector<16x128xbf16>,
    %c0_113 = arith.constant 0 : index
    %c0_114 = arith.constant 0 : index
    %237 = vector.load %arg4[%c0_113, %c0_114] : memref<16x16xbf16, #tpu.memory_space<vmem>>, vector<16x16xbf16>
    %c0_115 = arith.constant 0 : index
    %c0_116 = arith.constant 0 : index
    %238 = vector.load %arg12[%c0_115, %c0_116] : memref<16x512xbf16, #tpu.memory_space<vmem>>, vector<16x512xbf16>
    %cst_117 = arith.constant dense<0.000000e+00> : vector<16x512xf32>
    %239 = tpu.matmul %237, %238, %cst_117 {dimension_numbers = #tpu.dot_dimension_numbers<[1], [0], [0], [1], [0, 0, 1, 1], [], []>} : vector<16x16xbf16>, vector<16x512xbf16>, vector<16x512xf32> -> vector<16x512xf32>
    %240 = vector.extract_strided_slice %239 {offsets = [0, 0], sizes = [16, 128], strides = [1, 1]} : vector<16x512xf32> to vector<16x128xf32>
    %241 = arith.addf %240, %5 : vector<16x128xf32>
    %c0_118 = arith.constant 0 : index
    %c0_119 = arith.constant 0 : index
    %c0_120 = arith.constant 0 : index
    %242 = vector.load %arg2[%c0_118, %c0_119, %c0_120] : memref<4x16x128xf32, #tpu.memory_space<vmem>>, vector<1x16x128xf32>
    %243 = vector.shape_cast %242 : vector<1x16x128xf32> to vector<16x128xf32>
    %244 = arith.addf %241, %243 : vector<16x128xf32>
    %c0_121 = arith.constant 0 : index
    %c0_122 = arith.constant 0 : index
    %c0_123 = arith.constant 0 : index
    %245 = vector.load %arg11[%c0_121, %c0_122, %c0_123] : memref<4x16x128xf32, #tpu.memory_space<vmem>>, vector<1x16x128xf32>
    %246 = vector.shape_cast %245 : vector<1x16x128xf32> to vector<16x128xf32>
    %247 = vector.shape_cast %244 : vector<16x128xf32> to vector<1x16x128xf32>
    tpu.vector_store %arg11[%c0_121, %c0_122, %c0_123], %247 {strides = array<i32>} : memref<4x16x128xf32, #tpu.memory_space<vmem>>, vector<1x16x128xf32>,
    %248 = vector.extract_strided_slice %239 {offsets = [0, 128], sizes = [16, 128], strides = [1, 1]} : vector<16x512xf32> to vector<16x128xf32>
    %249 = arith.addf %248, %5 : vector<16x128xf32>
    %c1_124 = arith.constant 1 : index
    %c0_125 = arith.constant 0 : index
    %c0_126 = arith.constant 0 : index
    %250 = vector.load %arg2[%c1_124, %c0_125, %c0_126] : memref<4x16x128xf32, #tpu.memory_space<vmem>>, vector<1x16x128xf32>
    %251 = vector.shape_cast %250 : vector<1x16x128xf32> to vector<16x128xf32>
    %252 = arith.addf %249, %251 : vector<16x128xf32>
    %c1_127 = arith.constant 1 : index
    %c0_128 = arith.constant 0 : index
    %c0_129 = arith.constant 0 : index
    %253 = vector.load %arg11[%c1_127, %c0_128, %c0_129] : memref<4x16x128xf32, #tpu.memory_space<vmem>>, vector<1x16x128xf32>
    %254 = vector.shape_cast %253 : vector<1x16x128xf32> to vector<16x128xf32>
    %255 = vector.shape_cast %252 : vector<16x128xf32> to vector<1x16x128xf32>
    tpu.vector_store %arg11[%c1_127, %c0_128, %c0_129], %255 {strides = array<i32>} : memref<4x16x128xf32, #tpu.memory_space<vmem>>, vector<1x16x128xf32>,
    %256 = vector.extract_strided_slice %239 {offsets = [0, 256], sizes = [16, 128], strides = [1, 1]} : vector<16x512xf32> to vector<16x128xf32>
    %257 = arith.addf %256, %5 : vector<16x128xf32>
    %c2_130 = arith.constant 2 : index
    %c0_131 = arith.constant 0 : index
    %c0_132 = arith.constant 0 : index
    %258 = vector.load %arg2[%c2_130, %c0_131, %c0_132] : memref<4x16x128xf32, #tpu.memory_space<vmem>>, vector<1x16x128xf32>
    %259 = vector.shape_cast %258 : vector<1x16x128xf32> to vector<16x128xf32>
    %260 = arith.addf %257, %259 : vector<16x128xf32>
    %c2_133 = arith.constant 2 : index
    %c0_134 = arith.constant 0 : index
    %c0_135 = arith.constant 0 : index
    %261 = vector.load %arg11[%c2_133, %c0_134, %c0_135] : memref<4x16x128xf32, #tpu.memory_space<vmem>>, vector<1x16x128xf32>
    %262 = vector.shape_cast %261 : vector<1x16x128xf32> to vector<16x128xf32>
    %263 = vector.shape_cast %260 : vector<16x128xf32> to vector<1x16x128xf32>
    tpu.vector_store %arg11[%c2_133, %c0_134, %c0_135], %263 {strides = array<i32>} : memref<4x16x128xf32, #tpu.memory_space<vmem>>, vector<1x16x128xf32>,
    %264 = vector.extract_strided_slice %239 {offsets = [0, 384], sizes = [16, 128], strides = [1, 1]} : vector<16x512xf32> to vector<16x128xf32>
    %265 = arith.addf %264, %5 : vector<16x128xf32>
    %c3_136 = arith.constant 3 : index
    %c0_137 = arith.constant 0 : index
    %c0_138 = arith.constant 0 : index
    %266 = vector.load %arg2[%c3_136, %c0_137, %c0_138] : memref<4x16x128xf32, #tpu.memory_space<vmem>>, vector<1x16x128xf32>
    %267 = vector.shape_cast %266 : vector<1x16x128xf32> to vector<16x128xf32>
    %268 = arith.addf %265, %267 : vector<16x128xf32>
    %c3_139 = arith.constant 3 : index
    %c0_140 = arith.constant 0 : index
    %c0_141 = arith.constant 0 : index
    %269 = vector.load %arg11[%c3_139, %c0_140, %c0_141] : memref<4x16x128xf32, #tpu.memory_space<vmem>>, vector<1x16x128xf32>
    %270 = vector.shape_cast %269 : vector<1x16x128xf32> to vector<16x128xf32>
    %271 = vector.shape_cast %268 : vector<16x128xf32> to vector<1x16x128xf32>
    tpu.vector_store %arg11[%c3_139, %c0_140, %c0_141], %271 {strides = array<i32>} : memref<4x16x128xf32, #tpu.memory_space<vmem>>, vector<1x16x128xf32>,
    %c4 = arith.constant 4 : index
    %c0_142 = arith.constant 0 : index
    %272 = vector.load %arg6[%c4, %c0_142] : memref<8x128xf32, #tpu.memory_space<vmem>>, vector<1x128xf32>
    %c5 = arith.constant 5 : index
    %c0_143 = arith.constant 0 : index
    %273 = vector.load %arg6[%c5, %c0_143] : memref<8x128xf32, #tpu.memory_space<vmem>>, vector<1x128xf32>
    %c6 = arith.constant 6 : index
    %c0_144 = arith.constant 0 : index
    %274 = vector.load %arg6[%c6, %c0_144] : memref<8x128xf32, #tpu.memory_space<vmem>>, vector<1x128xf32>
    %c0_145 = arith.constant 0 : index
    %c0_146 = arith.constant 0 : index
    %275 = vector.load %arg8[%c0_145, %c0_146] : memref<1x512xf32, #tpu.memory_space<vmem>>, vector<1x512xf32>
    %c0_147 = arith.constant 0 : index
    %c0_148 = arith.constant 0 : index
    %276 = vector.load %arg7[%c0_147, %c0_148] : memref<128x512xbf16, #tpu.memory_space<vmem>>, vector<128x512xbf16>
    %c0_149 = arith.constant 0 : index
    %c0_150 = arith.constant 0 : index
    %277 = vector.load %arg9[%c0_149, %c0_150] : memref<512x128xbf16, #tpu.memory_space<vmem>>, vector<512x128xbf16>
    %c0_151 = arith.constant 0 : index
    %c0_152 = arith.constant 0 : index
    %c0_153 = arith.constant 0 : index
    %278 = vector.load %arg10[%c0_151, %c0_152, %c0_153] : memref<4x16x128xf32, #tpu.memory_space<vmem>>, vector<1x16x128xf32>
    %279 = vector.shape_cast %278 : vector<1x16x128xf32> to vector<16x128xf32>
    %cst_154 = arith.constant dense<0.000000e+00> : vector<16xf32>
    %280 = vector.multi_reduction <add>, %279, %cst_154 [1] : vector<16x128xf32> to vector<16xf32>
    %281 = vector.shape_cast %280 : vector<16xf32> to vector<16x1xf32>
    %cst_155 = arith.constant 1.280000e+02 : f32
    %282 = vector.broadcast %cst_155 : f32 to vector<16x1xf32>
    %283 = arith.divf %281, %282 : vector<16x1xf32>
    %284 = vector.broadcast %283 : vector<16x1xf32> to vector<16x128xf32>
    %285 = arith.subf %279, %284 : vector<16x128xf32>
    %286 = arith.mulf %285, %285 : vector<16x128xf32>
    %cst_156 = arith.constant dense<0.000000e+00> : vector<16xf32>
    %287 = vector.multi_reduction <add>, %286, %cst_156 [1] : vector<16x128xf32> to vector<16xf32>
    %288 = vector.shape_cast %287 : vector<16xf32> to vector<16x1xf32>
    %cst_157 = arith.constant 1.280000e+02 : f32
    %289 = vector.broadcast %cst_157 : f32 to vector<16x1xf32>
    %290 = arith.divf %288, %289 : vector<16x1xf32>
    %cst_158 = arith.constant 9.99999974E-6 : f32
    %291 = vector.broadcast %cst_158 : f32 to vector<16x1xf32>
    %292 = arith.addf %290, %291 : vector<16x1xf32>
    %293 = math.rsqrt %292 : vector<16x1xf32>
    %294 = vector.broadcast %293 : vector<16x1xf32> to vector<16x128xf32>
    %295 = arith.mulf %285, %294 : vector<16x128xf32>
    %296 = vector.broadcast %272 : vector<1x128xf32> to vector<16x128xf32>
    %297 = arith.mulf %295, %296 : vector<16x128xf32>
    %298 = vector.broadcast %273 : vector<1x128xf32> to vector<16x128xf32>
    %299 = arith.addf %297, %298 : vector<16x128xf32>
    %300 = arith.truncf %299 : vector<16x128xf32> to vector<16x128xbf16>
    %cst_159 = arith.constant dense<0.000000e+00> : vector<16x512xf32>
    %301 = tpu.matmul %300, %276, %cst_159 {dimension_numbers = #tpu.dot_dimension_numbers<[1], [0], [0], [1], [0, 0, 1, 1], [], []>} : vector<16x128xbf16>, vector<128x512xbf16>, vector<16x512xf32> -> vector<16x512xf32>
    %302 = vector.broadcast %275 : vector<1x512xf32> to vector<16x512xf32>
    %303 = arith.addf %301, %302 : vector<16x512xf32>
    %cst_160 = arith.constant 5.000000e-01 : f32
    %304 = vector.broadcast %cst_160 : f32 to vector<16x512xf32>
    %305 = arith.mulf %304, %303 : vector<16x512xf32>
    %cst_161 = arith.constant 0.707106769 : f32
    %306 = vector.broadcast %cst_161 : f32 to vector<16x512xf32>
    %307 = arith.mulf %303, %306 : vector<16x512xf32>
    %308 = math.erf %307 : vector<16x512xf32>
    %cst_162 = arith.constant 1.000000e+00 : f32
    %309 = vector.broadcast %cst_162 : f32 to vector<16x512xf32>
    %310 = arith.addf %309, %308 : vector<16x512xf32>
    %311 = arith.mulf %305, %310 : vector<16x512xf32>
    %312 = arith.truncf %311 : vector<16x512xf32> to vector<16x512xbf16>
    %cst_163 = arith.constant dense<0.000000e+00> : vector<16x128xf32>
    %313 = tpu.matmul %312, %277, %cst_163 {dimension_numbers = #tpu.dot_dimension_numbers<[1], [0], [0], [1], [0, 0, 1, 1], [], []>} : vector<16x512xbf16>, vector<512x128xbf16>, vector<16x128xf32> -> vector<16x128xf32>
    %314 = vector.broadcast %274 : vector<1x128xf32> to vector<16x128xf32>
    %315 = arith.addf %313, %314 : vector<16x128xf32>
    %316 = arith.addf %315, %279 : vector<16x128xf32>
    %c0_164 = arith.constant 0 : index
    %c0_165 = arith.constant 0 : index
    %c0_166 = arith.constant 0 : index
    %317 = vector.load %arg10[%c0_164, %c0_165, %c0_166] : memref<4x16x128xf32, #tpu.memory_space<vmem>>, vector<1x16x128xf32>
    %318 = vector.shape_cast %317 : vector<1x16x128xf32> to vector<16x128xf32>
    %319 = vector.shape_cast %316 : vector<16x128xf32> to vector<1x16x128xf32>
    tpu.vector_store %arg10[%c0_164, %c0_165, %c0_166], %319 {strides = array<i32>} : memref<4x16x128xf32, #tpu.memory_space<vmem>>, vector<1x16x128xf32>,
    %c1_167 = arith.constant 1 : index
    %c0_168 = arith.constant 0 : index
    %c0_169 = arith.constant 0 : index
    %320 = vector.load %arg10[%c1_167, %c0_168, %c0_169] : memref<4x16x128xf32, #tpu.memory_space<vmem>>, vector<1x16x128xf32>
    %321 = vector.shape_cast %320 : vector<1x16x128xf32> to vector<16x128xf32>
    %cst_170 = arith.constant dense<0.000000e+00> : vector<16xf32>
    %322 = vector.multi_reduction <add>, %321, %cst_170 [1] : vector<16x128xf32> to vector<16xf32>
    %323 = vector.shape_cast %322 : vector<16xf32> to vector<16x1xf32>
    %cst_171 = arith.constant 1.280000e+02 : f32
    %324 = vector.broadcast %cst_171 : f32 to vector<16x1xf32>
    %325 = arith.divf %323, %324 : vector<16x1xf32>
    %326 = vector.broadcast %325 : vector<16x1xf32> to vector<16x128xf32>
    %327 = arith.subf %321, %326 : vector<16x128xf32>
    %328 = arith.mulf %327, %327 : vector<16x128xf32>
    %cst_172 = arith.constant dense<0.000000e+00> : vector<16xf32>
    %329 = vector.multi_reduction <add>, %328, %cst_172 [1] : vector<16x128xf32> to vector<16xf32>
    %330 = vector.shape_cast %329 : vector<16xf32> to vector<16x1xf32>
    %cst_173 = arith.constant 1.280000e+02 : f32
    %331 = vector.broadcast %cst_173 : f32 to vector<16x1xf32>
    %332 = arith.divf %330, %331 : vector<16x1xf32>
    %cst_174 = arith.constant 9.99999974E-6 : f32
    %333 = vector.broadcast %cst_174 : f32 to vector<16x1xf32>
    %334 = arith.addf %332, %333 : vector<16x1xf32>
    %335 = math.rsqrt %334 : vector<16x1xf32>
    %336 = vector.broadcast %335 : vector<16x1xf32> to vector<16x128xf32>
    %337 = arith.mulf %327, %336 : vector<16x128xf32>
    %338 = vector.broadcast %272 : vector<1x128xf32> to vector<16x128xf32>
    %339 = arith.mulf %337, %338 : vector<16x128xf32>
    %340 = vector.broadcast %273 : vector<1x128xf32> to vector<16x128xf32>
    %341 = arith.addf %339, %340 : vector<16x128xf32>
    %342 = arith.truncf %341 : vector<16x128xf32> to vector<16x128xbf16>
    %cst_175 = arith.constant dense<0.000000e+00> : vector<16x512xf32>
    %343 = tpu.matmul %342, %276, %cst_175 {dimension_numbers = #tpu.dot_dimension_numbers<[1], [0], [0], [1], [0, 0, 1, 1], [], []>} : vector<16x128xbf16>, vector<128x512xbf16>, vector<16x512xf32> -> vector<16x512xf32>
    %344 = vector.broadcast %275 : vector<1x512xf32> to vector<16x512xf32>
    %345 = arith.addf %343, %344 : vector<16x512xf32>
    %cst_176 = arith.constant 5.000000e-01 : f32
    %346 = vector.broadcast %cst_176 : f32 to vector<16x512xf32>
    %347 = arith.mulf %346, %345 : vector<16x512xf32>
    %cst_177 = arith.constant 0.707106769 : f32
    %348 = vector.broadcast %cst_177 : f32 to vector<16x512xf32>
    %349 = arith.mulf %345, %348 : vector<16x512xf32>
    %350 = math.erf %349 : vector<16x512xf32>
    %cst_178 = arith.constant 1.000000e+00 : f32
    %351 = vector.broadcast %cst_178 : f32 to vector<16x512xf32>
    %352 = arith.addf %351, %350 : vector<16x512xf32>
    %353 = arith.mulf %347, %352 : vector<16x512xf32>
    %354 = arith.truncf %353 : vector<16x512xf32> to vector<16x512xbf16>
    %cst_179 = arith.constant dense<0.000000e+00> : vector<16x128xf32>
    %355 = tpu.matmul %354, %277, %cst_179 {dimension_numbers = #tpu.dot_dimension_numbers<[1], [0], [0], [1], [0, 0, 1, 1], [], []>} : vector<16x512xbf16>, vector<512x128xbf16>, vector<16x128xf32> -> vector<16x128xf32>
    %356 = vector.broadcast %274 : vector<1x128xf32> to vector<16x128xf32>
    %357 = arith.addf %355, %356 : vector<16x128xf32>
    %358 = arith.addf %357, %321 : vector<16x128xf32>
    %c1_180 = arith.constant 1 : index
    %c0_181 = arith.constant 0 : index
    %c0_182 = arith.constant 0 : index
    %359 = vector.load %arg10[%c1_180, %c0_181, %c0_182] : memref<4x16x128xf32, #tpu.memory_space<vmem>>, vector<1x16x128xf32>
    %360 = vector.shape_cast %359 : vector<1x16x128xf32> to vector<16x128xf32>
    %361 = vector.shape_cast %358 : vector<16x128xf32> to vector<1x16x128xf32>
    tpu.vector_store %arg10[%c1_180, %c0_181, %c0_182], %361 {strides = array<i32>} : memref<4x16x128xf32, #tpu.memory_space<vmem>>, vector<1x16x128xf32>,
    %c2_183 = arith.constant 2 : index
    %c0_184 = arith.constant 0 : index
    %c0_185 = arith.constant 0 : index
    %362 = vector.load %arg10[%c2_183, %c0_184, %c0_185] : memref<4x16x128xf32, #tpu.memory_space<vmem>>, vector<1x16x128xf32>
    %363 = vector.shape_cast %362 : vector<1x16x128xf32> to vector<16x128xf32>
    %cst_186 = arith.constant dense<0.000000e+00> : vector<16xf32>
    %364 = vector.multi_reduction <add>, %363, %cst_186 [1] : vector<16x128xf32> to vector<16xf32>
    %365 = vector.shape_cast %364 : vector<16xf32> to vector<16x1xf32>
    %cst_187 = arith.constant 1.280000e+02 : f32
    %366 = vector.broadcast %cst_187 : f32 to vector<16x1xf32>
    %367 = arith.divf %365, %366 : vector<16x1xf32>
    %368 = vector.broadcast %367 : vector<16x1xf32> to vector<16x128xf32>
    %369 = arith.subf %363, %368 : vector<16x128xf32>
    %370 = arith.mulf %369, %369 : vector<16x128xf32>
    %cst_188 = arith.constant dense<0.000000e+00> : vector<16xf32>
    %371 = vector.multi_reduction <add>, %370, %cst_188 [1] : vector<16x128xf32> to vector<16xf32>
    %372 = vector.shape_cast %371 : vector<16xf32> to vector<16x1xf32>
    %cst_189 = arith.constant 1.280000e+02 : f32
    %373 = vector.broadcast %cst_189 : f32 to vector<16x1xf32>
    %374 = arith.divf %372, %373 : vector<16x1xf32>
    %cst_190 = arith.constant 9.99999974E-6 : f32
    %375 = vector.broadcast %cst_190 : f32 to vector<16x1xf32>
    %376 = arith.addf %374, %375 : vector<16x1xf32>
    %377 = math.rsqrt %376 : vector<16x1xf32>
    %378 = vector.broadcast %377 : vector<16x1xf32> to vector<16x128xf32>
    %379 = arith.mulf %369, %378 : vector<16x128xf32>
    %380 = vector.broadcast %272 : vector<1x128xf32> to vector<16x128xf32>
    %381 = arith.mulf %379, %380 : vector<16x128xf32>
    %382 = vector.broadcast %273 : vector<1x128xf32> to vector<16x128xf32>
    %383 = arith.addf %381, %382 : vector<16x128xf32>
    %384 = arith.truncf %383 : vector<16x128xf32> to vector<16x128xbf16>
    %cst_191 = arith.constant dense<0.000000e+00> : vector<16x512xf32>
    %385 = tpu.matmul %384, %276, %cst_191 {dimension_numbers = #tpu.dot_dimension_numbers<[1], [0], [0], [1], [0, 0, 1, 1], [], []>} : vector<16x128xbf16>, vector<128x512xbf16>, vector<16x512xf32> -> vector<16x512xf32>
    %386 = vector.broadcast %275 : vector<1x512xf32> to vector<16x512xf32>
    %387 = arith.addf %385, %386 : vector<16x512xf32>
    %cst_192 = arith.constant 5.000000e-01 : f32
    %388 = vector.broadcast %cst_192 : f32 to vector<16x512xf32>
    %389 = arith.mulf %388, %387 : vector<16x512xf32>
    %cst_193 = arith.constant 0.707106769 : f32
    %390 = vector.broadcast %cst_193 : f32 to vector<16x512xf32>
    %391 = arith.mulf %387, %390 : vector<16x512xf32>
    %392 = math.erf %391 : vector<16x512xf32>
    %cst_194 = arith.constant 1.000000e+00 : f32
    %393 = vector.broadcast %cst_194 : f32 to vector<16x512xf32>
    %394 = arith.addf %393, %392 : vector<16x512xf32>
    %395 = arith.mulf %389, %394 : vector<16x512xf32>
    %396 = arith.truncf %395 : vector<16x512xf32> to vector<16x512xbf16>
    %cst_195 = arith.constant dense<0.000000e+00> : vector<16x128xf32>
    %397 = tpu.matmul %396, %277, %cst_195 {dimension_numbers = #tpu.dot_dimension_numbers<[1], [0], [0], [1], [0, 0, 1, 1], [], []>} : vector<16x512xbf16>, vector<512x128xbf16>, vector<16x128xf32> -> vector<16x128xf32>
    %398 = vector.broadcast %274 : vector<1x128xf32> to vector<16x128xf32>
    %399 = arith.addf %397, %398 : vector<16x128xf32>
    %400 = arith.addf %399, %363 : vector<16x128xf32>
    %c2_196 = arith.constant 2 : index
    %c0_197 = arith.constant 0 : index
    %c0_198 = arith.constant 0 : index
    %401 = vector.load %arg10[%c2_196, %c0_197, %c0_198] : memref<4x16x128xf32, #tpu.memory_space<vmem>>, vector<1x16x128xf32>
    %402 = vector.shape_cast %401 : vector<1x16x128xf32> to vector<16x128xf32>
    %403 = vector.shape_cast %400 : vector<16x128xf32> to vector<1x16x128xf32>
    tpu.vector_store %arg10[%c2_196, %c0_197, %c0_198], %403 {strides = array<i32>} : memref<4x16x128xf32, #tpu.memory_space<vmem>>, vector<1x16x128xf32>,
    %c3_199 = arith.constant 3 : index
    %c0_200 = arith.constant 0 : index
    %c0_201 = arith.constant 0 : index
    %404 = vector.load %arg10[%c3_199, %c0_200, %c0_201] : memref<4x16x128xf32, #tpu.memory_space<vmem>>, vector<1x16x128xf32>
    %405 = vector.shape_cast %404 : vector<1x16x128xf32> to vector<16x128xf32>
    %cst_202 = arith.constant dense<0.000000e+00> : vector<16xf32>
    %406 = vector.multi_reduction <add>, %405, %cst_202 [1] : vector<16x128xf32> to vector<16xf32>
    %407 = vector.shape_cast %406 : vector<16xf32> to vector<16x1xf32>
    %cst_203 = arith.constant 1.280000e+02 : f32
    %408 = vector.broadcast %cst_203 : f32 to vector<16x1xf32>
    %409 = arith.divf %407, %408 : vector<16x1xf32>
    %410 = vector.broadcast %409 : vector<16x1xf32> to vector<16x128xf32>
    %411 = arith.subf %405, %410 : vector<16x128xf32>
    %412 = arith.mulf %411, %411 : vector<16x128xf32>
    %cst_204 = arith.constant dense<0.000000e+00> : vector<16xf32>
    %413 = vector.multi_reduction <add>, %412, %cst_204 [1] : vector<16x128xf32> to vector<16xf32>
    %414 = vector.shape_cast %413 : vector<16xf32> to vector<16x1xf32>
    %cst_205 = arith.constant 1.280000e+02 : f32
    %415 = vector.broadcast %cst_205 : f32 to vector<16x1xf32>
    %416 = arith.divf %414, %415 : vector<16x1xf32>
    %cst_206 = arith.constant 9.99999974E-6 : f32
    %417 = vector.broadcast %cst_206 : f32 to vector<16x1xf32>
    %418 = arith.addf %416, %417 : vector<16x1xf32>
    %419 = math.rsqrt %418 : vector<16x1xf32>
    %420 = vector.broadcast %419 : vector<16x1xf32> to vector<16x128xf32>
    %421 = arith.mulf %411, %420 : vector<16x128xf32>
    %422 = vector.broadcast %272 : vector<1x128xf32> to vector<16x128xf32>
    %423 = arith.mulf %421, %422 : vector<16x128xf32>
    %424 = vector.broadcast %273 : vector<1x128xf32> to vector<16x128xf32>
    %425 = arith.addf %423, %424 : vector<16x128xf32>
    %426 = arith.truncf %425 : vector<16x128xf32> to vector<16x128xbf16>
    %cst_207 = arith.constant dense<0.000000e+00> : vector<16x512xf32>
    %427 = tpu.matmul %426, %276, %cst_207 {dimension_numbers = #tpu.dot_dimension_numbers<[1], [0], [0], [1], [0, 0, 1, 1], [], []>} : vector<16x128xbf16>, vector<128x512xbf16>, vector<16x512xf32> -> vector<16x512xf32>
    %428 = vector.broadcast %275 : vector<1x512xf32> to vector<16x512xf32>
    %429 = arith.addf %427, %428 : vector<16x512xf32>
    %cst_208 = arith.constant 5.000000e-01 : f32
    %430 = vector.broadcast %cst_208 : f32 to vector<16x512xf32>
    %431 = arith.mulf %430, %429 : vector<16x512xf32>
    %cst_209 = arith.constant 0.707106769 : f32
    %432 = vector.broadcast %cst_209 : f32 to vector<16x512xf32>
    %433 = arith.mulf %429, %432 : vector<16x512xf32>
    %434 = math.erf %433 : vector<16x512xf32>
    %cst_210 = arith.constant 1.000000e+00 : f32
    %435 = vector.broadcast %cst_210 : f32 to vector<16x512xf32>
    %436 = arith.addf %435, %434 : vector<16x512xf32>
    %437 = arith.mulf %431, %436 : vector<16x512xf32>
    %438 = arith.truncf %437 : vector<16x512xf32> to vector<16x512xbf16>
    %cst_211 = arith.constant dense<0.000000e+00> : vector<16x128xf32>
    %439 = tpu.matmul %438, %277, %cst_211 {dimension_numbers = #tpu.dot_dimension_numbers<[1], [0], [0], [1], [0, 0, 1, 1], [], []>} : vector<16x512xbf16>, vector<512x128xbf16>, vector<16x128xf32> -> vector<16x128xf32>
    %440 = vector.broadcast %274 : vector<1x128xf32> to vector<16x128xf32>
    %441 = arith.addf %439, %440 : vector<16x128xf32>
    %442 = arith.addf %441, %405 : vector<16x128xf32>
    %c3_212 = arith.constant 3 : index
    %c0_213 = arith.constant 0 : index
    %c0_214 = arith.constant 0 : index
    %443 = vector.load %arg10[%c3_212, %c0_213, %c0_214] : memref<4x16x128xf32, #tpu.memory_space<vmem>>, vector<1x16x128xf32>
    %444 = vector.shape_cast %443 : vector<1x16x128xf32> to vector<16x128xf32>
    %445 = vector.shape_cast %442 : vector<16x128xf32> to vector<1x16x128xf32>
    tpu.vector_store %arg10[%c3_212, %c0_213, %c0_214], %445 {strides = array<i32>} : memref<4x16x128xf32, #tpu.memory_space<vmem>>, vector<1x16x128xf32>,
    %c0_215 = arith.constant 0 : index
    %c0_216 = arith.constant 0 : index
    %c0_217 = arith.constant 0 : index
    %446 = vector.load %arg11[%c0_215, %c0_216, %c0_217] : memref<4x16x128xf32, #tpu.memory_space<vmem>>, vector<1x16x128xf32>
    %447 = vector.shape_cast %446 : vector<1x16x128xf32> to vector<16x128xf32>
    %cst_218 = arith.constant dense<0.000000e+00> : vector<16xf32>
    %448 = vector.multi_reduction <add>, %447, %cst_218 [1] : vector<16x128xf32> to vector<16xf32>
    %449 = vector.shape_cast %448 : vector<16xf32> to vector<16x1xf32>
    %cst_219 = arith.constant 1.280000e+02 : f32
    %450 = vector.broadcast %cst_219 : f32 to vector<16x1xf32>
    %451 = arith.divf %449, %450 : vector<16x1xf32>
    %452 = vector.broadcast %451 : vector<16x1xf32> to vector<16x128xf32>
    %453 = arith.subf %447, %452 : vector<16x128xf32>
    %454 = arith.mulf %453, %453 : vector<16x128xf32>
    %cst_220 = arith.constant dense<0.000000e+00> : vector<16xf32>
    %455 = vector.multi_reduction <add>, %454, %cst_220 [1] : vector<16x128xf32> to vector<16xf32>
    %456 = vector.shape_cast %455 : vector<16xf32> to vector<16x1xf32>
    %cst_221 = arith.constant 1.280000e+02 : f32
    %457 = vector.broadcast %cst_221 : f32 to vector<16x1xf32>
    %458 = arith.divf %456, %457 : vector<16x1xf32>
    %cst_222 = arith.constant 9.99999974E-6 : f32
    %459 = vector.broadcast %cst_222 : f32 to vector<16x1xf32>
    %460 = arith.addf %458, %459 : vector<16x1xf32>
    %461 = math.rsqrt %460 : vector<16x1xf32>
    %462 = vector.broadcast %461 : vector<16x1xf32> to vector<16x128xf32>
    %463 = arith.mulf %453, %462 : vector<16x128xf32>
    %464 = vector.broadcast %272 : vector<1x128xf32> to vector<16x128xf32>
    %465 = arith.mulf %463, %464 : vector<16x128xf32>
    %466 = vector.broadcast %273 : vector<1x128xf32> to vector<16x128xf32>
    %467 = arith.addf %465, %466 : vector<16x128xf32>
    %468 = arith.truncf %467 : vector<16x128xf32> to vector<16x128xbf16>
    %cst_223 = arith.constant dense<0.000000e+00> : vector<16x512xf32>
    %469 = tpu.matmul %468, %276, %cst_223 {dimension_numbers = #tpu.dot_dimension_numbers<[1], [0], [0], [1], [0, 0, 1, 1], [], []>} : vector<16x128xbf16>, vector<128x512xbf16>, vector<16x512xf32> -> vector<16x512xf32>
    %470 = vector.broadcast %275 : vector<1x512xf32> to vector<16x512xf32>
    %471 = arith.addf %469, %470 : vector<16x512xf32>
    %cst_224 = arith.constant 5.000000e-01 : f32
    %472 = vector.broadcast %cst_224 : f32 to vector<16x512xf32>
    %473 = arith.mulf %472, %471 : vector<16x512xf32>
    %cst_225 = arith.constant 0.707106769 : f32
    %474 = vector.broadcast %cst_225 : f32 to vector<16x512xf32>
    %475 = arith.mulf %471, %474 : vector<16x512xf32>
    %476 = math.erf %475 : vector<16x512xf32>
    %cst_226 = arith.constant 1.000000e+00 : f32
    %477 = vector.broadcast %cst_226 : f32 to vector<16x512xf32>
    %478 = arith.addf %477, %476 : vector<16x512xf32>
    %479 = arith.mulf %473, %478 : vector<16x512xf32>
    %480 = arith.truncf %479 : vector<16x512xf32> to vector<16x512xbf16>
    %cst_227 = arith.constant dense<0.000000e+00> : vector<16x128xf32>
    %481 = tpu.matmul %480, %277, %cst_227 {dimension_numbers = #tpu.dot_dimension_numbers<[1], [0], [0], [1], [0, 0, 1, 1], [], []>} : vector<16x512xbf16>, vector<512x128xbf16>, vector<16x128xf32> -> vector<16x128xf32>
    %482 = vector.broadcast %274 : vector<1x128xf32> to vector<16x128xf32>
    %483 = arith.addf %481, %482 : vector<16x128xf32>
    %484 = arith.addf %483, %447 : vector<16x128xf32>
    %c0_228 = arith.constant 0 : index
    %c0_229 = arith.constant 0 : index
    %c0_230 = arith.constant 0 : index
    %485 = vector.load %arg11[%c0_228, %c0_229, %c0_230] : memref<4x16x128xf32, #tpu.memory_space<vmem>>, vector<1x16x128xf32>
    %486 = vector.shape_cast %485 : vector<1x16x128xf32> to vector<16x128xf32>
    %487 = vector.shape_cast %484 : vector<16x128xf32> to vector<1x16x128xf32>
    tpu.vector_store %arg11[%c0_228, %c0_229, %c0_230], %487 {strides = array<i32>} : memref<4x16x128xf32, #tpu.memory_space<vmem>>, vector<1x16x128xf32>,
    %c1_231 = arith.constant 1 : index
    %c0_232 = arith.constant 0 : index
    %c0_233 = arith.constant 0 : index
    %488 = vector.load %arg11[%c1_231, %c0_232, %c0_233] : memref<4x16x128xf32, #tpu.memory_space<vmem>>, vector<1x16x128xf32>
    %489 = vector.shape_cast %488 : vector<1x16x128xf32> to vector<16x128xf32>
    %cst_234 = arith.constant dense<0.000000e+00> : vector<16xf32>
    %490 = vector.multi_reduction <add>, %489, %cst_234 [1] : vector<16x128xf32> to vector<16xf32>
    %491 = vector.shape_cast %490 : vector<16xf32> to vector<16x1xf32>
    %cst_235 = arith.constant 1.280000e+02 : f32
    %492 = vector.broadcast %cst_235 : f32 to vector<16x1xf32>
    %493 = arith.divf %491, %492 : vector<16x1xf32>
    %494 = vector.broadcast %493 : vector<16x1xf32> to vector<16x128xf32>
    %495 = arith.subf %489, %494 : vector<16x128xf32>
    %496 = arith.mulf %495, %495 : vector<16x128xf32>
    %cst_236 = arith.constant dense<0.000000e+00> : vector<16xf32>
    %497 = vector.multi_reduction <add>, %496, %cst_236 [1] : vector<16x128xf32> to vector<16xf32>
    %498 = vector.shape_cast %497 : vector<16xf32> to vector<16x1xf32>
    %cst_237 = arith.constant 1.280000e+02 : f32
    %499 = vector.broadcast %cst_237 : f32 to vector<16x1xf32>
    %500 = arith.divf %498, %499 : vector<16x1xf32>
    %cst_238 = arith.constant 9.99999974E-6 : f32
    %501 = vector.broadcast %cst_238 : f32 to vector<16x1xf32>
    %502 = arith.addf %500, %501 : vector<16x1xf32>
    %503 = math.rsqrt %502 : vector<16x1xf32>
    %504 = vector.broadcast %503 : vector<16x1xf32> to vector<16x128xf32>
    %505 = arith.mulf %495, %504 : vector<16x128xf32>
    %506 = vector.broadcast %272 : vector<1x128xf32> to vector<16x128xf32>
    %507 = arith.mulf %505, %506 : vector<16x128xf32>
    %508 = vector.broadcast %273 : vector<1x128xf32> to vector<16x128xf32>
    %509 = arith.addf %507, %508 : vector<16x128xf32>
    %510 = arith.truncf %509 : vector<16x128xf32> to vector<16x128xbf16>
    %cst_239 = arith.constant dense<0.000000e+00> : vector<16x512xf32>
    %511 = tpu.matmul %510, %276, %cst_239 {dimension_numbers = #tpu.dot_dimension_numbers<[1], [0], [0], [1], [0, 0, 1, 1], [], []>} : vector<16x128xbf16>, vector<128x512xbf16>, vector<16x512xf32> -> vector<16x512xf32>
    %512 = vector.broadcast %275 : vector<1x512xf32> to vector<16x512xf32>
    %513 = arith.addf %511, %512 : vector<16x512xf32>
    %cst_240 = arith.constant 5.000000e-01 : f32
    %514 = vector.broadcast %cst_240 : f32 to vector<16x512xf32>
    %515 = arith.mulf %514, %513 : vector<16x512xf32>
    %cst_241 = arith.constant 0.707106769 : f32
    %516 = vector.broadcast %cst_241 : f32 to vector<16x512xf32>
    %517 = arith.mulf %513, %516 : vector<16x512xf32>
    %518 = math.erf %517 : vector<16x512xf32>
    %cst_242 = arith.constant 1.000000e+00 : f32
    %519 = vector.broadcast %cst_242 : f32 to vector<16x512xf32>
    %520 = arith.addf %519, %518 : vector<16x512xf32>
    %521 = arith.mulf %515, %520 : vector<16x512xf32>
    %522 = arith.truncf %521 : vector<16x512xf32> to vector<16x512xbf16>
    %cst_243 = arith.constant dense<0.000000e+00> : vector<16x128xf32>
    %523 = tpu.matmul %522, %277, %cst_243 {dimension_numbers = #tpu.dot_dimension_numbers<[1], [0], [0], [1], [0, 0, 1, 1], [], []>} : vector<16x512xbf16>, vector<512x128xbf16>, vector<16x128xf32> -> vector<16x128xf32>
    %524 = vector.broadcast %274 : vector<1x128xf32> to vector<16x128xf32>
    %525 = arith.addf %523, %524 : vector<16x128xf32>
    %526 = arith.addf %525, %489 : vector<16x128xf32>
    %c1_244 = arith.constant 1 : index
    %c0_245 = arith.constant 0 : index
    %c0_246 = arith.constant 0 : index
    %527 = vector.load %arg11[%c1_244, %c0_245, %c0_246] : memref<4x16x128xf32, #tpu.memory_space<vmem>>, vector<1x16x128xf32>
    %528 = vector.shape_cast %527 : vector<1x16x128xf32> to vector<16x128xf32>
    %529 = vector.shape_cast %526 : vector<16x128xf32> to vector<1x16x128xf32>
    tpu.vector_store %arg11[%c1_244, %c0_245, %c0_246], %529 {strides = array<i32>} : memref<4x16x128xf32, #tpu.memory_space<vmem>>, vector<1x16x128xf32>,
    %c2_247 = arith.constant 2 : index
    %c0_248 = arith.constant 0 : index
    %c0_249 = arith.constant 0 : index
    %530 = vector.load %arg11[%c2_247, %c0_248, %c0_249] : memref<4x16x128xf32, #tpu.memory_space<vmem>>, vector<1x16x128xf32>
    %531 = vector.shape_cast %530 : vector<1x16x128xf32> to vector<16x128xf32>
    %cst_250 = arith.constant dense<0.000000e+00> : vector<16xf32>
    %532 = vector.multi_reduction <add>, %531, %cst_250 [1] : vector<16x128xf32> to vector<16xf32>
    %533 = vector.shape_cast %532 : vector<16xf32> to vector<16x1xf32>
    %cst_251 = arith.constant 1.280000e+02 : f32
    %534 = vector.broadcast %cst_251 : f32 to vector<16x1xf32>
    %535 = arith.divf %533, %534 : vector<16x1xf32>
    %536 = vector.broadcast %535 : vector<16x1xf32> to vector<16x128xf32>
    %537 = arith.subf %531, %536 : vector<16x128xf32>
    %538 = arith.mulf %537, %537 : vector<16x128xf32>
    %cst_252 = arith.constant dense<0.000000e+00> : vector<16xf32>
    %539 = vector.multi_reduction <add>, %538, %cst_252 [1] : vector<16x128xf32> to vector<16xf32>
    %540 = vector.shape_cast %539 : vector<16xf32> to vector<16x1xf32>
    %cst_253 = arith.constant 1.280000e+02 : f32
    %541 = vector.broadcast %cst_253 : f32 to vector<16x1xf32>
    %542 = arith.divf %540, %541 : vector<16x1xf32>
    %cst_254 = arith.constant 9.99999974E-6 : f32
    %543 = vector.broadcast %cst_254 : f32 to vector<16x1xf32>
    %544 = arith.addf %542, %543 : vector<16x1xf32>
    %545 = math.rsqrt %544 : vector<16x1xf32>
    %546 = vector.broadcast %545 : vector<16x1xf32> to vector<16x128xf32>
    %547 = arith.mulf %537, %546 : vector<16x128xf32>
    %548 = vector.broadcast %272 : vector<1x128xf32> to vector<16x128xf32>
    %549 = arith.mulf %547, %548 : vector<16x128xf32>
    %550 = vector.broadcast %273 : vector<1x128xf32> to vector<16x128xf32>
    %551 = arith.addf %549, %550 : vector<16x128xf32>
    %552 = arith.truncf %551 : vector<16x128xf32> to vector<16x128xbf16>
    %cst_255 = arith.constant dense<0.000000e+00> : vector<16x512xf32>
    %553 = tpu.matmul %552, %276, %cst_255 {dimension_numbers = #tpu.dot_dimension_numbers<[1], [0], [0], [1], [0, 0, 1, 1], [], []>} : vector<16x128xbf16>, vector<128x512xbf16>, vector<16x512xf32> -> vector<16x512xf32>
    %554 = vector.broadcast %275 : vector<1x512xf32> to vector<16x512xf32>
    %555 = arith.addf %553, %554 : vector<16x512xf32>
    %cst_256 = arith.constant 5.000000e-01 : f32
    %556 = vector.broadcast %cst_256 : f32 to vector<16x512xf32>
    %557 = arith.mulf %556, %555 : vector<16x512xf32>
    %cst_257 = arith.constant 0.707106769 : f32
    %558 = vector.broadcast %cst_257 : f32 to vector<16x512xf32>
    %559 = arith.mulf %555, %558 : vector<16x512xf32>
    %560 = math.erf %559 : vector<16x512xf32>
    %cst_258 = arith.constant 1.000000e+00 : f32
    %561 = vector.broadcast %cst_258 : f32 to vector<16x512xf32>
    %562 = arith.addf %561, %560 : vector<16x512xf32>
    %563 = arith.mulf %557, %562 : vector<16x512xf32>
    %564 = arith.truncf %563 : vector<16x512xf32> to vector<16x512xbf16>
    %cst_259 = arith.constant dense<0.000000e+00> : vector<16x128xf32>
    %565 = tpu.matmul %564, %277, %cst_259 {dimension_numbers = #tpu.dot_dimension_numbers<[1], [0], [0], [1], [0, 0, 1, 1], [], []>} : vector<16x512xbf16>, vector<512x128xbf16>, vector<16x128xf32> -> vector<16x128xf32>
    %566 = vector.broadcast %274 : vector<1x128xf32> to vector<16x128xf32>
    %567 = arith.addf %565, %566 : vector<16x128xf32>
    %568 = arith.addf %567, %531 : vector<16x128xf32>
    %c2_260 = arith.constant 2 : index
    %c0_261 = arith.constant 0 : index
    %c0_262 = arith.constant 0 : index
    %569 = vector.load %arg11[%c2_260, %c0_261, %c0_262] : memref<4x16x128xf32, #tpu.memory_space<vmem>>, vector<1x16x128xf32>
    %570 = vector.shape_cast %569 : vector<1x16x128xf32> to vector<16x128xf32>
    %571 = vector.shape_cast %568 : vector<16x128xf32> to vector<1x16x128xf32>
    tpu.vector_store %arg11[%c2_260, %c0_261, %c0_262], %571 {strides = array<i32>} : memref<4x16x128xf32, #tpu.memory_space<vmem>>, vector<1x16x128xf32>,
    %c3_263 = arith.constant 3 : index
    %c0_264 = arith.constant 0 : index
    %c0_265 = arith.constant 0 : index
    %572 = vector.load %arg11[%c3_263, %c0_264, %c0_265] : memref<4x16x128xf32, #tpu.memory_space<vmem>>, vector<1x16x128xf32>
    %573 = vector.shape_cast %572 : vector<1x16x128xf32> to vector<16x128xf32>
    %cst_266 = arith.constant dense<0.000000e+00> : vector<16xf32>
    %574 = vector.multi_reduction <add>, %573, %cst_266 [1] : vector<16x128xf32> to vector<16xf32>
    %575 = vector.shape_cast %574 : vector<16xf32> to vector<16x1xf32>
    %cst_267 = arith.constant 1.280000e+02 : f32
    %576 = vector.broadcast %cst_267 : f32 to vector<16x1xf32>
    %577 = arith.divf %575, %576 : vector<16x1xf32>
    %578 = vector.broadcast %577 : vector<16x1xf32> to vector<16x128xf32>
    %579 = arith.subf %573, %578 : vector<16x128xf32>
    %580 = arith.mulf %579, %579 : vector<16x128xf32>
    %cst_268 = arith.constant dense<0.000000e+00> : vector<16xf32>
    %581 = vector.multi_reduction <add>, %580, %cst_268 [1] : vector<16x128xf32> to vector<16xf32>
    %582 = vector.shape_cast %581 : vector<16xf32> to vector<16x1xf32>
    %cst_269 = arith.constant 1.280000e+02 : f32
    %583 = vector.broadcast %cst_269 : f32 to vector<16x1xf32>
    %584 = arith.divf %582, %583 : vector<16x1xf32>
    %cst_270 = arith.constant 9.99999974E-6 : f32
    %585 = vector.broadcast %cst_270 : f32 to vector<16x1xf32>
    %586 = arith.addf %584, %585 : vector<16x1xf32>
    %587 = math.rsqrt %586 : vector<16x1xf32>
    %588 = vector.broadcast %587 : vector<16x1xf32> to vector<16x128xf32>
    %589 = arith.mulf %579, %588 : vector<16x128xf32>
    %590 = vector.broadcast %272 : vector<1x128xf32> to vector<16x128xf32>
    %591 = arith.mulf %589, %590 : vector<16x128xf32>
    %592 = vector.broadcast %273 : vector<1x128xf32> to vector<16x128xf32>
    %593 = arith.addf %591, %592 : vector<16x128xf32>
    %594 = arith.truncf %593 : vector<16x128xf32> to vector<16x128xbf16>
    %cst_271 = arith.constant dense<0.000000e+00> : vector<16x512xf32>
    %595 = tpu.matmul %594, %276, %cst_271 {dimension_numbers = #tpu.dot_dimension_numbers<[1], [0], [0], [1], [0, 0, 1, 1], [], []>} : vector<16x128xbf16>, vector<128x512xbf16>, vector<16x512xf32> -> vector<16x512xf32>
    %596 = vector.broadcast %275 : vector<1x512xf32> to vector<16x512xf32>
    %597 = arith.addf %595, %596 : vector<16x512xf32>
    %cst_272 = arith.constant 5.000000e-01 : f32
    %598 = vector.broadcast %cst_272 : f32 to vector<16x512xf32>
    %599 = arith.mulf %598, %597 : vector<16x512xf32>
    %cst_273 = arith.constant 0.707106769 : f32
    %600 = vector.broadcast %cst_273 : f32 to vector<16x512xf32>
    %601 = arith.mulf %597, %600 : vector<16x512xf32>
    %602 = math.erf %601 : vector<16x512xf32>
    %cst_274 = arith.constant 1.000000e+00 : f32
    %603 = vector.broadcast %cst_274 : f32 to vector<16x512xf32>
    %604 = arith.addf %603, %602 : vector<16x512xf32>
    %605 = arith.mulf %599, %604 : vector<16x512xf32>
    %606 = arith.truncf %605 : vector<16x512xf32> to vector<16x512xbf16>
    %cst_275 = arith.constant dense<0.000000e+00> : vector<16x128xf32>
    %607 = tpu.matmul %606, %277, %cst_275 {dimension_numbers = #tpu.dot_dimension_numbers<[1], [0], [0], [1], [0, 0, 1, 1], [], []>} : vector<16x512xbf16>, vector<512x128xbf16>, vector<16x128xf32> -> vector<16x128xf32>
    %608 = vector.broadcast %274 : vector<1x128xf32> to vector<16x128xf32>
    %609 = arith.addf %607, %608 : vector<16x128xf32>
    %610 = arith.addf %609, %573 : vector<16x128xf32>
    %c3_276 = arith.constant 3 : index
    %c0_277 = arith.constant 0 : index
    %c0_278 = arith.constant 0 : index
    %611 = vector.load %arg11[%c3_276, %c0_277, %c0_278] : memref<4x16x128xf32, #tpu.memory_space<vmem>>, vector<1x16x128xf32>
    %612 = vector.shape_cast %611 : vector<1x16x128xf32> to vector<16x128xf32>
    %613 = vector.shape_cast %610 : vector<16x128xf32> to vector<1x16x128xf32>
    tpu.vector_store %arg11[%c3_276, %c0_277, %c0_278], %613 {strides = array<i32>} : memref<4x16x128xf32, #tpu.memory_space<vmem>>, vector<1x16x128xf32>,
    return
  }
  func.func @transform_0(%arg0: i32) -> (i32, i32, i32) {
    %c0_i32 = arith.constant 0 : i32
    %c0_i32_0 = arith.constant 0 : i32
    %c0_i32_1 = arith.constant 0 : i32
    return %arg0, %c0_i32, %c0_i32_0 : i32, i32, i32
  }
  func.func @transform_1(%arg0: i32) -> (i32, i32, i32) {
    %c0_i32 = arith.constant 0 : i32
    %c0_i32_0 = arith.constant 0 : i32
    %c0_i32_1 = arith.constant 0 : i32
    return %arg0, %c0_i32, %c0_i32_0 : i32, i32, i32
  }
  func.func @transform_2(%arg0: i32) -> (i32, i32) {
    %c0_i32 = arith.constant 0 : i32
    %c0_i32_0 = arith.constant 0 : i32
    %c0_i32_1 = arith.constant 0 : i32
    return %c0_i32, %c0_i32_0 : i32, i32
  }
  func.func @transform_3(%arg0: i32) -> (i32, i32) {
    %c0_i32 = arith.constant 0 : i32
    %c0_i32_0 = arith.constant 0 : i32
    %c0_i32_1 = arith.constant 0 : i32
    return %c0_i32, %c0_i32_0 : i32, i32
  }
  func.func @transform_4(%arg0: i32) -> (i32, i32) {
    %c0_i32 = arith.constant 0 : i32
    %c0_i32_0 = arith.constant 0 : i32
    %c0_i32_1 = arith.constant 0 : i32
    return %c0_i32, %c0_i32_0 : i32, i32
  }
  func.func @transform_5(%arg0: i32) -> (i32, i32) {
    %c0_i32 = arith.constant 0 : i32
    %c0_i32_0 = arith.constant 0 : i32
    %c0_i32_1 = arith.constant 0 : i32
    return %c0_i32, %c0_i32_0 : i32, i32
  }
  func.func @transform_6(%arg0: i32) -> (i32, i32) {
    %c0_i32 = arith.constant 0 : i32
    %c0_i32_0 = arith.constant 0 : i32
    %c0_i32_1 = arith.constant 0 : i32
    return %c0_i32, %c0_i32_0 : i32, i32
  }
  func.func @transform_7(%arg0: i32) -> (i32, i32) {
    %c0_i32 = arith.constant 0 : i32
    %c0_i32_0 = arith.constant 0 : i32
    %c0_i32_1 = arith.constant 0 : i32
    return %c0_i32, %c0_i32_0 : i32, i32
  }
  func.func @transform_8(%arg0: i32) -> (i32, i32) {
    %c0_i32 = arith.constant 0 : i32
    %c0_i32_0 = arith.constant 0 : i32
    %c0_i32_1 = arith.constant 0 : i32
    return %c0_i32, %c0_i32_0 : i32, i32
  }
  func.func @transform_9(%arg0: i32) -> (i32, i32, i32) {
    %c0_i32 = arith.constant 0 : i32
    %c0_i32_0 = arith.constant 0 : i32
    %c0_i32_1 = arith.constant 0 : i32
    return %arg0, %c0_i32, %c0_i32_0 : i32, i32, i32
  }
  func.func @transform_10(%arg0: i32) -> (i32, i32, i32) {
    %c0_i32 = arith.constant 0 : i32
    %c0_i32_0 = arith.constant 0 : i32
    %c0_i32_1 = arith.constant 0 : i32
    return %arg0, %c0_i32, %c0_i32_0 : i32, i32, i32
  }
}

</mosaic_0001>

<llo_original>
// kernel: tpu_custom_call.1
$region0: #{tpu_custom_call.1}
  #allocation0 [shape = 'u32[]', space=smem, size = 0x4, offset = 0x4, fixed_abs, tag = 'smem constant byte address 0x4 - core index']
  #allocation1 [shape = 'u32[144,128]{1,0:T(1,128)}', space=vmem, size = 0x12000, scoped, tag = 'internal scratch']
  #allocation2 [shape = 'bf16[16,512]{1,0:T(8,128)(2,1)}', space=vmem, size = 0x4000, scoped, tag = 'scratch operand']
  %s0 = inlined_call_operand.hbm [shape: f32[4,16,128], index: 0, kind: input, shape index: {}]
  %s1 = inlined_call_operand.hbm [shape: f32[4,16,128], index: 1, kind: input, shape index: {}]
  %s2 = inlined_call_operand.vmem [shape: bf16[16,16], index: 2, kind: input, shape index: {}]
  %s3 = inlined_call_operand.vmem [shape: bf16[16,16], index: 3, kind: input, shape index: {}]
  %s4 = inlined_call_operand.vmem [shape: f32[16,2], index: 4, kind: input, shape index: {}]
  %s5 = inlined_call_operand.vmem [shape: f32[8,128], index: 5, kind: input, shape index: {}]
  %s6 = inlined_call_operand.hbm [shape: bf16[128,512], index: 6, kind: input, shape index: {}]
  %s7 = inlined_call_operand.vmem [shape: f32[1,512], index: 7, kind: input, shape index: {}]
  %s8 = inlined_call_operand.hbm [shape: bf16[512,128], index: 8, kind: input, shape index: {}]
  %s9 = inlined_call_operand.hbm [shape: f32[4,16,128], index: 9, kind: output, shape index: {0}]
  %s10 = inlined_call_operand.hbm [shape: f32[4,16,128], index: 10, kind: output, shape index: {1}]
  %11 = xla_tuple %s9, %s10
  %s12 = sld [smem:[#allocation0]]
  $region70: #{tpu_custom_call.1} parent=0
    _
  %s14 = ssub.s32 1, %s12
  %s15 = scalar_select 0, %s14, %s12
  $region1: #{tpu_custom_call.1} parent=0
    #allocation3 [shape = 'u8[32768]{0}', space=vmem, size = 0x8000, scoped, tag = 'input window, operand 0, single buffered']
    #allocation4 [shape = 's32[1]{0}', space=sflag, size = 0x4, scoped, tag = 'scoped memory for tpu_custom_call.1']
    #allocation5 [shape = 's32[1]{0}', space=sflag, size = 0x4, scoped, tag = 'scoped memory for tpu_custom_call.1']
    #allocation6 [shape = 'u8[32768]{0}', space=vmem, size = 0x8000, scoped, tag = 'input window, operand 1, single buffered']
    #allocation7 [shape = 's32[1]{0}', space=sflag, size = 0x4, scoped, tag = 'scoped memory for tpu_custom_call.1']
    #allocation8 [shape = 'u8[131072]{0}', space=vmem, size = 0x20000, scoped, tag = 'input window, operand 6, single buffered']
    #allocation9 [shape = 'u8[131072]{0}', space=vmem, size = 0x20000, scoped, tag = 'input window, operand 8, single buffered']
    #allocation10 [shape = 's32[1]{0}', space=sflag, size = 0x4, scoped, tag = 'scoped memory for tpu_custom_call.1']
    #allocation11 [shape = 'u8[32768]{0}', space=vmem, size = 0x8000, scoped, tag = 'output window, operand 0, single buffered']
    #allocation12 [shape = 'u8[32768]{0}', space=vmem, size = 0x8000, scoped, tag = 'output window, operand 1, single buffered']
    #allocation13 [shape = 's32[1]{0}', space=sflag, size = 0x4, scoped, tag = 'scoped memory for tpu_custom_call.1']
    %16 = vsyncpa [#allocation4], 0
    %17 = vsyncpa [#allocation7], 0
    %18 = vsyncpa [#allocation10], 0
    %19 = vsyncpa [#allocation5], 0
    %20 = vsyncpa [#allocation13], 0
    // Predicated region
    $region2: #{tpu_custom_call.1} parent=1 // pred_check
      _
    $region3: #{tpu_custom_call.1} parent=1 // pred_check_branch
      %22 = sbr.rel (0) target = $region5
    $region4: #{tpu_custom_call.1} parent=1 // pred_region
      %s24 = ssub.s32 1024, 1024
      %25 = vsyncadd [#allocation4], %s24
      %s26 = sshll.u32 [#allocation3], 4
      %s27 = int_to_ptr.vmem [resolvable:$true] %s26
      %32 = dma.hbm_to_vmem [thread:$0]  %s0, 1024, %s27, [#allocation4], 128, 128, 8
    $region5: #{tpu_custom_call.1} parent=1 // pred_fallthru
      _
    // Predicated region
    $region6: #{tpu_custom_call.1} parent=1 // pred_check
      _
    $region7: #{tpu_custom_call.1} parent=1 // pred_check_branch
      %34 = sbr.rel (0) target = $region9
    $region8: #{tpu_custom_call.1} parent=1 // pred_region
      %s36 = ssub.s32 1024, 1024
      %37 = vsyncadd [#allocation7], %s36
      %s38 = sshll.u32 [#allocation6], 4
      %s39 = int_to_ptr.vmem [resolvable:$true] %s38
      %44 = dma.hbm_to_vmem [thread:$0]  %s1, 1024, %s39, [#allocation7], 128, 128, 8
    $region9: #{tpu_custom_call.1} parent=1 // pred_fallthru
      _
    // Predicated region
    $region10: #{tpu_custom_call.1} parent=1 // pred_check
      _
    $region11: #{tpu_custom_call.1} parent=1 // pred_check_branch
      %46 = sbr.rel (0) target = $region13
    $region12: #{tpu_custom_call.1} parent=1 // pred_region
      _
    $region13: #{tpu_custom_call.1} parent=1 // pred_fallthru
      _
    // Predicated region
    $region14: #{tpu_custom_call.1} parent=1 // pred_check
      _
    $region15: #{tpu_custom_call.1} parent=1 // pred_check_branch
      %48 = sbr.rel (0) target = $region17
    $region16: #{tpu_custom_call.1} parent=1 // pred_region
      _
    $region17: #{tpu_custom_call.1} parent=1 // pred_fallthru
      _
    // Predicated region
    $region18: #{tpu_custom_call.1} parent=1 // pred_check
      _
    $region19: #{tpu_custom_call.1} parent=1 // pred_check_branch
      %50 = sbr.rel (0) target = $region21
    $region20: #{tpu_custom_call.1} parent=1 // pred_region
      _
    $region21: #{tpu_custom_call.1} parent=1 // pred_fallthru
      _
    // Predicated region
    $region22: #{tpu_custom_call.1} parent=1 // pred_check
      _
    $region23: #{tpu_custom_call.1} parent=1 // pred_check_branch
      %52 = sbr.rel (0) target = $region25
    $region24: #{tpu_custom_call.1} parent=1 // pred_region
      _
    $region25: #{tpu_custom_call.1} parent=1 // pred_fallthru
      _
    // Predicated region
    $region26: #{tpu_custom_call.1} parent=1 // pred_check
      _
    $region27: #{tpu_custom_call.1} parent=1 // pred_check_branch
      %54 = sbr.rel (0) target = $region29
    $region28: #{tpu_custom_call.1} parent=1 // pred_region
      %s56 = ssub.s32 4096, 4096
      %57 = vsyncadd [#allocation7], %s56
      %s58 = sshll.u32 [#allocation8], 4
      %s59 = int_to_ptr.vmem [resolvable:$true] %s58
      %64 = dma.hbm_to_vmem [thread:$0]  %s6, 4096, %s59, [#allocation7], 256, 256, 16
    $region29: #{tpu_custom_call.1} parent=1 // pred_fallthru
      _
    // Predicated region
    $region30: #{tpu_custom_call.1} parent=1 // pred_check
      _
    $region31: #{tpu_custom_call.1} parent=1 // pred_check_branch
      %66 = sbr.rel (0) target = $region33
    $region32: #{tpu_custom_call.1} parent=1 // pred_region
      _
    $region33: #{tpu_custom_call.1} parent=1 // pred_fallthru
      _
    // Predicated region
    $region34: #{tpu_custom_call.1} parent=1 // pred_check
      _
    $region35: #{tpu_custom_call.1} parent=1 // pred_check_branch
      %68 = sbr.rel (0) target = $region37
    $region36: #{tpu_custom_call.1} parent=1 // pred_region
      %s70 = ssub.s32 4096, 4096
      %71 = vsyncadd [#allocation10], %s70
      %s72 = sshll.u32 [#allocation9], 4
      %s73 = int_to_ptr.vmem [resolvable:$true] %s72
      %78 = dma.hbm_to_vmem [thread:$0]  %s8, 4096, %s73, [#allocation10], 64, 64, 4
    $region37: #{tpu_custom_call.1} parent=1 // pred_fallthru
      _
    // Predicated region
    $region38: #{tpu_custom_call.1} parent=1 // pred_check
      _
    $region39: #{tpu_custom_call.1} parent=1 // pred_check_branch
      %80 = sbr.rel (0) target = $region41
    $region40: #{tpu_custom_call.1} parent=1 // pred_region
      %81 = dma.done [#allocation4], 1024
    $region41: #{tpu_custom_call.1} parent=1 // pred_fallthru
      _
    // Predicated region
    $region42: #{tpu_custom_call.1} parent=1 // pred_check
      _
    $region43: #{tpu_custom_call.1} parent=1 // pred_check_branch
      %83 = sbr.rel (0) target = $region45
    $region44: #{tpu_custom_call.1} parent=1 // pred_region
      %84 = dma.done [#allocation7], 1024
    $region45: #{tpu_custom_call.1} parent=1 // pred_fallthru
      _
    // Predicated region
    $region46: #{tpu_custom_call.1} parent=1 // pred_check
      _
    $region47: #{tpu_custom_call.1} parent=1 // pred_check_branch
      %86 = sbr.rel (0) target = $region49
    $region48: #{tpu_custom_call.1} parent=1 // pred_region
      %87 = dma.done [#allocation7], 4096
    $region49: #{tpu_custom_call.1} parent=1 // pred_fallthru
      _
    // Predicated region
    $region50: #{tpu_custom_call.1} parent=1 // pred_check
      _
    $region51: #{tpu_custom_call.1} parent=1 // pred_check_branch
      %89 = sbr.rel (0) target = $region53
    $region52: #{tpu_custom_call.1} parent=1 // pred_region
      %90 = dma.done [#allocation10], 4096
    $region53: #{tpu_custom_call.1} parent=1 // pred_fallthru
      _
    %v92 = vld [vmem:[%s4] sm:$0xff]
    %v93 = vld [vmem:[%s4 + $0x8] sm:$0xff]
    %95 = vset.pattern.permute.xlu0 0
    %96 = vperm.xlu0 %95, %v92
    %v97 = vpop.permute.xlu0 %96
    %100 = vset.pattern.permute.xlu0 0
    %101 = vperm.xlu0 %100, %v93
    %v102 = vpop.permute.xlu0 %101
    %104 = vset.pattern.permute.xlu0 1
    %105 = vperm.xlu0 %104, %v92
    %v106 = vpop.permute.xlu0 %105
    %108 = vset.pattern.permute.xlu0 1
    %109 = vperm.xlu0 %108, %v93
    %v110 = vpop.permute.xlu0 %109
    %v112 = vld [vmem:[%s5] sm:$0x1]
    %v113 = vld [vmem:[%s5 + $0x1] sm:$0x1]
    %v114 = vld [vmem:[#allocation3] sm:$0xff]
    %v115 = vld [vmem:[#allocation3 + $0x8] sm:$0xff]
    %116 = vadd.xlane.f32.xlu0 %v114
    %v117 = vpop.xlane.xlu0 %116
    %118 = vadd.xlane.f32.xlu0 %v115
    %v119 = vpop.xlane.xlu0 %118
    %v120 = vrcp.pop 128.0
    %v121 = vmul.f32 %v117, %v120
    %v122 = vmul.f32 %v119, %v120
    %v123 = vsub.f32 %v114, %v121
    %v124 = vsub.f32 %v115, %v122
    %v125 = vmul.f32 %v123, %v123
    %v126 = vmul.f32 %v124, %v124
    %127 = vadd.xlane.f32.xlu0 %v125
    %v128 = vpop.xlane.xlu0 %127
    %129 = vadd.xlane.f32.xlu0 %v126
    %v130 = vpop.xlane.xlu0 %129
    %v131 = vmul.f32 %v128, %v120
    %v132 = vmul.f32 %v130, %v120
    %v133 = vadd.f32 %v131, 1e-05
    %v134 = vadd.f32 %v132, 1e-05
    %v135 = vrsqrt.pop %v133
    %v136 = vrsqrt.pop %v134
    %v137 = vmul.f32 %v123, %v135
    %v138 = vmul.f32 %v124, %v136
    %v139 = vlaneseq
    %v140 = vshrl.u32 %v139, 7
    %v141 = vsub.s32 0, %v140
    %v142 = vrot.slane %v112, %v141
    %v143 = vmul.f32 %v137, %v142
    %v144 = vmul.f32 %v138, %v142
    %v145 = vlaneseq
    %v146 = vshrl.u32 %v145, 7
    %v147 = vsub.s32 0, %v146
    %v148 = vrot.slane %v113, %v147
    %v149 = vadd.f32 %v143, %v148
    %v150 = vadd.f32 %v144, %v148
    %v151 = vpack.c.bf16 %v150, %v149
    %v153 = vunpack.c.l.b16 %v151
    %v154 = vunpack.c.h.b16 %v151
    %v155 = vpack.c.b16 %v153, %v153
    %v156 = vpack.c.b16 %v154, %v154
    %159 = vst [vmem:[#allocation2] sm:$0xf] %v155
    %160 = vst [vmem:[#allocation2 + $0x10] sm:$0xf] %v156
    %s161 = scalar_lea.vmem [#allocation3], 16
    %v162 = vld [vmem:[%s161] sm:$0xff]
    %v163 = vld [vmem:[%s161 + $0x8] sm:$0xff]
    %164 = vadd.xlane.f32.xlu0 %v162
    %v165 = vpop.xlane.xlu0 %164
    %166 = vadd.xlane.f32.xlu0 %v163
    %v167 = vpop.xlane.xlu0 %166
    %v168 = vmul.f32 %v165, %v120
    %v169 = vmul.f32 %v167, %v120
    %v170 = vsub.f32 %v162, %v168
    %v171 = vsub.f32 %v163, %v169
    %v172 = vmul.f32 %v170, %v170
    %v173 = vmul.f32 %v171, %v171
    %174 = vadd.xlane.f32.xlu0 %v172
    %v175 = vpop.xlane.xlu0 %174
    %176 = vadd.xlane.f32.xlu0 %v173
    %v177 = vpop.xlane.xlu0 %176
    %v178 = vmul.f32 %v175, %v120
    %v179 = vmul.f32 %v177, %v120
    %v180 = vadd.f32 %v178, 1e-05
    %v181 = vadd.f32 %v179, 1e-05
    %v182 = vrsqrt.pop %v180
    %v183 = vrsqrt.pop %v181
    %v184 = vmul.f32 %v170, %v182
    %v185 = vmul.f32 %v171, %v183
    %v186 = vmul.f32 %v184, %v142
    %v187 = vmul.f32 %v185, %v142
    %v188 = vadd.f32 %v186, %v148
    %v189 = vadd.f32 %v187, %v148
    %v190 = vpack.c.bf16 %v189, %v188
    %v192 = vunpack.c.l.b16 %v190
    %v193 = vunpack.c.h.b16 %v190
    %v194 = vpack.c.b16 %v192, %v192
    %v195 = vpack.c.b16 %v193, %v193
    %198 = vst [vmem:[#allocation2 + $0x4] sm:$0xf] %v194
    %199 = vst [vmem:[#allocation2 + $0x14] sm:$0xf] %v195
    %s200 = scalar_lea.vmem [#allocation3], 32
    %v201 = vld [vmem:[%s200] sm:$0xff]
    %v202 = vld [vmem:[%s200 + $0x8] sm:$0xff]
    %203 = vadd.xlane.f32.xlu0 %v201
    %v204 = vpop.xlane.xlu0 %203
    %205 = vadd.xlane.f32.xlu0 %v202
    %v206 = vpop.xlane.xlu0 %205
    %v207 = vmul.f32 %v204, %v120
    %v208 = vmul.f32 %v206, %v120
    %v209 = vsub.f32 %v201, %v207
    %v210 = vsub.f32 %v202, %v208
    %v211 = vmul.f32 %v209, %v209
    %v212 = vmul.f32 %v210, %v210
    %213 = vadd.xlane.f32.xlu0 %v211
    %v214 = vpop.xlane.xlu0 %213
    %215 = vadd.xlane.f32.xlu0 %v212
    %v216 = vpop.xlane.xlu0 %215
    %v217 = vmul.f32 %v214, %v120
    %v218 = vmul.f32 %v216, %v120
    %v219 = vadd.f32 %v217, 1e-05
    %v220 = vadd.f32 %v218, 1e-05
    %v221 = vrsqrt.pop %v219
    %v222 = vrsqrt.pop %v220
    %v223 = vmul.f32 %v209, %v221
    %v224 = vmul.f32 %v210, %v222
    %v225 = vmul.f32 %v223, %v142
    %v226 = vmul.f32 %v224, %v142
    %v227 = vadd.f32 %v225, %v148
    %v228 = vadd.f32 %v226, %v148
    %v229 = vpack.c.bf16 %v228, %v227
    %v231 = vunpack.c.l.b16 %v229
    %v232 = vunpack.c.h.b16 %v229
    %v233 = vpack.c.b16 %v231, %v231
    %v234 = vpack.c.b16 %v232, %v232
    %237 = vst [vmem:[#allocation2 + $0x8] sm:$0xf] %v233
    %238 = vst [vmem:[#allocation2 + $0x18] sm:$0xf] %v234
    %s239 = scalar_lea.vmem [#allocation3], 48
    %v240 = vld [vmem:[%s239] sm:$0xff]
    %v241 = vld [vmem:[%s239 + $0x8] sm:$0xff]
    %242 = vadd.xlane.f32.xlu0 %v240
    %v243 = vpop.xlane.xlu0 %242
    %244 = vadd.xlane.f32.xlu0 %v241
    %v245 = vpop.xlane.xlu0 %244
    %v246 = vmul.f32 %v243, %v120
    %v247 = vmul.f32 %v245, %v120
    %v248 = vsub.f32 %v240, %v246
    %v249 = vsub.f32 %v241, %v247
    %v250 = vmul.f32 %v248, %v248
    %v251 = vmul.f32 %v249, %v249
    %252 = vadd.xlane.f32.xlu0 %v250
    %v253 = vpop.xlane.xlu0 %252
    %254 = vadd.xlane.f32.xlu0 %v251
    %v255 = vpop.xlane.xlu0 %254
    %v256 = vmul.f32 %v253, %v120
    %v257 = vmul.f32 %v255, %v120
    %v258 = vadd.f32 %v256, 1e-05
    %v259 = vadd.f32 %v257, 1e-05
    %v260 = vrsqrt.pop %v258
    %v261 = vrsqrt.pop %v259
    %v262 = vmul.f32 %v248, %v260
    %v263 = vmul.f32 %v249, %v261
    %v264 = vmul.f32 %v262, %v142
    %v265 = vmul.f32 %v263, %v142
    %v266 = vadd.f32 %v264, %v148
    %v267 = vadd.f32 %v265, %v148
    %v268 = vpack.c.bf16 %v267, %v266
    %v270 = vunpack.c.l.b16 %v268
    %v271 = vunpack.c.h.b16 %v268
    %v272 = vpack.c.b16 %v270, %v270
    %v273 = vpack.c.b16 %v271, %v271
    %276 = vst [vmem:[#allocation2 + $0xc] sm:$0xf] %v272
    %277 = vst [vmem:[#allocation2 + $0x1c] sm:$0xf] %v273
    %v278 = vld [vmem:[%s2] sm:$0xf]
    %v279 = vld [vmem:[%s2 + $0x4] sm:$0xf]
    %v280 = vld [vmem:[#allocation2] sm:$0xff]
    %v281 = vld [vmem:[#allocation2 + $0x8] sm:$0xff]
    %v282 = vld [vmem:[#allocation2 + $0x10] sm:$0xff]
    %v283 = vld [vmem:[#allocation2 + $0x18] sm:$0xff]
    %v286 = vunpack.c.l.b16 %v278
    %v287 = vunpack.c.l.b16 %v279
    %v288 = vpack.c.b16 %v287, %v286
    %v293 = vunpack.c.l.b16 %v280
    %v294 = vunpack.c.h.b16 %v280
    %v295 = vunpack.c.l.b16 %v281
    %v296 = vunpack.c.h.b16 %v281
    %v297 = vunpack.c.l.b16 %v282
    %v298 = vunpack.c.h.b16 %v282
    %v299 = vunpack.c.l.b16 %v283
    %v300 = vunpack.c.h.b16 %v283
    %v301 = vpack.c.b16 %v297, %v293
    %v302 = vpack.c.b16 %v298, %v294
    %v303 = vpack.c.b16 %v299, %v295
    %v304 = vpack.c.b16 %v300, %v296
    %vm309 = vcmask 130048
    %v311 = vsel %vm309, %v288, 0
    %313 = vmatprep.subr.bf16.mxu0 0
    %314 = vmatpush1.bf16.msra.mxu0 0
    %315 = vmatprep.subr.bf16.mxu0 0
    %316 = vmatpush1.bf16.msra.mxu0 0
    %317 = vmatprep.subr.bf16.mxu0 0
    %318 = vmatpush1.bf16.msra.mxu0 0
    %319 = vmatprep.subr.bf16.mxu0 0
    %320 = vmatpush1.bf16.msra.mxu0 0
    %321 = vmatprep.subr.bf16.mxu0 0
    %322 = vmatpush1.bf16.msra.mxu0 0
    %323 = vmatprep.subr.bf16.mxu0 0
    %324 = vmatpush1.bf16.msra.mxu0 0
    %325 = vmatprep.subr.bf16.mxu0 0
    %326 = vmatpush1.bf16.msra.mxu0 0
    %327 = vmatprep.subr.bf16.mxu0 %v302
    %328 = vmatpush1.bf16.msra.mxu0 %v301
    %329 = vmatprep.subr.bf16.mxu0 0
    %330 = vmatpush2.bf16.msra.mxu0 0
    %331 = vmatprep.subr.bf16.mxu0 0
    %332 = vmatpush2.bf16.msra.mxu0 0
    %333 = vmatprep.subr.bf16.mxu0 0
    %334 = vmatpush2.bf16.msra.mxu0 0
    %335 = vmatprep.subr.bf16.mxu0 0
    %336 = vmatpush2.bf16.msra.mxu0 0
    %337 = vmatprep.subr.bf16.mxu0 0
    %338 = vmatpush2.bf16.msra.mxu0 0
    %339 = vmatprep.subr.bf16.mxu0 0
    %340 = vmatpush2.bf16.msra.mxu0 0
    %341 = vmatprep.subr.bf16.mxu0 0
    %342 = vmatpush2.bf16.msra.mxu0 0
    %343 = vmatprep.subr.bf16.mxu0 0
    %344 = vmatpush2.bf16.msra.mxu0 0
    %345 = vmatprep.mubr.bf16.mxu0 0
    %346 = vmatmul.mubr.bf16.gmra.mxu0 %v311
    %v347 = vpop.f32.mrf.mxu0
    %v348 = vadd.f32 0.0, %v347
    %v349 = vpop.f32.mrf.mxu0
    %v350 = vadd.f32 0.0, %v349
    %v351 = vpop.f32.mrf.mxu0
    %v352 = vadd.f32 0.0, %v351
    %v353 = vpop.f32.mrf.mxu0
    %v354 = vadd.f32 0.0, %v353
    %355 = vdwg.mxu0
    %356 = vmatprep.subr.bf16.mxu0 0
    %357 = vmatpush1.bf16.msra.mxu0 0
    %358 = vmatprep.subr.bf16.mxu0 0
    %359 = vmatpush1.bf16.msra.mxu0 0
    %360 = vmatprep.subr.bf16.mxu0 0
    %361 = vmatpush1.bf16.msra.mxu0 0
    %362 = vmatprep.subr.bf16.mxu0 0
    %363 = vmatpush1.bf16.msra.mxu0 0
    %364 = vmatprep.subr.bf16.mxu0 0
    %365 = vmatpush1.bf16.msra.mxu0 0
    %366 = vmatprep.subr.bf16.mxu0 0
    %367 = vmatpush1.bf16.msra.mxu0 0
    %368 = vmatprep.subr.bf16.mxu0 0
    %369 = vmatpush1.bf16.msra.mxu0 0
    %370 = vmatprep.subr.bf16.mxu0 %v304
    %371 = vmatpush1.bf16.msra.mxu0 %v303
    %372 = vmatprep.subr.bf16.mxu0 0
    %373 = vmatpush2.bf16.msra.mxu0 0
    %374 = vmatprep.subr.bf16.mxu0 0
    %375 = vmatpush2.bf16.msra.mxu0 0
    %376 = vmatprep.subr.bf16.mxu0 0
    %377 = vmatpush2.bf16.msra.mxu0 0
    %378 = vmatprep.subr.bf16.mxu0 0
    %379 = vmatpush2.bf16.msra.mxu0 0
    %380 = vmatprep.subr.bf16.mxu0 0
    %381 = vmatpush2.bf16.msra.mxu0 0
    %382 = vmatprep.subr.bf16.mxu0 0
    %383 = vmatpush2.bf16.msra.mxu0 0
    %384 = vmatprep.subr.bf16.mxu0 0
    %385 = vmatpush2.bf16.msra.mxu0 0
    %386 = vmatprep.subr.bf16.mxu0 0
    %387 = vmatpush2.bf16.msra.mxu0 0
    %388 = vmatprep.mubr.bf16.mxu0 0
    %389 = vmatmul.mubr.bf16.gmra.mxu0 %v311
    %v390 = vpop.f32.mrf.mxu0
    %v391 = vadd.f32 0.0, %v390
    %v392 = vpop.f32.mrf.mxu0
    %v393 = vadd.f32 0.0, %v392
    %v394 = vpop.f32.mrf.mxu0
    %v395 = vadd.f32 0.0, %v394
    %v396 = vpop.f32.mrf.mxu0
    %v397 = vadd.f32 0.0, %v396
    %398 = vdwg.mxu0
    %v399 = vadd.f32 %v348, %v97
    %v400 = vadd.f32 %v352, %v102
    %v401 = vld [vmem:[#allocation3] sm:$0xff]
    %v402 = vld [vmem:[#allocation3 + $0x8] sm:$0xff]
    %v403 = vadd.f32 %v399, %v401
    %v404 = vadd.f32 %v400, %v402
    %405 = vst [vmem:[#allocation11] sm:$0xff] %v403
    %406 = vst [vmem:[#allocation11 + $0x8] sm:$0xff] %v404
    %v407 = vadd.f32 %v350, %v97
    %v408 = vadd.f32 %v354, %v102
    %v409 = vld [vmem:[%s161] sm:$0xff]
    %v410 = vld [vmem:[%s161 + $0x8] sm:$0xff]
    %v411 = vadd.f32 %v407, %v409
    %v412 = vadd.f32 %v408, %v410
    %s413 = scalar_lea.vmem [#allocation11], 16
    %414 = vst [vmem:[%s413] sm:$0xff] %v411
    %415 = vst [vmem:[%s413 + $0x8] sm:$0xff] %v412
    %v416 = vadd.f32 %v391, %v97
    %v417 = vadd.f32 %v395, %v102
    %v418 = vld [vmem:[%s200] sm:$0xff]
    %v419 = vld [vmem:[%s200 + $0x8] sm:$0xff]
    %v420 = vadd.f32 %v416, %v418
    %v421 = vadd.f32 %v417, %v419
    %s422 = scalar_lea.vmem [#allocation11], 32
    %423 = vst [vmem:[%s422] sm:$0xff] %v420
    %424 = vst [vmem:[%s422 + $0x8] sm:$0xff] %v421
    %v425 = vadd.f32 %v393, %v97
    %v426 = vadd.f32 %v397, %v102
    %v427 = vld [vmem:[%s239] sm:$0xff]
    %v428 = vld [vmem:[%s239 + $0x8] sm:$0xff]
    %v429 = vadd.f32 %v425, %v427
    %v430 = vadd.f32 %v426, %v428
    %s431 = scalar_lea.vmem [#allocation11], 48
    %432 = vst [vmem:[%s431] sm:$0xff] %v429
    %433 = vst [vmem:[%s431 + $0x8] sm:$0xff] %v430
    %v434 = vld [vmem:[%s5 + $0x2] sm:$0x1]
    %v435 = vld [vmem:[%s5 + $0x3] sm:$0x1]
    %v436 = vld [vmem:[#allocation6] sm:$0xff]
    %v437 = vld [vmem:[#allocation6 + $0x8] sm:$0xff]
    %438 = vadd.xlane.f32.xlu0 %v436
    %v439 = vpop.xlane.xlu0 %438
    %440 = vadd.xlane.f32.xlu0 %v437
    %v441 = vpop.xlane.xlu0 %440
    %v442 = vmul.f32 %v439, %v120
    %v443 = vmul.f32 %v441, %v120
    %v444 = vsub.f32 %v436, %v442
    %v445 = vsub.f32 %v437, %v443
    %v446 = vmul.f32 %v444, %v444
    %v447 = vmul.f32 %v445, %v445
    %448 = vadd.xlane.f32.xlu0 %v446
    %v449 = vpop.xlane.xlu0 %448
    %450 = vadd.xlane.f32.xlu0 %v447
    %v451 = vpop.xlane.xlu0 %450
    %v452 = vmul.f32 %v449, %v120
    %v453 = vmul.f32 %v451, %v120
    %v454 = vadd.f32 %v452, 1e-05
    %v455 = vadd.f32 %v453, 1e-05
    %v456 = vrsqrt.pop %v454
    %v457 = vrsqrt.pop %v455
    %v458 = vmul.f32 %v444, %v456
    %v459 = vmul.f32 %v445, %v457
    %v460 = vlaneseq
    %v461 = vshrl.u32 %v460, 7
    %v462 = vsub.s32 0, %v461
    %v463 = vrot.slane %v434, %v462
    %v464 = vmul.f32 %v458, %v463
    %v465 = vmul.f32 %v459, %v463
    %v466 = vlaneseq
    %v467 = vshrl.u32 %v466, 7
    %v468 = vsub.s32 0, %v467
    %v469 = vrot.slane %v435, %v468
    %v470 = vadd.f32 %v464, %v469
    %v471 = vadd.f32 %v465, %v469
    %v472 = vpack.c.bf16 %v471, %v470
    %v474 = vunpack.c.l.b16 %v472
    %v475 = vunpack.c.h.b16 %v472
    %v476 = vpack.c.b16 %v474, %v474
    %v477 = vpack.c.b16 %v475, %v475
    %480 = vst [vmem:[#allocation2] sm:$0xf] %v476
    %481 = vst [vmem:[#allocation2 + $0x10] sm:$0xf] %v477
    %s482 = scalar_lea.vmem [#allocation6], 16
    %v483 = vld [vmem:[%s482] sm:$0xff]
    %v484 = vld [vmem:[%s482 + $0x8] sm:$0xff]
    %485 = vadd.xlane.f32.xlu0 %v483
    %v486 = vpop.xlane.xlu0 %485
    %487 = vadd.xlane.f32.xlu0 %v484
    %v488 = vpop.xlane.xlu0 %487
    %v489 = vmul.f32 %v486, %v120
    %v490 = vmul.f32 %v488, %v120
    %v491 = vsub.f32 %v483, %v489
    %v492 = vsub.f32 %v484, %v490
    %v493 = vmul.f32 %v491, %v491
    %v494 = vmul.f32 %v492, %v492
    %495 = vadd.xlane.f32.xlu0 %v493
    %v496 = vpop.xlane.xlu0 %495
    %497 = vadd.xlane.f32.xlu0 %v494
    %v498 = vpop.xlane.xlu0 %497
    %v499 = vmul.f32 %v496, %v120
    %v500 = vmul.f32 %v498, %v120
    %v501 = vadd.f32 %v499, 1e-05
    %v502 = vadd.f32 %v500, 1e-05
    %v503 = vrsqrt.pop %v501
    %v504 = vrsqrt.pop %v502
    %v505 = vmul.f32 %v491, %v503
    %v506 = vmul.f32 %v492, %v504
    %v507 = vmul.f32 %v505, %v463
    %v508 = vmul.f32 %v506, %v463
    %v509 = vadd.f32 %v507, %v469
    %v510 = vadd.f32 %v508, %v469
    %v511 = vpack.c.bf16 %v510, %v509
    %v513 = vunpack.c.l.b16 %v511
    %v514 = vunpack.c.h.b16 %v511
    %v515 = vpack.c.b16 %v513, %v513
    %v516 = vpack.c.b16 %v514, %v514
    %519 = vst [vmem:[#allocation2 + $0x4] sm:$0xf] %v515
    %520 = vst [vmem:[#allocation2 + $0x14] sm:$0xf] %v516
    %s521 = scalar_lea.vmem [#allocation6], 32
    %v522 = vld [vmem:[%s521] sm:$0xff]
    %v523 = vld [vmem:[%s521 + $0x8] sm:$0xff]
    %524 = vadd.xlane.f32.xlu0 %v522
    %v525 = vpop.xlane.xlu0 %524
    %526 = vadd.xlane.f32.xlu0 %v523
    %v527 = vpop.xlane.xlu0 %526
    %v528 = vmul.f32 %v525, %v120
    %v529 = vmul.f32 %v527, %v120
    %v530 = vsub.f32 %v522, %v528
    %v531 = vsub.f32 %v523, %v529
    %v532 = vmul.f32 %v530, %v530
    %v533 = vmul.f32 %v531, %v531
    %534 = vadd.xlane.f32.xlu0 %v532
    %v535 = vpop.xlane.xlu0 %534
    %536 = vadd.xlane.f32.xlu0 %v533
    %v537 = vpop.xlane.xlu0 %536
    %v538 = vmul.f32 %v535, %v120
    %v539 = vmul.f32 %v537, %v120
    %v540 = vadd.f32 %v538, 1e-05
    %v541 = vadd.f32 %v539, 1e-05
    %v542 = vrsqrt.pop %v540
    %v543 = vrsqrt.pop %v541
    %v544 = vmul.f32 %v530, %v542
    %v545 = vmul.f32 %v531, %v543
    %v546 = vmul.f32 %v544, %v463
    %v547 = vmul.f32 %v545, %v463
    %v548 = vadd.f32 %v546, %v469
    %v549 = vadd.f32 %v547, %v469
    %v550 = vpack.c.bf16 %v549, %v548
    %v552 = vunpack.c.l.b16 %v550
    %v553 = vunpack.c.h.b16 %v550
    %v554 = vpack.c.b16 %v552, %v552
    %v555 = vpack.c.b16 %v553, %v553
    %558 = vst [vmem:[#allocation2 + $0x8] sm:$0xf] %v554
    %559 = vst [vmem:[#allocation2 + $0x18] sm:$0xf] %v555
    %s560 = scalar_lea.vmem [#allocation6], 48
    %v561 = vld [vmem:[%s560] sm:$0xff]
    %v562 = vld [vmem:[%s560 + $0x8] sm:$0xff]
    %563 = vadd.xlane.f32.xlu0 %v561
    %v564 = vpop.xlane.xlu0 %563
    %565 = vadd.xlane.f32.xlu0 %v562
    %v566 = vpop.xlane.xlu0 %565
    %v567 = vmul.f32 %v564, %v120
    %v568 = vmul.f32 %v566, %v120
    %v569 = vsub.f32 %v561, %v567
    %v570 = vsub.f32 %v562, %v568
    %v571 = vmul.f32 %v569, %v569
    %v572 = vmul.f32 %v570, %v570
    %573 = vadd.xlane.f32.xlu0 %v571
    %v574 = vpop.xlane.xlu0 %573
    %575 = vadd.xlane.f32.xlu0 %v572
    %v576 = vpop.xlane.xlu0 %575
    %v577 = vmul.f32 %v574, %v120
    %v578 = vmul.f32 %v576, %v120
    %v579 = vadd.f32 %v577, 1e-05
    %v580 = vadd.f32 %v578, 1e-05
    %v581 = vrsqrt.pop %v579
    %v582 = vrsqrt.pop %v580
    %v583 = vmul.f32 %v569, %v581
    %v584 = vmul.f32 %v570, %v582
    %v585 = vmul.f32 %v583, %v463
    %v586 = vmul.f32 %v584, %v463
    %v587 = vadd.f32 %v585, %v469
    %v588 = vadd.f32 %v586, %v469
    %v589 = vpack.c.bf16 %v588, %v587
    %v591 = vunpack.c.l.b16 %v589
    %v592 = vunpack.c.h.b16 %v589
    %v593 = vpack.c.b16 %v591, %v591
    %v594 = vpack.c.b16 %v592, %v592
    %597 = vst [vmem:[#allocation2 + $0xc] sm:$0xf] %v593
    %598 = vst [vmem:[#allocation2 + $0x1c] sm:$0xf] %v594
    %v599 = vld [vmem:[%s3] sm:$0xf]
    %v600 = vld [vmem:[%s3 + $0x4] sm:$0xf]
    %v601 = vld [vmem:[#allocation2] sm:$0xff]
    %v602 = vld [vmem:[#allocation2 + $0x8] sm:$0xff]
    %v603 = vld [vmem:[#allocation2 + $0x10] sm:$0xff]
    %v604 = vld [vmem:[#allocation2 + $0x18] sm:$0xff]
    %v607 = vunpack.c.l.b16 %v599
    %v608 = vunpack.c.l.b16 %v600
    %v609 = vpack.c.b16 %v608, %v607
    %v614 = vunpack.c.l.b16 %v601
    %v615 = vunpack.c.h.b16 %v601
    %v616 = vunpack.c.l.b16 %v602
    %v617 = vunpack.c.h.b16 %v602
    %v618 = vunpack.c.l.b16 %v603
    %v619 = vunpack.c.h.b16 %v603
    %v620 = vunpack.c.l.b16 %v604
    %v621 = vunpack.c.h.b16 %v604
    %v622 = vpack.c.b16 %v618, %v614
    %v623 = vpack.c.b16 %v619, %v615
    %v624 = vpack.c.b16 %v620, %v616
    %v625 = vpack.c.b16 %v621, %v617
    %v631 = vsel %vm309, %v609, 0
    %633 = vmatprep.subr.bf16.mxu0 0
    %634 = vmatpush1.bf16.msra.mxu0 0
    %635 = vmatprep.subr.bf16.mxu0 0
    %636 = vmatpush1.bf16.msra.mxu0 0
    %637 = vmatprep.subr.bf16.mxu0 0
    %638 = vmatpush1.bf16.msra.mxu0 0
    %639 = vmatprep.subr.bf16.mxu0 0
    %640 = vmatpush1.bf16.msra.mxu0 0
    %641 = vmatprep.subr.bf16.mxu0 0
    %642 = vmatpush1.bf16.msra.mxu0 0
    %643 = vmatprep.subr.bf16.mxu0 0
    %644 = vmatpush1.bf16.msra.mxu0 0
    %645 = vmatprep.subr.bf16.mxu0 0
    %646 = vmatpush1.bf16.msra.mxu0 0
    %647 = vmatprep.subr.bf16.mxu0 %v623
    %648 = vmatpush1.bf16.msra.mxu0 %v622
    %649 = vmatprep.subr.bf16.mxu0 0
    %650 = vmatpush2.bf16.msra.mxu0 0
    %651 = vmatprep.subr.bf16.mxu0 0
    %652 = vmatpush2.bf16.msra.mxu0 0
    %653 = vmatprep.subr.bf16.mxu0 0
    %654 = vmatpush2.bf16.msra.mxu0 0
    %655 = vmatprep.subr.bf16.mxu0 0
    %656 = vmatpush2.bf16.msra.mxu0 0
    %657 = vmatprep.subr.bf16.mxu0 0
    %658 = vmatpush2.bf16.msra.mxu0 0
    %659 = vmatprep.subr.bf16.mxu0 0
    %660 = vmatpush2.bf16.msra.mxu0 0
    %661 = vmatprep.subr.bf16.mxu0 0
    %662 = vmatpush2.bf16.msra.mxu0 0
    %663 = vmatprep.subr.bf16.mxu0 0
    %664 = vmatpush2.bf16.msra.mxu0 0
    %665 = vmatprep.mubr.bf16.mxu0 0
    %666 = vmatmul.mubr.bf16.gmra.mxu0 %v631
    %v667 = vpop.f32.mrf.mxu0
    %v668 = vadd.f32 0.0, %v667
    %v669 = vpop.f32.mrf.mxu0
    %v670 = vadd.f32 0.0, %v669
    %v671 = vpop.f32.mrf.mxu0
    %v672 = vadd.f32 0.0, %v671
    %v673 = vpop.f32.mrf.mxu0
    %v674 = vadd.f32 0.0, %v673
    %675 = vdwg.mxu0
    %676 = vmatprep.subr.bf16.mxu0 0
    %677 = vmatpush1.bf16.msra.mxu0 0
    %678 = vmatprep.subr.bf16.mxu0 0
    %679 = vmatpush1.bf16.msra.mxu0 0
    %680 = vmatprep.subr.bf16.mxu0 0
    %681 = vmatpush1.bf16.msra.mxu0 0
    %682 = vmatprep.subr.bf16.mxu0 0
    %683 = vmatpush1.bf16.msra.mxu0 0
    %684 = vmatprep.subr.bf16.mxu0 0
    %685 = vmatpush1.bf16.msra.mxu0 0
    %686 = vmatprep.subr.bf16.mxu0 0
    %687 = vmatpush1.bf16.msra.mxu0 0
    %688 = vmatprep.subr.bf16.mxu0 0
    %689 = vmatpush1.bf16.msra.mxu0 0
    %690 = vmatprep.subr.bf16.mxu0 %v625
    %691 = vmatpush1.bf16.msra.mxu0 %v624
    %692 = vmatprep.subr.bf16.mxu0 0
    %693 = vmatpush2.bf16.msra.mxu0 0
    %694 = vmatprep.subr.bf16.mxu0 0
    %695 = vmatpush2.bf16.msra.mxu0 0
    %696 = vmatprep.subr.bf16.mxu0 0
    %697 = vmatpush2.bf16.msra.mxu0 0
    %698 = vmatprep.subr.bf16.mxu0 0
    %699 = vmatpush2.bf16.msra.mxu0 0
    %700 = vmatprep.subr.bf16.mxu0 0
    %701 = vmatpush2.bf16.msra.mxu0 0
    %702 = vmatprep.subr.bf16.mxu0 0
    %703 = vmatpush2.bf16.msra.mxu0 0
    %704 = vmatprep.subr.bf16.mxu0 0
    %705 = vmatpush2.bf16.msra.mxu0 0
    %706 = vmatprep.subr.bf16.mxu0 0
    %707 = vmatpush2.bf16.msra.mxu0 0
    %708 = vmatprep.mubr.bf16.mxu0 0
    %709 = vmatmul.mubr.bf16.gmra.mxu0 %v631
    %v710 = vpop.f32.mrf.mxu0
    %v711 = vadd.f32 0.0, %v710
    %v712 = vpop.f32.mrf.mxu0
    %v713 = vadd.f32 0.0, %v712
    %v714 = vpop.f32.mrf.mxu0
    %v715 = vadd.f32 0.0, %v714
    %v716 = vpop.f32.mrf.mxu0
    %v717 = vadd.f32 0.0, %v716
    %718 = vdwg.mxu0
    %v719 = vadd.f32 %v668, %v106
    %v720 = vadd.f32 %v672, %v110
    %v721 = vld [vmem:[#allocation6] sm:$0xff]
    %v722 = vld [vmem:[#allocation6 + $0x8] sm:$0xff]
    %v723 = vadd.f32 %v719, %v721
    %v724 = vadd.f32 %v720, %v722
    %725 = vst [vmem:[#allocation12] sm:$0xff] %v723
    %726 = vst [vmem:[#allocation12 + $0x8] sm:$0xff] %v724
    %v727 = vadd.f32 %v670, %v106
    %v728 = vadd.f32 %v674, %v110
    %v729 = vld [vmem:[%s482] sm:$0xff]
    %v730 = vld [vmem:[%s482 + $0x8] sm:$0xff]
    %v731 = vadd.f32 %v727, %v729
    %v732 = vadd.f32 %v728, %v730
    %s733 = scalar_lea.vmem [#allocation12], 16
    %734 = vst [vmem:[%s733] sm:$0xff] %v731
    %735 = vst [vmem:[%s733 + $0x8] sm:$0xff] %v732
    %v736 = vadd.f32 %v711, %v106
    %v737 = vadd.f32 %v715, %v110
    %v738 = vld [vmem:[%s521] sm:$0xff]
    %v739 = vld [vmem:[%s521 + $0x8] sm:$0xff]
    %v740 = vadd.f32 %v736, %v738
    %v741 = vadd.f32 %v737, %v739
    %s742 = scalar_lea.vmem [#allocation12], 32
    %743 = vst [vmem:[%s742] sm:$0xff] %v740
    %744 = vst [vmem:[%s742 + $0x8] sm:$0xff] %v741
    %v745 = vadd.f32 %v713, %v106
    %v746 = vadd.f32 %v717, %v110
    %v747 = vld [vmem:[%s560] sm:$0xff]
    %v748 = vld [vmem:[%s560 + $0x8] sm:$0xff]
    %v749 = vadd.f32 %v745, %v747
    %v750 = vadd.f32 %v746, %v748
    %s751 = scalar_lea.vmem [#allocation12], 48
    %752 = vst [vmem:[%s751] sm:$0xff] %v749
    %753 = vst [vmem:[%s751 + $0x8] sm:$0xff] %v750
    %v754 = vld [vmem:[%s5 + $0x4] sm:$0x1]
    %v755 = vld [vmem:[%s5 + $0x5] sm:$0x1]
    %v756 = vld [vmem:[%s5 + $0x6] sm:$0x1]
    %v757 = vld [vmem:[%s7] sm:$0xf]
    %v758 = vld [vmem:[#allocation8] sm:$0xff]
    %v759 = vld [vmem:[#allocation8 + $0x8] sm:$0xff]
    %v760 = vld [vmem:[#allocation8 + $0x10] sm:$0xff]
    %v761 = vld [vmem:[#allocation8 + $0x18] sm:$0xff]
    %v762 = vld [vmem:[#allocation8 + $0x20] sm:$0xff]
    %v763 = vld [vmem:[#allocation8 + $0x28] sm:$0xff]
    %v764 = vld [vmem:[#allocation8 + $0x30] sm:$0xff]
    %v765 = vld [vmem:[#allocation8 + $0x38] sm:$0xff]
    %v766 = vld [vmem:[#allocation8 + $0x40] sm:$0xff]
    %v767 = vld [vmem:[#allocation8 + $0x48] sm:$0xff]
    %v768 = vld [vmem:[#allocation8 + $0x50] sm:$0xff]
    %v769 = vld [vmem:[#allocation8 + $0x58] sm:$0xff]
    %v770 = vld [vmem:[#allocation8 + $0x60] sm:$0xff]
    %v771 = vld [vmem:[#allocation8 + $0x68] sm:$0xff]
    %v772 = vld [vmem:[#allocation8 + $0x70] sm:$0xff]
    %v773 = vld [vmem:[#allocation8 + $0x78] sm:$0xff]
    %v774 = vld [vmem:[#allocation8 + $0x80] sm:$0xff]
    %v775 = vld [vmem:[#allocation8 + $0x88] sm:$0xff]
    %v776 = vld [vmem:[#allocation8 + $0x90] sm:$0xff]
    %v777 = vld [vmem:[#allocation8 + $0x98] sm:$0xff]
    %v778 = vld [vmem:[#allocation8 + $0xa0] sm:$0xff]
    %v779 = vld [vmem:[#allocation8 + $0xa8] sm:$0xff]
    %v780 = vld [vmem:[#allocation8 + $0xb0] sm:$0xff]
    %v781 = vld [vmem:[#allocation8 + $0xb8] sm:$0xff]
    %v782 = vld [vmem:[#allocation8 + $0xc0] sm:$0xff]
    %v783 = vld [vmem:[#allocation8 + $0xc8] sm:$0xff]
    %v784 = vld [vmem:[#allocation8 + $0xd0] sm:$0xff]
    %v785 = vld [vmem:[#allocation8 + $0xd8] sm:$0xff]
    %v786 = vld [vmem:[#allocation8 + $0xe0] sm:$0xff]
    %v787 = vld [vmem:[#allocation8 + $0xe8] sm:$0xff]
    %v788 = vld [vmem:[#allocation8 + $0xf0] sm:$0xff]
    %v789 = vld [vmem:[#allocation8 + $0xf8] sm:$0xff]
    %v790 = vld [vmem:[#allocation9] sm:$0xf]
    %v791 = vld [vmem:[#allocation9 + $0x4] sm:$0xf]
    %v792 = vld [vmem:[#allocation9 + $0x8] sm:$0xf]
    %v793 = vld [vmem:[#allocation9 + $0xc] sm:$0xf]
    %v794 = vld [vmem:[#allocation9 + $0x10] sm:$0xf]
    %v795 = vld [vmem:[#allocation9 + $0x14] sm:$0xf]
    %v796 = vld [vmem:[#allocation9 + $0x18] sm:$0xf]
    %v797 = vld [vmem:[#allocation9 + $0x1c] sm:$0xf]
    %v798 = vld [vmem:[#allocation9 + $0x20] sm:$0xf]
    %v799 = vld [vmem:[#allocation9 + $0x24] sm:$0xf]
    %v800 = vld [vmem:[#allocation9 + $0x28] sm:$0xf]
    %v801 = vld [vmem:[#allocation9 + $0x2c] sm:$0xf]
    %v802 = vld [vmem:[#allocation9 + $0x30] sm:$0xf]
    %v803 = vld [vmem:[#allocation9 + $0x34] sm:$0xf]
    %v804 = vld [vmem:[#allocation9 + $0x38] sm:$0xf]
    %v805 = vld [vmem:[#allocation9 + $0x3c] sm:$0xf]
    %v806 = vld [vmem:[#allocation9 + $0x40] sm:$0xf]
    %v807 = vld [vmem:[#allocation9 + $0x44] sm:$0xf]
    %v808 = vld [vmem:[#allocation9 + $0x48] sm:$0xf]
    %v809 = vld [vmem:[#allocation9 + $0x4c] sm:$0xf]
    %v810 = vld [vmem:[#allocation9 + $0x50] sm:$0xf]
    %v811 = vld [vmem:[#allocation9 + $0x54] sm:$0xf]
    %v812 = vld [vmem:[#allocation9 + $0x58] sm:$0xf]
    %v813 = vld [vmem:[#allocation9 + $0x5c] sm:$0xf]
    %v814 = vld [vmem:[#allocation9 + $0x60] sm:$0xf]
    %v815 = vld [vmem:[#allocation9 + $0x64] sm:$0xf]
    %v816 = vld [vmem:[#allocation9 + $0x68] sm:$0xf]
    %v817 = vld [vmem:[#allocation9 + $0x6c] sm:$0xf]
    %v818 = vld [vmem:[#allocation9 + $0x70] sm:$0xf]
    %v819 = vld [vmem:[#allocation9 + $0x74] sm:$0xf]
    %v820 = vld [vmem:[#allocation9 + $0x78] sm:$0xf]
    %v821 = vld [vmem:[#allocation9 + $0x7c] sm:$0xf]
    %v822 = vld [vmem:[#allocation9 + $0x80] sm:$0xf]
    %v823 = vld [vmem:[#allocation9 + $0x84] sm:$0xf]
    %v824 = vld [vmem:[#allocation9 + $0x88] sm:$0xf]
    %v825 = vld [vmem:[#allocation9 + $0x8c] sm:$0xf]
    %v826 = vld [vmem:[#allocation9 + $0x90] sm:$0xf]
    %v827 = vld [vmem:[#allocation9 + $0x94] sm:$0xf]
    %v828 = vld [vmem:[#allocation9 + $0x98] sm:$0xf]
    %v829 = vld [vmem:[#allocation9 + $0x9c] sm:$0xf]
    %v830 = vld [vmem:[#allocation9 + $0xa0] sm:$0xf]
    %v831 = vld [vmem:[#allocation9 + $0xa4] sm:$0xf]
    %v832 = vld [vmem:[#allocation9 + $0xa8] sm:$0xf]
    %v833 = vld [vmem:[#allocation9 + $0xac] sm:$0xf]
    %v834 = vld [vmem:[#allocation9 + $0xb0] sm:$0xf]
    %v835 = vld [vmem:[#allocation9 + $0xb4] sm:$0xf]
    %v836 = vld [vmem:[#allocation9 + $0xb8] sm:$0xf]
    %v837 = vld [vmem:[#allocation9 + $0xbc] sm:$0xf]
    %v838 = vld [vmem:[#allocation9 + $0xc0] sm:$0xf]
    %v839 = vld [vmem:[#allocation9 + $0xc4] sm:$0xf]
    %v840 = vld [vmem:[#allocation9 + $0xc8] sm:$0xf]
    %v841 = vld [vmem:[#allocation9 + $0xcc] sm:$0xf]
    %v842 = vld [vmem:[#allocation9 + $0xd0] sm:$0xf]
    %v843 = vld [vmem:[#allocation9 + $0xd4] sm:$0xf]
    %v844 = vld [vmem:[#allocation9 + $0xd8] sm:$0xf]
    %v845 = vld [vmem:[#allocation9 + $0xdc] sm:$0xf]
    %v846 = vld [vmem:[#allocation9 + $0xe0] sm:$0xf]
    %v847 = vld [vmem:[#allocation9 + $0xe4] sm:$0xf]
    %v848 = vld [vmem:[#allocation9 + $0xe8] sm:$0xf]
    %v849 = vld [vmem:[#allocation9 + $0xec] sm:$0xf]
    %v850 = vld [vmem:[#allocation9 + $0xf0] sm:$0xf]
    %v851 = vld [vmem:[#allocation9 + $0xf4] sm:$0xf]
    %v852 = vld [vmem:[#allocation9 + $0xf8] sm:$0xf]
    %v853 = vld [vmem:[#allocation9 + $0xfc] sm:$0xf]
    %v854 = vld [vmem:[#allocation11] sm:$0xff]
    %v855 = vld [vmem:[#allocation11 + $0x8] sm:$0xff]
    %856 = vadd.xlane.f32.xlu0 %v854
    %v857 = vpop.xlane.xlu0 %856
    %858 = vadd.xlane.f32.xlu0 %v855
    %v859 = vpop.xlane.xlu0 %858
    %v860 = vmul.f32 %v857, %v120
    %v861 = vmul.f32 %v859, %v120
    %v862 = vsub.f32 %v854, %v860
    %v863 = vsub.f32 %v855, %v861
    %v864 = vmul.f32 %v862, %v862
    %v865 = vmul.f32 %v863, %v863
    %866 = vadd.xlane.f32.xlu0 %v864
    %v867 = vpop.xlane.xlu0 %866
    %868 = vadd.xlane.f32.xlu0 %v865
    %v869 = vpop.xlane.xlu0 %868
    %v870 = vmul.f32 %v867, %v120
    %v871 = vmul.f32 %v869, %v120
    %v872 = vadd.f32 %v870, 1e-05
    %v873 = vadd.f32 %v871, 1e-05
    %v874 = vrsqrt.pop %v872
    %v875 = vrsqrt.pop %v873
    %v876 = vmul.f32 %v862, %v874
    %v877 = vmul.f32 %v863, %v875
    %v878 = vlaneseq
    %v879 = vshrl.u32 %v878, 7
    %v880 = vsub.s32 0, %v879
    %v881 = vrot.slane %v754, %v880
    %v882 = vmul.f32 %v876, %v881
    %v883 = vmul.f32 %v877, %v881
    %v884 = vlaneseq
    %v885 = vshrl.u32 %v884, 7
    %v886 = vsub.s32 0, %v885
    %v887 = vrot.slane %v755, %v886
    %v888 = vadd.f32 %v882, %v887
    %v889 = vadd.f32 %v883, %v887
    %v890 = vpack.c.bf16 %v889, %v888
    %v892 = vlaneseq
    %v893 = vshrl.u32 %v892, 7
    %v894 = vsub.s32 0, %v893
    %v895 = vrot.slane %v757, %v894
    %v896 = vlaneseq
    %v897 = vshrl.u32 %v896, 7
    %v898 = vsub.s32 1, %v897
    %v899 = vrot.slane %v757, %v898
    %v900 = vlaneseq
    %v901 = vshrl.u32 %v900, 7
    %v902 = vsub.s32 2, %v901
    %v903 = vrot.slane %v757, %v902
    %v904 = vlaneseq
    %v905 = vshrl.u32 %v904, 7
    %v906 = vsub.s32 3, %v905
    %v907 = vrot.slane %v757, %v906
    %v944 = vunpack.c.l.b16 %v758
    %v945 = vunpack.c.h.b16 %v758
    %v946 = vunpack.c.l.b16 %v759
    %v947 = vunpack.c.h.b16 %v759
    %v948 = vunpack.c.l.b16 %v760
    %v949 = vunpack.c.h.b16 %v760
    %v950 = vunpack.c.l.b16 %v761
    %v951 = vunpack.c.h.b16 %v761
    %v952 = vunpack.c.l.b16 %v762
    %v953 = vunpack.c.h.b16 %v762
    %v954 = vunpack.c.l.b16 %v763
    %v955 = vunpack.c.h.b16 %v763
    %v956 = vunpack.c.l.b16 %v764
    %v957 = vunpack.c.h.b16 %v764
    %v958 = vunpack.c.l.b16 %v765
    %v959 = vunpack.c.h.b16 %v765
    %v960 = vunpack.c.l.b16 %v766
    %v961 = vunpack.c.h.b16 %v766
    %v962 = vunpack.c.l.b16 %v767
    %v963 = vunpack.c.h.b16 %v767
    %v964 = vunpack.c.l.b16 %v768
    %v965 = vunpack.c.h.b16 %v768
    %v966 = vunpack.c.l.b16 %v769
    %v967 = vunpack.c.h.b16 %v769
    %v968 = vunpack.c.l.b16 %v770
    %v969 = vunpack.c.h.b16 %v770
    %v970 = vunpack.c.l.b16 %v771
    %v971 = vunpack.c.h.b16 %v771
    %v972 = vunpack.c.l.b16 %v772
    %v973 = vunpack.c.h.b16 %v772
    %v974 = vunpack.c.l.b16 %v773
    %v975 = vunpack.c.h.b16 %v773
    %v976 = vunpack.c.l.b16 %v774
    %v977 = vunpack.c.h.b16 %v774
    %v978 = vunpack.c.l.b16 %v775
    %v979 = vunpack.c.h.b16 %v775
    %v980 = vunpack.c.l.b16 %v776
    %v981 = vunpack.c.h.b16 %v776
    %v982 = vunpack.c.l.b16 %v777
    %v983 = vunpack.c.h.b16 %v777
    %v984 = vunpack.c.l.b16 %v778
    %v985 = vunpack.c.h.b16 %v778
    %v986 = vunpack.c.l.b16 %v779
    %v987 = vunpack.c.h.b16 %v779
    %v988 = vunpack.c.l.b16 %v780
    %v989 = vunpack.c.h.b16 %v780
    %v990 = vunpack.c.l.b16 %v781
    %v991 = vunpack.c.h.b16 %v781
    %v992 = vunpack.c.l.b16 %v782
    %v993 = vunpack.c.h.b16 %v782
    %v994 = vunpack.c.l.b16 %v783
    %v995 = vunpack.c.h.b16 %v783
    %v996 = vunpack.c.l.b16 %v784
    %v997 = vunpack.c.h.b16 %v784
    %v998 = vunpack.c.l.b16 %v785
    %v999 = vunpack.c.h.b16 %v785
    %v1000 = vunpack.c.l.b16 %v786
    %v1001 = vunpack.c.h.b16 %v786
    %v1002 = vunpack.c.l.b16 %v787
    %v1003 = vunpack.c.h.b16 %v787
    %v1004 = vunpack.c.l.b16 %v788
    %v1005 = vunpack.c.h.b16 %v788
    %v1006 = vunpack.c.l.b16 %v789
    %v1007 = vunpack.c.h.b16 %v789
    %v1008 = vpack.c.b16 %v948, %v944
    %v1009 = vpack.c.b16 %v949, %v945
    %v1010 = vpack.c.b16 %v950, %v946
    %v1011 = vpack.c.b16 %v951, %v947
    %v1012 = vpack.c.b16 %v956, %v952
    %v1013 = vpack.c.b16 %v957, %v953
    %v1014 = vpack.c.b16 %v958, %v954
    %v1015 = vpack.c.b16 %v959, %v955
    %v1016 = vpack.c.b16 %v964, %v960
    %v1017 = vpack.c.b16 %v965, %v961
    %v1018 = vpack.c.b16 %v966, %v962
    %v1019 = vpack.c.b16 %v967, %v963
    %v1020 = vpack.c.b16 %v972, %v968
    %v1021 = vpack.c.b16 %v973, %v969
    %v1022 = vpack.c.b16 %v974, %v970
    %v1023 = vpack.c.b16 %v975, %v971
    %v1024 = vpack.c.b16 %v980, %v976
    %v1025 = vpack.c.b16 %v981, %v977
    %v1026 = vpack.c.b16 %v982, %v978
    %v1027 = vpack.c.b16 %v983, %v979
    %v1028 = vpack.c.b16 %v988, %v984
    %v1029 = vpack.c.b16 %v989, %v985
    %v1030 = vpack.c.b16 %v990, %v986
    %v1031 = vpack.c.b16 %v991, %v987
    %v1032 = vpack.c.b16 %v996, %v992
    %v1033 = vpack.c.b16 %v997, %v993
    %v1034 = vpack.c.b16 %v998, %v994
    %v1035 = vpack.c.b16 %v999, %v995
    %v1036 = vpack.c.b16 %v1004, %v1000
    %v1037 = vpack.c.b16 %v1005, %v1001
    %v1038 = vpack.c.b16 %v1006, %v1002
    %v1039 = vpack.c.b16 %v1007, %v1003
    %1072 = vmatprep.subr.bf16.mxu0 %v1037
    %1073 = vmatpush1.bf16.msra.mxu0 %v1036
    %1074 = vmatprep.subr.bf16.mxu0 %v1033
    %1075 = vmatpush1.bf16.msra.mxu0 %v1032
    %1076 = vmatprep.subr.bf16.mxu0 %v1029
    %1077 = vmatpush1.bf16.msra.mxu0 %v1028
    %1078 = vmatprep.subr.bf16.mxu0 %v1025
    %1079 = vmatpush1.bf16.msra.mxu0 %v1024
    %1080 = vmatprep.subr.bf16.mxu0 %v1021
    %1081 = vmatpush1.bf16.msra.mxu0 %v1020
    %1082 = vmatprep.subr.bf16.mxu0 %v1017
    %1083 = vmatpush1.bf16.msra.mxu0 %v1016
    %1084 = vmatprep.subr.bf16.mxu0 %v1013
    %1085 = vmatpush1.bf16.msra.mxu0 %v1012
    %1086 = vmatprep.subr.bf16.mxu0 %v1009
    %1087 = vmatpush1.bf16.msra.mxu0 %v1008
    %1088 = vmatprep.subr.bf16.mxu0 0
    %1089 = vmatpush2.bf16.msra.mxu0 0
    %1090 = vmatprep.subr.bf16.mxu0 0
    %1091 = vmatpush2.bf16.msra.mxu0 0
    %1092 = vmatprep.subr.bf16.mxu0 0
    %1093 = vmatpush2.bf16.msra.mxu0 0
    %1094 = vmatprep.subr.bf16.mxu0 0
    %1095 = vmatpush2.bf16.msra.mxu0 0
    %1096 = vmatprep.subr.bf16.mxu0 0
    %1097 = vmatpush2.bf16.msra.mxu0 0
    %1098 = vmatprep.subr.bf16.mxu0 0
    %1099 = vmatpush2.bf16.msra.mxu0 0
    %1100 = vmatprep.subr.bf16.mxu0 0
    %1101 = vmatpush2.bf16.msra.mxu0 0
    %1102 = vmatprep.subr.bf16.mxu0 0
    %1103 = vmatpush2.bf16.msra.mxu0 0
    %1104 = vmatprep.mubr.bf16.mxu0 0
    %1105 = vmatmul.mubr.bf16.gmra.mxu0 %v890
    %v1106 = vpop.f32.mrf.mxu0
    %v1107 = vadd.f32 %v895, %v1106
    %v1108 = vpop.f32.mrf.mxu0
    %v1109 = vadd.f32 %v899, %v1108
    %v1110 = vpop.f32.mrf.mxu0
    %v1111 = vadd.f32 %v895, %v1110
    %v1112 = vpop.f32.mrf.mxu0
    %v1113 = vadd.f32 %v899, %v1112
    %1114 = vdwg.mxu0
    %1115 = vmatprep.subr.bf16.mxu0 %v1039
    %1116 = vmatpush1.bf16.msra.mxu0 %v1038
    %1117 = vmatprep.subr.bf16.mxu0 %v1035
    %1118 = vmatpush1.bf16.msra.mxu0 %v1034
    %1119 = vmatprep.subr.bf16.mxu0 %v1031
    %1120 = vmatpush1.bf16.msra.mxu0 %v1030
    %1121 = vmatprep.subr.bf16.mxu0 %v1027
    %1122 = vmatpush1.bf16.msra.mxu0 %v1026
    %1123 = vmatprep.subr.bf16.mxu0 %v1023
    %1124 = vmatpush1.bf16.msra.mxu0 %v1022
    %1125 = vmatprep.subr.bf16.mxu0 %v1019
    %1126 = vmatpush1.bf16.msra.mxu0 %v1018
    %1127 = vmatprep.subr.bf16.mxu0 %v1015
    %1128 = vmatpush1.bf16.msra.mxu0 %v1014
    %1129 = vmatprep.subr.bf16.mxu0 %v1011
    %1130 = vmatpush1.bf16.msra.mxu0 %v1010
    %1131 = vmatprep.subr.bf16.mxu0 0
    %1132 = vmatpush2.bf16.msra.mxu0 0
    %1133 = vmatprep.subr.bf16.mxu0 0
    %1134 = vmatpush2.bf16.msra.mxu0 0
    %1135 = vmatprep.subr.bf16.mxu0 0
    %1136 = vmatpush2.bf16.msra.mxu0 0
    %1137 = vmatprep.subr.bf16.mxu0 0
    %1138 = vmatpush2.bf16.msra.mxu0 0
    %1139 = vmatprep.subr.bf16.mxu0 0
    %1140 = vmatpush2.bf16.msra.mxu0 0
    %1141 = vmatprep.subr.bf16.mxu0 0
    %1142 = vmatpush2.bf16.msra.mxu0 0
    %1143 = vmatprep.subr.bf16.mxu0 0
    %1144 = vmatpush2.bf16.msra.mxu0 0
    %1145 = vmatprep.subr.bf16.mxu0 0
    %1146 = vmatpush2.bf16.msra.mxu0 0
    %1147 = vmatprep.mubr.bf16.mxu0 0
    %1148 = vmatmul.mubr.bf16.gmra.mxu0 %v890
    %v1149 = vpop.f32.mrf.mxu0
    %v1150 = vadd.f32 %v903, %v1149
    %v1151 = vpop.f32.mrf.mxu0
    %v1152 = vadd.f32 %v907, %v1151
    %v1153 = vpop.f32.mrf.mxu0
    %v1154 = vadd.f32 %v903, %v1153
    %v1155 = vpop.f32.mrf.mxu0
    %v1156 = vadd.f32 %v907, %v1155
    %1157 = vdwg.mxu0
    %v1158 = vmul.f32 %v1107, 0.5
    %v1159 = vmul.f32 %v1109, 0.5
    %v1160 = vmul.f32 %v1150, 0.5
    %v1161 = vmul.f32 %v1152, 0.5
    %v1162 = vmul.f32 %v1111, 0.5
    %v1163 = vmul.f32 %v1113, 0.5
    %v1164 = vmul.f32 %v1154, 0.5
    %v1165 = vmul.f32 %v1156, 0.5
    %v1166 = vmul.f32 %v1107, 0.70710677
    %v1167 = vmul.f32 %v1109, 0.70710677
    %v1168 = vmul.f32 %v1150, 0.70710677
    %v1169 = vmul.f32 %v1152, 0.70710677
    %v1170 = vmul.f32 %v1111, 0.70710677
    %v1171 = vmul.f32 %v1113, 0.70710677
    %v1172 = vmul.f32 %v1154, 0.70710677
    %v1173 = vmul.f32 %v1156, 0.70710677
    %v1174 = verf.f32.pop %v1166
    %v1175 = verf.f32.pop %v1167
    %v1176 = verf.f32.pop %v1168
    %v1177 = verf.f32.pop %v1169
    %v1178 = verf.f32.pop %v1170
    %v1179 = verf.f32.pop %v1171
    %v1180 = verf.f32.pop %v1172
    %v1181 = verf.f32.pop %v1173
    %v1182 = vadd.f32 %v1174, 1.0
    %v1183 = vadd.f32 %v1175, 1.0
    %v1184 = vadd.f32 %v1176, 1.0
    %v1185 = vadd.f32 %v1177, 1.0
    %v1186 = vadd.f32 %v1178, 1.0
    %v1187 = vadd.f32 %v1179, 1.0
    %v1188 = vadd.f32 %v1180, 1.0
    %v1189 = vadd.f32 %v1181, 1.0
    %v1190 = vmul.f32 %v1158, %v1182
    %v1191 = vmul.f32 %v1159, %v1183
    %v1192 = vmul.f32 %v1160, %v1184
    %v1193 = vmul.f32 %v1161, %v1185
    %v1194 = vmul.f32 %v1162, %v1186
    %v1195 = vmul.f32 %v1163, %v1187
    %v1196 = vmul.f32 %v1164, %v1188
    %v1197 = vmul.f32 %v1165, %v1189
    %v1198 = vpack.c.bf16 %v1194, %v1190
    %v1199 = vpack.c.bf16 %v1195, %v1191
    %v1200 = vpack.c.bf16 %v1196, %v1192
    %v1201 = vpack.c.bf16 %v1197, %v1193
    %v1202 = vlaneseq
    %v1203 = vshrl.u32 %v1202, 7
    %v1204 = vsub.s32 0, %v1203
    %v1205 = vrot.slane %v756, %v1204
    %v1270 = vunpack.c.l.b16 %v790
    %v1271 = vunpack.c.l.b16 %v791
    %v1272 = vunpack.c.l.b16 %v792
    %v1273 = vunpack.c.l.b16 %v793
    %v1274 = vunpack.c.l.b16 %v794
    %v1275 = vunpack.c.l.b16 %v795
    %v1276 = vunpack.c.l.b16 %v796
    %v1277 = vunpack.c.l.b16 %v797
    %v1278 = vunpack.c.l.b16 %v798
    %v1279 = vunpack.c.l.b16 %v799
    %v1280 = vunpack.c.l.b16 %v800
    %v1281 = vunpack.c.l.b16 %v801
    %v1282 = vunpack.c.l.b16 %v802
    %v1283 = vunpack.c.l.b16 %v803
    %v1284 = vunpack.c.l.b16 %v804
    %v1285 = vunpack.c.l.b16 %v805
    %v1286 = vunpack.c.l.b16 %v806
    %v1287 = vunpack.c.l.b16 %v807
    %v1288 = vunpack.c.l.b16 %v808
    %v1289 = vunpack.c.l.b16 %v809
    %v1290 = vunpack.c.l.b16 %v810
    %v1291 = vunpack.c.l.b16 %v811
    %v1292 = vunpack.c.l.b16 %v812
    %v1293 = vunpack.c.l.b16 %v813
    %v1294 = vunpack.c.l.b16 %v814
    %v1295 = vunpack.c.l.b16 %v815
    %v1296 = vunpack.c.l.b16 %v816
    %v1297 = vunpack.c.l.b16 %v817
    %v1298 = vunpack.c.l.b16 %v818
    %v1299 = vunpack.c.l.b16 %v819
    %v1300 = vunpack.c.l.b16 %v820
    %v1301 = vunpack.c.l.b16 %v821
    %v1302 = vunpack.c.l.b16 %v822
    %v1303 = vunpack.c.l.b16 %v823
    %v1304 = vunpack.c.l.b16 %v824
    %v1305 = vunpack.c.l.b16 %v825
    %v1306 = vunpack.c.l.b16 %v826
    %v1307 = vunpack.c.l.b16 %v827
    %v1308 = vunpack.c.l.b16 %v828
    %v1309 = vunpack.c.l.b16 %v829
    %v1310 = vunpack.c.l.b16 %v830
    %v1311 = vunpack.c.l.b16 %v831
    %v1312 = vunpack.c.l.b16 %v832
    %v1313 = vunpack.c.l.b16 %v833
    %v1314 = vunpack.c.l.b16 %v834
    %v1315 = vunpack.c.l.b16 %v835
    %v1316 = vunpack.c.l.b16 %v836
    %v1317 = vunpack.c.l.b16 %v837
    %v1318 = vunpack.c.l.b16 %v838
    %v1319 = vunpack.c.l.b16 %v839
    %v1320 = vunpack.c.l.b16 %v840
    %v1321 = vunpack.c.l.b16 %v841
    %v1322 = vunpack.c.l.b16 %v842
    %v1323 = vunpack.c.l.b16 %v843
    %v1324 = vunpack.c.l.b16 %v844
    %v1325 = vunpack.c.l.b16 %v845
    %v1326 = vunpack.c.l.b16 %v846
    %v1327 = vunpack.c.l.b16 %v847
    %v1328 = vunpack.c.l.b16 %v848
    %v1329 = vunpack.c.l.b16 %v849
    %v1330 = vunpack.c.l.b16 %v850
    %v1331 = vunpack.c.l.b16 %v851
    %v1332 = vunpack.c.l.b16 %v852
    %v1333 = vunpack.c.l.b16 %v853
    %v1334 = vpack.c.b16 %v1271, %v1270
    %v1335 = vpack.c.b16 %v1273, %v1272
    %v1336 = vpack.c.b16 %v1275, %v1274
    %v1337 = vpack.c.b16 %v1277, %v1276
    %v1338 = vpack.c.b16 %v1279, %v1278
    %v1339 = vpack.c.b16 %v1281, %v1280
    %v1340 = vpack.c.b16 %v1283, %v1282
    %v1341 = vpack.c.b16 %v1285, %v1284
    %v1342 = vpack.c.b16 %v1287, %v1286
    %v1343 = vpack.c.b16 %v1289, %v1288
    %v1344 = vpack.c.b16 %v1291, %v1290
    %v1345 = vpack.c.b16 %v1293, %v1292
    %v1346 = vpack.c.b16 %v1295, %v1294
    %v1347 = vpack.c.b16 %v1297, %v1296
    %v1348 = vpack.c.b16 %v1299, %v1298
    %v1349 = vpack.c.b16 %v1301, %v1300
    %v1350 = vpack.c.b16 %v1303, %v1302
    %v1351 = vpack.c.b16 %v1305, %v1304
    %v1352 = vpack.c.b16 %v1307, %v1306
    %v1353 = vpack.c.b16 %v1309, %v1308
    %v1354 = vpack.c.b16 %v1311, %v1310
    %v1355 = vpack.c.b16 %v1313, %v1312
    %v1356 = vpack.c.b16 %v1315, %v1314
    %v1357 = vpack.c.b16 %v1317, %v1316
    %v1358 = vpack.c.b16 %v1319, %v1318
    %v1359 = vpack.c.b16 %v1321, %v1320
    %v1360 = vpack.c.b16 %v1323, %v1322
    %v1361 = vpack.c.b16 %v1325, %v1324
    %v1362 = vpack.c.b16 %v1327, %v1326
    %v1363 = vpack.c.b16 %v1329, %v1328
    %v1364 = vpack.c.b16 %v1331, %v1330
    %v1365 = vpack.c.b16 %v1333, %v1332
    %1398 = vmatprep.subr.bf16.mxu0 0
    %1399 = vmatpush1.bf16.msra.mxu0 %v1341
    %1400 = vmatprep.subr.bf16.mxu0 0
    %1401 = vmatpush1.bf16.msra.mxu0 %v1340
    %1402 = vmatprep.subr.bf16.mxu0 0
    %1403 = vmatpush1.bf16.msra.mxu0 %v1339
    %1404 = vmatprep.subr.bf16.mxu0 0
    %1405 = vmatpush1.bf16.msra.mxu0 %v1338
    %1406 = vmatprep.subr.bf16.mxu0 0
    %1407 = vmatpush1.bf16.msra.mxu0 %v1337
    %1408 = vmatprep.subr.bf16.mxu0 0
    %1409 = vmatpush1.bf16.msra.mxu0 %v1336
    %1410 = vmatprep.subr.bf16.mxu0 0
    %1411 = vmatpush1.bf16.msra.mxu0 %v1335
    %1412 = vmatprep.subr.bf16.mxu0 0
    %1413 = vmatpush1.bf16.msra.mxu0 %v1334
    %1414 = vmatprep.subr.bf16.mxu0 0
    %1415 = vmatpush2.bf16.msra.mxu0 %v1349
    %1416 = vmatprep.subr.bf16.mxu0 0
    %1417 = vmatpush2.bf16.msra.mxu0 %v1348
    %1418 = vmatprep.subr.bf16.mxu0 0
    %1419 = vmatpush2.bf16.msra.mxu0 %v1347
    %1420 = vmatprep.subr.bf16.mxu0 0
    %1421 = vmatpush2.bf16.msra.mxu0 %v1346
    %1422 = vmatprep.subr.bf16.mxu0 0
    %1423 = vmatpush2.bf16.msra.mxu0 %v1345
    %1424 = vmatprep.subr.bf16.mxu0 0
    %1425 = vmatpush2.bf16.msra.mxu0 %v1344
    %1426 = vmatprep.subr.bf16.mxu0 0
    %1427 = vmatpush2.bf16.msra.mxu0 %v1343
    %1428 = vmatprep.subr.bf16.mxu0 0
    %1429 = vmatpush2.bf16.msra.mxu0 %v1342
    %1430 = vmatprep.mubr.bf16.mxu0 %v1199
    %1431 = vmatmul.mubr.bf16.gmra.mxu0 %v1198
    %v1432 = vpop.f32.mrf.mxu0
    %v1433 = vadd.f32 %v1205, %v1432
    %v1434 = vpop.f32.mrf.mxu0
    %v1435 = vpop.f32.mrf.mxu0
    %v1436 = vadd.f32 %v1205, %v1435
    %v1437 = vpop.f32.mrf.mxu0
    %1438 = vdwg.mxu0
    %1439 = vmatprep.subr.bf16.mxu0 0
    %1440 = vmatpush1.bf16.msra.mxu0 %v1357
    %1441 = vmatprep.subr.bf16.mxu0 0
    %1442 = vmatpush1.bf16.msra.mxu0 %v1356
    %1443 = vmatprep.subr.bf16.mxu0 0
    %1444 = vmatpush1.bf16.msra.mxu0 %v1355
    %1445 = vmatprep.subr.bf16.mxu0 0
    %1446 = vmatpush1.bf16.msra.mxu0 %v1354
    %1447 = vmatprep.subr.bf16.mxu0 0
    %1448 = vmatpush1.bf16.msra.mxu0 %v1353
    %1449 = vmatprep.subr.bf16.mxu0 0
    %1450 = vmatpush1.bf16.msra.mxu0 %v1352
    %1451 = vmatprep.subr.bf16.mxu0 0
    %1452 = vmatpush1.bf16.msra.mxu0 %v1351
    %1453 = vmatprep.subr.bf16.mxu0 0
    %1454 = vmatpush1.bf16.msra.mxu0 %v1350
    %1455 = vmatprep.subr.bf16.mxu0 0
    %1456 = vmatpush2.bf16.msra.mxu0 %v1365
    %1457 = vmatprep.subr.bf16.mxu0 0
    %1458 = vmatpush2.bf16.msra.mxu0 %v1364
    %1459 = vmatprep.subr.bf16.mxu0 0
    %1460 = vmatpush2.bf16.msra.mxu0 %v1363
    %1461 = vmatprep.subr.bf16.mxu0 0
    %1462 = vmatpush2.bf16.msra.mxu0 %v1362
    %1463 = vmatprep.subr.bf16.mxu0 0
    %1464 = vmatpush2.bf16.msra.mxu0 %v1361
    %1465 = vmatprep.subr.bf16.mxu0 0
    %1466 = vmatpush2.bf16.msra.mxu0 %v1360
    %1467 = vmatprep.subr.bf16.mxu0 0
    %1468 = vmatpush2.bf16.msra.mxu0 %v1359
    %1469 = vmatprep.subr.bf16.mxu0 0
    %1470 = vmatpush2.bf16.msra.mxu0 %v1358
    %1471 = vmatprep.mubr.bf16.mxu0 %v1201
    %1472 = vmatmul.mubr.bf16.gmra.mxu0 %v1200
    %v1473 = vpop.f32.mrf.mxu0
    %v1474 = vadd.f32 %v1433, %v1473
    %v1475 = vpop.f32.mrf.mxu0
    %v1476 = vpop.f32.mrf.mxu0
    %v1477 = vadd.f32 %v1436, %v1476
    %v1478 = vpop.f32.mrf.mxu0
    %1479 = vdwg.mxu0
    %v1480 = vadd.f32 %v1474, %v854
    %v1481 = vadd.f32 %v1477, %v855
    %1482 = vst [vmem:[#allocation11] sm:$0xff] %v1480
    %1483 = vst [vmem:[#allocation11 + $0x8] sm:$0xff] %v1481
    %v1484 = vld [vmem:[%s413] sm:$0xff]
    %v1485 = vld [vmem:[%s413 + $0x8] sm:$0xff]
    %1486 = vadd.xlane.f32.xlu0 %v1484
    %v1487 = vpop.xlane.xlu0 %1486
    %1488 = vadd.xlane.f32.xlu0 %v1485
    %v1489 = vpop.xlane.xlu0 %1488
    %v1490 = vmul.f32 %v1487, %v120
    %v1491 = vmul.f32 %v1489, %v120
    %v1492 = vsub.f32 %v1484, %v1490
    %v1493 = vsub.f32 %v1485, %v1491
    %v1494 = vmul.f32 %v1492, %v1492
    %v1495 = vmul.f32 %v1493, %v1493
    %1496 = vadd.xlane.f32.xlu0 %v1494
    %v1497 = vpop.xlane.xlu0 %1496
    %1498 = vadd.xlane.f32.xlu0 %v1495
    %v1499 = vpop.xlane.xlu0 %1498
    %v1500 = vmul.f32 %v1497, %v120
    %v1501 = vmul.f32 %v1499, %v120
    %v1502 = vadd.f32 %v1500, 1e-05
    %v1503 = vadd.f32 %v1501, 1e-05
    %v1504 = vrsqrt.pop %v1502
    %v1505 = vrsqrt.pop %v1503
    %v1506 = vmul.f32 %v1492, %v1504
    %v1507 = vmul.f32 %v1493, %v1505
    %v1508 = vmul.f32 %v1506, %v881
    %v1509 = vmul.f32 %v1507, %v881
    %v1510 = vadd.f32 %v1508, %v887
    %v1511 = vadd.f32 %v1509, %v887
    %v1512 = vpack.c.bf16 %v1511, %v1510
    %1513 = vmatprep.subr.bf16.mxu0 %v1037
    %1514 = vmatpush1.bf16.msra.mxu0 %v1036
    %1515 = vmatprep.subr.bf16.mxu0 %v1033
    %1516 = vmatpush1.bf16.msra.mxu0 %v1032
    %1517 = vmatprep.subr.bf16.mxu0 %v1029
    %1518 = vmatpush1.bf16.msra.mxu0 %v1028
    %1519 = vmatprep.subr.bf16.mxu0 %v1025
    %1520 = vmatpush1.bf16.msra.mxu0 %v1024
    %1521 = vmatprep.subr.bf16.mxu0 %v1021
    %1522 = vmatpush1.bf16.msra.mxu0 %v1020
    %1523 = vmatprep.subr.bf16.mxu0 %v1017
    %1524 = vmatpush1.bf16.msra.mxu0 %v1016
    %1525 = vmatprep.subr.bf16.mxu0 %v1013
    %1526 = vmatpush1.bf16.msra.mxu0 %v1012
    %1527 = vmatprep.subr.bf16.mxu0 %v1009
    %1528 = vmatpush1.bf16.msra.mxu0 %v1008
    %1529 = vmatprep.subr.bf16.mxu0 0
    %1530 = vmatpush2.bf16.msra.mxu0 0
    %1531 = vmatprep.subr.bf16.mxu0 0
    %1532 = vmatpush2.bf16.msra.mxu0 0
    %1533 = vmatprep.subr.bf16.mxu0 0
    %1534 = vmatpush2.bf16.msra.mxu0 0
    %1535 = vmatprep.subr.bf16.mxu0 0
    %1536 = vmatpush2.bf16.msra.mxu0 0
    %1537 = vmatprep.subr.bf16.mxu0 0
    %1538 = vmatpush2.bf16.msra.mxu0 0
    %1539 = vmatprep.subr.bf16.mxu0 0
    %1540 = vmatpush2.bf16.msra.mxu0 0
    %1541 = vmatprep.subr.bf16.mxu0 0
    %1542 = vmatpush2.bf16.msra.mxu0 0
    %1543 = vmatprep.subr.bf16.mxu0 0
    %1544 = vmatpush2.bf16.msra.mxu0 0
    %1545 = vmatprep.mubr.bf16.mxu0 0
    %1546 = vmatmul.mubr.bf16.gmra.mxu0 %v1512
    %v1547 = vpop.f32.mrf.mxu0
    %v1548 = vadd.f32 %v895, %v1547
    %v1549 = vpop.f32.mrf.mxu0
    %v1550 = vadd.f32 %v899, %v1549
    %v1551 = vpop.f32.mrf.mxu0
    %v1552 = vadd.f32 %v895, %v1551
    %v1553 = vpop.f32.mrf.mxu0
    %v1554 = vadd.f32 %v899, %v1553
    %1555 = vdwg.mxu0
    %1556 = vmatprep.subr.bf16.mxu0 %v1039
    %1557 = vmatpush1.bf16.msra.mxu0 %v1038
    %1558 = vmatprep.subr.bf16.mxu0 %v1035
    %1559 = vmatpush1.bf16.msra.mxu0 %v1034
    %1560 = vmatprep.subr.bf16.mxu0 %v1031
    %1561 = vmatpush1.bf16.msra.mxu0 %v1030
    %1562 = vmatprep.subr.bf16.mxu0 %v1027
    %1563 = vmatpush1.bf16.msra.mxu0 %v1026
    %1564 = vmatprep.subr.bf16.mxu0 %v1023
    %1565 = vmatpush1.bf16.msra.mxu0 %v1022
    %1566 = vmatprep.subr.bf16.mxu0 %v1019
    %1567 = vmatpush1.bf16.msra.mxu0 %v1018
    %1568 = vmatprep.subr.bf16.mxu0 %v1015
    %1569 = vmatpush1.bf16.msra.mxu0 %v1014
    %1570 = vmatprep.subr.bf16.mxu0 %v1011
    %1571 = vmatpush1.bf16.msra.mxu0 %v1010
    %1572 = vmatprep.subr.bf16.mxu0 0
    %1573 = vmatpush2.bf16.msra.mxu0 0
    %1574 = vmatprep.subr.bf16.mxu0 0
    %1575 = vmatpush2.bf16.msra.mxu0 0
    %1576 = vmatprep.subr.bf16.mxu0 0
    %1577 = vmatpush2.bf16.msra.mxu0 0
    %1578 = vmatprep.subr.bf16.mxu0 0
    %1579 = vmatpush2.bf16.msra.mxu0 0
    %1580 = vmatprep.subr.bf16.mxu0 0
    %1581 = vmatpush2.bf16.msra.mxu0 0
    %1582 = vmatprep.subr.bf16.mxu0 0
    %1583 = vmatpush2.bf16.msra.mxu0 0
    %1584 = vmatprep.subr.bf16.mxu0 0
    %1585 = vmatpush2.bf16.msra.mxu0 0
    %1586 = vmatprep.subr.bf16.mxu0 0
    %1587 = vmatpush2.bf16.msra.mxu0 0
    %1588 = vmatprep.mubr.bf16.mxu0 0
    %1589 = vmatmul.mubr.bf16.gmra.mxu0 %v1512
    %v1590 = vpop.f32.mrf.mxu0
    %v1591 = vadd.f32 %v903, %v1590
    %v1592 = vpop.f32.mrf.mxu0
    %v1593 = vadd.f32 %v907, %v1592
    %v1594 = vpop.f32.mrf.mxu0
    %v1595 = vadd.f32 %v903, %v1594
    %v1596 = vpop.f32.mrf.mxu0
    %v1597 = vadd.f32 %v907, %v1596
    %1598 = vdwg.mxu0
    %v1599 = vmul.f32 %v1548, 0.5
    %v1600 = vmul.f32 %v1550, 0.5
    %v1601 = vmul.f32 %v1591, 0.5
    %v1602 = vmul.f32 %v1593, 0.5
    %v1603 = vmul.f32 %v1552, 0.5
    %v1604 = vmul.f32 %v1554, 0.5
    %v1605 = vmul.f32 %v1595, 0.5
    %v1606 = vmul.f32 %v1597, 0.5
    %v1607 = vmul.f32 %v1548, 0.70710677
    %v1608 = vmul.f32 %v1550, 0.70710677
    %v1609 = vmul.f32 %v1591, 0.70710677
    %v1610 = vmul.f32 %v1593, 0.70710677
    %v1611 = vmul.f32 %v1552, 0.70710677
    %v1612 = vmul.f32 %v1554, 0.70710677
    %v1613 = vmul.f32 %v1595, 0.70710677
    %v1614 = vmul.f32 %v1597, 0.70710677
    %v1615 = verf.f32.pop %v1607
    %v1616 = verf.f32.pop %v1608
    %v1617 = verf.f32.pop %v1609
    %v1618 = verf.f32.pop %v1610
    %v1619 = verf.f32.pop %v1611
    %v1620 = verf.f32.pop %v1612
    %v1621 = verf.f32.pop %v1613
    %v1622 = verf.f32.pop %v1614
    %v1623 = vadd.f32 %v1615, 1.0
    %v1624 = vadd.f32 %v1616, 1.0
    %v1625 = vadd.f32 %v1617, 1.0
    %v1626 = vadd.f32 %v1618, 1.0
    %v1627 = vadd.f32 %v1619, 1.0
    %v1628 = vadd.f32 %v1620, 1.0
    %v1629 = vadd.f32 %v1621, 1.0
    %v1630 = vadd.f32 %v1622, 1.0
    %v1631 = vmul.f32 %v1599, %v1623
    %v1632 = vmul.f32 %v1600, %v1624
    %v1633 = vmul.f32 %v1601, %v1625
    %v1634 = vmul.f32 %v1602, %v1626
    %v1635 = vmul.f32 %v1603, %v1627
    %v1636 = vmul.f32 %v1604, %v1628
    %v1637 = vmul.f32 %v1605, %v1629
    %v1638 = vmul.f32 %v1606, %v1630
    %v1639 = vpack.c.bf16 %v1635, %v1631
    %v1640 = vpack.c.bf16 %v1636, %v1632
    %v1641 = vpack.c.bf16 %v1637, %v1633
    %v1642 = vpack.c.bf16 %v1638, %v1634
    %1643 = vmatprep.subr.bf16.mxu0 0
    %1644 = vmatpush1.bf16.msra.mxu0 %v1341
    %1645 = vmatprep.subr.bf16.mxu0 0
    %1646 = vmatpush1.bf16.msra.mxu0 %v1340
    %1647 = vmatprep.subr.bf16.mxu0 0
    %1648 = vmatpush1.bf16.msra.mxu0 %v1339
    %1649 = vmatprep.subr.bf16.mxu0 0
    %1650 = vmatpush1.bf16.msra.mxu0 %v1338
    %1651 = vmatprep.subr.bf16.mxu0 0
    %1652 = vmatpush1.bf16.msra.mxu0 %v1337
    %1653 = vmatprep.subr.bf16.mxu0 0
    %1654 = vmatpush1.bf16.msra.mxu0 %v1336
    %1655 = vmatprep.subr.bf16.mxu0 0
    %1656 = vmatpush1.bf16.msra.mxu0 %v1335
    %1657 = vmatprep.subr.bf16.mxu0 0
    %1658 = vmatpush1.bf16.msra.mxu0 %v1334
    %1659 = vmatprep.subr.bf16.mxu0 0
    %1660 = vmatpush2.bf16.msra.mxu0 %v1349
    %1661 = vmatprep.subr.bf16.mxu0 0
    %1662 = vmatpush2.bf16.msra.mxu0 %v1348
    %1663 = vmatprep.subr.bf16.mxu0 0
    %1664 = vmatpush2.bf16.msra.mxu0 %v1347
    %1665 = vmatprep.subr.bf16.mxu0 0
    %1666 = vmatpush2.bf16.msra.mxu0 %v1346
    %1667 = vmatprep.subr.bf16.mxu0 0
    %1668 = vmatpush2.bf16.msra.mxu0 %v1345
    %1669 = vmatprep.subr.bf16.mxu0 0
    %1670 = vmatpush2.bf16.msra.mxu0 %v1344
    %1671 = vmatprep.subr.bf16.mxu0 0
    %1672 = vmatpush2.bf16.msra.mxu0 %v1343
    %1673 = vmatprep.subr.bf16.mxu0 0
    %1674 = vmatpush2.bf16.msra.mxu0 %v1342
    %1675 = vmatprep.mubr.bf16.mxu0 %v1640
    %1676 = vmatmul.mubr.bf16.gmra.mxu0 %v1639
    %v1677 = vpop.f32.mrf.mxu0
    %v1678 = vadd.f32 %v1205, %v1677
    %v1679 = vpop.f32.mrf.mxu0
    %v1680 = vpop.f32.mrf.mxu0
    %v1681 = vadd.f32 %v1205, %v1680
    %v1682 = vpop.f32.mrf.mxu0
    %1683 = vdwg.mxu0
    %1684 = vmatprep.subr.bf16.mxu0 0
    %1685 = vmatpush1.bf16.msra.mxu0 %v1357
    %1686 = vmatprep.subr.bf16.mxu0 0
    %1687 = vmatpush1.bf16.msra.mxu0 %v1356
    %1688 = vmatprep.subr.bf16.mxu0 0
    %1689 = vmatpush1.bf16.msra.mxu0 %v1355
    %1690 = vmatprep.subr.bf16.mxu0 0
    %1691 = vmatpush1.bf16.msra.mxu0 %v1354
    %1692 = vmatprep.subr.bf16.mxu0 0
    %1693 = vmatpush1.bf16.msra.mxu0 %v1353
    %1694 = vmatprep.subr.bf16.mxu0 0
    %1695 = vmatpush1.bf16.msra.mxu0 %v1352
    %1696 = vmatprep.subr.bf16.mxu0 0
    %1697 = vmatpush1.bf16.msra.mxu0 %v1351
    %1698 = vmatprep.subr.bf16.mxu0 0
    %1699 = vmatpush1.bf16.msra.mxu0 %v1350
    %1700 = vmatprep.subr.bf16.mxu0 0
    %1701 = vmatpush2.bf16.msra.mxu0 %v1365
    %1702 = vmatprep.subr.bf16.mxu0 0
    %1703 = vmatpush2.bf16.msra.mxu0 %v1364
    %1704 = vmatprep.subr.bf16.mxu0 0
    %1705 = vmatpush2.bf16.msra.mxu0 %v1363
    %1706 = vmatprep.subr.bf16.mxu0 0
    %1707 = vmatpush2.bf16.msra.mxu0 %v1362
    %1708 = vmatprep.subr.bf16.mxu0 0
    %1709 = vmatpush2.bf16.msra.mxu0 %v1361
    %1710 = vmatprep.subr.bf16.mxu0 0
    %1711 = vmatpush2.bf16.msra.mxu0 %v1360
    %1712 = vmatprep.subr.bf16.mxu0 0
    %1713 = vmatpush2.bf16.msra.mxu0 %v1359
    %1714 = vmatprep.subr.bf16.mxu0 0
    %1715 = vmatpush2.bf16.msra.mxu0 %v1358
    %1716 = vmatprep.mubr.bf16.mxu0 %v1642
    %1717 = vmatmul.mubr.bf16.gmra.mxu0 %v1641
    %v1718 = vpop.f32.mrf.mxu0
    %v1719 = vadd.f32 %v1678, %v1718
    %v1720 = vpop.f32.mrf.mxu0
    %v1721 = vpop.f32.mrf.mxu0
    %v1722 = vadd.f32 %v1681, %v1721
    %v1723 = vpop.f32.mrf.mxu0
    %1724 = vdwg.mxu0
    %v1725 = vadd.f32 %v1719, %v1484
    %v1726 = vadd.f32 %v1722, %v1485
    %1727 = vst [vmem:[%s413] sm:$0xff] %v1725
    %1728 = vst [vmem:[%s413 + $0x8] sm:$0xff] %v1726
    %v1729 = vld [vmem:[%s422] sm:$0xff]
    %v1730 = vld [vmem:[%s422 + $0x8] sm:$0xff]
    %1731 = vadd.xlane.f32.xlu0 %v1729
    %v1732 = vpop.xlane.xlu0 %1731
    %1733 = vadd.xlane.f32.xlu0 %v1730
    %v1734 = vpop.xlane.xlu0 %1733
    %v1735 = vmul.f32 %v1732, %v120
    %v1736 = vmul.f32 %v1734, %v120
    %v1737 = vsub.f32 %v1729, %v1735
    %v1738 = vsub.f32 %v1730, %v1736
    %v1739 = vmul.f32 %v1737, %v1737
    %v1740 = vmul.f32 %v1738, %v1738
    %1741 = vadd.xlane.f32.xlu0 %v1739
    %v1742 = vpop.xlane.xlu0 %1741
    %1743 = vadd.xlane.f32.xlu0 %v1740
    %v1744 = vpop.xlane.xlu0 %1743
    %v1745 = vmul.f32 %v1742, %v120
    %v1746 = vmul.f32 %v1744, %v120
    %v1747 = vadd.f32 %v1745, 1e-05
    %v1748 = vadd.f32 %v1746, 1e-05
    %v1749 = vrsqrt.pop %v1747
    %v1750 = vrsqrt.pop %v1748
    %v1751 = vmul.f32 %v1737, %v1749
    %v1752 = vmul.f32 %v1738, %v1750
    %v1753 = vmul.f32 %v1751, %v881
    %v1754 = vmul.f32 %v1752, %v881
    %v1755 = vadd.f32 %v1753, %v887
    %v1756 = vadd.f32 %v1754, %v887
    %v1757 = vpack.c.bf16 %v1756, %v1755
    %1758 = vmatprep.subr.bf16.mxu0 %v1037
    %1759 = vmatpush1.bf16.msra.mxu0 %v1036
    %1760 = vmatprep.subr.bf16.mxu0 %v1033
    %1761 = vmatpush1.bf16.msra.mxu0 %v1032
    %1762 = vmatprep.subr.bf16.mxu0 %v1029
    %1763 = vmatpush1.bf16.msra.mxu0 %v1028
    %1764 = vmatprep.subr.bf16.mxu0 %v1025
    %1765 = vmatpush1.bf16.msra.mxu0 %v1024
    %1766 = vmatprep.subr.bf16.mxu0 %v1021
    %1767 = vmatpush1.bf16.msra.mxu0 %v1020
    %1768 = vmatprep.subr.bf16.mxu0 %v1017
    %1769 = vmatpush1.bf16.msra.mxu0 %v1016
    %1770 = vmatprep.subr.bf16.mxu0 %v1013
    %1771 = vmatpush1.bf16.msra.mxu0 %v1012
    %1772 = vmatprep.subr.bf16.mxu0 %v1009
    %1773 = vmatpush1.bf16.msra.mxu0 %v1008
    %1774 = vmatprep.subr.bf16.mxu0 0
    %1775 = vmatpush2.bf16.msra.mxu0 0
    %1776 = vmatprep.subr.bf16.mxu0 0
    %1777 = vmatpush2.bf16.msra.mxu0 0
    %1778 = vmatprep.subr.bf16.mxu0 0
    %1779 = vmatpush2.bf16.msra.mxu0 0
    %1780 = vmatprep.subr.bf16.mxu0 0
    %1781 = vmatpush2.bf16.msra.mxu0 0
    %1782 = vmatprep.subr.bf16.mxu0 0
    %1783 = vmatpush2.bf16.msra.mxu0 0
    %1784 = vmatprep.subr.bf16.mxu0 0
    %1785 = vmatpush2.bf16.msra.mxu0 0
    %1786 = vmatprep.subr.bf16.mxu0 0
    %1787 = vmatpush2.bf16.msra.mxu0 0
    %1788 = vmatprep.subr.bf16.mxu0 0
    %1789 = vmatpush2.bf16.msra.mxu0 0
    %1790 = vmatprep.mubr.bf16.mxu0 0
    %1791 = vmatmul.mubr.bf16.gmra.mxu0 %v1757
    %v1792 = vpop.f32.mrf.mxu0
    %v1793 = vadd.f32 %v895, %v1792
    %v1794 = vpop.f32.mrf.mxu0
    %v1795 = vadd.f32 %v899, %v1794
    %v1796 = vpop.f32.mrf.mxu0
    %v1797 = vadd.f32 %v895, %v1796
    %v1798 = vpop.f32.mrf.mxu0
    %v1799 = vadd.f32 %v899, %v1798
    %1800 = vdwg.mxu0
    %1801 = vmatprep.subr.bf16.mxu0 %v1039
    %1802 = vmatpush1.bf16.msra.mxu0 %v1038
    %1803 = vmatprep.subr.bf16.mxu0 %v1035
    %1804 = vmatpush1.bf16.msra.mxu0 %v1034
    %1805 = vmatprep.subr.bf16.mxu0 %v1031
    %1806 = vmatpush1.bf16.msra.mxu0 %v1030
    %1807 = vmatprep.subr.bf16.mxu0 %v1027
    %1808 = vmatpush1.bf16.msra.mxu0 %v1026
    %1809 = vmatprep.subr.bf16.mxu0 %v1023
    %1810 = vmatpush1.bf16.msra.mxu0 %v1022
    %1811 = vmatprep.subr.bf16.mxu0 %v1019
    %1812 = vmatpush1.bf16.msra.mxu0 %v1018
    %1813 = vmatprep.subr.bf16.mxu0 %v1015
    %1814 = vmatpush1.bf16.msra.mxu0 %v1014
    %1815 = vmatprep.subr.bf16.mxu0 %v1011
    %1816 = vmatpush1.bf16.msra.mxu0 %v1010
    %1817 = vmatprep.subr.bf16.mxu0 0
    %1818 = vmatpush2.bf16.msra.mxu0 0
    %1819 = vmatprep.subr.bf16.mxu0 0
    %1820 = vmatpush2.bf16.msra.mxu0 0
    %1821 = vmatprep.subr.bf16.mxu0 0
    %1822 = vmatpush2.bf16.msra.mxu0 0
    %1823 = vmatprep.subr.bf16.mxu0 0
    %1824 = vmatpush2.bf16.msra.mxu0 0
    %1825 = vmatprep.subr.bf16.mxu0 0
    %1826 = vmatpush2.bf16.msra.mxu0 0
    %1827 = vmatprep.subr.bf16.mxu0 0
    %1828 = vmatpush2.bf16.msra.mxu0 0
    %1829 = vmatprep.subr.bf16.mxu0 0
    %1830 = vmatpush2.bf16.msra.mxu0 0
    %1831 = vmatprep.subr.bf16.mxu0 0
    %1832 = vmatpush2.bf16.msra.mxu0 0
    %1833 = vmatprep.mubr.bf16.mxu0 0
    %1834 = vmatmul.mubr.bf16.gmra.mxu0 %v1757
    %v1835 = vpop.f32.mrf.mxu0
    %v1836 = vadd.f32 %v903, %v1835
    %v1837 = vpop.f32.mrf.mxu0
    %v1838 = vadd.f32 %v907, %v1837
    %v1839 = vpop.f32.mrf.mxu0
    %v1840 = vadd.f32 %v903, %v1839
    %v1841 = vpop.f32.mrf.mxu0
    %v1842 = vadd.f32 %v907, %v1841
    %1843 = vdwg.mxu0
    %v1844 = vmul.f32 %v1793, 0.5
    %v1845 = vmul.f32 %v1795, 0.5
    %v1846 = vmul.f32 %v1836, 0.5
    %v1847 = vmul.f32 %v1838, 0.5
    %v1848 = vmul.f32 %v1797, 0.5
    %v1849 = vmul.f32 %v1799, 0.5
    %v1850 = vmul.f32 %v1840, 0.5
    %v1851 = vmul.f32 %v1842, 0.5
    %v1852 = vmul.f32 %v1793, 0.70710677
    %v1853 = vmul.f32 %v1795, 0.70710677
    %v1854 = vmul.f32 %v1836, 0.70710677
    %v1855 = vmul.f32 %v1838, 0.70710677
    %v1856 = vmul.f32 %v1797, 0.70710677
    %v1857 = vmul.f32 %v1799, 0.70710677
    %v1858 = vmul.f32 %v1840, 0.70710677
    %v1859 = vmul.f32 %v1842, 0.70710677
    %v1860 = verf.f32.pop %v1852
    %v1861 = verf.f32.pop %v1853
    %v1862 = verf.f32.pop %v1854
    %v1863 = verf.f32.pop %v1855
    %v1864 = verf.f32.pop %v1856
    %v1865 = verf.f32.pop %v1857
    %v1866 = verf.f32.pop %v1858
    %v1867 = verf.f32.pop %v1859
    %v1868 = vadd.f32 %v1860, 1.0
    %v1869 = vadd.f32 %v1861, 1.0
    %v1870 = vadd.f32 %v1862, 1.0
    %v1871 = vadd.f32 %v1863, 1.0
    %v1872 = vadd.f32 %v1864, 1.0
    %v1873 = vadd.f32 %v1865, 1.0
    %v1874 = vadd.f32 %v1866, 1.0
    %v1875 = vadd.f32 %v1867, 1.0
    %v1876 = vmul.f32 %v1844, %v1868
    %v1877 = vmul.f32 %v1845, %v1869
    %v1878 = vmul.f32 %v1846, %v1870
    %v1879 = vmul.f32 %v1847, %v1871
    %v1880 = vmul.f32 %v1848, %v1872
    %v1881 = vmul.f32 %v1849, %v1873
    %v1882 = vmul.f32 %v1850, %v1874
    %v1883 = vmul.f32 %v1851, %v1875
    %v1884 = vpack.c.bf16 %v1880, %v1876
    %v1885 = vpack.c.bf16 %v1881, %v1877
    %v1886 = vpack.c.bf16 %v1882, %v1878
    %v1887 = vpack.c.bf16 %v1883, %v1879
    %1888 = vmatprep.subr.bf16.mxu0 0
    %1889 = vmatpush1.bf16.msra.mxu0 %v1341
    %1890 = vmatprep.subr.bf16.mxu0 0
    %1891 = vmatpush1.bf16.msra.mxu0 %v1340
    %1892 = vmatprep.subr.bf16.mxu0 0
    %1893 = vmatpush1.bf16.msra.mxu0 %v1339
    %1894 = vmatprep.subr.bf16.mxu0 0
    %1895 = vmatpush1.bf16.msra.mxu0 %v1338
    %1896 = vmatprep.subr.bf16.mxu0 0
    %1897 = vmatpush1.bf16.msra.mxu0 %v1337
    %1898 = vmatprep.subr.bf16.mxu0 0
    %1899 = vmatpush1.bf16.msra.mxu0 %v1336
    %1900 = vmatprep.subr.bf16.mxu0 0
    %1901 = vmatpush1.bf16.msra.mxu0 %v1335
    %1902 = vmatprep.subr.bf16.mxu0 0
    %1903 = vmatpush1.bf16.msra.mxu0 %v1334
    %1904 = vmatprep.subr.bf16.mxu0 0
    %1905 = vmatpush2.bf16.msra.mxu0 %v1349
    %1906 = vmatprep.subr.bf16.mxu0 0
    %1907 = vmatpush2.bf16.msra.mxu0 %v1348
    %1908 = vmatprep.subr.bf16.mxu0 0
    %1909 = vmatpush2.bf16.msra.mxu0 %v1347
    %1910 = vmatprep.subr.bf16.mxu0 0
    %1911 = vmatpush2.bf16.msra.mxu0 %v1346
    %1912 = vmatprep.subr.bf16.mxu0 0
    %1913 = vmatpush2.bf16.msra.mxu0 %v1345
    %1914 = vmatprep.subr.bf16.mxu0 0
    %1915 = vmatpush2.bf16.msra.mxu0 %v1344
    %1916 = vmatprep.subr.bf16.mxu0 0
    %1917 = vmatpush2.bf16.msra.mxu0 %v1343
    %1918 = vmatprep.subr.bf16.mxu0 0
    %1919 = vmatpush2.bf16.msra.mxu0 %v1342
    %1920 = vmatprep.mubr.bf16.mxu0 %v1885
    %1921 = vmatmul.mubr.bf16.gmra.mxu0 %v1884
    %v1922 = vpop.f32.mrf.mxu0
    %v1923 = vadd.f32 %v1205, %v1922
    %v1924 = vpop.f32.mrf.mxu0
    %v1925 = vpop.f32.mrf.mxu0
    %v1926 = vadd.f32 %v1205, %v1925
    %v1927 = vpop.f32.mrf.mxu0
    %1928 = vdwg.mxu0
    %1929 = vmatprep.subr.bf16.mxu0 0
    %1930 = vmatpush1.bf16.msra.mxu0 %v1357
    %1931 = vmatprep.subr.bf16.mxu0 0
    %1932 = vmatpush1.bf16.msra.mxu0 %v1356
    %1933 = vmatprep.subr.bf16.mxu0 0
    %1934 = vmatpush1.bf16.msra.mxu0 %v1355
    %1935 = vmatprep.subr.bf16.mxu0 0
    %1936 = vmatpush1.bf16.msra.mxu0 %v1354
    %1937 = vmatprep.subr.bf16.mxu0 0
    %1938 = vmatpush1.bf16.msra.mxu0 %v1353
    %1939 = vmatprep.subr.bf16.mxu0 0
    %1940 = vmatpush1.bf16.msra.mxu0 %v1352
    %1941 = vmatprep.subr.bf16.mxu0 0
    %1942 = vmatpush1.bf16.msra.mxu0 %v1351
    %1943 = vmatprep.subr.bf16.mxu0 0
    %1944 = vmatpush1.bf16.msra.mxu0 %v1350
    %1945 = vmatprep.subr.bf16.mxu0 0
    %1946 = vmatpush2.bf16.msra.mxu0 %v1365
    %1947 = vmatprep.subr.bf16.mxu0 0
    %1948 = vmatpush2.bf16.msra.mxu0 %v1364
    %1949 = vmatprep.subr.bf16.mxu0 0
    %1950 = vmatpush2.bf16.msra.mxu0 %v1363
    %1951 = vmatprep.subr.bf16.mxu0 0
    %1952 = vmatpush2.bf16.msra.mxu0 %v1362
    %1953 = vmatprep.subr.bf16.mxu0 0
    %1954 = vmatpush2.bf16.msra.mxu0 %v1361
    %1955 = vmatprep.subr.bf16.mxu0 0
    %1956 = vmatpush2.bf16.msra.mxu0 %v1360
    %1957 = vmatprep.subr.bf16.mxu0 0
    %1958 = vmatpush2.bf16.msra.mxu0 %v1359
    %1959 = vmatprep.subr.bf16.mxu0 0
    %1960 = vmatpush2.bf16.msra.mxu0 %v1358
    %1961 = vmatprep.mubr.bf16.mxu0 %v1887
    %1962 = vmatmul.mubr.bf16.gmra.mxu0 %v1886
    %v1963 = vpop.f32.mrf.mxu0
    %v1964 = vadd.f32 %v1923, %v1963
    %v1965 = vpop.f32.mrf.mxu0
    %v1966 = vpop.f32.mrf.mxu0
    %v1967 = vadd.f32 %v1926, %v1966
    %v1968 = vpop.f32.mrf.mxu0
    %1969 = vdwg.mxu0
    %v1970 = vadd.f32 %v1964, %v1729
    %v1971 = vadd.f32 %v1967, %v1730
    %1972 = vst [vmem:[%s422] sm:$0xff] %v1970
    %1973 = vst [vmem:[%s422 + $0x8] sm:$0xff] %v1971
    %v1974 = vld [vmem:[%s431] sm:$0xff]
    %v1975 = vld [vmem:[%s431 + $0x8] sm:$0xff]
    %1976 = vadd.xlane.f32.xlu0 %v1974
    %v1977 = vpop.xlane.xlu0 %1976
    %1978 = vadd.xlane.f32.xlu0 %v1975
    %v1979 = vpop.xlane.xlu0 %1978
    %v1980 = vmul.f32 %v1977, %v120
    %v1981 = vmul.f32 %v1979, %v120
    %v1982 = vsub.f32 %v1974, %v1980
    %v1983 = vsub.f32 %v1975, %v1981
    %v1984 = vmul.f32 %v1982, %v1982
    %v1985 = vmul.f32 %v1983, %v1983
    %1986 = vadd.xlane.f32.xlu0 %v1984
    %v1987 = vpop.xlane.xlu0 %1986
    %1988 = vadd.xlane.f32.xlu0 %v1985
    %v1989 = vpop.xlane.xlu0 %1988
    %v1990 = vmul.f32 %v1987, %v120
    %v1991 = vmul.f32 %v1989, %v120
    %v1992 = vadd.f32 %v1990, 1e-05
    %v1993 = vadd.f32 %v1991, 1e-05
    %v1994 = vrsqrt.pop %v1992
    %v1995 = vrsqrt.pop %v1993
    %v1996 = vmul.f32 %v1982, %v1994
    %v1997 = vmul.f32 %v1983, %v1995
    %v1998 = vmul.f32 %v1996, %v881
    %v1999 = vmul.f32 %v1997, %v881
    %v2000 = vadd.f32 %v1998, %v887
    %v2001 = vadd.f32 %v1999, %v887
    %v2002 = vpack.c.bf16 %v2001, %v2000
    %2003 = vmatprep.subr.bf16.mxu0 %v1037
    %2004 = vmatpush1.bf16.msra.mxu0 %v1036
    %2005 = vmatprep.subr.bf16.mxu0 %v1033
    %2006 = vmatpush1.bf16.msra.mxu0 %v1032
    %2007 = vmatprep.subr.bf16.mxu0 %v1029
    %2008 = vmatpush1.bf16.msra.mxu0 %v1028
    %2009 = vmatprep.subr.bf16.mxu0 %v1025
    %2010 = vmatpush1.bf16.msra.mxu0 %v1024
    %2011 = vmatprep.subr.bf16.mxu0 %v1021
    %2012 = vmatpush1.bf16.msra.mxu0 %v1020
    %2013 = vmatprep.subr.bf16.mxu0 %v1017
    %2014 = vmatpush1.bf16.msra.mxu0 %v1016
    %2015 = vmatprep.subr.bf16.mxu0 %v1013
    %2016 = vmatpush1.bf16.msra.mxu0 %v1012
    %2017 = vmatprep.subr.bf16.mxu0 %v1009
    %2018 = vmatpush1.bf16.msra.mxu0 %v1008
    %2019 = vmatprep.subr.bf16.mxu0 0
    %2020 = vmatpush2.bf16.msra.mxu0 0
    %2021 = vmatprep.subr.bf16.mxu0 0
    %2022 = vmatpush2.bf16.msra.mxu0 0
    %2023 = vmatprep.subr.bf16.mxu0 0
    %2024 = vmatpush2.bf16.msra.mxu0 0
    %2025 = vmatprep.subr.bf16.mxu0 0
    %2026 = vmatpush2.bf16.msra.mxu0 0
    %2027 = vmatprep.subr.bf16.mxu0 0
    %2028 = vmatpush2.bf16.msra.mxu0 0
    %2029 = vmatprep.subr.bf16.mxu0 0
    %2030 = vmatpush2.bf16.msra.mxu0 0
    %2031 = vmatprep.subr.bf16.mxu0 0
    %2032 = vmatpush2.bf16.msra.mxu0 0
    %2033 = vmatprep.subr.bf16.mxu0 0
    %2034 = vmatpush2.bf16.msra.mxu0 0
    %2035 = vmatprep.mubr.bf16.mxu0 0
    %2036 = vmatmul.mubr.bf16.gmra.mxu0 %v2002
    %v2037 = vpop.f32.mrf.mxu0
    %v2038 = vadd.f32 %v895, %v2037
    %v2039 = vpop.f32.mrf.mxu0
    %v2040 = vadd.f32 %v899, %v2039
    %v2041 = vpop.f32.mrf.mxu0
    %v2042 = vadd.f32 %v895, %v2041
    %v2043 = vpop.f32.mrf.mxu0
    %v2044 = vadd.f32 %v899, %v2043
    %2045 = vdwg.mxu0
    %2046 = vmatprep.subr.bf16.mxu0 %v1039
    %2047 = vmatpush1.bf16.msra.mxu0 %v1038
    %2048 = vmatprep.subr.bf16.mxu0 %v1035
    %2049 = vmatpush1.bf16.msra.mxu0 %v1034
    %2050 = vmatprep.subr.bf16.mxu0 %v1031
    %2051 = vmatpush1.bf16.msra.mxu0 %v1030
    %2052 = vmatprep.subr.bf16.mxu0 %v1027
    %2053 = vmatpush1.bf16.msra.mxu0 %v1026
    %2054 = vmatprep.subr.bf16.mxu0 %v1023
    %2055 = vmatpush1.bf16.msra.mxu0 %v1022
    %2056 = vmatprep.subr.bf16.mxu0 %v1019
    %2057 = vmatpush1.bf16.msra.mxu0 %v1018
    %2058 = vmatprep.subr.bf16.mxu0 %v1015
    %2059 = vmatpush1.bf16.msra.mxu0 %v1014
    %2060 = vmatprep.subr.bf16.mxu0 %v1011
    %2061 = vmatpush1.bf16.msra.mxu0 %v1010
    %2062 = vmatprep.subr.bf16.mxu0 0
    %2063 = vmatpush2.bf16.msra.mxu0 0
    %2064 = vmatprep.subr.bf16.mxu0 0
    %2065 = vmatpush2.bf16.msra.mxu0 0
    %2066 = vmatprep.subr.bf16.mxu0 0
    %2067 = vmatpush2.bf16.msra.mxu0 0
    %2068 = vmatprep.subr.bf16.mxu0 0
    %2069 = vmatpush2.bf16.msra.mxu0 0
    %2070 = vmatprep.subr.bf16.mxu0 0
    %2071 = vmatpush2.bf16.msra.mxu0 0
    %2072 = vmatprep.subr.bf16.mxu0 0
    %2073 = vmatpush2.bf16.msra.mxu0 0
    %2074 = vmatprep.subr.bf16.mxu0 0
    %2075 = vmatpush2.bf16.msra.mxu0 0
    %2076 = vmatprep.subr.bf16.mxu0 0
    %2077 = vmatpush2.bf16.msra.mxu0 0
    %2078 = vmatprep.mubr.bf16.mxu0 0
    %2079 = vmatmul.mubr.bf16.gmra.mxu0 %v2002
    %v2080 = vpop.f32.mrf.mxu0
    %v2081 = vadd.f32 %v903, %v2080
    %v2082 = vpop.f32.mrf.mxu0
    %v2083 = vadd.f32 %v907, %v2082
    %v2084 = vpop.f32.mrf.mxu0
    %v2085 = vadd.f32 %v903, %v2084
    %v2086 = vpop.f32.mrf.mxu0
    %v2087 = vadd.f32 %v907, %v2086
    %2088 = vdwg.mxu0
    %v2089 = vmul.f32 %v2038, 0.5
    %v2090 = vmul.f32 %v2040, 0.5
    %v2091 = vmul.f32 %v2081, 0.5
    %v2092 = vmul.f32 %v2083, 0.5
    %v2093 = vmul.f32 %v2042, 0.5
    %v2094 = vmul.f32 %v2044, 0.5
    %v2095 = vmul.f32 %v2085, 0.5
    %v2096 = vmul.f32 %v2087, 0.5
    %v2097 = vmul.f32 %v2038, 0.70710677
    %v2098 = vmul.f32 %v2040, 0.70710677
    %v2099 = vmul.f32 %v2081, 0.70710677
    %v2100 = vmul.f32 %v2083, 0.70710677
    %v2101 = vmul.f32 %v2042, 0.70710677
    %v2102 = vmul.f32 %v2044, 0.70710677
    %v2103 = vmul.f32 %v2085, 0.70710677
    %v2104 = vmul.f32 %v2087, 0.70710677
    %v2105 = verf.f32.pop %v2097
    %v2106 = verf.f32.pop %v2098
    %v2107 = verf.f32.pop %v2099
    %v2108 = verf.f32.pop %v2100
    %v2109 = verf.f32.pop %v2101
    %v2110 = verf.f32.pop %v2102
    %v2111 = verf.f32.pop %v2103
    %v2112 = verf.f32.pop %v2104
    %v2113 = vadd.f32 %v2105, 1.0
    %v2114 = vadd.f32 %v2106, 1.0
    %v2115 = vadd.f32 %v2107, 1.0
    %v2116 = vadd.f32 %v2108, 1.0
    %v2117 = vadd.f32 %v2109, 1.0
    %v2118 = vadd.f32 %v2110, 1.0
    %v2119 = vadd.f32 %v2111, 1.0
    %v2120 = vadd.f32 %v2112, 1.0
    %v2121 = vmul.f32 %v2089, %v2113
    %v2122 = vmul.f32 %v2090, %v2114
    %v2123 = vmul.f32 %v2091, %v2115
    %v2124 = vmul.f32 %v2092, %v2116
    %v2125 = vmul.f32 %v2093, %v2117
    %v2126 = vmul.f32 %v2094, %v2118
    %v2127 = vmul.f32 %v2095, %v2119
    %v2128 = vmul.f32 %v2096, %v2120
    %v2129 = vpack.c.bf16 %v2125, %v2121
    %v2130 = vpack.c.bf16 %v2126, %v2122
    %v2131 = vpack.c.bf16 %v2127, %v2123
    %v2132 = vpack.c.bf16 %v2128, %v2124
    %2133 = vmatprep.subr.bf16.mxu0 0
    %2134 = vmatpush1.bf16.msra.mxu0 %v1341
    %2135 = vmatprep.subr.bf16.mxu0 0
    %2136 = vmatpush1.bf16.msra.mxu0 %v1340
    %2137 = vmatprep.subr.bf16.mxu0 0
    %2138 = vmatpush1.bf16.msra.mxu0 %v1339
    %2139 = vmatprep.subr.bf16.mxu0 0
    %2140 = vmatpush1.bf16.msra.mxu0 %v1338
    %2141 = vmatprep.subr.bf16.mxu0 0
    %2142 = vmatpush1.bf16.msra.mxu0 %v1337
    %2143 = vmatprep.subr.bf16.mxu0 0
    %2144 = vmatpush1.bf16.msra.mxu0 %v1336
    %2145 = vmatprep.subr.bf16.mxu0 0
    %2146 = vmatpush1.bf16.msra.mxu0 %v1335
    %2147 = vmatprep.subr.bf16.mxu0 0
    %2148 = vmatpush1.bf16.msra.mxu0 %v1334
    %2149 = vmatprep.subr.bf16.mxu0 0
    %2150 = vmatpush2.bf16.msra.mxu0 %v1349
    %2151 = vmatprep.subr.bf16.mxu0 0
    %2152 = vmatpush2.bf16.msra.mxu0 %v1348
    %2153 = vmatprep.subr.bf16.mxu0 0
    %2154 = vmatpush2.bf16.msra.mxu0 %v1347
    %2155 = vmatprep.subr.bf16.mxu0 0
    %2156 = vmatpush2.bf16.msra.mxu0 %v1346
    %2157 = vmatprep.subr.bf16.mxu0 0
    %2158 = vmatpush2.bf16.msra.mxu0 %v1345
    %2159 = vmatprep.subr.bf16.mxu0 0
    %2160 = vmatpush2.bf16.msra.mxu0 %v1344
    %2161 = vmatprep.subr.bf16.mxu0 0
    %2162 = vmatpush2.bf16.msra.mxu0 %v1343
    %2163 = vmatprep.subr.bf16.mxu0 0
    %2164 = vmatpush2.bf16.msra.mxu0 %v1342
    %2165 = vmatprep.mubr.bf16.mxu0 %v2130
    %2166 = vmatmul.mubr.bf16.gmra.mxu0 %v2129
    %v2167 = vpop.f32.mrf.mxu0
    %v2168 = vadd.f32 %v1205, %v2167
    %v2169 = vpop.f32.mrf.mxu0
    %v2170 = vpop.f32.mrf.mxu0
    %v2171 = vadd.f32 %v1205, %v2170
    %v2172 = vpop.f32.mrf.mxu0
    %2173 = vdwg.mxu0
    %2174 = vmatprep.subr.bf16.mxu0 0
    %2175 = vmatpush1.bf16.msra.mxu0 %v1357
    %2176 = vmatprep.subr.bf16.mxu0 0
    %2177 = vmatpush1.bf16.msra.mxu0 %v1356
    %2178 = vmatprep.subr.bf16.mxu0 0
    %2179 = vmatpush1.bf16.msra.mxu0 %v1355
    %2180 = vmatprep.subr.bf16.mxu0 0
    %2181 = vmatpush1.bf16.msra.mxu0 %v1354
    %2182 = vmatprep.subr.bf16.mxu0 0
    %2183 = vmatpush1.bf16.msra.mxu0 %v1353
    %2184 = vmatprep.subr.bf16.mxu0 0
    %2185 = vmatpush1.bf16.msra.mxu0 %v1352
    %2186 = vmatprep.subr.bf16.mxu0 0
    %2187 = vmatpush1.bf16.msra.mxu0 %v1351
    %2188 = vmatprep.subr.bf16.mxu0 0
    %2189 = vmatpush1.bf16.msra.mxu0 %v1350
    %2190 = vmatprep.subr.bf16.mxu0 0
    %2191 = vmatpush2.bf16.msra.mxu0 %v1365
    %2192 = vmatprep.subr.bf16.mxu0 0
    %2193 = vmatpush2.bf16.msra.mxu0 %v1364
    %2194 = vmatprep.subr.bf16.mxu0 0
    %2195 = vmatpush2.bf16.msra.mxu0 %v1363
    %2196 = vmatprep.subr.bf16.mxu0 0
    %2197 = vmatpush2.bf16.msra.mxu0 %v1362
    %2198 = vmatprep.subr.bf16.mxu0 0
    %2199 = vmatpush2.bf16.msra.mxu0 %v1361
    %2200 = vmatprep.subr.bf16.mxu0 0
    %2201 = vmatpush2.bf16.msra.mxu0 %v1360
    %2202 = vmatprep.subr.bf16.mxu0 0
    %2203 = vmatpush2.bf16.msra.mxu0 %v1359
    %2204 = vmatprep.subr.bf16.mxu0 0
    %2205 = vmatpush2.bf16.msra.mxu0 %v1358
    %2206 = vmatprep.mubr.bf16.mxu0 %v2132
    %2207 = vmatmul.mubr.bf16.gmra.mxu0 %v2131
    %v2208 = vpop.f32.mrf.mxu0
    %v2209 = vadd.f32 %v2168, %v2208
    %v2210 = vpop.f32.mrf.mxu0
    %v2211 = vpop.f32.mrf.mxu0
    %v2212 = vadd.f32 %v2171, %v2211
    %v2213 = vpop.f32.mrf.mxu0
    %2214 = vdwg.mxu0
    %v2215 = vadd.f32 %v2209, %v1974
    %v2216 = vadd.f32 %v2212, %v1975
    %2217 = vst [vmem:[%s431] sm:$0xff] %v2215
    %2218 = vst [vmem:[%s431 + $0x8] sm:$0xff] %v2216
    %v2219 = vld [vmem:[#allocation12] sm:$0xff]
    %v2220 = vld [vmem:[#allocation12 + $0x8] sm:$0xff]
    %2221 = vadd.xlane.f32.xlu0 %v2219
    %v2222 = vpop.xlane.xlu0 %2221
    %2223 = vadd.xlane.f32.xlu0 %v2220
    %v2224 = vpop.xlane.xlu0 %2223
    %v2225 = vmul.f32 %v2222, %v120
    %v2226 = vmul.f32 %v2224, %v120
    %v2227 = vsub.f32 %v2219, %v2225
    %v2228 = vsub.f32 %v2220, %v2226
    %v2229 = vmul.f32 %v2227, %v2227
    %v2230 = vmul.f32 %v2228, %v2228
    %2231 = vadd.xlane.f32.xlu0 %v2229
    %v2232 = vpop.xlane.xlu0 %2231
    %2233 = vadd.xlane.f32.xlu0 %v2230
    %v2234 = vpop.xlane.xlu0 %2233
    %v2235 = vmul.f32 %v2232, %v120
    %v2236 = vmul.f32 %v2234, %v120
    %v2237 = vadd.f32 %v2235, 1e-05
    %v2238 = vadd.f32 %v2236, 1e-05
    %v2239 = vrsqrt.pop %v2237
    %v2240 = vrsqrt.pop %v2238
    %v2241 = vmul.f32 %v2227, %v2239
    %v2242 = vmul.f32 %v2228, %v2240
    %v2243 = vmul.f32 %v2241, %v881
    %v2244 = vmul.f32 %v2242, %v881
    %v2245 = vadd.f32 %v2243, %v887
    %v2246 = vadd.f32 %v2244, %v887
    %v2247 = vpack.c.bf16 %v2246, %v2245
    %2248 = vmatprep.subr.bf16.mxu0 %v1037
    %2249 = vmatpush1.bf16.msra.mxu0 %v1036
    %2250 = vmatprep.subr.bf16.mxu0 %v1033
    %2251 = vmatpush1.bf16.msra.mxu0 %v1032
    %2252 = vmatprep.subr.bf16.mxu0 %v1029
    %2253 = vmatpush1.bf16.msra.mxu0 %v1028
    %2254 = vmatprep.subr.bf16.mxu0 %v1025
    %2255 = vmatpush1.bf16.msra.mxu0 %v1024
    %2256 = vmatprep.subr.bf16.mxu0 %v1021
    %2257 = vmatpush1.bf16.msra.mxu0 %v1020
    %2258 = vmatprep.subr.bf16.mxu0 %v1017
    %2259 = vmatpush1.bf16.msra.mxu0 %v1016
    %2260 = vmatprep.subr.bf16.mxu0 %v1013
    %2261 = vmatpush1.bf16.msra.mxu0 %v1012
    %2262 = vmatprep.subr.bf16.mxu0 %v1009
    %2263 = vmatpush1.bf16.msra.mxu0 %v1008
    %2264 = vmatprep.subr.bf16.mxu0 0
    %2265 = vmatpush2.bf16.msra.mxu0 0
    %2266 = vmatprep.subr.bf16.mxu0 0
    %2267 = vmatpush2.bf16.msra.mxu0 0
    %2268 = vmatprep.subr.bf16.mxu0 0
    %2269 = vmatpush2.bf16.msra.mxu0 0
    %2270 = vmatprep.subr.bf16.mxu0 0
    %2271 = vmatpush2.bf16.msra.mxu0 0
    %2272 = vmatprep.subr.bf16.mxu0 0
    %2273 = vmatpush2.bf16.msra.mxu0 0
    %2274 = vmatprep.subr.bf16.mxu0 0
    %2275 = vmatpush2.bf16.msra.mxu0 0
    %2276 = vmatprep.subr.bf16.mxu0 0
    %2277 = vmatpush2.bf16.msra.mxu0 0
    %2278 = vmatprep.subr.bf16.mxu0 0
    %2279 = vmatpush2.bf16.msra.mxu0 0
    %2280 = vmatprep.mubr.bf16.mxu0 0
    %2281 = vmatmul.mubr.bf16.gmra.mxu0 %v2247
    %v2282 = vpop.f32.mrf.mxu0
    %v2283 = vadd.f32 %v895, %v2282
    %v2284 = vpop.f32.mrf.mxu0
    %v2285 = vadd.f32 %v899, %v2284
    %v2286 = vpop.f32.mrf.mxu0
    %v2287 = vadd.f32 %v895, %v2286
    %v2288 = vpop.f32.mrf.mxu0
    %v2289 = vadd.f32 %v899, %v2288
    %2290 = vdwg.mxu0
    %2291 = vmatprep.subr.bf16.mxu0 %v1039
    %2292 = vmatpush1.bf16.msra.mxu0 %v1038
    %2293 = vmatprep.subr.bf16.mxu0 %v1035
    %2294 = vmatpush1.bf16.msra.mxu0 %v1034
    %2295 = vmatprep.subr.bf16.mxu0 %v1031
    %2296 = vmatpush1.bf16.msra.mxu0 %v1030
    %2297 = vmatprep.subr.bf16.mxu0 %v1027
    %2298 = vmatpush1.bf16.msra.mxu0 %v1026
    %2299 = vmatprep.subr.bf16.mxu0 %v1023
    %2300 = vmatpush1.bf16.msra.mxu0 %v1022
    %2301 = vmatprep.subr.bf16.mxu0 %v1019
    %2302 = vmatpush1.bf16.msra.mxu0 %v1018
    %2303 = vmatprep.subr.bf16.mxu0 %v1015
    %2304 = vmatpush1.bf16.msra.mxu0 %v1014
    %2305 = vmatprep.subr.bf16.mxu0 %v1011
    %2306 = vmatpush1.bf16.msra.mxu0 %v1010
    %2307 = vmatprep.subr.bf16.mxu0 0
    %2308 = vmatpush2.bf16.msra.mxu0 0
    %2309 = vmatprep.subr.bf16.mxu0 0
    %2310 = vmatpush2.bf16.msra.mxu0 0
    %2311 = vmatprep.subr.bf16.mxu0 0
    %2312 = vmatpush2.bf16.msra.mxu0 0
    %2313 = vmatprep.subr.bf16.mxu0 0
    %2314 = vmatpush2.bf16.msra.mxu0 0
    %2315 = vmatprep.subr.bf16.mxu0 0
    %2316 = vmatpush2.bf16.msra.mxu0 0
    %2317 = vmatprep.subr.bf16.mxu0 0
    %2318 = vmatpush2.bf16.msra.mxu0 0
    %2319 = vmatprep.subr.bf16.mxu0 0
    %2320 = vmatpush2.bf16.msra.mxu0 0
    %2321 = vmatprep.subr.bf16.mxu0 0
    %2322 = vmatpush2.bf16.msra.mxu0 0
    %2323 = vmatprep.mubr.bf16.mxu0 0
    %2324 = vmatmul.mubr.bf16.gmra.mxu0 %v2247
    %v2325 = vpop.f32.mrf.mxu0
    %v2326 = vadd.f32 %v903, %v2325
    %v2327 = vpop.f32.mrf.mxu0
    %v2328 = vadd.f32 %v907, %v2327
    %v2329 = vpop.f32.mrf.mxu0
    %v2330 = vadd.f32 %v903, %v2329
    %v2331 = vpop.f32.mrf.mxu0
    %v2332 = vadd.f32 %v907, %v2331
    %2333 = vdwg.mxu0
    %v2334 = vmul.f32 %v2283, 0.5
    %v2335 = vmul.f32 %v2285, 0.5
    %v2336 = vmul.f32 %v2326, 0.5
    %v2337 = vmul.f32 %v2328, 0.5
    %v2338 = vmul.f32 %v2287, 0.5
    %v2339 = vmul.f32 %v2289, 0.5
    %v2340 = vmul.f32 %v2330, 0.5
    %v2341 = vmul.f32 %v2332, 0.5
    %v2342 = vmul.f32 %v2283, 0.70710677
    %v2343 = vmul.f32 %v2285, 0.70710677
    %v2344 = vmul.f32 %v2326, 0.70710677
    %v2345 = vmul.f32 %v2328, 0.70710677
    %v2346 = vmul.f32 %v2287, 0.70710677
    %v2347 = vmul.f32 %v2289, 0.70710677
    %v2348 = vmul.f32 %v2330, 0.70710677
    %v2349 = vmul.f32 %v2332, 0.70710677
    %v2350 = verf.f32.pop %v2342
    %v2351 = verf.f32.pop %v2343
    %v2352 = verf.f32.pop %v2344
    %v2353 = verf.f32.pop %v2345
    %v2354 = verf.f32.pop %v2346
    %v2355 = verf.f32.pop %v2347
    %v2356 = verf.f32.pop %v2348
    %v2357 = verf.f32.pop %v2349
    %v2358 = vadd.f32 %v2350, 1.0
    %v2359 = vadd.f32 %v2351, 1.0
    %v2360 = vadd.f32 %v2352, 1.0
    %v2361 = vadd.f32 %v2353, 1.0
    %v2362 = vadd.f32 %v2354, 1.0
    %v2363 = vadd.f32 %v2355, 1.0
    %v2364 = vadd.f32 %v2356, 1.0
    %v2365 = vadd.f32 %v2357, 1.0
    %v2366 = vmul.f32 %v2334, %v2358
    %v2367 = vmul.f32 %v2335, %v2359
    %v2368 = vmul.f32 %v2336, %v2360
    %v2369 = vmul.f32 %v2337, %v2361
    %v2370 = vmul.f32 %v2338, %v2362
    %v2371 = vmul.f32 %v2339, %v2363
    %v2372 = vmul.f32 %v2340, %v2364
    %v2373 = vmul.f32 %v2341, %v2365
    %v2374 = vpack.c.bf16 %v2370, %v2366
    %v2375 = vpack.c.bf16 %v2371, %v2367
    %v2376 = vpack.c.bf16 %v2372, %v2368
    %v2377 = vpack.c.bf16 %v2373, %v2369
    %2378 = vmatprep.subr.bf16.mxu0 0
    %2379 = vmatpush1.bf16.msra.mxu0 %v1341
    %2380 = vmatprep.subr.bf16.mxu0 0
    %2381 = vmatpush1.bf16.msra.mxu0 %v1340
    %2382 = vmatprep.subr.bf16.mxu0 0
    %2383 = vmatpush1.bf16.msra.mxu0 %v1339
    %2384 = vmatprep.subr.bf16.mxu0 0
    %2385 = vmatpush1.bf16.msra.mxu0 %v1338
    %2386 = vmatprep.subr.bf16.mxu0 0
    %2387 = vmatpush1.bf16.msra.mxu0 %v1337
    %2388 = vmatprep.subr.bf16.mxu0 0
    %2389 = vmatpush1.bf16.msra.mxu0 %v1336
    %2390 = vmatprep.subr.bf16.mxu0 0
    %2391 = vmatpush1.bf16.msra.mxu0 %v1335
    %2392 = vmatprep.subr.bf16.mxu0 0
    %2393 = vmatpush1.bf16.msra.mxu0 %v1334
    %2394 = vmatprep.subr.bf16.mxu0 0
    %2395 = vmatpush2.bf16.msra.mxu0 %v1349
    %2396 = vmatprep.subr.bf16.mxu0 0
    %2397 = vmatpush2.bf16.msra.mxu0 %v1348
    %2398 = vmatprep.subr.bf16.mxu0 0
    %2399 = vmatpush2.bf16.msra.mxu0 %v1347
    %2400 = vmatprep.subr.bf16.mxu0 0
    %2401 = vmatpush2.bf16.msra.mxu0 %v1346
    %2402 = vmatprep.subr.bf16.mxu0 0
    %2403 = vmatpush2.bf16.msra.mxu0 %v1345
    %2404 = vmatprep.subr.bf16.mxu0 0
    %2405 = vmatpush2.bf16.msra.mxu0 %v1344
    %2406 = vmatprep.subr.bf16.mxu0 0
    %2407 = vmatpush2.bf16.msra.mxu0 %v1343
    %2408 = vmatprep.subr.bf16.mxu0 0
    %2409 = vmatpush2.bf16.msra.mxu0 %v1342
    %2410 = vmatprep.mubr.bf16.mxu0 %v2375
    %2411 = vmatmul.mubr.bf16.gmra.mxu0 %v2374
    %v2412 = vpop.f32.mrf.mxu0
    %v2413 = vadd.f32 %v1205, %v2412
    %v2414 = vpop.f32.mrf.mxu0
    %v2415 = vpop.f32.mrf.mxu0
    %v2416 = vadd.f32 %v1205, %v2415
    %v2417 = vpop.f32.mrf.mxu0
    %2418 = vdwg.mxu0
    %2419 = vmatprep.subr.bf16.mxu0 0
    %2420 = vmatpush1.bf16.msra.mxu0 %v1357
    %2421 = vmatprep.subr.bf16.mxu0 0
    %2422 = vmatpush1.bf16.msra.mxu0 %v1356
    %2423 = vmatprep.subr.bf16.mxu0 0
    %2424 = vmatpush1.bf16.msra.mxu0 %v1355
    %2425 = vmatprep.subr.bf16.mxu0 0
    %2426 = vmatpush1.bf16.msra.mxu0 %v1354
    %2427 = vmatprep.subr.bf16.mxu0 0
    %2428 = vmatpush1.bf16.msra.mxu0 %v1353
    %2429 = vmatprep.subr.bf16.mxu0 0
    %2430 = vmatpush1.bf16.msra.mxu0 %v1352
    %2431 = vmatprep.subr.bf16.mxu0 0
    %2432 = vmatpush1.bf16.msra.mxu0 %v1351
    %2433 = vmatprep.subr.bf16.mxu0 0
    %2434 = vmatpush1.bf16.msra.mxu0 %v1350
    %2435 = vmatprep.subr.bf16.mxu0 0
    %2436 = vmatpush2.bf16.msra.mxu0 %v1365
    %2437 = vmatprep.subr.bf16.mxu0 0
    %2438 = vmatpush2.bf16.msra.mxu0 %v1364
    %2439 = vmatprep.subr.bf16.mxu0 0
    %2440 = vmatpush2.bf16.msra.mxu0 %v1363
    %2441 = vmatprep.subr.bf16.mxu0 0
    %2442 = vmatpush2.bf16.msra.mxu0 %v1362
    %2443 = vmatprep.subr.bf16.mxu0 0
    %2444 = vmatpush2.bf16.msra.mxu0 %v1361
    %2445 = vmatprep.subr.bf16.mxu0 0
    %2446 = vmatpush2.bf16.msra.mxu0 %v1360
    %2447 = vmatprep.subr.bf16.mxu0 0
    %2448 = vmatpush2.bf16.msra.mxu0 %v1359
    %2449 = vmatprep.subr.bf16.mxu0 0
    %2450 = vmatpush2.bf16.msra.mxu0 %v1358
    %2451 = vmatprep.mubr.bf16.mxu0 %v2377
    %2452 = vmatmul.mubr.bf16.gmra.mxu0 %v2376
    %v2453 = vpop.f32.mrf.mxu0
    %v2454 = vadd.f32 %v2413, %v2453
    %v2455 = vpop.f32.mrf.mxu0
    %v2456 = vpop.f32.mrf.mxu0
    %v2457 = vadd.f32 %v2416, %v2456
    %v2458 = vpop.f32.mrf.mxu0
    %2459 = vdwg.mxu0
    %v2460 = vadd.f32 %v2454, %v2219
    %v2461 = vadd.f32 %v2457, %v2220
    %2462 = vst [vmem:[#allocation12] sm:$0xff] %v2460
    %2463 = vst [vmem:[#allocation12 + $0x8] sm:$0xff] %v2461
    %v2464 = vld [vmem:[%s733] sm:$0xff]
    %v2465 = vld [vmem:[%s733 + $0x8] sm:$0xff]
    %2466 = vadd.xlane.f32.xlu0 %v2464
    %v2467 = vpop.xlane.xlu0 %2466
    %2468 = vadd.xlane.f32.xlu0 %v2465
    %v2469 = vpop.xlane.xlu0 %2468
    %v2470 = vmul.f32 %v2467, %v120
    %v2471 = vmul.f32 %v2469, %v120
    %v2472 = vsub.f32 %v2464, %v2470
    %v2473 = vsub.f32 %v2465, %v2471
    %v2474 = vmul.f32 %v2472, %v2472
    %v2475 = vmul.f32 %v2473, %v2473
    %2476 = vadd.xlane.f32.xlu0 %v2474
    %v2477 = vpop.xlane.xlu0 %2476
    %2478 = vadd.xlane.f32.xlu0 %v2475
    %v2479 = vpop.xlane.xlu0 %2478
    %v2480 = vmul.f32 %v2477, %v120
    %v2481 = vmul.f32 %v2479, %v120
    %v2482 = vadd.f32 %v2480, 1e-05
    %v2483 = vadd.f32 %v2481, 1e-05
    %v2484 = vrsqrt.pop %v2482
    %v2485 = vrsqrt.pop %v2483
    %v2486 = vmul.f32 %v2472, %v2484
    %v2487 = vmul.f32 %v2473, %v2485
    %v2488 = vmul.f32 %v2486, %v881
    %v2489 = vmul.f32 %v2487, %v881
    %v2490 = vadd.f32 %v2488, %v887
    %v2491 = vadd.f32 %v2489, %v887
    %v2492 = vpack.c.bf16 %v2491, %v2490
    %2493 = vmatprep.subr.bf16.mxu0 %v1037
    %2494 = vmatpush1.bf16.msra.mxu0 %v1036
    %2495 = vmatprep.subr.bf16.mxu0 %v1033
    %2496 = vmatpush1.bf16.msra.mxu0 %v1032
    %2497 = vmatprep.subr.bf16.mxu0 %v1029
    %2498 = vmatpush1.bf16.msra.mxu0 %v1028
    %2499 = vmatprep.subr.bf16.mxu0 %v1025
    %2500 = vmatpush1.bf16.msra.mxu0 %v1024
    %2501 = vmatprep.subr.bf16.mxu0 %v1021
    %2502 = vmatpush1.bf16.msra.mxu0 %v1020
    %2503 = vmatprep.subr.bf16.mxu0 %v1017
    %2504 = vmatpush1.bf16.msra.mxu0 %v1016
    %2505 = vmatprep.subr.bf16.mxu0 %v1013
    %2506 = vmatpush1.bf16.msra.mxu0 %v1012
    %2507 = vmatprep.subr.bf16.mxu0 %v1009
    %2508 = vmatpush1.bf16.msra.mxu0 %v1008
    %2509 = vmatprep.subr.bf16.mxu0 0
    %2510 = vmatpush2.bf16.msra.mxu0 0
    %2511 = vmatprep.subr.bf16.mxu0 0
    %2512 = vmatpush2.bf16.msra.mxu0 0
    %2513 = vmatprep.subr.bf16.mxu0 0
    %2514 = vmatpush2.bf16.msra.mxu0 0
    %2515 = vmatprep.subr.bf16.mxu0 0
    %2516 = vmatpush2.bf16.msra.mxu0 0
    %2517 = vmatprep.subr.bf16.mxu0 0
    %2518 = vmatpush2.bf16.msra.mxu0 0
    %2519 = vmatprep.subr.bf16.mxu0 0
    %2520 = vmatpush2.bf16.msra.mxu0 0
    %2521 = vmatprep.subr.bf16.mxu0 0
    %2522 = vmatpush2.bf16.msra.mxu0 0
    %2523 = vmatprep.subr.bf16.mxu0 0
    %2524 = vmatpush2.bf16.msra.mxu0 0
    %2525 = vmatprep.mubr.bf16.mxu0 0
    %2526 = vmatmul.mubr.bf16.gmra.mxu0 %v2492
    %v2527 = vpop.f32.mrf.mxu0
    %v2528 = vadd.f32 %v895, %v2527
    %v2529 = vpop.f32.mrf.mxu0
    %v2530 = vadd.f32 %v899, %v2529
    %v2531 = vpop.f32.mrf.mxu0
    %v2532 = vadd.f32 %v895, %v2531
    %v2533 = vpop.f32.mrf.mxu0
    %v2534 = vadd.f32 %v899, %v2533
    %2535 = vdwg.mxu0
    %2536 = vmatprep.subr.bf16.mxu0 %v1039
    %2537 = vmatpush1.bf16.msra.mxu0 %v1038
    %2538 = vmatprep.subr.bf16.mxu0 %v1035
    %2539 = vmatpush1.bf16.msra.mxu0 %v1034
    %2540 = vmatprep.subr.bf16.mxu0 %v1031
    %2541 = vmatpush1.bf16.msra.mxu0 %v1030
    %2542 = vmatprep.subr.bf16.mxu0 %v1027
    %2543 = vmatpush1.bf16.msra.mxu0 %v1026
    %2544 = vmatprep.subr.bf16.mxu0 %v1023
    %2545 = vmatpush1.bf16.msra.mxu0 %v1022
    %2546 = vmatprep.subr.bf16.mxu0 %v1019
    %2547 = vmatpush1.bf16.msra.mxu0 %v1018
    %2548 = vmatprep.subr.bf16.mxu0 %v1015
    %2549 = vmatpush1.bf16.msra.mxu0 %v1014
    %2550 = vmatprep.subr.bf16.mxu0 %v1011
    %2551 = vmatpush1.bf16.msra.mxu0 %v1010
    %2552 = vmatprep.subr.bf16.mxu0 0
    %2553 = vmatpush2.bf16.msra.mxu0 0
    %2554 = vmatprep.subr.bf16.mxu0 0
    %2555 = vmatpush2.bf16.msra.mxu0 0
    %2556 = vmatprep.subr.bf16.mxu0 0
    %2557 = vmatpush2.bf16.msra.mxu0 0
    %2558 = vmatprep.subr.bf16.mxu0 0
    %2559 = vmatpush2.bf16.msra.mxu0 0
    %2560 = vmatprep.subr.bf16.mxu0 0
    %2561 = vmatpush2.bf16.msra.mxu0 0
    %2562 = vmatprep.subr.bf16.mxu0 0
    %2563 = vmatpush2.bf16.msra.mxu0 0
    %2564 = vmatprep.subr.bf16.mxu0 0
    %2565 = vmatpush2.bf16.msra.mxu0 0
    %2566 = vmatprep.subr.bf16.mxu0 0
    %2567 = vmatpush2.bf16.msra.mxu0 0
    %2568 = vmatprep.mubr.bf16.mxu0 0
    %2569 = vmatmul.mubr.bf16.gmra.mxu0 %v2492
    %v2570 = vpop.f32.mrf.mxu0
    %v2571 = vadd.f32 %v903, %v2570
    %v2572 = vpop.f32.mrf.mxu0
    %v2573 = vadd.f32 %v907, %v2572
    %v2574 = vpop.f32.mrf.mxu0
    %v2575 = vadd.f32 %v903, %v2574
    %v2576 = vpop.f32.mrf.mxu0
    %v2577 = vadd.f32 %v907, %v2576
    %2578 = vdwg.mxu0
    %v2579 = vmul.f32 %v2528, 0.5
    %v2580 = vmul.f32 %v2530, 0.5
    %v2581 = vmul.f32 %v2571, 0.5
    %v2582 = vmul.f32 %v2573, 0.5
    %v2583 = vmul.f32 %v2532, 0.5
    %v2584 = vmul.f32 %v2534, 0.5
    %v2585 = vmul.f32 %v2575, 0.5
    %v2586 = vmul.f32 %v2577, 0.5
    %v2587 = vmul.f32 %v2528, 0.70710677
    %v2588 = vmul.f32 %v2530, 0.70710677
    %v2589 = vmul.f32 %v2571, 0.70710677
    %v2590 = vmul.f32 %v2573, 0.70710677
    %v2591 = vmul.f32 %v2532, 0.70710677
    %v2592 = vmul.f32 %v2534, 0.70710677
    %v2593 = vmul.f32 %v2575, 0.70710677
    %v2594 = vmul.f32 %v2577, 0.70710677
    %v2595 = verf.f32.pop %v2587
    %v2596 = verf.f32.pop %v2588
    %v2597 = verf.f32.pop %v2589
    %v2598 = verf.f32.pop %v2590
    %v2599 = verf.f32.pop %v2591
    %v2600 = verf.f32.pop %v2592
    %v2601 = verf.f32.pop %v2593
    %v2602 = verf.f32.pop %v2594
    %v2603 = vadd.f32 %v2595, 1.0
    %v2604 = vadd.f32 %v2596, 1.0
    %v2605 = vadd.f32 %v2597, 1.0
    %v2606 = vadd.f32 %v2598, 1.0
    %v2607 = vadd.f32 %v2599, 1.0
    %v2608 = vadd.f32 %v2600, 1.0
    %v2609 = vadd.f32 %v2601, 1.0
    %v2610 = vadd.f32 %v2602, 1.0
    %v2611 = vmul.f32 %v2579, %v2603
    %v2612 = vmul.f32 %v2580, %v2604
    %v2613 = vmul.f32 %v2581, %v2605
    %v2614 = vmul.f32 %v2582, %v2606
    %v2615 = vmul.f32 %v2583, %v2607
    %v2616 = vmul.f32 %v2584, %v2608
    %v2617 = vmul.f32 %v2585, %v2609
    %v2618 = vmul.f32 %v2586, %v2610
    %v2619 = vpack.c.bf16 %v2615, %v2611
    %v2620 = vpack.c.bf16 %v2616, %v2612
    %v2621 = vpack.c.bf16 %v2617, %v2613
    %v2622 = vpack.c.bf16 %v2618, %v2614
    %2623 = vmatprep.subr.bf16.mxu0 0
    %2624 = vmatpush1.bf16.msra.mxu0 %v1341
    %2625 = vmatprep.subr.bf16.mxu0 0
    %2626 = vmatpush1.bf16.msra.mxu0 %v1340
    %2627 = vmatprep.subr.bf16.mxu0 0
    %2628 = vmatpush1.bf16.msra.mxu0 %v1339
    %2629 = vmatprep.subr.bf16.mxu0 0
    %2630 = vmatpush1.bf16.msra.mxu0 %v1338
    %2631 = vmatprep.subr.bf16.mxu0 0
    %2632 = vmatpush1.bf16.msra.mxu0 %v1337
    %2633 = vmatprep.subr.bf16.mxu0 0
    %2634 = vmatpush1.bf16.msra.mxu0 %v1336
    %2635 = vmatprep.subr.bf16.mxu0 0
    %2636 = vmatpush1.bf16.msra.mxu0 %v1335
    %2637 = vmatprep.subr.bf16.mxu0 0
    %2638 = vmatpush1.bf16.msra.mxu0 %v1334
    %2639 = vmatprep.subr.bf16.mxu0 0
    %2640 = vmatpush2.bf16.msra.mxu0 %v1349
    %2641 = vmatprep.subr.bf16.mxu0 0
    %2642 = vmatpush2.bf16.msra.mxu0 %v1348
    %2643 = vmatprep.subr.bf16.mxu0 0
    %2644 = vmatpush2.bf16.msra.mxu0 %v1347
    %2645 = vmatprep.subr.bf16.mxu0 0
    %2646 = vmatpush2.bf16.msra.mxu0 %v1346
    %2647 = vmatprep.subr.bf16.mxu0 0
    %2648 = vmatpush2.bf16.msra.mxu0 %v1345
    %2649 = vmatprep.subr.bf16.mxu0 0
    %2650 = vmatpush2.bf16.msra.mxu0 %v1344
    %2651 = vmatprep.subr.bf16.mxu0 0
    %2652 = vmatpush2.bf16.msra.mxu0 %v1343
    %2653 = vmatprep.subr.bf16.mxu0 0
    %2654 = vmatpush2.bf16.msra.mxu0 %v1342
    %2655 = vmatprep.mubr.bf16.mxu0 %v2620
    %2656 = vmatmul.mubr.bf16.gmra.mxu0 %v2619
    %v2657 = vpop.f32.mrf.mxu0
    %v2658 = vadd.f32 %v1205, %v2657
    %v2659 = vpop.f32.mrf.mxu0
    %v2660 = vpop.f32.mrf.mxu0
    %v2661 = vadd.f32 %v1205, %v2660
    %v2662 = vpop.f32.mrf.mxu0
    %2663 = vdwg.mxu0
    %2664 = vmatprep.subr.bf16.mxu0 0
    %2665 = vmatpush1.bf16.msra.mxu0 %v1357
    %2666 = vmatprep.subr.bf16.mxu0 0
    %2667 = vmatpush1.bf16.msra.mxu0 %v1356
    %2668 = vmatprep.subr.bf16.mxu0 0
    %2669 = vmatpush1.bf16.msra.mxu0 %v1355
    %2670 = vmatprep.subr.bf16.mxu0 0
    %2671 = vmatpush1.bf16.msra.mxu0 %v1354
    %2672 = vmatprep.subr.bf16.mxu0 0
    %2673 = vmatpush1.bf16.msra.mxu0 %v1353
    %2674 = vmatprep.subr.bf16.mxu0 0
    %2675 = vmatpush1.bf16.msra.mxu0 %v1352
    %2676 = vmatprep.subr.bf16.mxu0 0
    %2677 = vmatpush1.bf16.msra.mxu0 %v1351
    %2678 = vmatprep.subr.bf16.mxu0 0
    %2679 = vmatpush1.bf16.msra.mxu0 %v1350
    %2680 = vmatprep.subr.bf16.mxu0 0
    %2681 = vmatpush2.bf16.msra.mxu0 %v1365
    %2682 = vmatprep.subr.bf16.mxu0 0
    %2683 = vmatpush2.bf16.msra.mxu0 %v1364
    %2684 = vmatprep.subr.bf16.mxu0 0
    %2685 = vmatpush2.bf16.msra.mxu0 %v1363
    %2686 = vmatprep.subr.bf16.mxu0 0
    %2687 = vmatpush2.bf16.msra.mxu0 %v1362
    %2688 = vmatprep.subr.bf16.mxu0 0
    %2689 = vmatpush2.bf16.msra.mxu0 %v1361
    %2690 = vmatprep.subr.bf16.mxu0 0
    %2691 = vmatpush2.bf16.msra.mxu0 %v1360
    %2692 = vmatprep.subr.bf16.mxu0 0
    %2693 = vmatpush2.bf16.msra.mxu0 %v1359
    %2694 = vmatprep.subr.bf16.mxu0 0
    %2695 = vmatpush2.bf16.msra.mxu0 %v1358
    %2696 = vmatprep.mubr.bf16.mxu0 %v2622
    %2697 = vmatmul.mubr.bf16.gmra.mxu0 %v2621
    %v2698 = vpop.f32.mrf.mxu0
    %v2699 = vadd.f32 %v2658, %v2698
    %v2700 = vpop.f32.mrf.mxu0
    %v2701 = vpop.f32.mrf.mxu0
    %v2702 = vadd.f32 %v2661, %v2701
    %v2703 = vpop.f32.mrf.mxu0
    %2704 = vdwg.mxu0
    %v2705 = vadd.f32 %v2699, %v2464
    %v2706 = vadd.f32 %v2702, %v2465
    %2707 = vst [vmem:[%s733] sm:$0xff] %v2705
    %2708 = vst [vmem:[%s733 + $0x8] sm:$0xff] %v2706
    %v2709 = vld [vmem:[%s742] sm:$0xff]
    %v2710 = vld [vmem:[%s742 + $0x8] sm:$0xff]
    %2711 = vadd.xlane.f32.xlu0 %v2709
    %v2712 = vpop.xlane.xlu0 %2711
    %2713 = vadd.xlane.f32.xlu0 %v2710
    %v2714 = vpop.xlane.xlu0 %2713
    %v2715 = vmul.f32 %v2712, %v120
    %v2716 = vmul.f32 %v2714, %v120
    %v2717 = vsub.f32 %v2709, %v2715
    %v2718 = vsub.f32 %v2710, %v2716
    %v2719 = vmul.f32 %v2717, %v2717
    %v2720 = vmul.f32 %v2718, %v2718
    %2721 = vadd.xlane.f32.xlu0 %v2719
    %v2722 = vpop.xlane.xlu0 %2721
    %2723 = vadd.xlane.f32.xlu0 %v2720
    %v2724 = vpop.xlane.xlu0 %2723
    %v2725 = vmul.f32 %v2722, %v120
    %v2726 = vmul.f32 %v2724, %v120
    %v2727 = vadd.f32 %v2725, 1e-05
    %v2728 = vadd.f32 %v2726, 1e-05
    %v2729 = vrsqrt.pop %v2727
    %v2730 = vrsqrt.pop %v2728
    %v2731 = vmul.f32 %v2717, %v2729
    %v2732 = vmul.f32 %v2718, %v2730
    %v2733 = vmul.f32 %v2731, %v881
    %v2734 = vmul.f32 %v2732, %v881
    %v2735 = vadd.f32 %v2733, %v887
    %v2736 = vadd.f32 %v2734, %v887
    %v2737 = vpack.c.bf16 %v2736, %v2735
    %2738 = vmatprep.subr.bf16.mxu0 %v1037
    %2739 = vmatpush1.bf16.msra.mxu0 %v1036
    %2740 = vmatprep.subr.bf16.mxu0 %v1033
    %2741 = vmatpush1.bf16.msra.mxu0 %v1032
    %2742 = vmatprep.subr.bf16.mxu0 %v1029
    %2743 = vmatpush1.bf16.msra.mxu0 %v1028
    %2744 = vmatprep.subr.bf16.mxu0 %v1025
    %2745 = vmatpush1.bf16.msra.mxu0 %v1024
    %2746 = vmatprep.subr.bf16.mxu0 %v1021
    %2747 = vmatpush1.bf16.msra.mxu0 %v1020
    %2748 = vmatprep.subr.bf16.mxu0 %v1017
    %2749 = vmatpush1.bf16.msra.mxu0 %v1016
    %2750 = vmatprep.subr.bf16.mxu0 %v1013
    %2751 = vmatpush1.bf16.msra.mxu0 %v1012
    %2752 = vmatprep.subr.bf16.mxu0 %v1009
    %2753 = vmatpush1.bf16.msra.mxu0 %v1008
    %2754 = vmatprep.subr.bf16.mxu0 0
    %2755 = vmatpush2.bf16.msra.mxu0 0
    %2756 = vmatprep.subr.bf16.mxu0 0
    %2757 = vmatpush2.bf16.msra.mxu0 0
    %2758 = vmatprep.subr.bf16.mxu0 0
    %2759 = vmatpush2.bf16.msra.mxu0 0
    %2760 = vmatprep.subr.bf16.mxu0 0
    %2761 = vmatpush2.bf16.msra.mxu0 0
    %2762 = vmatprep.subr.bf16.mxu0 0
    %2763 = vmatpush2.bf16.msra.mxu0 0
    %2764 = vmatprep.subr.bf16.mxu0 0
    %2765 = vmatpush2.bf16.msra.mxu0 0
    %2766 = vmatprep.subr.bf16.mxu0 0
    %2767 = vmatpush2.bf16.msra.mxu0 0
    %2768 = vmatprep.subr.bf16.mxu0 0
    %2769 = vmatpush2.bf16.msra.mxu0 0
    %2770 = vmatprep.mubr.bf16.mxu0 0
    %2771 = vmatmul.mubr.bf16.gmra.mxu0 %v2737
    %v2772 = vpop.f32.mrf.mxu0
    %v2773 = vadd.f32 %v895, %v2772
    %v2774 = vpop.f32.mrf.mxu0
    %v2775 = vadd.f32 %v899, %v2774
    %v2776 = vpop.f32.mrf.mxu0
    %v2777 = vadd.f32 %v895, %v2776
    %v2778 = vpop.f32.mrf.mxu0
    %v2779 = vadd.f32 %v899, %v2778
    %2780 = vdwg.mxu0
    %2781 = vmatprep.subr.bf16.mxu0 %v1039
    %2782 = vmatpush1.bf16.msra.mxu0 %v1038
    %2783 = vmatprep.subr.bf16.mxu0 %v1035
    %2784 = vmatpush1.bf16.msra.mxu0 %v1034
    %2785 = vmatprep.subr.bf16.mxu0 %v1031
    %2786 = vmatpush1.bf16.msra.mxu0 %v1030
    %2787 = vmatprep.subr.bf16.mxu0 %v1027
    %2788 = vmatpush1.bf16.msra.mxu0 %v1026
    %2789 = vmatprep.subr.bf16.mxu0 %v1023
    %2790 = vmatpush1.bf16.msra.mxu0 %v1022
    %2791 = vmatprep.subr.bf16.mxu0 %v1019
    %2792 = vmatpush1.bf16.msra.mxu0 %v1018
    %2793 = vmatprep.subr.bf16.mxu0 %v1015
    %2794 = vmatpush1.bf16.msra.mxu0 %v1014
    %2795 = vmatprep.subr.bf16.mxu0 %v1011
    %2796 = vmatpush1.bf16.msra.mxu0 %v1010
    %2797 = vmatprep.subr.bf16.mxu0 0
    %2798 = vmatpush2.bf16.msra.mxu0 0
    %2799 = vmatprep.subr.bf16.mxu0 0
    %2800 = vmatpush2.bf16.msra.mxu0 0
    %2801 = vmatprep.subr.bf16.mxu0 0
    %2802 = vmatpush2.bf16.msra.mxu0 0
    %2803 = vmatprep.subr.bf16.mxu0 0
    %2804 = vmatpush2.bf16.msra.mxu0 0
    %2805 = vmatprep.subr.bf16.mxu0 0
    %2806 = vmatpush2.bf16.msra.mxu0 0
    %2807 = vmatprep.subr.bf16.mxu0 0
    %2808 = vmatpush2.bf16.msra.mxu0 0
    %2809 = vmatprep.subr.bf16.mxu0 0
    %2810 = vmatpush2.bf16.msra.mxu0 0
    %2811 = vmatprep.subr.bf16.mxu0 0
    %2812 = vmatpush2.bf16.msra.mxu0 0
    %2813 = vmatprep.mubr.bf16.mxu0 0
    %2814 = vmatmul.mubr.bf16.gmra.mxu0 %v2737
    %v2815 = vpop.f32.mrf.mxu0
    %v2816 = vadd.f32 %v903, %v2815
    %v2817 = vpop.f32.mrf.mxu0
    %v2818 = vadd.f32 %v907, %v2817
    %v2819 = vpop.f32.mrf.mxu0
    %v2820 = vadd.f32 %v903, %v2819
    %v2821 = vpop.f32.mrf.mxu0
    %v2822 = vadd.f32 %v907, %v2821
    %2823 = vdwg.mxu0
    %v2824 = vmul.f32 %v2773, 0.5
    %v2825 = vmul.f32 %v2775, 0.5
    %v2826 = vmul.f32 %v2816, 0.5
    %v2827 = vmul.f32 %v2818, 0.5
    %v2828 = vmul.f32 %v2777, 0.5
    %v2829 = vmul.f32 %v2779, 0.5
    %v2830 = vmul.f32 %v2820, 0.5
    %v2831 = vmul.f32 %v2822, 0.5
    %v2832 = vmul.f32 %v2773, 0.70710677
    %v2833 = vmul.f32 %v2775, 0.70710677
    %v2834 = vmul.f32 %v2816, 0.70710677
    %v2835 = vmul.f32 %v2818, 0.70710677
    %v2836 = vmul.f32 %v2777, 0.70710677
    %v2837 = vmul.f32 %v2779, 0.70710677
    %v2838 = vmul.f32 %v2820, 0.70710677
    %v2839 = vmul.f32 %v2822, 0.70710677
    %v2840 = verf.f32.pop %v2832
    %v2841 = verf.f32.pop %v2833
    %v2842 = verf.f32.pop %v2834
    %v2843 = verf.f32.pop %v2835
    %v2844 = verf.f32.pop %v2836
    %v2845 = verf.f32.pop %v2837
    %v2846 = verf.f32.pop %v2838
    %v2847 = verf.f32.pop %v2839
    %v2848 = vadd.f32 %v2840, 1.0
    %v2849 = vadd.f32 %v2841, 1.0
    %v2850 = vadd.f32 %v2842, 1.0
    %v2851 = vadd.f32 %v2843, 1.0
    %v2852 = vadd.f32 %v2844, 1.0
    %v2853 = vadd.f32 %v2845, 1.0
    %v2854 = vadd.f32 %v2846, 1.0
    %v2855 = vadd.f32 %v2847, 1.0
    %v2856 = vmul.f32 %v2824, %v2848
    %v2857 = vmul.f32 %v2825, %v2849
    %v2858 = vmul.f32 %v2826, %v2850
    %v2859 = vmul.f32 %v2827, %v2851
    %v2860 = vmul.f32 %v2828, %v2852
    %v2861 = vmul.f32 %v2829, %v2853
    %v2862 = vmul.f32 %v2830, %v2854
    %v2863 = vmul.f32 %v2831, %v2855
    %v2864 = vpack.c.bf16 %v2860, %v2856
    %v2865 = vpack.c.bf16 %v2861, %v2857
    %v2866 = vpack.c.bf16 %v2862, %v2858
    %v2867 = vpack.c.bf16 %v2863, %v2859
    %2868 = vmatprep.subr.bf16.mxu0 0
    %2869 = vmatpush1.bf16.msra.mxu0 %v1341
    %2870 = vmatprep.subr.bf16.mxu0 0
    %2871 = vmatpush1.bf16.msra.mxu0 %v1340
    %2872 = vmatprep.subr.bf16.mxu0 0
    %2873 = vmatpush1.bf16.msra.mxu0 %v1339
    %2874 = vmatprep.subr.bf16.mxu0 0
    %2875 = vmatpush1.bf16.msra.mxu0 %v1338
    %2876 = vmatprep.subr.bf16.mxu0 0
    %2877 = vmatpush1.bf16.msra.mxu0 %v1337
    %2878 = vmatprep.subr.bf16.mxu0 0
    %2879 = vmatpush1.bf16.msra.mxu0 %v1336
    %2880 = vmatprep.subr.bf16.mxu0 0
    %2881 = vmatpush1.bf16.msra.mxu0 %v1335
    %2882 = vmatprep.subr.bf16.mxu0 0
    %2883 = vmatpush1.bf16.msra.mxu0 %v1334
    %2884 = vmatprep.subr.bf16.mxu0 0
    %2885 = vmatpush2.bf16.msra.mxu0 %v1349
    %2886 = vmatprep.subr.bf16.mxu0 0
    %2887 = vmatpush2.bf16.msra.mxu0 %v1348
    %2888 = vmatprep.subr.bf16.mxu0 0
    %2889 = vmatpush2.bf16.msra.mxu0 %v1347
    %2890 = vmatprep.subr.bf16.mxu0 0
    %2891 = vmatpush2.bf16.msra.mxu0 %v1346
    %2892 = vmatprep.subr.bf16.mxu0 0
    %2893 = vmatpush2.bf16.msra.mxu0 %v1345
    %2894 = vmatprep.subr.bf16.mxu0 0
    %2895 = vmatpush2.bf16.msra.mxu0 %v1344
    %2896 = vmatprep.subr.bf16.mxu0 0
    %2897 = vmatpush2.bf16.msra.mxu0 %v1343
    %2898 = vmatprep.subr.bf16.mxu0 0
    %2899 = vmatpush2.bf16.msra.mxu0 %v1342
    %2900 = vmatprep.mubr.bf16.mxu0 %v2865
    %2901 = vmatmul.mubr.bf16.gmra.mxu0 %v2864
    %v2902 = vpop.f32.mrf.mxu0
    %v2903 = vadd.f32 %v1205, %v2902
    %v2904 = vpop.f32.mrf.mxu0
    %v2905 = vpop.f32.mrf.mxu0
    %v2906 = vadd.f32 %v1205, %v2905
    %v2907 = vpop.f32.mrf.mxu0
    %2908 = vdwg.mxu0
    %2909 = vmatprep.subr.bf16.mxu0 0
    %2910 = vmatpush1.bf16.msra.mxu0 %v1357
    %2911 = vmatprep.subr.bf16.mxu0 0
    %2912 = vmatpush1.bf16.msra.mxu0 %v1356
    %2913 = vmatprep.subr.bf16.mxu0 0
    %2914 = vmatpush1.bf16.msra.mxu0 %v1355
    %2915 = vmatprep.subr.bf16.mxu0 0
    %2916 = vmatpush1.bf16.msra.mxu0 %v1354
    %2917 = vmatprep.subr.bf16.mxu0 0
    %2918 = vmatpush1.bf16.msra.mxu0 %v1353
    %2919 = vmatprep.subr.bf16.mxu0 0
    %2920 = vmatpush1.bf16.msra.mxu0 %v1352
    %2921 = vmatprep.subr.bf16.mxu0 0
    %2922 = vmatpush1.bf16.msra.mxu0 %v1351
    %2923 = vmatprep.subr.bf16.mxu0 0
    %2924 = vmatpush1.bf16.msra.mxu0 %v1350
    %2925 = vmatprep.subr.bf16.mxu0 0
    %2926 = vmatpush2.bf16.msra.mxu0 %v1365
    %2927 = vmatprep.subr.bf16.mxu0 0
    %2928 = vmatpush2.bf16.msra.mxu0 %v1364
    %2929 = vmatprep.subr.bf16.mxu0 0
    %2930 = vmatpush2.bf16.msra.mxu0 %v1363
    %2931 = vmatprep.subr.bf16.mxu0 0
    %2932 = vmatpush2.bf16.msra.mxu0 %v1362
    %2933 = vmatprep.subr.bf16.mxu0 0
    %2934 = vmatpush2.bf16.msra.mxu0 %v1361
    %2935 = vmatprep.subr.bf16.mxu0 0
    %2936 = vmatpush2.bf16.msra.mxu0 %v1360
    %2937 = vmatprep.subr.bf16.mxu0 0
    %2938 = vmatpush2.bf16.msra.mxu0 %v1359
    %2939 = vmatprep.subr.bf16.mxu0 0
    %2940 = vmatpush2.bf16.msra.mxu0 %v1358
    %2941 = vmatprep.mubr.bf16.mxu0 %v2867
    %2942 = vmatmul.mubr.bf16.gmra.mxu0 %v2866
    %v2943 = vpop.f32.mrf.mxu0
    %v2944 = vadd.f32 %v2903, %v2943
    %v2945 = vpop.f32.mrf.mxu0
    %v2946 = vpop.f32.mrf.mxu0
    %v2947 = vadd.f32 %v2906, %v2946
    %v2948 = vpop.f32.mrf.mxu0
    %2949 = vdwg.mxu0
    %v2950 = vadd.f32 %v2944, %v2709
    %v2951 = vadd.f32 %v2947, %v2710
    %2952 = vst [vmem:[%s742] sm:$0xff] %v2950
    %2953 = vst [vmem:[%s742 + $0x8] sm:$0xff] %v2951
    %v2954 = vld [vmem:[%s751] sm:$0xff]
    %v2955 = vld [vmem:[%s751 + $0x8] sm:$0xff]
    %2956 = vadd.xlane.f32.xlu0 %v2954
    %v2957 = vpop.xlane.xlu0 %2956
    %2958 = vadd.xlane.f32.xlu0 %v2955
    %v2959 = vpop.xlane.xlu0 %2958
    %v2960 = vmul.f32 %v2957, %v120
    %v2961 = vmul.f32 %v2959, %v120
    %v2962 = vsub.f32 %v2954, %v2960
    %v2963 = vsub.f32 %v2955, %v2961
    %v2964 = vmul.f32 %v2962, %v2962
    %v2965 = vmul.f32 %v2963, %v2963
    %2966 = vadd.xlane.f32.xlu0 %v2964
    %v2967 = vpop.xlane.xlu0 %2966
    %2968 = vadd.xlane.f32.xlu0 %v2965
    %v2969 = vpop.xlane.xlu0 %2968
    %v2970 = vmul.f32 %v2967, %v120
    %v2971 = vmul.f32 %v2969, %v120
    %v2972 = vadd.f32 %v2970, 1e-05
    %v2973 = vadd.f32 %v2971, 1e-05
    %v2974 = vrsqrt.pop %v2972
    %v2975 = vrsqrt.pop %v2973
    %v2976 = vmul.f32 %v2962, %v2974
    %v2977 = vmul.f32 %v2963, %v2975
    %v2978 = vmul.f32 %v2976, %v881
    %v2979 = vmul.f32 %v2977, %v881
    %v2980 = vadd.f32 %v2978, %v887
    %v2981 = vadd.f32 %v2979, %v887
    %v2982 = vpack.c.bf16 %v2981, %v2980
    %2983 = vmatprep.subr.bf16.mxu0 %v1037
    %2984 = vmatpush1.bf16.msra.mxu0 %v1036
    %2985 = vmatprep.subr.bf16.mxu0 %v1033
    %2986 = vmatpush1.bf16.msra.mxu0 %v1032
    %2987 = vmatprep.subr.bf16.mxu0 %v1029
    %2988 = vmatpush1.bf16.msra.mxu0 %v1028
    %2989 = vmatprep.subr.bf16.mxu0 %v1025
    %2990 = vmatpush1.bf16.msra.mxu0 %v1024
    %2991 = vmatprep.subr.bf16.mxu0 %v1021
    %2992 = vmatpush1.bf16.msra.mxu0 %v1020
    %2993 = vmatprep.subr.bf16.mxu0 %v1017
    %2994 = vmatpush1.bf16.msra.mxu0 %v1016
    %2995 = vmatprep.subr.bf16.mxu0 %v1013
    %2996 = vmatpush1.bf16.msra.mxu0 %v1012
    %2997 = vmatprep.subr.bf16.mxu0 %v1009
    %2998 = vmatpush1.bf16.msra.mxu0 %v1008
    %2999 = vmatprep.subr.bf16.mxu0 0
    %3000 = vmatpush2.bf16.msra.mxu0 0
    %3001 = vmatprep.subr.bf16.mxu0 0
    %3002 = vmatpush2.bf16.msra.mxu0 0
    %3003 = vmatprep.subr.bf16.mxu0 0
    %3004 = vmatpush2.bf16.msra.mxu0 0
    %3005 = vmatprep.subr.bf16.mxu0 0
    %3006 = vmatpush2.bf16.msra.mxu0 0
    %3007 = vmatprep.subr.bf16.mxu0 0
    %3008 = vmatpush2.bf16.msra.mxu0 0
    %3009 = vmatprep.subr.bf16.mxu0 0
    %3010 = vmatpush2.bf16.msra.mxu0 0
    %3011 = vmatprep.subr.bf16.mxu0 0
    %3012 = vmatpush2.bf16.msra.mxu0 0
    %3013 = vmatprep.subr.bf16.mxu0 0
    %3014 = vmatpush2.bf16.msra.mxu0 0
    %3015 = vmatprep.mubr.bf16.mxu0 0
    %3016 = vmatmul.mubr.bf16.gmra.mxu0 %v2982
    %v3017 = vpop.f32.mrf.mxu0
    %v3018 = vadd.f32 %v895, %v3017
    %v3019 = vpop.f32.mrf.mxu0
    %v3020 = vadd.f32 %v899, %v3019
    %v3021 = vpop.f32.mrf.mxu0
    %v3022 = vadd.f32 %v895, %v3021
    %v3023 = vpop.f32.mrf.mxu0
    %v3024 = vadd.f32 %v899, %v3023
    %3025 = vdwg.mxu0
    %3026 = vmatprep.subr.bf16.mxu0 %v1039
    %3027 = vmatpush1.bf16.msra.mxu0 %v1038
    %3028 = vmatprep.subr.bf16.mxu0 %v1035
    %3029 = vmatpush1.bf16.msra.mxu0 %v1034
    %3030 = vmatprep.subr.bf16.mxu0 %v1031
    %3031 = vmatpush1.bf16.msra.mxu0 %v1030
    %3032 = vmatprep.subr.bf16.mxu0 %v1027
    %3033 = vmatpush1.bf16.msra.mxu0 %v1026
    %3034 = vmatprep.subr.bf16.mxu0 %v1023
    %3035 = vmatpush1.bf16.msra.mxu0 %v1022
    %3036 = vmatprep.subr.bf16.mxu0 %v1019
    %3037 = vmatpush1.bf16.msra.mxu0 %v1018
    %3038 = vmatprep.subr.bf16.mxu0 %v1015
    %3039 = vmatpush1.bf16.msra.mxu0 %v1014
    %3040 = vmatprep.subr.bf16.mxu0 %v1011
    %3041 = vmatpush1.bf16.msra.mxu0 %v1010
    %3042 = vmatprep.subr.bf16.mxu0 0
    %3043 = vmatpush2.bf16.msra.mxu0 0
    %3044 = vmatprep.subr.bf16.mxu0 0
    %3045 = vmatpush2.bf16.msra.mxu0 0
    %3046 = vmatprep.subr.bf16.mxu0 0
    %3047 = vmatpush2.bf16.msra.mxu0 0
    %3048 = vmatprep.subr.bf16.mxu0 0
    %3049 = vmatpush2.bf16.msra.mxu0 0
    %3050 = vmatprep.subr.bf16.mxu0 0
    %3051 = vmatpush2.bf16.msra.mxu0 0
    %3052 = vmatprep.subr.bf16.mxu0 0
    %3053 = vmatpush2.bf16.msra.mxu0 0
    %3054 = vmatprep.subr.bf16.mxu0 0
    %3055 = vmatpush2.bf16.msra.mxu0 0
    %3056 = vmatprep.subr.bf16.mxu0 0
    %3057 = vmatpush2.bf16.msra.mxu0 0
    %3058 = vmatprep.mubr.bf16.mxu0 0
    %3059 = vmatmul.mubr.bf16.gmra.mxu0 %v2982
    %v3060 = vpop.f32.mrf.mxu0
    %v3061 = vadd.f32 %v903, %v3060
    %v3062 = vpop.f32.mrf.mxu0
    %v3063 = vadd.f32 %v907, %v3062
    %v3064 = vpop.f32.mrf.mxu0
    %v3065 = vadd.f32 %v903, %v3064
    %v3066 = vpop.f32.mrf.mxu0
    %v3067 = vadd.f32 %v907, %v3066
    %3068 = vdwg.mxu0
    %v3069 = vmul.f32 %v3018, 0.5
    %v3070 = vmul.f32 %v3020, 0.5
    %v3071 = vmul.f32 %v3061, 0.5
    %v3072 = vmul.f32 %v3063, 0.5
    %v3073 = vmul.f32 %v3022, 0.5
    %v3074 = vmul.f32 %v3024, 0.5
    %v3075 = vmul.f32 %v3065, 0.5
    %v3076 = vmul.f32 %v3067, 0.5
    %v3077 = vmul.f32 %v3018, 0.70710677
    %v3078 = vmul.f32 %v3020, 0.70710677
    %v3079 = vmul.f32 %v3061, 0.70710677
    %v3080 = vmul.f32 %v3063, 0.70710677
    %v3081 = vmul.f32 %v3022, 0.70710677
    %v3082 = vmul.f32 %v3024, 0.70710677
    %v3083 = vmul.f32 %v3065, 0.70710677
    %v3084 = vmul.f32 %v3067, 0.70710677
    %v3085 = verf.f32.pop %v3077
    %v3086 = verf.f32.pop %v3078
    %v3087 = verf.f32.pop %v3079
    %v3088 = verf.f32.pop %v3080
    %v3089 = verf.f32.pop %v3081
    %v3090 = verf.f32.pop %v3082
    %v3091 = verf.f32.pop %v3083
    %v3092 = verf.f32.pop %v3084
    %v3093 = vadd.f32 %v3085, 1.0
    %v3094 = vadd.f32 %v3086, 1.0
    %v3095 = vadd.f32 %v3087, 1.0
    %v3096 = vadd.f32 %v3088, 1.0
    %v3097 = vadd.f32 %v3089, 1.0
    %v3098 = vadd.f32 %v3090, 1.0
    %v3099 = vadd.f32 %v3091, 1.0
    %v3100 = vadd.f32 %v3092, 1.0
    %v3101 = vmul.f32 %v3069, %v3093
    %v3102 = vmul.f32 %v3070, %v3094
    %v3103 = vmul.f32 %v3071, %v3095
    %v3104 = vmul.f32 %v3072, %v3096
    %v3105 = vmul.f32 %v3073, %v3097
    %v3106 = vmul.f32 %v3074, %v3098
    %v3107 = vmul.f32 %v3075, %v3099
    %v3108 = vmul.f32 %v3076, %v3100
    %v3109 = vpack.c.bf16 %v3105, %v3101
    %v3110 = vpack.c.bf16 %v3106, %v3102
    %v3111 = vpack.c.bf16 %v3107, %v3103
    %v3112 = vpack.c.bf16 %v3108, %v3104
    %3113 = vmatprep.subr.bf16.mxu0 0
    %3114 = vmatpush1.bf16.msra.mxu0 %v1341
    %3115 = vmatprep.subr.bf16.mxu0 0
    %3116 = vmatpush1.bf16.msra.mxu0 %v1340
    %3117 = vmatprep.subr.bf16.mxu0 0
    %3118 = vmatpush1.bf16.msra.mxu0 %v1339
    %3119 = vmatprep.subr.bf16.mxu0 0
    %3120 = vmatpush1.bf16.msra.mxu0 %v1338
    %3121 = vmatprep.subr.bf16.mxu0 0
    %3122 = vmatpush1.bf16.msra.mxu0 %v1337
    %3123 = vmatprep.subr.bf16.mxu0 0
    %3124 = vmatpush1.bf16.msra.mxu0 %v1336
    %3125 = vmatprep.subr.bf16.mxu0 0
    %3126 = vmatpush1.bf16.msra.mxu0 %v1335
    %3127 = vmatprep.subr.bf16.mxu0 0
    %3128 = vmatpush1.bf16.msra.mxu0 %v1334
    %3129 = vmatprep.subr.bf16.mxu0 0
    %3130 = vmatpush2.bf16.msra.mxu0 %v1349
    %3131 = vmatprep.subr.bf16.mxu0 0
    %3132 = vmatpush2.bf16.msra.mxu0 %v1348
    %3133 = vmatprep.subr.bf16.mxu0 0
    %3134 = vmatpush2.bf16.msra.mxu0 %v1347
    %3135 = vmatprep.subr.bf16.mxu0 0
    %3136 = vmatpush2.bf16.msra.mxu0 %v1346
    %3137 = vmatprep.subr.bf16.mxu0 0
    %3138 = vmatpush2.bf16.msra.mxu0 %v1345
    %3139 = vmatprep.subr.bf16.mxu0 0
    %3140 = vmatpush2.bf16.msra.mxu0 %v1344
    %3141 = vmatprep.subr.bf16.mxu0 0
    %3142 = vmatpush2.bf16.msra.mxu0 %v1343
    %3143 = vmatprep.subr.bf16.mxu0 0
    %3144 = vmatpush2.bf16.msra.mxu0 %v1342
    %3145 = vmatprep.mubr.bf16.mxu0 %v3110
    %3146 = vmatmul.mubr.bf16.gmra.mxu0 %v3109
    %v3147 = vpop.f32.mrf.mxu0
    %v3148 = vadd.f32 %v1205, %v3147
    %v3149 = vpop.f32.mrf.mxu0
    %v3150 = vpop.f32.mrf.mxu0
    %v3151 = vadd.f32 %v1205, %v3150
    %v3152 = vpop.f32.mrf.mxu0
    %3153 = vdwg.mxu0
    %3154 = vmatprep.subr.bf16.mxu0 0
    %3155 = vmatpush1.bf16.msra.mxu0 %v1357
    %3156 = vmatprep.subr.bf16.mxu0 0
    %3157 = vmatpush1.bf16.msra.mxu0 %v1356
    %3158 = vmatprep.subr.bf16.mxu0 0
    %3159 = vmatpush1.bf16.msra.mxu0 %v1355
    %3160 = vmatprep.subr.bf16.mxu0 0
    %3161 = vmatpush1.bf16.msra.mxu0 %v1354
    %3162 = vmatprep.subr.bf16.mxu0 0
    %3163 = vmatpush1.bf16.msra.mxu0 %v1353
    %3164 = vmatprep.subr.bf16.mxu0 0
    %3165 = vmatpush1.bf16.msra.mxu0 %v1352
    %3166 = vmatprep.subr.bf16.mxu0 0
    %3167 = vmatpush1.bf16.msra.mxu0 %v1351
    %3168 = vmatprep.subr.bf16.mxu0 0
    %3169 = vmatpush1.bf16.msra.mxu0 %v1350
    %3170 = vmatprep.subr.bf16.mxu0 0
    %3171 = vmatpush2.bf16.msra.mxu0 %v1365
    %3172 = vmatprep.subr.bf16.mxu0 0
    %3173 = vmatpush2.bf16.msra.mxu0 %v1364
    %3174 = vmatprep.subr.bf16.mxu0 0
    %3175 = vmatpush2.bf16.msra.mxu0 %v1363
    %3176 = vmatprep.subr.bf16.mxu0 0
    %3177 = vmatpush2.bf16.msra.mxu0 %v1362
    %3178 = vmatprep.subr.bf16.mxu0 0
    %3179 = vmatpush2.bf16.msra.mxu0 %v1361
    %3180 = vmatprep.subr.bf16.mxu0 0
    %3181 = vmatpush2.bf16.msra.mxu0 %v1360
    %3182 = vmatprep.subr.bf16.mxu0 0
    %3183 = vmatpush2.bf16.msra.mxu0 %v1359
    %3184 = vmatprep.subr.bf16.mxu0 0
    %3185 = vmatpush2.bf16.msra.mxu0 %v1358
    %3186 = vmatprep.mubr.bf16.mxu0 %v3112
    %3187 = vmatmul.mubr.bf16.gmra.mxu0 %v3111
    %v3188 = vpop.f32.mrf.mxu0
    %v3189 = vadd.f32 %v3148, %v3188
    %v3190 = vpop.f32.mrf.mxu0
    %v3191 = vpop.f32.mrf.mxu0
    %v3192 = vadd.f32 %v3151, %v3191
    %v3193 = vpop.f32.mrf.mxu0
    %3194 = vdwg.mxu0
    %v3195 = vadd.f32 %v3189, %v2954
    %v3196 = vadd.f32 %v3192, %v2955
    %3197 = vst [vmem:[%s751] sm:$0xff] %v3195
    %3198 = vst [vmem:[%s751 + $0x8] sm:$0xff] %v3196
    // Predicated region
    $region54: #{tpu_custom_call.1} parent=1 // pred_check
      _
    $region55: #{tpu_custom_call.1} parent=1 // pred_check_branch
      %3200 = sbr.rel (0) target = $region57
    $region56: #{tpu_custom_call.1} parent=1 // pred_region
      %s3202 = ssub.s32 1024, 1024
      %3203 = vsyncadd [#allocation5], %s3202
      %s3204 = sshll.u32 [#allocation11], 4
      %s3205 = int_to_ptr.vmem [resolvable:$true] %s3204
      %3210 = dma.vmem_to_hbm [thread:$0]  %s3205, 1024, %s9, [#allocation5], 128, 128, 8
    $region57: #{tpu_custom_call.1} parent=1 // pred_fallthru
      _
    // Predicated region
    $region58: #{tpu_custom_call.1} parent=1 // pred_check
      _
    $region59: #{tpu_custom_call.1} parent=1 // pred_check_branch
      %3212 = sbr.rel (0) target = $region61
    $region60: #{tpu_custom_call.1} parent=1 // pred_region
      %s3214 = ssub.s32 1024, 1024
      %3215 = vsyncadd [#allocation13], %s3214
      %s3216 = sshll.u32 [#allocation12], 4
      %s3217 = int_to_ptr.vmem [resolvable:$true] %s3216
      %3222 = dma.vmem_to_hbm [thread:$0]  %s3217, 1024, %s10, [#allocation13], 128, 128, 8
    $region61: #{tpu_custom_call.1} parent=1 // pred_fallthru
      _
    // Predicated region
    $region62: #{tpu_custom_call.1} parent=1 // pred_check
      _
    $region63: #{tpu_custom_call.1} parent=1 // pred_check_branch
      %3224 = sbr.rel (0) target = $region65
    $region64: #{tpu_custom_call.1} parent=1 // pred_region
      %3225 = dma.done [#allocation5], 1024
    $region65: #{tpu_custom_call.1} parent=1 // pred_fallthru
      _
    // Predicated region
    $region66: #{tpu_custom_call.1} parent=1 // pred_check
      _
    $region67: #{tpu_custom_call.1} parent=1 // pred_check_branch
      %3227 = sbr.rel (0) target = $region69
    $region68: #{tpu_custom_call.1} parent=1 // pred_region
      %3228 = dma.done [#allocation13], 1024
    $region69: #{tpu_custom_call.1} parent=1 // pred_fallthru
      _
    %3229 = vsyncpa [#allocation4], 1
    %3230 = vsyncpa [#allocation7], 1
    %3231 = vsyncpa [#allocation10], 1
    %3232 = vsyncpa [#allocation5], 1
    %3233 = vsyncpa [#allocation13], 1

// kernel: tpu_custom_call.1
$region0: #{tpu_custom_call.1}
  #allocation0 [shape = 'u32[]', space=smem, size = 0x4, offset = 0x4, fixed_abs, tag = 'smem constant byte address 0x4 - core index']
  #allocation1 [shape = 'u32[144,128]{1,0:T(1,128)}', space=vmem, size = 0x12000, scoped, tag = 'internal scratch']
  #allocation2 [shape = 'bf16[16,512]{1,0:T(8,128)(2,1)}', space=vmem, size = 0x4000, scoped, tag = 'scratch operand']
  %s0 = inlined_call_operand.hbm [shape: f32[4,16,128], index: 0, kind: input, shape index: {}]
  %s1 = inlined_call_operand.hbm [shape: f32[4,16,128], index: 1, kind: input, shape index: {}]
  %s2 = inlined_call_operand.vmem [shape: bf16[16,16], index: 2, kind: input, shape index: {}]
  %s3 = inlined_call_operand.vmem [shape: bf16[16,16], index: 3, kind: input, shape index: {}]
  %s4 = inlined_call_operand.vmem [shape: f32[16,2], index: 4, kind: input, shape index: {}]
  %s5 = inlined_call_operand.vmem [shape: f32[8,128], index: 5, kind: input, shape index: {}]
  %s6 = inlined_call_operand.hbm [shape: bf16[128,512], index: 6, kind: input, shape index: {}]
  %s7 = inlined_call_operand.vmem [shape: f32[1,512], index: 7, kind: input, shape index: {}]
  %s8 = inlined_call_operand.hbm [shape: bf16[512,128], index: 8, kind: input, shape index: {}]
  %s9 = inlined_call_operand.hbm [shape: f32[4,16,128], index: 9, kind: output, shape index: {0}]
  %s10 = inlined_call_operand.hbm [shape: f32[4,16,128], index: 10, kind: output, shape index: {1}]
  %11 = xla_tuple %s9, %s10
  %s12 = sld [smem:[#allocation0]]
  $region70: #{tpu_custom_call.1} parent=0
    _
  %s14 = ssub.s32 1, %s12
  %s15 = scalar_select 0, %s14, %s12
  $region1: #{tpu_custom_call.1} parent=0
    #allocation3 [shape = 'u8[32768]{0}', space=vmem, size = 0x8000, scoped, tag = 'input window, operand 0, single buffered']
    #allocation4 [shape = 's32[1]{0}', space=sflag, size = 0x4, scoped, tag = 'scoped memory for tpu_custom_call.1']
    #allocation5 [shape = 's32[1]{0}', space=sflag, size = 0x4, scoped, tag = 'scoped memory for tpu_custom_call.1']
    #allocation6 [shape = 'u8[32768]{0}', space=vmem, size = 0x8000, scoped, tag = 'input window, operand 1, single buffered']
    #allocation7 [shape = 's32[1]{0}', space=sflag, size = 0x4, scoped, tag = 'scoped memory for tpu_custom_call.1']
    #allocation8 [shape = 'u8[131072]{0}', space=vmem, size = 0x20000, scoped, tag = 'input window, operand 6, single buffered']
    #allocation9 [shape = 'u8[131072]{0}', space=vmem, size = 0x20000, scoped, tag = 'input window, operand 8, single buffered']
    #allocation10 [shape = 's32[1]{0}', space=sflag, size = 0x4, scoped, tag = 'scoped memory for tpu_custom_call.1']
    #allocation11 [shape = 'u8[32768]{0}', space=vmem, size = 0x8000, scoped, tag = 'output window, operand 0, single buffered']
    #allocation12 [shape = 'u8[32768]{0}', space=vmem, size = 0x8000, scoped, tag = 'output window, operand 1, single buffered']
    #allocation13 [shape = 's32[1]{0}', space=sflag, size = 0x4, scoped, tag = 'scoped memory for tpu_custom_call.1']
    %16 = vsyncpa [#allocation4], 0
    %17 = vsyncpa [#allocation7], 0
    %18 = vsyncpa [#allocation10], 0
    %19 = vsyncpa [#allocation5], 0
    %20 = vsyncpa [#allocation13], 0
    // Predicated region
    $region2: #{tpu_custom_call.1} parent=1 // pred_check
      _
    $region3: #{tpu_custom_call.1} parent=1 // pred_check_branch
      %22 = sbr.rel (0) target = $region5
    $region4: #{tpu_custom_call.1} parent=1 // pred_region
      %s24 = ssub.s32 1024, 1024
      %25 = vsyncadd [#allocation4], %s24
      %s26 = sshll.u32 [#allocation3], 4
      %s27 = int_to_ptr.vmem [resolvable:$true] %s26
      %32 = dma.hbm_to_vmem [thread:$0]  %s0, 1024, %s27, [#allocation4], 128, 128, 8
    $region5: #{tpu_custom_call.1} parent=1 // pred_fallthru
      _
    // Predicated region
    $region6: #{tpu_custom_call.1} parent=1 // pred_check
      _
    $region7: #{tpu_custom_call.1} parent=1 // pred_check_branch
      %34 = sbr.rel (0) target = $region9
    $region8: #{tpu_custom_call.1} parent=1 // pred_region
      %s36 = ssub.s32 1024, 1024
      %37 = vsyncadd [#allocation7], %s36
      %s38 = sshll.u32 [#allocation6], 4
      %s39 = int_to_ptr.vmem [resolvable:$true] %s38
      %44 = dma.hbm_to_vmem [thread:$0]  %s1, 1024, %s39, [#allocation7], 128, 128, 8
    $region9: #{tpu_custom_call.1} parent=1 // pred_fallthru
      _
    // Predicated region
    $region10: #{tpu_custom_call.1} parent=1 // pred_check
      _
    $region11: #{tpu_custom_call.1} parent=1 // pred_check_branch
      %46 = sbr.rel (0) target = $region13
    $region12: #{tpu_custom_call.1} parent=1 // pred_region
      _
    $region13: #{tpu_custom_call.1} parent=1 // pred_fallthru
      _
    // Predicated region
    $region14: #{tpu_custom_call.1} parent=1 // pred_check
      _
    $region15: #{tpu_custom_call.1} parent=1 // pred_check_branch
      %48 = sbr.rel (0) target = $region17
    $region16: #{tpu_custom_call.1} parent=1 // pred_region
      _
    $region17: #{tpu_custom_call.1} parent=1 // pred_fallthru
      _
    // Predicated region
    $region18: #{tpu_custom_call.1} parent=1 // pred_check
      _
    $region19: #{tpu_custom_call.1} parent=1 // pred_check_branch
      %50 = sbr.rel (0) target = $region21
    $region20: #{tpu_custom_call.1} parent=1 // pred_region
      _
    $region21: #{tpu_custom_call.1} parent=1 // pred_fallthru
      _
    // Predicated region
    $region22: #{tpu_custom_call.1} parent=1 // pred_check
      _
    $region23: #{tpu_custom_call.1} parent=1 // pred_check_branch
      %52 = sbr.rel (0) target = $region25
    $region24: #{tpu_custom_call.1} parent=1 // pred_region
      _
    $region25: #{tpu_custom_call.1} parent=1 // pred_fallthru
      _
    // Predicated region
    $region26: #{tpu_custom_call.1} parent=1 // pred_check
      _
    $region27: #{tpu_custom_call.1} parent=1 // pred_check_branch
      %54 = sbr.rel (0) target = $region29
    $region28: #{tpu_custom_call.1} parent=1 // pred_region
      %s56 = ssub.s32 4096, 4096
      %57 = vsyncadd [#allocation7], %s56
      %s58 = sshll.u32 [#allocation8], 4
      %s59 = int_to_ptr.vmem [resolvable:$true] %s58
      %64 = dma.hbm_to_vmem [thread:$0]  %s6, 4096, %s59, [#allocation7], 256, 256, 16
    $region29: #{tpu_custom_call.1} parent=1 // pred_fallthru
      _
    // Predicated region
    $region30: #{tpu_custom_call.1} parent=1 // pred_check
      _
    $region31: #{tpu_custom_call.1} parent=1 // pred_check_branch
      %66 = sbr.rel (0) target = $region33
    $region32: #{tpu_custom_call.1} parent=1 // pred_region
      _
    $region33: #{tpu_custom_call.1} parent=1 // pred_fallthru
      _
    // Predicated region
    $region34: #{tpu_custom_call.1} parent=1 // pred_check
      _
    $region35: #{tpu_custom_call.1} parent=1 // pred_check_branch
      %68 = sbr.rel (0) target = $region37
    $region36: #{tpu_custom_call.1} parent=1 // pred_region
      %s70 = ssub.s32 4096, 4096
      %71 = vsyncadd [#allocation10], %s70
      %s72 = sshll.u32 [#allocation9], 4
      %s73 = int_to_ptr.vmem [resolvable:$true] %s72
      %78 = dma.hbm_to_vmem [thread:$0]  %s8, 4096, %s73, [#allocation10], 64, 64, 4
    $region37: #{tpu_custom_call.1} parent=1 // pred_fallthru
      _
    // Predicated region
    $region38: #{tpu_custom_call.1} parent=1 // pred_check
      _
    $region39: #{tpu_custom_call.1} parent=1 // pred_check_branch
      %80 = sbr.rel (0) target = $region41
    $region40: #{tpu_custom_call.1} parent=1 // pred_region
      %81 = dma.done [#allocation4], 1024
    $region41: #{tpu_custom_call.1} parent=1 // pred_fallthru
      _
    // Predicated region
    $region42: #{tpu_custom_call.1} parent=1 // pred_check
      _
    $region43: #{tpu_custom_call.1} parent=1 // pred_check_branch
      %83 = sbr.rel (0) target = $region45
    $region44: #{tpu_custom_call.1} parent=1 // pred_region
      %84 = dma.done [#allocation7], 1024
    $region45: #{tpu_custom_call.1} parent=1 // pred_fallthru
      _
    // Predicated region
    $region46: #{tpu_custom_call.1} parent=1 // pred_check
      _
    $region47: #{tpu_custom_call.1} parent=1 // pred_check_branch
      %86 = sbr.rel (0) target = $region49
    $region48: #{tpu_custom_call.1} parent=1 // pred_region
      %87 = dma.done [#allocation7], 4096
    $region49: #{tpu_custom_call.1} parent=1 // pred_fallthru
      _
    // Predicated region
    $region50: #{tpu_custom_call.1} parent=1 // pred_check
      _
    $region51: #{tpu_custom_call.1} parent=1 // pred_check_branch
      %89 = sbr.rel (0) target = $region53
    $region52: #{tpu_custom_call.1} parent=1 // pred_region
      %90 = dma.done [#allocation10], 4096
    $region53: #{tpu_custom_call.1} parent=1 // pred_fallthru
      _
    %v92 = vld [vmem:[%s4] sm:$0xff]
    %v93 = vld [vmem:[%s4 + $0x8] sm:$0xff]
    %95 = vset.pattern.permute.xlu0 0
    %96 = vperm.xlu0 %95, %v92
    %v97 = vpop.permute.xlu0 %96
    %100 = vset.pattern.permute.xlu0 0
    %101 = vperm.xlu0 %100, %v93
    %v102 = vpop.permute.xlu0 %101
    %104 = vset.pattern.permute.xlu0 1
    %105 = vperm.xlu0 %104, %v92
    %v106 = vpop.permute.xlu0 %105
    %108 = vset.pattern.permute.xlu0 1
    %109 = vperm.xlu0 %108, %v93
    %v110 = vpop.permute.xlu0 %109
    %v112 = vld [vmem:[%s5] sm:$0x1]
    %v113 = vld [vmem:[%s5 + $0x1] sm:$0x1]
    %v114 = vld [vmem:[#allocation3] sm:$0xff]
    %v115 = vld [vmem:[#allocation3 + $0x8] sm:$0xff]
    %116 = vadd.xlane.f32.xlu0 %v114
    %v117 = vpop.xlane.xlu0 %116
    %118 = vadd.xlane.f32.xlu0 %v115
    %v119 = vpop.xlane.xlu0 %118
    %v120 = vrcp.pop 128.0
    %v121 = vmul.f32 %v117, %v120
    %v122 = vmul.f32 %v119, %v120
    %v123 = vsub.f32 %v114, %v121
    %v124 = vsub.f32 %v115, %v122
    %v125 = vmul.f32 %v123, %v123
    %v126 = vmul.f32 %v124, %v124
    %127 = vadd.xlane.f32.xlu0 %v125
    %v128 = vpop.xlane.xlu0 %127
    %129 = vadd.xlane.f32.xlu0 %v126
    %v130 = vpop.xlane.xlu0 %129
    %v131 = vmul.f32 %v128, %v120
    %v132 = vmul.f32 %v130, %v120
    %v133 = vadd.f32 %v131, 1e-05
    %v134 = vadd.f32 %v132, 1e-05
    %v135 = vrsqrt.pop %v133
    %v136 = vrsqrt.pop %v134
    %v137 = vmul.f32 %v123, %v135
    %v138 = vmul.f32 %v124, %v136
    %v139 = vlaneseq
    %v140 = vshrl.u32 %v139, 7
    %v141 = vsub.s32 0, %v140
    %v142 = vrot.slane %v112, %v141
    %v143 = vmul.f32 %v137, %v142
    %v144 = vmul.f32 %v138, %v142
    %v145 = vlaneseq
    %v146 = vshrl.u32 %v145, 7
    %v147 = vsub.s32 0, %v146
    %v148 = vrot.slane %v113, %v147
    %v149 = vadd.f32 %v143, %v148
    %v150 = vadd.f32 %v144, %v148
    %v151 = vpack.c.bf16 %v150, %v149
    %v153 = vunpack.c.l.b16 %v151
    %v154 = vunpack.c.h.b16 %v151
    %v155 = vpack.c.b16 %v153, %v153
    %v156 = vpack.c.b16 %v154, %v154
    %159 = vst [vmem:[#allocation2] sm:$0xf] %v155
    %160 = vst [vmem:[#allocation2 + $0x10] sm:$0xf] %v156
    %s161 = scalar_lea.vmem [#allocation3], 16
    %v162 = vld [vmem:[%s161] sm:$0xff]
    %v163 = vld [vmem:[%s161 + $0x8] sm:$0xff]
    %164 = vadd.xlane.f32.xlu0 %v162
    %v165 = vpop.xlane.xlu0 %164
    %166 = vadd.xlane.f32.xlu0 %v163
    %v167 = vpop.xlane.xlu0 %166
    %v168 = vmul.f32 %v165, %v120
    %v169 = vmul.f32 %v167, %v120
    %v170 = vsub.f32 %v162, %v168
    %v171 = vsub.f32 %v163, %v169
    %v172 = vmul.f32 %v170, %v170
    %v173 = vmul.f32 %v171, %v171
    %174 = vadd.xlane.f32.xlu0 %v172
    %v175 = vpop.xlane.xlu0 %174
    %176 = vadd.xlane.f32.xlu0 %v173
    %v177 = vpop.xlane.xlu0 %176
    %v178 = vmul.f32 %v175, %v120
    %v179 = vmul.f32 %v177, %v120
    %v180 = vadd.f32 %v178, 1e-05
    %v181 = vadd.f32 %v179, 1e-05
    %v182 = vrsqrt.pop %v180
    %v183 = vrsqrt.pop %v181
    %v184 = vmul.f32 %v170, %v182
    %v185 = vmul.f32 %v171, %v183
    %v186 = vmul.f32 %v184, %v142
    %v187 = vmul.f32 %v185, %v142
    %v188 = vadd.f32 %v186, %v148
    %v189 = vadd.f32 %v187, %v148
    %v190 = vpack.c.bf16 %v189, %v188
    %v192 = vunpack.c.l.b16 %v190
    %v193 = vunpack.c.h.b16 %v190
    %v194 = vpack.c.b16 %v192, %v192
    %v195 = vpack.c.b16 %v193, %v193
    %198 = vst [vmem:[#allocation2 + $0x4] sm:$0xf] %v194
    %199 = vst [vmem:[#allocation2 + $0x14] sm:$0xf] %v195
    %s200 = scalar_lea.vmem [#allocation3], 32
    %v201 = vld [vmem:[%s200] sm:$0xff]
    %v202 = vld [vmem:[%s200 + $0x8] sm:$0xff]
    %203 = vadd.xlane.f32.xlu0 %v201
    %v204 = vpop.xlane.xlu0 %203
    %205 = vadd.xlane.f32.xlu0 %v202
    %v206 = vpop.xlane.xlu0 %205
    %v207 = vmul.f32 %v204, %v120
    %v208 = vmul.f32 %v206, %v120
    %v209 = vsub.f32 %v201, %v207
    %v210 = vsub.f32 %v202, %v208
    %v211 = vmul.f32 %v209, %v209
    %v212 = vmul.f32 %v210, %v210
    %213 = vadd.xlane.f32.xlu0 %v211
    %v214 = vpop.xlane.xlu0 %213
    %215 = vadd.xlane.f32.xlu0 %v212
    %v216 = vpop.xlane.xlu0 %215
    %v217 = vmul.f32 %v214, %v120
    %v218 = vmul.f32 %v216, %v120
    %v219 = vadd.f32 %v217, 1e-05
    %v220 = vadd.f32 %v218, 1e-05
    %v221 = vrsqrt.pop %v219
    %v222 = vrsqrt.pop %v220
    %v223 = vmul.f32 %v209, %v221
    %v224 = vmul.f32 %v210, %v222
    %v225 = vmul.f32 %v223, %v142
    %v226 = vmul.f32 %v224, %v142
    %v227 = vadd.f32 %v225, %v148
    %v228 = vadd.f32 %v226, %v148
    %v229 = vpack.c.bf16 %v228, %v227
    %v231 = vunpack.c.l.b16 %v229
    %v232 = vunpack.c.h.b16 %v229
    %v233 = vpack.c.b16 %v231, %v231
    %v234 = vpack.c.b16 %v232, %v232
    %237 = vst [vmem:[#allocation2 + $0x8] sm:$0xf] %v233
    %238 = vst [vmem:[#allocation2 + $0x18] sm:$0xf] %v234
    %s239 = scalar_lea.vmem [#allocation3], 48
    %v240 = vld [vmem:[%s239] sm:$0xff]
    %v241 = vld [vmem:[%s239 + $0x8] sm:$0xff]
    %242 = vadd.xlane.f32.xlu0 %v240
    %v243 = vpop.xlane.xlu0 %242
    %244 = vadd.xlane.f32.xlu0 %v241
    %v245 = vpop.xlane.xlu0 %244
    %v246 = vmul.f32 %v243, %v120
    %v247 = vmul.f32 %v245, %v120
    %v248 = vsub.f32 %v240, %v246
    %v249 = vsub.f32 %v241, %v247
    %v250 = vmul.f32 %v248, %v248
    %v251 = vmul.f32 %v249, %v249
    %252 = vadd.xlane.f32.xlu0 %v250
    %v253 = vpop.xlane.xlu0 %252
    %254 = vadd.xlane.f32.xlu0 %v251
    %v255 = vpop.xlane.xlu0 %254
    %v256 = vmul.f32 %v253, %v120
    %v257 = vmul.f32 %v255, %v120
    %v258 = vadd.f32 %v256, 1e-05
    %v259 = vadd.f32 %v257, 1e-05
    %v260 = vrsqrt.pop %v258
    %v261 = vrsqrt.pop %v259
    %v262 = vmul.f32 %v248, %v260
    %v263 = vmul.f32 %v249, %v261
    %v264 = vmul.f32 %v262, %v142
    %v265 = vmul.f32 %v263, %v142
    %v266 = vadd.f32 %v264, %v148
    %v267 = vadd.f32 %v265, %v148
    %v268 = vpack.c.bf16 %v267, %v266
    %v270 = vunpack.c.l.b16 %v268
    %v271 = vunpack.c.h.b16 %v268
    %v272 = vpack.c.b16 %v270, %v270
    %v273 = vpack.c.b16 %v271, %v271
    %276 = vst [vmem:[#allocation2 + $0xc] sm:$0xf] %v272
    %277 = vst [vmem:[#allocation2 + $0x1c] sm:$0xf] %v273
    %v278 = vld [vmem:[%s2] sm:$0xf]
    %v279 = vld [vmem:[%s2 + $0x4] sm:$0xf]
    %v280 = vld [vmem:[#allocation2] sm:$0xff]
    %v281 = vld [vmem:[#allocation2 + $0x8] sm:$0xff]
    %v282 = vld [vmem:[#allocation2 + $0x10] sm:$0xff]
    %v283 = vld [vmem:[#allocation2 + $0x18] sm:$0xff]
    %v286 = vunpack.c.l.b16 %v278
    %v287 = vunpack.c.l.b16 %v279
    %v288 = vpack.c.b16 %v287, %v286
    %v293 = vunpack.c.l.b16 %v280
    %v294 = vunpack.c.h.b16 %v280
    %v295 = vunpack.c.l.b16 %v281
    %v296 = vunpack.c.h.b16 %v281
    %v297 = vunpack.c.l.b16 %v282
    %v298 = vunpack.c.h.b16 %v282
    %v299 = vunpack.c.l.b16 %v283
    %v300 = vunpack.c.h.b16 %v283
    %v301 = vpack.c.b16 %v297, %v293
    %v302 = vpack.c.b16 %v298, %v294
    %v303 = vpack.c.b16 %v299, %v295
    %v304 = vpack.c.b16 %v300, %v296
    %vm309 = vcmask 130048
    %v311 = vsel %vm309, %v288, 0
    %313 = vmatprep.subr.bf16.mxu0 0
    %314 = vmatpush1.bf16.msra.mxu0 0
    %315 = vmatprep.subr.bf16.mxu0 0
    %316 = vmatpush1.bf16.msra.mxu0 0
    %317 = vmatprep.subr.bf16.mxu0 0
    %318 = vmatpush1.bf16.msra.mxu0 0
    %319 = vmatprep.subr.bf16.mxu0 0
    %320 = vmatpush1.bf16.msra.mxu0 0
    %321 = vmatprep.subr.bf16.mxu0 0
    %322 = vmatpush1.bf16.msra.mxu0 0
    %323 = vmatprep.subr.bf16.mxu0 0
    %324 = vmatpush1.bf16.msra.mxu0 0
    %325 = vmatprep.subr.bf16.mxu0 0
    %326 = vmatpush1.bf16.msra.mxu0 0
    %327 = vmatprep.subr.bf16.mxu0 %v302
    %328 = vmatpush1.bf16.msra.mxu0 %v301
    %329 = vmatprep.subr.bf16.mxu0 0
    %330 = vmatpush2.bf16.msra.mxu0 0
    %331 = vmatprep.subr.bf16.mxu0 0
    %332 = vmatpush2.bf16.msra.mxu0 0
    %333 = vmatprep.subr.bf16.mxu0 0
    %334 = vmatpush2.bf16.msra.mxu0 0
    %335 = vmatprep.subr.bf16.mxu0 0
    %336 = vmatpush2.bf16.msra.mxu0 0
    %337 = vmatprep.subr.bf16.mxu0 0
    %338 = vmatpush2.bf16.msra.mxu0 0
    %339 = vmatprep.subr.bf16.mxu0 0
    %340 = vmatpush2.bf16.msra.mxu0 0
    %341 = vmatprep.subr.bf16.mxu0 0
    %342 = vmatpush2.bf16.msra.mxu0 0
    %343 = vmatprep.subr.bf16.mxu0 0
    %344 = vmatpush2.bf16.msra.mxu0 0
    %345 = vmatprep.mubr.bf16.mxu0 0
    %346 = vmatmul.mubr.bf16.gmra.mxu0 %v311
    %v347 = vpop.f32.mrf.mxu0
    %v348 = vadd.f32 0.0, %v347
    %v349 = vpop.f32.mrf.mxu0
    %v350 = vadd.f32 0.0, %v349
    %v351 = vpop.f32.mrf.mxu0
    %v352 = vadd.f32 0.0, %v351
    %v353 = vpop.f32.mrf.mxu0
    %v354 = vadd.f32 0.0, %v353
    %355 = vdwg.mxu0
    %356 = vmatprep.subr.bf16.mxu0 0
    %357 = vmatpush1.bf16.msra.mxu0 0
    %358 = vmatprep.subr.bf16.mxu0 0
    %359 = vmatpush1.bf16.msra.mxu0 0
    %360 = vmatprep.subr.bf16.mxu0 0
    %361 = vmatpush1.bf16.msra.mxu0 0
    %362 = vmatprep.subr.bf16.mxu0 0
    %363 = vmatpush1.bf16.msra.mxu0 0
    %364 = vmatprep.subr.bf16.mxu0 0
    %365 = vmatpush1.bf16.msra.mxu0 0
    %366 = vmatprep.subr.bf16.mxu0 0
    %367 = vmatpush1.bf16.msra.mxu0 0
    %368 = vmatprep.subr.bf16.mxu0 0
    %369 = vmatpush1.bf16.msra.mxu0 0
    %370 = vmatprep.subr.bf16.mxu0 %v304
    %371 = vmatpush1.bf16.msra.mxu0 %v303
    %372 = vmatprep.subr.bf16.mxu0 0
    %373 = vmatpush2.bf16.msra.mxu0 0
    %374 = vmatprep.subr.bf16.mxu0 0
    %375 = vmatpush2.bf16.msra.mxu0 0
    %376 = vmatprep.subr.bf16.mxu0 0
    %377 = vmatpush2.bf16.msra.mxu0 0
    %378 = vmatprep.subr.bf16.mxu0 0
    %379 = vmatpush2.bf16.msra.mxu0 0
    %380 = vmatprep.subr.bf16.mxu0 0
    %381 = vmatpush2.bf16.msra.mxu0 0
    %382 = vmatprep.subr.bf16.mxu0 0
    %383 = vmatpush2.bf16.msra.mxu0 0
    %384 = vmatprep.subr.bf16.mxu0 0
    %385 = vmatpush2.bf16.msra.mxu0 0
    %386 = vmatprep.subr.bf16.mxu0 0
    %387 = vmatpush2.bf16.msra.mxu0 0
    %388 = vmatprep.mubr.bf16.mxu0 0
    %389 = vmatmul.mubr.bf16.gmra.mxu0 %v311
    %v390 = vpop.f32.mrf.mxu0
    %v391 = vadd.f32 0.0, %v390
    %v392 = vpop.f32.mrf.mxu0
    %v393 = vadd.f32 0.0, %v392
    %v394 = vpop.f32.mrf.mxu0
    %v395 = vadd.f32 0.0, %v394
    %v396 = vpop.f32.mrf.mxu0
    %v397 = vadd.f32 0.0, %v396
    %398 = vdwg.mxu0
    %v399 = vadd.f32 %v348, %v97
    %v400 = vadd.f32 %v352, %v102
    %v401 = vld [vmem:[#allocation3] sm:$0xff]
    %v402 = vld [vmem:[#allocation3 + $0x8] sm:$0xff]
    %v403 = vadd.f32 %v399, %v401
    %v404 = vadd.f32 %v400, %v402
    %405 = vst [vmem:[#allocation11] sm:$0xff] %v403
    %406 = vst [vmem:[#allocation11 + $0x8] sm:$0xff] %v404
    %v407 = vadd.f32 %v350, %v97
    %v408 = vadd.f32 %v354, %v102
    %v409 = vld [vmem:[%s161] sm:$0xff]
    %v410 = vld [vmem:[%s161 + $0x8] sm:$0xff]
    %v411 = vadd.f32 %v407, %v409
    %v412 = vadd.f32 %v408, %v410
    %s413 = scalar_lea.vmem [#allocation11], 16
    %414 = vst [vmem:[%s413] sm:$0xff] %v411
    %415 = vst [vmem:[%s413 + $0x8] sm:$0xff] %v412
    %v416 = vadd.f32 %v391, %v97
    %v417 = vadd.f32 %v395, %v102
    %v418 = vld [vmem:[%s200] sm:$0xff]
    %v419 = vld [vmem:[%s200 + $0x8] sm:$0xff]
    %v420 = vadd.f32 %v416, %v418
    %v421 = vadd.f32 %v417, %v419
    %s422 = scalar_lea.vmem [#allocation11], 32
    %423 = vst [vmem:[%s422] sm:$0xff] %v420
    %424 = vst [vmem:[%s422 + $0x8] sm:$0xff] %v421
    %v425 = vadd.f32 %v393, %v97
    %v426 = vadd.f32 %v397, %v102
    %v427 = vld [vmem:[%s239] sm:$0xff]
    %v428 = vld [vmem:[%s239 + $0x8] sm:$0xff]
    %v429 = vadd.f32 %v425, %v427
    %v430 = vadd.f32 %v426, %v428
    %s431 = scalar_lea.vmem [#allocation11], 48
    %432 = vst [vmem:[%s431] sm:$0xff] %v429
    %433 = vst [vmem:[%s431 + $0x8] sm:$0xff] %v430
    %v434 = vld [vmem:[%s5 + $0x2] sm:$0x1]
    %v435 = vld [vmem:[%s5 + $0x3] sm:$0x1]
    %v436 = vld [vmem:[#allocation6] sm:$0xff]
    %v437 = vld [vmem:[#allocation6 + $0x8] sm:$0xff]
    %438 = vadd.xlane.f32.xlu0 %v436
    %v439 = vpop.xlane.xlu0 %438
    %440 = vadd.xlane.f32.xlu0 %v437
    %v441 = vpop.xlane.xlu0 %440
    %v442 = vmul.f32 %v439, %v120
    %v443 = vmul.f32 %v441, %v120
    %v444 = vsub.f32 %v436, %v442
    %v445 = vsub.f32 %v437, %v443
    %v446 = vmul.f32 %v444, %v444
    %v447 = vmul.f32 %v445, %v445
    %448 = vadd.xlane.f32.xlu0 %v446
    %v449 = vpop.xlane.xlu0 %448
    %450 = vadd.xlane.f32.xlu0 %v447
    %v451 = vpop.xlane.xlu0 %450
    %v452 = vmul.f32 %v449, %v120
    %v453 = vmul.f32 %v451, %v120
    %v454 = vadd.f32 %v452, 1e-05
    %v455 = vadd.f32 %v453, 1e-05
    %v456 = vrsqrt.pop %v454
    %v457 = vrsqrt.pop %v455
    %v458 = vmul.f32 %v444, %v456
    %v459 = vmul.f32 %v445, %v457
    %v460 = vlaneseq
    %v461 = vshrl.u32 %v460, 7
    %v462 = vsub.s32 0, %v461
    %v463 = vrot.slane %v434, %v462
    %v464 = vmul.f32 %v458, %v463
    %v465 = vmul.f32 %v459, %v463
    %v466 = vlaneseq
    %v467 = vshrl.u32 %v466, 7
    %v468 = vsub.s32 0, %v467
    %v469 = vrot.slane %v435, %v468
    %v470 = vadd.f32 %v464, %v469
    %v471 = vadd.f32 %v465, %v469
    %v472 = vpack.c.bf16 %v471, %v470
    %v474 = vunpack.c.l.b16 %v472
    %v475 = vunpack.c.h.b16 %v472
    %v476 = vpack.c.b16 %v474, %v474
    %v477 = vpack.c.b16 %v475, %v475
    %480 = vst [vmem:[#allocation2] sm:$0xf] %v476
    %481 = vst [vmem:[#allocation2 + $0x10] sm:$0xf] %v477
    %s482 = scalar_lea.vmem [#allocation6], 16
    %v483 = vld [vmem:[%s482] sm:$0xff]
    %v484 = vld [vmem:[%s482 + $0x8] sm:$0xff]
    %485 = vadd.xlane.f32.xlu0 %v483
    %v486 = vpop.xlane.xlu0 %485
    %487 = vadd.xlane.f32.xlu0 %v484
    %v488 = vpop.xlane.xlu0 %487
    %v489 = vmul.f32 %v486, %v120
    %v490 = vmul.f32 %v488, %v120
    %v491 = vsub.f32 %v483, %v489
    %v492 = vsub.f32 %v484, %v490
    %v493 = vmul.f32 %v491, %v491
    %v494 = vmul.f32 %v492, %v492
    %495 = vadd.xlane.f32.xlu0 %v493
    %v496 = vpop.xlane.xlu0 %495
    %497 = vadd.xlane.f32.xlu0 %v494
    %v498 = vpop.xlane.xlu0 %497
    %v499 = vmul.f32 %v496, %v120
    %v500 = vmul.f32 %v498, %v120
    %v501 = vadd.f32 %v499, 1e-05
    %v502 = vadd.f32 %v500, 1e-05
    %v503 = vrsqrt.pop %v501
    %v504 = vrsqrt.pop %v502
    %v505 = vmul.f32 %v491, %v503
    %v506 = vmul.f32 %v492, %v504
    %v507 = vmul.f32 %v505, %v463
    %v508 = vmul.f32 %v506, %v463
    %v509 = vadd.f32 %v507, %v469
    %v510 = vadd.f32 %v508, %v469
    %v511 = vpack.c.bf16 %v510, %v509
    %v513 = vunpack.c.l.b16 %v511
    %v514 = vunpack.c.h.b16 %v511
    %v515 = vpack.c.b16 %v513, %v513
    %v516 = vpack.c.b16 %v514, %v514
    %519 = vst [vmem:[#allocation2 + $0x4] sm:$0xf] %v515
    %520 = vst [vmem:[#allocation2 + $0x14] sm:$0xf] %v516
    %s521 = scalar_lea.vmem [#allocation6], 32
    %v522 = vld [vmem:[%s521] sm:$0xff]
    %v523 = vld [vmem:[%s521 + $0x8] sm:$0xff]
    %524 = vadd.xlane.f32.xlu0 %v522
    %v525 = vpop.xlane.xlu0 %524
    %526 = vadd.xlane.f32.xlu0 %v523
    %v527 = vpop.xlane.xlu0 %526
    %v528 = vmul.f32 %v525, %v120
    %v529 = vmul.f32 %v527, %v120
    %v530 = vsub.f32 %v522, %v528
    %v531 = vsub.f32 %v523, %v529
    %v532 = vmul.f32 %v530, %v530
    %v533 = vmul.f32 %v531, %v531
    %534 = vadd.xlane.f32.xlu0 %v532
    %v535 = vpop.xlane.xlu0 %534
    %536 = vadd.xlane.f32.xlu0 %v533
    %v537 = vpop.xlane.xlu0 %536
    %v538 = vmul.f32 %v535, %v120
    %v539 = vmul.f32 %v537, %v120
    %v540 = vadd.f32 %v538, 1e-05
    %v541 = vadd.f32 %v539, 1e-05
    %v542 = vrsqrt.pop %v540
    %v543 = vrsqrt.pop %v541
    %v544 = vmul.f32 %v530, %v542
    %v545 = vmul.f32 %v531, %v543
    %v546 = vmul.f32 %v544, %v463
    %v547 = vmul.f32 %v545, %v463
    %v548 = vadd.f32 %v546, %v469
    %v549 = vadd.f32 %v547, %v469
    %v550 = vpack.c.bf16 %v549, %v548
    %v552 = vunpack.c.l.b16 %v550
    %v553 = vunpack.c.h.b16 %v550
    %v554 = vpack.c.b16 %v552, %v552
    %v555 = vpack.c.b16 %v553, %v553
    %558 = vst [vmem:[#allocation2 + $0x8] sm:$0xf] %v554
    %559 = vst [vmem:[#allocation2 + $0x18] sm:$0xf] %v555
    %s560 = scalar_lea.vmem [#allocation6], 48
    %v561 = vld [vmem:[%s560] sm:$0xff]
    %v562 = vld [vmem:[%s560 + $0x8] sm:$0xff]
    %563 = vadd.xlane.f32.xlu0 %v561
    %v564 = vpop.xlane.xlu0 %563
    %565 = vadd.xlane.f32.xlu0 %v562
    %v566 = vpop.xlane.xlu0 %565
    %v567 = vmul.f32 %v564, %v120
    %v568 = vmul.f32 %v566, %v120
    %v569 = vsub.f32 %v561, %v567
    %v570 = vsub.f32 %v562, %v568
    %v571 = vmul.f32 %v569, %v569
    %v572 = vmul.f32 %v570, %v570
    %573 = vadd.xlane.f32.xlu0 %v571
    %v574 = vpop.xlane.xlu0 %573
    %575 = vadd.xlane.f32.xlu0 %v572
    %v576 = vpop.xlane.xlu0 %575
    %v577 = vmul.f32 %v574, %v120
    %v578 = vmul.f32 %v576, %v120
    %v579 = vadd.f32 %v577, 1e-05
    %v580 = vadd.f32 %v578, 1e-05
    %v581 = vrsqrt.pop %v579
    %v582 = vrsqrt.pop %v580
    %v583 = vmul.f32 %v569, %v581
    %v584 = vmul.f32 %v570, %v582
    %v585 = vmul.f32 %v583, %v463
    %v586 = vmul.f32 %v584, %v463
    %v587 = vadd.f32 %v585, %v469
    %v588 = vadd.f32 %v586, %v469
    %v589 = vpack.c.bf16 %v588, %v587
    %v591 = vunpack.c.l.b16 %v589
    %v592 = vunpack.c.h.b16 %v589
    %v593 = vpack.c.b16 %v591, %v591
    %v594 = vpack.c.b16 %v592, %v592
    %597 = vst [vmem:[#allocation2 + $0xc] sm:$0xf] %v593
    %598 = vst [vmem:[#allocation2 + $0x1c] sm:$0xf] %v594
    %v599 = vld [vmem:[%s3] sm:$0xf]
    %v600 = vld [vmem:[%s3 + $0x4] sm:$0xf]
    %v601 = vld [vmem:[#allocation2] sm:$0xff]
    %v602 = vld [vmem:[#allocation2 + $0x8] sm:$0xff]
    %v603 = vld [vmem:[#allocation2 + $0x10] sm:$0xff]
    %v604 = vld [vmem:[#allocation2 + $0x18] sm:$0xff]
    %v607 = vunpack.c.l.b16 %v599
    %v608 = vunpack.c.l.b16 %v600
    %v609 = vpack.c.b16 %v608, %v607
    %v614 = vunpack.c.l.b16 %v601
    %v615 = vunpack.c.h.b16 %v601
    %v616 = vunpack.c.l.b16 %v602
    %v617 = vunpack.c.h.b16 %v602
    %v618 = vunpack.c.l.b16 %v603
    %v619 = vunpack.c.h.b16 %v603
    %v620 = vunpack.c.l.b16 %v604
    %v621 = vunpack.c.h.b16 %v604
    %v622 = vpack.c.b16 %v618, %v614
    %v623 = vpack.c.b16 %v619, %v615
    %v624 = vpack.c.b16 %v620, %v616
    %v625 = vpack.c.b16 %v621, %v617
    %v631 = vsel %vm309, %v609, 0
    %633 = vmatprep.subr.bf16.mxu0 0
    %634 = vmatpush1.bf16.msra.mxu0 0
    %635 = vmatprep.subr.bf16.mxu0 0
    %636 = vmatpush1.bf16.msra.mxu0 0
    %637 = vmatprep.subr.bf16.mxu0 0
    %638 = vmatpush1.bf16.msra.mxu0 0
    %639 = vmatprep.subr.bf16.mxu0 0
    %640 = vmatpush1.bf16.msra.mxu0 0
    %641 = vmatprep.subr.bf16.mxu0 0
    %642 = vmatpush1.bf16.msra.mxu0 0
    %643 = vmatprep.subr.bf16.mxu0 0
    %644 = vmatpush1.bf16.msra.mxu0 0
    %645 = vmatprep.subr.bf16.mxu0 0
    %646 = vmatpush1.bf16.msra.mxu0 0
    %647 = vmatprep.subr.bf16.mxu0 %v623
    %648 = vmatpush1.bf16.msra.mxu0 %v622
    %649 = vmatprep.subr.bf16.mxu0 0
    %650 = vmatpush2.bf16.msra.mxu0 0
    %651 = vmatprep.subr.bf16.mxu0 0
    %652 = vmatpush2.bf16.msra.mxu0 0
    %653 = vmatprep.subr.bf16.mxu0 0
    %654 = vmatpush2.bf16.msra.mxu0 0
    %655 = vmatprep.subr.bf16.mxu0 0
    %656 = vmatpush2.bf16.msra.mxu0 0
    %657 = vmatprep.subr.bf16.mxu0 0
    %658 = vmatpush2.bf16.msra.mxu0 0
    %659 = vmatprep.subr.bf16.mxu0 0
    %660 = vmatpush2.bf16.msra.mxu0 0
    %661 = vmatprep.subr.bf16.mxu0 0
    %662 = vmatpush2.bf16.msra.mxu0 0
    %663 = vmatprep.subr.bf16.mxu0 0
    %664 = vmatpush2.bf16.msra.mxu0 0
    %665 = vmatprep.mubr.bf16.mxu0 0
    %666 = vmatmul.mubr.bf16.gmra.mxu0 %v631
    %v667 = vpop.f32.mrf.mxu0
    %v668 = vadd.f32 0.0, %v667
    %v669 = vpop.f32.mrf.mxu0
    %v670 = vadd.f32 0.0, %v669
    %v671 = vpop.f32.mrf.mxu0
    %v672 = vadd.f32 0.0, %v671
    %v673 = vpop.f32.mrf.mxu0
    %v674 = vadd.f32 0.0, %v673
    %675 = vdwg.mxu0
    %676 = vmatprep.subr.bf16.mxu0 0
    %677 = vmatpush1.bf16.msra.mxu0 0
    %678 = vmatprep.subr.bf16.mxu0 0
    %679 = vmatpush1.bf16.msra.mxu0 0
    %680 = vmatprep.subr.bf16.mxu0 0
    %681 = vmatpush1.bf16.msra.mxu0 0
    %682 = vmatprep.subr.bf16.mxu0 0
    %683 = vmatpush1.bf16.msra.mxu0 0
    %684 = vmatprep.subr.bf16.mxu0 0
    %685 = vmatpush1.bf16.msra.mxu0 0
    %686 = vmatprep.subr.bf16.mxu0 0
    %687 = vmatpush1.bf16.msra.mxu0 0
    %688 = vmatprep.subr.bf16.mxu0 0
    %689 = vmatpush1.bf16.msra.mxu0 0
    %690 = vmatprep.subr.bf16.mxu0 %v625
    %691 = vmatpush1.bf16.msra.mxu0 %v624
    %692 = vmatprep.subr.bf16.mxu0 0
    %693 = vmatpush2.bf16.msra.mxu0 0
    %694 = vmatprep.subr.bf16.mxu0 0
    %695 = vmatpush2.bf16.msra.mxu0 0
    %696 = vmatprep.subr.bf16.mxu0 0
    %697 = vmatpush2.bf16.msra.mxu0 0
    %698 = vmatprep.subr.bf16.mxu0 0
    %699 = vmatpush2.bf16.msra.mxu0 0
    %700 = vmatprep.subr.bf16.mxu0 0
    %701 = vmatpush2.bf16.msra.mxu0 0
    %702 = vmatprep.subr.bf16.mxu0 0
    %703 = vmatpush2.bf16.msra.mxu0 0
    %704 = vmatprep.subr.bf16.mxu0 0
    %705 = vmatpush2.bf16.msra.mxu0 0
    %706 = vmatprep.subr.bf16.mxu0 0
    %707 = vmatpush2.bf16.msra.mxu0 0
    %708 = vmatprep.mubr.bf16.mxu0 0
    %709 = vmatmul.mubr.bf16.gmra.mxu0 %v631
    %v710 = vpop.f32.mrf.mxu0
    %v711 = vadd.f32 0.0, %v710
    %v712 = vpop.f32.mrf.mxu0
    %v713 = vadd.f32 0.0, %v712
    %v714 = vpop.f32.mrf.mxu0
    %v715 = vadd.f32 0.0, %v714
    %v716 = vpop.f32.mrf.mxu0
    %v717 = vadd.f32 0.0, %v716
    %718 = vdwg.mxu0
    %v719 = vadd.f32 %v668, %v106
    %v720 = vadd.f32 %v672, %v110
    %v721 = vld [vmem:[#allocation6] sm:$0xff]
    %v722 = vld [vmem:[#allocation6 + $0x8] sm:$0xff]
    %v723 = vadd.f32 %v719, %v721
    %v724 = vadd.f32 %v720, %v722
    %725 = vst [vmem:[#allocation12] sm:$0xff] %v723
    %726 = vst [vmem:[#allocation12 + $0x8] sm:$0xff] %v724
    %v727 = vadd.f32 %v670, %v106
    %v728 = vadd.f32 %v674, %v110
    %v729 = vld [vmem:[%s482] sm:$0xff]
    %v730 = vld [vmem:[%s482 + $0x8] sm:$0xff]
    %v731 = vadd.f32 %v727, %v729
    %v732 = vadd.f32 %v728, %v730
    %s733 = scalar_lea.vmem [#allocation12], 16
    %734 = vst [vmem:[%s733] sm:$0xff] %v731
    %735 = vst [vmem:[%s733 + $0x8] sm:$0xff] %v732
    %v736 = vadd.f32 %v711, %v106
    %v737 = vadd.f32 %v715, %v110
    %v738 = vld [vmem:[%s521] sm:$0xff]
    %v739 = vld [vmem:[%s521 + $0x8] sm:$0xff]
    %v740 = vadd.f32 %v736, %v738
    %v741 = vadd.f32 %v737, %v739
    %s742 = scalar_lea.vmem [#allocation12], 32
    %743 = vst [vmem:[%s742] sm:$0xff] %v740
    %744 = vst [vmem:[%s742 + $0x8] sm:$0xff] %v741
    %v745 = vadd.f32 %v713, %v106
    %v746 = vadd.f32 %v717, %v110
    %v747 = vld [vmem:[%s560] sm:$0xff]
    %v748 = vld [vmem:[%s560 + $0x8] sm:$0xff]
    %v749 = vadd.f32 %v745, %v747
    %v750 = vadd.f32 %v746, %v748
    %s751 = scalar_lea.vmem [#allocation12], 48
    %752 = vst [vmem:[%s751] sm:$0xff] %v749
    %753 = vst [vmem:[%s751 + $0x8] sm:$0xff] %v750
    %v754 = vld [vmem:[%s5 + $0x4] sm:$0x1]
    %v755 = vld [vmem:[%s5 + $0x5] sm:$0x1]
    %v756 = vld [vmem:[%s5 + $0x6] sm:$0x1]
    %v757 = vld [vmem:[%s7] sm:$0xf]
    %v758 = vld [vmem:[#allocation8] sm:$0xff]
    %v759 = vld [vmem:[#allocation8 + $0x8] sm:$0xff]
    %v760 = vld [vmem:[#allocation8 + $0x10] sm:$0xff]
    %v761 = vld [vmem:[#allocation8 + $0x18] sm:$0xff]
    %v762 = vld [vmem:[#allocation8 + $0x20] sm:$0xff]
    %v763 = vld [vmem:[#allocation8 + $0x28] sm:$0xff]
    %v764 = vld [vmem:[#allocation8 + $0x30] sm:$0xff]
    %v765 = vld [vmem:[#allocation8 + $0x38] sm:$0xff]
    %v766 = vld [vmem:[#allocation8 + $0x40] sm:$0xff]
    %v767 = vld [vmem:[#allocation8 + $0x48] sm:$0xff]
    %v768 = vld [vmem:[#allocation8 + $0x50] sm:$0xff]
    %v769 = vld [vmem:[#allocation8 + $0x58] sm:$0xff]
    %v770 = vld [vmem:[#allocation8 + $0x60] sm:$0xff]
    %v771 = vld [vmem:[#allocation8 + $0x68] sm:$0xff]
    %v772 = vld [vmem:[#allocation8 + $0x70] sm:$0xff]
    %v773 = vld [vmem:[#allocation8 + $0x78] sm:$0xff]
    %v774 = vld [vmem:[#allocation8 + $0x80] sm:$0xff]
    %v775 = vld [vmem:[#allocation8 + $0x88] sm:$0xff]
    %v776 = vld [vmem:[#allocation8 + $0x90] sm:$0xff]
    %v777 = vld [vmem:[#allocation8 + $0x98] sm:$0xff]
    %v778 = vld [vmem:[#allocation8 + $0xa0] sm:$0xff]
    %v779 = vld [vmem:[#allocation8 + $0xa8] sm:$0xff]
    %v780 = vld [vmem:[#allocation8 + $0xb0] sm:$0xff]
    %v781 = vld [vmem:[#allocation8 + $0xb8] sm:$0xff]
    %v782 = vld [vmem:[#allocation8 + $0xc0] sm:$0xff]
    %v783 = vld [vmem:[#allocation8 + $0xc8] sm:$0xff]
    %v784 = vld [vmem:[#allocation8 + $0xd0] sm:$0xff]
    %v785 = vld [vmem:[#allocation8 + $0xd8] sm:$0xff]
    %v786 = vld [vmem:[#allocation8 + $0xe0] sm:$0xff]
    %v787 = vld [vmem:[#allocation8 + $0xe8] sm:$0xff]
    %v788 = vld [vmem:[#allocation8 + $0xf0] sm:$0xff]
    %v789 = vld [vmem:[#allocation8 + $0xf8] sm:$0xff]
    %v790 = vld [vmem:[#allocation9] sm:$0xf]
    %v791 = vld [vmem:[#allocation9 + $0x4] sm:$0xf]
    %v792 = vld [vmem:[#allocation9 + $0x8] sm:$0xf]
    %v793 = vld [vmem:[#allocation9 + $0xc] sm:$0xf]
    %v794 = vld [vmem:[#allocation9 + $0x10] sm:$0xf]
    %v795 = vld [vmem:[#allocation9 + $0x14] sm:$0xf]
    %v796 = vld [vmem:[#allocation9 + $0x18] sm:$0xf]
    %v797 = vld [vmem:[#allocation9 + $0x1c] sm:$0xf]
    %v798 = vld [vmem:[#allocation9 + $0x20] sm:$0xf]
    %v799 = vld [vmem:[#allocation9 + $0x24] sm:$0xf]
    %v800 = vld [vmem:[#allocation9 + $0x28] sm:$0xf]
    %v801 = vld [vmem:[#allocation9 + $0x2c] sm:$0xf]
    %v802 = vld [vmem:[#allocation9 + $0x30] sm:$0xf]
    %v803 = vld [vmem:[#allocation9 + $0x34] sm:$0xf]
    %v804 = vld [vmem:[#allocation9 + $0x38] sm:$0xf]
    %v805 = vld [vmem:[#allocation9 + $0x3c] sm:$0xf]
    %v806 = vld [vmem:[#allocation9 + $0x40] sm:$0xf]
    %v807 = vld [vmem:[#allocation9 + $0x44] sm:$0xf]
    %v808 = vld [vmem:[#allocation9 + $0x48] sm:$0xf]
    %v809 = vld [vmem:[#allocation9 + $0x4c] sm:$0xf]
    %v810 = vld [vmem:[#allocation9 + $0x50] sm:$0xf]
    %v811 = vld [vmem:[#allocation9 + $0x54] sm:$0xf]
    %v812 = vld [vmem:[#allocation9 + $0x58] sm:$0xf]
    %v813 = vld [vmem:[#allocation9 + $0x5c] sm:$0xf]
    %v814 = vld [vmem:[#allocation9 + $0x60] sm:$0xf]
    %v815 = vld [vmem:[#allocation9 + $0x64] sm:$0xf]
    %v816 = vld [vmem:[#allocation9 + $0x68] sm:$0xf]
    %v817 = vld [vmem:[#allocation9 + $0x6c] sm:$0xf]
    %v818 = vld [vmem:[#allocation9 + $0x70] sm:$0xf]
    %v819 = vld [vmem:[#allocation9 + $0x74] sm:$0xf]
    %v820 = vld [vmem:[#allocation9 + $0x78] sm:$0xf]
    %v821 = vld [vmem:[#allocation9 + $0x7c] sm:$0xf]
    %v822 = vld [vmem:[#allocation9 + $0x80] sm:$0xf]
    %v823 = vld [vmem:[#allocation9 + $0x84] sm:$0xf]
    %v824 = vld [vmem:[#allocation9 + $0x88] sm:$0xf]
    %v825 = vld [vmem:[#allocation9 + $0x8c] sm:$0xf]
    %v826 = vld [vmem:[#allocation9 + $0x90] sm:$0xf]
    %v827 = vld [vmem:[#allocation9 + $0x94] sm:$0xf]
    %v828 = vld [vmem:[#allocation9 + $0x98] sm:$0xf]
    %v829 = vld [vmem:[#allocation9 + $0x9c] sm:$0xf]
    %v830 = vld [vmem:[#allocation9 + $0xa0] sm:$0xf]
    %v831 = vld [vmem:[#allocation9 + $0xa4] sm:$0xf]
    %v832 = vld [vmem:[#allocation9 + $0xa8] sm:$0xf]
    %v833 = vld [vmem:[#allocation9 + $0xac] sm:$0xf]
    %v834 = vld [vmem:[#allocation9 + $0xb0] sm:$0xf]
    %v835 = vld [vmem:[#allocation9 + $0xb4] sm:$0xf]
    %v836 = vld [vmem:[#allocation9 + $0xb8] sm:$0xf]
    %v837 = vld [vmem:[#allocation9 + $0xbc] sm:$0xf]
    %v838 = vld [vmem:[#allocation9 + $0xc0] sm:$0xf]
    %v839 = vld [vmem:[#allocation9 + $0xc4] sm:$0xf]
    %v840 = vld [vmem:[#allocation9 + $0xc8] sm:$0xf]
    %v841 = vld [vmem:[#allocation9 + $0xcc] sm:$0xf]
    %v842 = vld [vmem:[#allocation9 + $0xd0] sm:$0xf]
    %v843 = vld [vmem:[#allocation9 + $0xd4] sm:$0xf]
    %v844 = vld [vmem:[#allocation9 + $0xd8] sm:$0xf]
    %v845 = vld [vmem:[#allocation9 + $0xdc] sm:$0xf]
    %v846 = vld [vmem:[#allocation9 + $0xe0] sm:$0xf]
    %v847 = vld [vmem:[#allocation9 + $0xe4] sm:$0xf]
    %v848 = vld [vmem:[#allocation9 + $0xe8] sm:$0xf]
    %v849 = vld [vmem:[#allocation9 + $0xec] sm:$0xf]
    %v850 = vld [vmem:[#allocation9 + $0xf0] sm:$0xf]
    %v851 = vld [vmem:[#allocation9 + $0xf4] sm:$0xf]
    %v852 = vld [vmem:[#allocation9 + $0xf8] sm:$0xf]
    %v853 = vld [vmem:[#allocation9 + $0xfc] sm:$0xf]
    %v854 = vld [vmem:[#allocation11] sm:$0xff]
    %v855 = vld [vmem:[#allocation11 + $0x8] sm:$0xff]
    %856 = vadd.xlane.f32.xlu0 %v854
    %v857 = vpop.xlane.xlu0 %856
    %858 = vadd.xlane.f32.xlu0 %v855
    %v859 = vpop.xlane.xlu0 %858
    %v860 = vmul.f32 %v857, %v120
    %v861 = vmul.f32 %v859, %v120
    %v862 = vsub.f32 %v854, %v860
    %v863 = vsub.f32 %v855, %v861
    %v864 = vmul.f32 %v862, %v862
    %v865 = vmul.f32 %v863, %v863
    %866 = vadd.xlane.f32.xlu0 %v864
    %v867 = vpop.xlane.xlu0 %866
    %868 = vadd.xlane.f32.xlu0 %v865
    %v869 = vpop.xlane.xlu0 %868
    %v870 = vmul.f32 %v867, %v120
    %v871 = vmul.f32 %v869, %v120
    %v872 = vadd.f32 %v870, 1e-05
    %v873 = vadd.f32 %v871, 1e-05
    %v874 = vrsqrt.pop %v872
    %v875 = vrsqrt.pop %v873
    %v876 = vmul.f32 %v862, %v874
    %v877 = vmul.f32 %v863, %v875
    %v878 = vlaneseq
    %v879 = vshrl.u32 %v878, 7
    %v880 = vsub.s32 0, %v879
    %v881 = vrot.slane %v754, %v880
    %v882 = vmul.f32 %v876, %v881
    %v883 = vmul.f32 %v877, %v881
    %v884 = vlaneseq
    %v885 = vshrl.u32 %v884, 7
    %v886 = vsub.s32 0, %v885
    %v887 = vrot.slane %v755, %v886
    %v888 = vadd.f32 %v882, %v887
    %v889 = vadd.f32 %v883, %v887
    %v890 = vpack.c.bf16 %v889, %v888
    %v892 = vlaneseq
    %v893 = vshrl.u32 %v892, 7
    %v894 = vsub.s32 0, %v893
    %v895 = vrot.slane %v757, %v894
    %v896 = vlaneseq
    %v897 = vshrl.u32 %v896, 7
    %v898 = vsub.s32 1, %v897
    %v899 = vrot.slane %v757, %v898
    %v900 = vlaneseq
    %v901 = vshrl.u32 %v900, 7
    %v902 = vsub.s32 2, %v901
    %v903 = vrot.slane %v757, %v902
    %v904 = vlaneseq
    %v905 = vshrl.u32 %v904, 7
    %v906 = vsub.s32 3, %v905
    %v907 = vrot.slane %v757, %v906
    %v944 = vunpack.c.l.b16 %v758
    %v945 = vunpack.c.h.b16 %v758
    %v946 = vunpack.c.l.b16 %v759
    %v947 = vunpack.c.h.b16 %v759
    %v948 = vunpack.c.l.b16 %v760
    %v949 = vunpack.c.h.b16 %v760
    %v950 = vunpack.c.l.b16 %v761
    %v951 = vunpack.c.h.b16 %v761
    %v952 = vunpack.c.l.b16 %v762
    %v953 = vunpack.c.h.b16 %v762
    %v954 = vunpack.c.l.b16 %v763
    %v955 = vunpack.c.h.b16 %v763
    %v956 = vunpack.c.l.b16 %v764
    %v957 = vunpack.c.h.b16 %v764
    %v958 = vunpack.c.l.b16 %v765
    %v959 = vunpack.c.h.b16 %v765
    %v960 = vunpack.c.l.b16 %v766
    %v961 = vunpack.c.h.b16 %v766
    %v962 = vunpack.c.l.b16 %v767
    %v963 = vunpack.c.h.b16 %v767
    %v964 = vunpack.c.l.b16 %v768
    %v965 = vunpack.c.h.b16 %v768
    %v966 = vunpack.c.l.b16 %v769
    %v967 = vunpack.c.h.b16 %v769
    %v968 = vunpack.c.l.b16 %v770
    %v969 = vunpack.c.h.b16 %v770
    %v970 = vunpack.c.l.b16 %v771
    %v971 = vunpack.c.h.b16 %v771
    %v972 = vunpack.c.l.b16 %v772
    %v973 = vunpack.c.h.b16 %v772
    %v974 = vunpack.c.l.b16 %v773
    %v975 = vunpack.c.h.b16 %v773
    %v976 = vunpack.c.l.b16 %v774
    %v977 = vunpack.c.h.b16 %v774
    %v978 = vunpack.c.l.b16 %v775
    %v979 = vunpack.c.h.b16 %v775
    %v980 = vunpack.c.l.b16 %v776
    %v981 = vunpack.c.h.b16 %v776
    %v982 = vunpack.c.l.b16 %v777
    %v983 = vunpack.c.h.b16 %v777
    %v984 = vunpack.c.l.b16 %v778
    %v985 = vunpack.c.h.b16 %v778
    %v986 = vunpack.c.l.b16 %v779
    %v987 = vunpack.c.h.b16 %v779
    %v988 = vunpack.c.l.b16 %v780
    %v989 = vunpack.c.h.b16 %v780
    %v990 = vunpack.c.l.b16 %v781
    %v991 = vunpack.c.h.b16 %v781
    %v992 = vunpack.c.l.b16 %v782
    %v993 = vunpack.c.h.b16 %v782
    %v994 = vunpack.c.l.b16 %v783
    %v995 = vunpack.c.h.b16 %v783
    %v996 = vunpack.c.l.b16 %v784
    %v997 = vunpack.c.h.b16 %v784
    %v998 = vunpack.c.l.b16 %v785
    %v999 = vunpack.c.h.b16 %v785
    %v1000 = vunpack.c.l.b16 %v786
    %v1001 = vunpack.c.h.b16 %v786
    %v1002 = vunpack.c.l.b16 %v787
    %v1003 = vunpack.c.h.b16 %v787
    %v1004 = vunpack.c.l.b16 %v788
    %v1005 = vunpack.c.h.b16 %v788
    %v1006 = vunpack.c.l.b16 %v789
    %v1007 = vunpack.c.h.b16 %v789
    %v1008 = vpack.c.b16 %v948, %v944
    %v1009 = vpack.c.b16 %v949, %v945
    %v1010 = vpack.c.b16 %v950, %v946
    %v1011 = vpack.c.b16 %v951, %v947
    %v1012 = vpack.c.b16 %v956, %v952
    %v1013 = vpack.c.b16 %v957, %v953
    %v1014 = vpack.c.b16 %v958, %v954
    %v1015 = vpack.c.b16 %v959, %v955
    %v1016 = vpack.c.b16 %v964, %v960
    %v1017 = vpack.c.b16 %v965, %v961
    %v1018 = vpack.c.b16 %v966, %v962
    %v1019 = vpack.c.b16 %v967, %v963
    %v1020 = vpack.c.b16 %v972, %v968
    %v1021 = vpack.c.b16 %v973, %v969
    %v1022 = vpack.c.b16 %v974, %v970
    %v1023 = vpack.c.b16 %v975, %v971
    %v1024 = vpack.c.b16 %v980, %v976
    %v1025 = vpack.c.b16 %v981, %v977
    %v1026 = vpack.c.b16 %v982, %v978
    %v1027 = vpack.c.b16 %v983, %v979
    %v1028 = vpack.c.b16 %v988, %v984
    %v1029 = vpack.c.b16 %v989, %v985
    %v1030 = vpack.c.b16 %v990, %v986
    %v1031 = vpack.c.b16 %v991, %v987
    %v1032 = vpack.c.b16 %v996, %v992
    %v1033 = vpack.c.b16 %v997, %v993
    %v1034 = vpack.c.b16 %v998, %v994
    %v1035 = vpack.c.b16 %v999, %v995
    %v1036 = vpack.c.b16 %v1004, %v1000
    %v1037 = vpack.c.b16 %v1005, %v1001
    %v1038 = vpack.c.b16 %v1006, %v1002
    %v1039 = vpack.c.b16 %v1007, %v1003
    %1072 = vmatprep.subr.bf16.mxu0 %v1037
    %1073 = vmatpush1.bf16.msra.mxu0 %v1036
    %1074 = vmatprep.subr.bf16.mxu0 %v1033
    %1075 = vmatpush1.bf16.msra.mxu0 %v1032
    %1076 = vmatprep.subr.bf16.mxu0 %v1029
    %1077 = vmatpush1.bf16.msra.mxu0 %v1028
    %1078 = vmatprep.subr.bf16.mxu0 %v1025
    %1079 = vmatpush1.bf16.msra.mxu0 %v1024
    %1080 = vmatprep.subr.bf16.mxu0 %v1021
    %1081 = vmatpush1.bf16.msra.mxu0 %v1020
    %1082 = vmatprep.subr.bf16.mxu0 %v1017
    %1083 = vmatpush1.bf16.msra.mxu0 %v1016
    %1084 = vmatprep.subr.bf16.mxu0 %v1013
    %1085 = vmatpush1.bf16.msra.mxu0 %v1012
    %1086 = vmatprep.subr.bf16.mxu0 %v1009
    %1087 = vmatpush1.bf16.msra.mxu0 %v1008
    %1088 = vmatprep.subr.bf16.mxu0 0
    %1089 = vmatpush2.bf16.msra.mxu0 0
    %1090 = vmatprep.subr.bf16.mxu0 0
    %1091 = vmatpush2.bf16.msra.mxu0 0
    %1092 = vmatprep.subr.bf16.mxu0 0
    %1093 = vmatpush2.bf16.msra.mxu0 0
    %1094 = vmatprep.subr.bf16.mxu0 0
    %1095 = vmatpush2.bf16.msra.mxu0 0
    %1096 = vmatprep.subr.bf16.mxu0 0
    %1097 = vmatpush2.bf16.msra.mxu0 0
    %1098 = vmatprep.subr.bf16.mxu0 0
    %1099 = vmatpush2.bf16.msra.mxu0 0
    %1100 = vmatprep.subr.bf16.mxu0 0
    %1101 = vmatpush2.bf16.msra.mxu0 0
    %1102 = vmatprep.subr.bf16.mxu0 0
    %1103 = vmatpush2.bf16.msra.mxu0 0
    %1104 = vmatprep.mubr.bf16.mxu0 0
    %1105 = vmatmul.mubr.bf16.gmra.mxu0 %v890
    %v1106 = vpop.f32.mrf.mxu0
    %v1107 = vadd.f32 %v895, %v1106
    %v1108 = vpop.f32.mrf.mxu0
    %v1109 = vadd.f32 %v899, %v1108
    %v1110 = vpop.f32.mrf.mxu0
    %v1111 = vadd.f32 %v895, %v1110
    %v1112 = vpop.f32.mrf.mxu0
    %v1113 = vadd.f32 %v899, %v1112
    %1114 = vdwg.mxu0
    %1115 = vmatprep.subr.bf16.mxu0 %v1039
    %1116 = vmatpush1.bf16.msra.mxu0 %v1038
    %1117 = vmatprep.subr.bf16.mxu0 %v1035
    %1118 = vmatpush1.bf16.msra.mxu0 %v1034
    %1119 = vmatprep.subr.bf16.mxu0 %v1031
    %1120 = vmatpush1.bf16.msra.mxu0 %v1030
    %1121 = vmatprep.subr.bf16.mxu0 %v1027
    %1122 = vmatpush1.bf16.msra.mxu0 %v1026
    %1123 = vmatprep.subr.bf16.mxu0 %v1023
    %1124 = vmatpush1.bf16.msra.mxu0 %v1022
    %1125 = vmatprep.subr.bf16.mxu0 %v1019
    %1126 = vmatpush1.bf16.msra.mxu0 %v1018
    %1127 = vmatprep.subr.bf16.mxu0 %v1015
    %1128 = vmatpush1.bf16.msra.mxu0 %v1014
    %1129 = vmatprep.subr.bf16.mxu0 %v1011
    %1130 = vmatpush1.bf16.msra.mxu0 %v1010
    %1131 = vmatprep.subr.bf16.mxu0 0
    %1132 = vmatpush2.bf16.msra.mxu0 0
    %1133 = vmatprep.subr.bf16.mxu0 0
    %1134 = vmatpush2.bf16.msra.mxu0 0
    %1135 = vmatprep.subr.bf16.mxu0 0
    %1136 = vmatpush2.bf16.msra.mxu0 0
    %1137 = vmatprep.subr.bf16.mxu0 0
    %1138 = vmatpush2.bf16.msra.mxu0 0
    %1139 = vmatprep.subr.bf16.mxu0 0
    %1140 = vmatpush2.bf16.msra.mxu0 0
    %1141 = vmatprep.subr.bf16.mxu0 0
    %1142 = vmatpush2.bf16.msra.mxu0 0
    %1143 = vmatprep.subr.bf16.mxu0 0
    %1144 = vmatpush2.bf16.msra.mxu0 0
    %1145 = vmatprep.subr.bf16.mxu0 0
    %1146 = vmatpush2.bf16.msra.mxu0 0
    %1147 = vmatprep.mubr.bf16.mxu0 0
    %1148 = vmatmul.mubr.bf16.gmra.mxu0 %v890
    %v1149 = vpop.f32.mrf.mxu0
    %v1150 = vadd.f32 %v903, %v1149
    %v1151 = vpop.f32.mrf.mxu0
    %v1152 = vadd.f32 %v907, %v1151
    %v1153 = vpop.f32.mrf.mxu0
    %v1154 = vadd.f32 %v903, %v1153
    %v1155 = vpop.f32.mrf.mxu0
    %v1156 = vadd.f32 %v907, %v1155
    %1157 = vdwg.mxu0
    %v1158 = vmul.f32 %v1107, 0.5
    %v1159 = vmul.f32 %v1109, 0.5
    %v1160 = vmul.f32 %v1150, 0.5
    %v1161 = vmul.f32 %v1152, 0.5
    %v1162 = vmul.f32 %v1111, 0.5
    %v1163 = vmul.f32 %v1113, 0.5
    %v1164 = vmul.f32 %v1154, 0.5
    %v1165 = vmul.f32 %v1156, 0.5
    %v1166 = vmul.f32 %v1107, 0.70710677
    %v1167 = vmul.f32 %v1109, 0.70710677
    %v1168 = vmul.f32 %v1150, 0.70710677
    %v1169 = vmul.f32 %v1152, 0.70710677
    %v1170 = vmul.f32 %v1111, 0.70710677
    %v1171 = vmul.f32 %v1113, 0.70710677
    %v1172 = vmul.f32 %v1154, 0.70710677
    %v1173 = vmul.f32 %v1156, 0.70710677
    %v1174 = verf.f32.pop %v1166
    %v1175 = verf.f32.pop %v1167
    %v1176 = verf.f32.pop %v1168
    %v1177 = verf.f32.pop %v1169
    %v1178 = verf.f32.pop %v1170
    %v1179 = verf.f32.pop %v1171
    %v1180 = verf.f32.pop %v1172
    %v1181 = verf.f32.pop %v1173
    %v1182 = vadd.f32 %v1174, 1.0
    %v1183 = vadd.f32 %v1175, 1.0
    %v1184 = vadd.f32 %v1176, 1.0
    %v1185 = vadd.f32 %v1177, 1.0
    %v1186 = vadd.f32 %v1178, 1.0
    %v1187 = vadd.f32 %v1179, 1.0
    %v1188 = vadd.f32 %v1180, 1.0
    %v1189 = vadd.f32 %v1181, 1.0
    %v1190 = vmul.f32 %v1158, %v1182
    %v1191 = vmul.f32 %v1159, %v1183
    %v1192 = vmul.f32 %v1160, %v1184
    %v1193 = vmul.f32 %v1161, %v1185
    %v1194 = vmul.f32 %v1162, %v1186
    %v1195 = vmul.f32 %v1163, %v1187
    %v1196 = vmul.f32 %v1164, %v1188
    %v1197 = vmul.f32 %v1165, %v1189
    %v1198 = vpack.c.bf16 %v1194, %v1190
    %v1199 = vpack.c.bf16 %v1195, %v1191
    %v1200 = vpack.c.bf16 %v1196, %v1192
    %v1201 = vpack.c.bf16 %v1197, %v1193
    %v1202 = vlaneseq
    %v1203 = vshrl.u32 %v1202, 7
    %v1204 = vsub.s32 0, %v1203
    %v1205 = vrot.slane %v756, %v1204
    %v1270 = vunpack.c.l.b16 %v790
    %v1271 = vunpack.c.l.b16 %v791
    %v1272 = vunpack.c.l.b16 %v792
    %v1273 = vunpack.c.l.b16 %v793
    %v1274 = vunpack.c.l.b16 %v794
    %v1275 = vunpack.c.l.b16 %v795
    %v1276 = vunpack.c.l.b16 %v796
    %v1277 = vunpack.c.l.b16 %v797
    %v1278 = vunpack.c.l.b16 %v798
    %v1279 = vunpack.c.l.b16 %v799
    %v1280 = vunpack.c.l.b16 %v800
    %v1281 = vunpack.c.l.b16 %v801
    %v1282 = vunpack.c.l.b16 %v802
    %v1283 = vunpack.c.l.b16 %v803
    %v1284 = vunpack.c.l.b16 %v804
    %v1285 = vunpack.c.l.b16 %v805
    %v1286 = vunpack.c.l.b16 %v806
    %v1287 = vunpack.c.l.b16 %v807
    %v1288 = vunpack.c.l.b16 %v808
    %v1289 = vunpack.c.l.b16 %v809
    %v1290 = vunpack.c.l.b16 %v810
    %v1291 = vunpack.c.l.b16 %v811
    %v1292 = vunpack.c.l.b16 %v812
    %v1293 = vunpack.c.l.b16 %v813
    %v1294 = vunpack.c.l.b16 %v814
    %v1295 = vunpack.c.l.b16 %v815
    %v1296 = vunpack.c.l.b16 %v816
    %v1297 = vunpack.c.l.b16 %v817
    %v1298 = vunpack.c.l.b16 %v818
    %v1299 = vunpack.c.l.b16 %v819
    %v1300 = vunpack.c.l.b16 %v820
    %v1301 = vunpack.c.l.b16 %v821
    %v1302 = vunpack.c.l.b16 %v822
    %v1303 = vunpack.c.l.b16 %v823
    %v1304 = vunpack.c.l.b16 %v824
    %v1305 = vunpack.c.l.b16 %v825
    %v1306 = vunpack.c.l.b16 %v826
    %v1307 = vunpack.c.l.b16 %v827
    %v1308 = vunpack.c.l.b16 %v828
    %v1309 = vunpack.c.l.b16 %v829
    %v1310 = vunpack.c.l.b16 %v830
    %v1311 = vunpack.c.l.b16 %v831
    %v1312 = vunpack.c.l.b16 %v832
    %v1313 = vunpack.c.l.b16 %v833
    %v1314 = vunpack.c.l.b16 %v834
    %v1315 = vunpack.c.l.b16 %v835
    %v1316 = vunpack.c.l.b16 %v836
    %v1317 = vunpack.c.l.b16 %v837
    %v1318 = vunpack.c.l.b16 %v838
    %v1319 = vunpack.c.l.b16 %v839
    %v1320 = vunpack.c.l.b16 %v840
    %v1321 = vunpack.c.l.b16 %v841
    %v1322 = vunpack.c.l.b16 %v842
    %v1323 = vunpack.c.l.b16 %v843
    %v1324 = vunpack.c.l.b16 %v844
    %v1325 = vunpack.c.l.b16 %v845
    %v1326 = vunpack.c.l.b16 %v846
    %v1327 = vunpack.c.l.b16 %v847
    %v1328 = vunpack.c.l.b16 %v848
    %v1329 = vunpack.c.l.b16 %v849
    %v1330 = vunpack.c.l.b16 %v850
    %v1331 = vunpack.c.l.b16 %v851
    %v1332 = vunpack.c.l.b16 %v852
    %v1333 = vunpack.c.l.b16 %v853
    %v1334 = vpack.c.b16 %v1271, %v1270
    %v1335 = vpack.c.b16 %v1273, %v1272
    %v1336 = vpack.c.b16 %v1275, %v1274
    %v1337 = vpack.c.b16 %v1277, %v1276
    %v1338 = vpack.c.b16 %v1279, %v1278
    %v1339 = vpack.c.b16 %v1281, %v1280
    %v1340 = vpack.c.b16 %v1283, %v1282
    %v1341 = vpack.c.b16 %v1285, %v1284
    %v1342 = vpack.c.b16 %v1287, %v1286
    %v1343 = vpack.c.b16 %v1289, %v1288
    %v1344 = vpack.c.b16 %v1291, %v1290
    %v1345 = vpack.c.b16 %v1293, %v1292
    %v1346 = vpack.c.b16 %v1295, %v1294
    %v1347 = vpack.c.b16 %v1297, %v1296
    %v1348 = vpack.c.b16 %v1299, %v1298
    %v1349 = vpack.c.b16 %v1301, %v1300
    %v1350 = vpack.c.b16 %v1303, %v1302
    %v1351 = vpack.c.b16 %v1305, %v1304
    %v1352 = vpack.c.b16 %v1307, %v1306
    %v1353 = vpack.c.b16 %v1309, %v1308
    %v1354 = vpack.c.b16 %v1311, %v1310
    %v1355 = vpack.c.b16 %v1313, %v1312
    %v1356 = vpack.c.b16 %v1315, %v1314
    %v1357 = vpack.c.b16 %v1317, %v1316
    %v1358 = vpack.c.b16 %v1319, %v1318
    %v1359 = vpack.c.b16 %v1321, %v1320
    %v1360 = vpack.c.b16 %v1323, %v1322
    %v1361 = vpack.c.b16 %v1325, %v1324
    %v1362 = vpack.c.b16 %v1327, %v1326
    %v1363 = vpack.c.b16 %v1329, %v1328
    %v1364 = vpack.c.b16 %v1331, %v1330
    %v1365 = vpack.c.b16 %v1333, %v1332
    %1398 = vmatprep.subr.bf16.mxu0 0
    %1399 = vmatpush1.bf16.msra.mxu0 %v1341
    %1400 = vmatprep.subr.bf16.mxu0 0
    %1401 = vmatpush1.bf16.msra.mxu0 %v1340
    %1402 = vmatprep.subr.bf16.mxu0 0
    %1403 = vmatpush1.bf16.msra.mxu0 %v1339
    %1404 = vmatprep.subr.bf16.mxu0 0
    %1405 = vmatpush1.bf16.msra.mxu0 %v1338
    %1406 = vmatprep.subr.bf16.mxu0 0
    %1407 = vmatpush1.bf16.msra.mxu0 %v1337
    %1408 = vmatprep.subr.bf16.mxu0 0
    %1409 = vmatpush1.bf16.msra.mxu0 %v1336
    %1410 = vmatprep.subr.bf16.mxu0 0
    %1411 = vmatpush1.bf16.msra.mxu0 %v1335
    %1412 = vmatprep.subr.bf16.mxu0 0
    %1413 = vmatpush1.bf16.msra.mxu0 %v1334
    %1414 = vmatprep.subr.bf16.mxu0 0
    %1415 = vmatpush2.bf16.msra.mxu0 %v1349
    %1416 = vmatprep.subr.bf16.mxu0 0
    %1417 = vmatpush2.bf16.msra.mxu0 %v1348
    %1418 = vmatprep.subr.bf16.mxu0 0
    %1419 = vmatpush2.bf16.msra.mxu0 %v1347
    %1420 = vmatprep.subr.bf16.mxu0 0
    %1421 = vmatpush2.bf16.msra.mxu0 %v1346
    %1422 = vmatprep.subr.bf16.mxu0 0
    %1423 = vmatpush2.bf16.msra.mxu0 %v1345
    %1424 = vmatprep.subr.bf16.mxu0 0
    %1425 = vmatpush2.bf16.msra.mxu0 %v1344
    %1426 = vmatprep.subr.bf16.mxu0 0
    %1427 = vmatpush2.bf16.msra.mxu0 %v1343
    %1428 = vmatprep.subr.bf16.mxu0 0
    %1429 = vmatpush2.bf16.msra.mxu0 %v1342
    %1430 = vmatprep.mubr.bf16.mxu0 %v1199
    %1431 = vmatmul.mubr.bf16.gmra.mxu0 %v1198
    %v1432 = vpop.f32.mrf.mxu0
    %v1433 = vadd.f32 %v1205, %v1432
    %v1434 = vpop.f32.mrf.mxu0
    %v1435 = vpop.f32.mrf.mxu0
    %v1436 = vadd.f32 %v1205, %v1435
    %v1437 = vpop.f32.mrf.mxu0
    %1438 = vdwg.mxu0
    %1439 = vmatprep.subr.bf16.mxu0 0
    %1440 = vmatpush1.bf16.msra.mxu0 %v1357
    %1441 = vmatprep.subr.bf16.mxu0 0
    %1442 = vmatpush1.bf16.msra.mxu0 %v1356
    %1443 = vmatprep.subr.bf16.mxu0 0
    %1444 = vmatpush1.bf16.msra.mxu0 %v1355
    %1445 = vmatprep.subr.bf16.mxu0 0
    %1446 = vmatpush1.bf16.msra.mxu0 %v1354
    %1447 = vmatprep.subr.bf16.mxu0 0
    %1448 = vmatpush1.bf16.msra.mxu0 %v1353
    %1449 = vmatprep.subr.bf16.mxu0 0
    %1450 = vmatpush1.bf16.msra.mxu0 %v1352
    %1451 = vmatprep.subr.bf16.mxu0 0
    %1452 = vmatpush1.bf16.msra.mxu0 %v1351
    %1453 = vmatprep.subr.bf16.mxu0 0
    %1454 = vmatpush1.bf16.msra.mxu0 %v1350
    %1455 = vmatprep.subr.bf16.mxu0 0
    %1456 = vmatpush2.bf16.msra.mxu0 %v1365
    %1457 = vmatprep.subr.bf16.mxu0 0
    %1458 = vmatpush2.bf16.msra.mxu0 %v1364
    %1459 = vmatprep.subr.bf16.mxu0 0
    %1460 = vmatpush2.bf16.msra.mxu0 %v1363
    %1461 = vmatprep.subr.bf16.mxu0 0
    %1462 = vmatpush2.bf16.msra.mxu0 %v1362
    %1463 = vmatprep.subr.bf16.mxu0 0
    %1464 = vmatpush2.bf16.msra.mxu0 %v1361
    %1465 = vmatprep.subr.bf16.mxu0 0
    %1466 = vmatpush2.bf16.msra.mxu0 %v1360
    %1467 = vmatprep.subr.bf16.mxu0 0
    %1468 = vmatpush2.bf16.msra.mxu0 %v1359
    %1469 = vmatprep.subr.bf16.mxu0 0
    %1470 = vmatpush2.bf16.msra.mxu0 %v1358
    %1471 = vmatprep.mubr.bf16.mxu0 %v1201
    %1472 = vmatmul.mubr.bf16.gmra.mxu0 %v1200
    %v1473 = vpop.f32.mrf.mxu0
    %v1474 = vadd.f32 %v1433, %v1473
    %v1475 = vpop.f32.mrf.mxu0
    %v1476 = vpop.f32.mrf.mxu0
    %v1477 = vadd.f32 %v1436, %v1476
    %v1478 = vpop.f32.mrf.mxu0
    %1479 = vdwg.mxu0
    %v1480 = vadd.f32 %v1474, %v854
    %v1481 = vadd.f32 %v1477, %v855
    %1482 = vst [vmem:[#allocation11] sm:$0xff] %v1480
    %1483 = vst [vmem:[#allocation11 + $0x8] sm:$0xff] %v1481
    %v1484 = vld [vmem:[%s413] sm:$0xff]
    %v1485 = vld [vmem:[%s413 + $0x8] sm:$0xff]
    %1486 = vadd.xlane.f32.xlu0 %v1484
    %v1487 = vpop.xlane.xlu0 %1486
    %1488 = vadd.xlane.f32.xlu0 %v1485
    %v1489 = vpop.xlane.xlu0 %1488
    %v1490 = vmul.f32 %v1487, %v120
    %v1491 = vmul.f32 %v1489, %v120
    %v1492 = vsub.f32 %v1484, %v1490
    %v1493 = vsub.f32 %v1485, %v1491
    %v1494 = vmul.f32 %v1492, %v1492
    %v1495 = vmul.f32 %v1493, %v1493
    %1496 = vadd.xlane.f32.xlu0 %v1494
    %v1497 = vpop.xlane.xlu0 %1496
    %1498 = vadd.xlane.f32.xlu0 %v1495
    %v1499 = vpop.xlane.xlu0 %1498
    %v1500 = vmul.f32 %v1497, %v120
    %v1501 = vmul.f32 %v1499, %v120
    %v1502 = vadd.f32 %v1500, 1e-05
    %v1503 = vadd.f32 %v1501, 1e-05
    %v1504 = vrsqrt.pop %v1502
    %v1505 = vrsqrt.pop %v1503
    %v1506 = vmul.f32 %v1492, %v1504
    %v1507 = vmul.f32 %v1493, %v1505
    %v1508 = vmul.f32 %v1506, %v881
    %v1509 = vmul.f32 %v1507, %v881
    %v1510 = vadd.f32 %v1508, %v887
    %v1511 = vadd.f32 %v1509, %v887
    %v1512 = vpack.c.bf16 %v1511, %v1510
    %1513 = vmatprep.subr.bf16.mxu0 %v1037
    %1514 = vmatpush1.bf16.msra.mxu0 %v1036
    %1515 = vmatprep.subr.bf16.mxu0 %v1033
    %1516 = vmatpush1.bf16.msra.mxu0 %v1032
    %1517 = vmatprep.subr.bf16.mxu0 %v1029
    %1518 = vmatpush1.bf16.msra.mxu0 %v1028
    %1519 = vmatprep.subr.bf16.mxu0 %v1025
    %1520 = vmatpush1.bf16.msra.mxu0 %v1024
    %1521 = vmatprep.subr.bf16.mxu0 %v1021
    %1522 = vmatpush1.bf16.msra.mxu0 %v1020
    %1523 = vmatprep.subr.bf16.mxu0 %v1017
    %1524 = vmatpush1.bf16.msra.mxu0 %v1016
    %1525 = vmatprep.subr.bf16.mxu0 %v1013
    %1526 = vmatpush1.bf16.msra.mxu0 %v1012
    %1527 = vmatprep.subr.bf16.mxu0 %v1009
    %1528 = vmatpush1.bf16.msra.mxu0 %v1008
    %1529 = vmatprep.subr.bf16.mxu0 0
    %1530 = vmatpush2.bf16.msra.mxu0 0
    %1531 = vmatprep.subr.bf16.mxu0 0
    %1532 = vmatpush2.bf16.msra.mxu0 0
    %1533 = vmatprep.subr.bf16.mxu0 0
    %1534 = vmatpush2.bf16.msra.mxu0 0
    %1535 = vmatprep.subr.bf16.mxu0 0
    %1536 = vmatpush2.bf16.msra.mxu0 0
    %1537 = vmatprep.subr.bf16.mxu0 0
    %1538 = vmatpush2.bf16.msra.mxu0 0
    %1539 = vmatprep.subr.bf16.mxu0 0
    %1540 = vmatpush2.bf16.msra.mxu0 0
    %1541 = vmatprep.subr.bf16.mxu0 0
    %1542 = vmatpush2.bf16.msra.mxu0 0
    %1543 = vmatprep.subr.bf16.mxu0 0
    %1544 = vmatpush2.bf16.msra.mxu0 0
    %1545 = vmatprep.mubr.bf16.mxu0 0
    %1546 = vmatmul.mubr.bf16.gmra.mxu0 %v1512
    %v1547 = vpop.f32.mrf.mxu0
    %v1548 = vadd.f32 %v895, %v1547
    %v1549 = vpop.f32.mrf.mxu0
    %v1550 = vadd.f32 %v899, %v1549
    %v1551 = vpop.f32.mrf.mxu0
    %v1552 = vadd.f32 %v895, %v1551
    %v1553 = vpop.f32.mrf.mxu0
    %v1554 = vadd.f32 %v899, %v1553
    %1555 = vdwg.mxu0
    %1556 = vmatprep.subr.bf16.mxu0 %v1039
    %1557 = vmatpush1.bf16.msra.mxu0 %v1038
    %1558 = vmatprep.subr.bf16.mxu0 %v1035
    %1559 = vmatpush1.bf16.msra.mxu0 %v1034
    %1560 = vmatprep.subr.bf16.mxu0 %v1031
    %1561 = vmatpush1.bf16.msra.mxu0 %v1030
    %1562 = vmatprep.subr.bf16.mxu0 %v1027
    %1563 = vmatpush1.bf16.msra.mxu0 %v1026
    %1564 = vmatprep.subr.bf16.mxu0 %v1023
    %1565 = vmatpush1.bf16.msra.mxu0 %v1022
    %1566 = vmatprep.subr.bf16.mxu0 %v1019
    %1567 = vmatpush1.bf16.msra.mxu0 %v1018
    %1568 = vmatprep.subr.bf16.mxu0 %v1015
    %1569 = vmatpush1.bf16.msra.mxu0 %v1014
    %1570 = vmatprep.subr.bf16.mxu0 %v1011
    %1571 = vmatpush1.bf16.msra.mxu0 %v1010
    %1572 = vmatprep.subr.bf16.mxu0 0
    %1573 = vmatpush2.bf16.msra.mxu0 0
    %1574 = vmatprep.subr.bf16.mxu0 0
    %1575 = vmatpush2.bf16.msra.mxu0 0
    %1576 = vmatprep.subr.bf16.mxu0 0
    %1577 = vmatpush2.bf16.msra.mxu0 0
    %1578 = vmatprep.subr.bf16.mxu0 0
    %1579 = vmatpush2.bf16.msra.mxu0 0
    %1580 = vmatprep.subr.bf16.mxu0 0
    %1581 = vmatpush2.bf16.msra.mxu0 0
    %1582 = vmatprep.subr.bf16.mxu0 0
    %1583 = vmatpush2.bf16.msra.mxu0 0
    %1584 = vmatprep.subr.bf16.mxu0 0
    %1585 = vmatpush2.bf16.msra.mxu0 0
    %1586 = vmatprep.subr.bf16.mxu0 0
    %1587 = vmatpush2.bf16.msra.mxu0 0
    %1588 = vmatprep.mubr.bf16.mxu0 0
    %1589 = vmatmul.mubr.bf16.gmra.mxu0 %v1512
    %v1590 = vpop.f32.mrf.mxu0
    %v1591 = vadd.f32 %v903, %v1590
    %v1592 = vpop.f32.mrf.mxu0
    %v1593 = vadd.f32 %v907, %v1592
    %v1594 = vpop.f32.mrf.mxu0
    %v1595 = vadd.f32 %v903, %v1594
    %v1596 = vpop.f32.mrf.mxu0
    %v1597 = vadd.f32 %v907, %v1596
    %1598 = vdwg.mxu0
    %v1599 = vmul.f32 %v1548, 0.5
    %v1600 = vmul.f32 %v1550, 0.5
    %v1601 = vmul.f32 %v1591, 0.5
    %v1602 = vmul.f32 %v1593, 0.5
    %v1603 = vmul.f32 %v1552, 0.5
    %v1604 = vmul.f32 %v1554, 0.5
    %v1605 = vmul.f32 %v1595, 0.5
    %v1606 = vmul.f32 %v1597, 0.5
    %v1607 = vmul.f32 %v1548, 0.70710677
    %v1608 = vmul.f32 %v1550, 0.70710677
    %v1609 = vmul.f32 %v1591, 0.70710677
    %v1610 = vmul.f32 %v1593, 0.70710677
    %v1611 = vmul.f32 %v1552, 0.70710677
    %v1612 = vmul.f32 %v1554, 0.70710677
    %v1613 = vmul.f32 %v1595, 0.70710677
    %v1614 = vmul.f32 %v1597, 0.70710677
    %v1615 = verf.f32.pop %v1607
    %v1616 = verf.f32.pop %v1608
    %v1617 = verf.f32.pop %v1609
    %v1618 = verf.f32.pop %v1610
    %v1619 = verf.f32.pop %v1611
    %v1620 = verf.f32.pop %v1612
    %v1621 = verf.f32.pop %v1613
    %v1622 = verf.f32.pop %v1614
    %v1623 = vadd.f32 %v1615, 1.0
    %v1624 = vadd.f32 %v1616, 1.0
    %v1625 = vadd.f32 %v1617, 1.0
    %v1626 = vadd.f32 %v1618, 1.0
    %v1627 = vadd.f32 %v1619, 1.0
    %v1628 = vadd.f32 %v1620, 1.0
    %v1629 = vadd.f32 %v1621, 1.0
    %v1630 = vadd.f32 %v1622, 1.0
    %v1631 = vmul.f32 %v1599, %v1623
    %v1632 = vmul.f32 %v1600, %v1624
    %v1633 = vmul.f32 %v1601, %v1625
    %v1634 = vmul.f32 %v1602, %v1626
    %v1635 = vmul.f32 %v1603, %v1627
    %v1636 = vmul.f32 %v1604, %v1628
    %v1637 = vmul.f32 %v1605, %v1629
    %v1638 = vmul.f32 %v1606, %v1630
    %v1639 = vpack.c.bf16 %v1635, %v1631
    %v1640 = vpack.c.bf16 %v1636, %v1632
    %v1641 = vpack.c.bf16 %v1637, %v1633
    %v1642 = vpack.c.bf16 %v1638, %v1634
    %1643 = vmatprep.subr.bf16.mxu0 0
    %1644 = vmatpush1.bf16.msra.mxu0 %v1341
    %1645 = vmatprep.subr.bf16.mxu0 0
    %1646 = vmatpush1.bf16.msra.mxu0 %v1340
    %1647 = vmatprep.subr.bf16.mxu0 0
    %1648 = vmatpush1.bf16.msra.mxu0 %v1339
    %1649 = vmatprep.subr.bf16.mxu0 0
    %1650 = vmatpush1.bf16.msra.mxu0 %v1338
    %1651 = vmatprep.subr.bf16.mxu0 0
    %1652 = vmatpush1.bf16.msra.mxu0 %v1337
    %1653 = vmatprep.subr.bf16.mxu0 0
    %1654 = vmatpush1.bf16.msra.mxu0 %v1336
    %1655 = vmatprep.subr.bf16.mxu0 0
    %1656 = vmatpush1.bf16.msra.mxu0 %v1335
    %1657 = vmatprep.subr.bf16.mxu0 0
    %1658 = vmatpush1.bf16.msra.mxu0 %v1334
    %1659 = vmatprep.subr.bf16.mxu0 0
    %1660 = vmatpush2.bf16.msra.mxu0 %v1349
    %1661 = vmatprep.subr.bf16.mxu0 0
    %1662 = vmatpush2.bf16.msra.mxu0 %v1348
    %1663 = vmatprep.subr.bf16.mxu0 0
    %1664 = vmatpush2.bf16.msra.mxu0 %v1347
    %1665 = vmatprep.subr.bf16.mxu0 0
    %1666 = vmatpush2.bf16.msra.mxu0 %v1346
    %1667 = vmatprep.subr.bf16.mxu0 0
    %1668 = vmatpush2.bf16.msra.mxu0 %v1345
    %1669 = vmatprep.subr.bf16.mxu0 0
    %1670 = vmatpush2.bf16.msra.mxu0 %v1344
    %1671 = vmatprep.subr.bf16.mxu0 0
    %1672 = vmatpush2.bf16.msra.mxu0 %v1343
    %1673 = vmatprep.subr.bf16.mxu0 0
    %1674 = vmatpush2.bf16.msra.mxu0 %v1342
    %1675 = vmatprep.mubr.bf16.mxu0 %v1640
    %1676 = vmatmul.mubr.bf16.gmra.mxu0 %v1639
    %v1677 = vpop.f32.mrf.mxu0
    %v1678 = vadd.f32 %v1205, %v1677
    %v1679 = vpop.f32.mrf.mxu0
    %v1680 = vpop.f32.mrf.mxu0
    %v1681 = vadd.f32 %v1205, %v1680
    %v1682 = vpop.f32.mrf.mxu0
    %1683 = vdwg.mxu0
    %1684 = vmatprep.subr.bf16.mxu0 0
    %1685 = vmatpush1.bf16.msra.mxu0 %v1357
    %1686 = vmatprep.subr.bf16.mxu0 0
    %1687 = vmatpush1.bf16.msra.mxu0 %v1356
    %1688 = vmatprep.subr.bf16.mxu0 0
    %1689 = vmatpush1.bf16.msra.mxu0 %v1355
    %1690 = vmatprep.subr.bf16.mxu0 0
    %1691 = vmatpush1.bf16.msra.mxu0 %v1354
    %1692 = vmatprep.subr.bf16.mxu0 0
    %1693 = vmatpush1.bf16.msra.mxu0 %v1353
    %1694 = vmatprep.subr.bf16.mxu0 0
    %1695 = vmatpush1.bf16.msra.mxu0 %v1352
    %1696 = vmatprep.subr.bf16.mxu0 0
    %1697 = vmatpush1.bf16.msra.mxu0 %v1351
    %1698 = vmatprep.subr.bf16.mxu0 0
    %1699 = vmatpush1.bf16.msra.mxu0 %v1350
    %1700 = vmatprep.subr.bf16.mxu0 0
    %1701 = vmatpush2.bf16.msra.mxu0 %v1365
    %1702 = vmatprep.subr.bf16.mxu0 0
    %1703 = vmatpush2.bf16.msra.mxu0 %v1364
    %1704 = vmatprep.subr.bf16.mxu0 0
    %1705 = vmatpush2.bf16.msra.mxu0 %v1363
    %1706 = vmatprep.subr.bf16.mxu0 0
    %1707 = vmatpush2.bf16.msra.mxu0 %v1362
    %1708 = vmatprep.subr.bf16.mxu0 0
    %1709 = vmatpush2.bf16.msra.mxu0 %v1361
    %1710 = vmatprep.subr.bf16.mxu0 0
    %1711 = vmatpush2.bf16.msra.mxu0 %v1360
    %1712 = vmatprep.subr.bf16.mxu0 0
    %1713 = vmatpush2.bf16.msra.mxu0 %v1359
    %1714 = vmatprep.subr.bf16.mxu0 0
    %1715 = vmatpush2.bf16.msra.mxu0 %v1358
    %1716 = vmatprep.mubr.bf16.mxu0 %v1642
    %1717 = vmatmul.mubr.bf16.gmra.mxu0 %v1641
    %v1718 = vpop.f32.mrf.mxu0
    %v1719 = vadd.f32 %v1678, %v1718
    %v1720 = vpop.f32.mrf.mxu0
    %v1721 = vpop.f32.mrf.mxu0
    %v1722 = vadd.f32 %v1681, %v1721
    %v1723 = vpop.f32.mrf.mxu0
    %1724 = vdwg.mxu0
    %v1725 = vadd.f32 %v1719, %v1484
    %v1726 = vadd.f32 %v1722, %v1485
    %1727 = vst [vmem:[%s413] sm:$0xff] %v1725
    %1728 = vst [vmem:[%s413 + $0x8] sm:$0xff] %v1726
    %v1729 = vld [vmem:[%s422] sm:$0xff]
    %v1730 = vld [vmem:[%s422 + $0x8] sm:$0xff]
    %1731 = vadd.xlane.f32.xlu0 %v1729
    %v1732 = vpop.xlane.xlu0 %1731
    %1733 = vadd.xlane.f32.xlu0 %v1730
    %v1734 = vpop.xlane.xlu0 %1733
    %v1735 = vmul.f32 %v1732, %v120
    %v1736 = vmul.f32 %v1734, %v120
    %v1737 = vsub.f32 %v1729, %v1735
    %v1738 = vsub.f32 %v1730, %v1736
    %v1739 = vmul.f32 %v1737, %v1737
    %v1740 = vmul.f32 %v1738, %v1738
    %1741 = vadd.xlane.f32.xlu0 %v1739
    %v1742 = vpop.xlane.xlu0 %1741
    %1743 = vadd.xlane.f32.xlu0 %v1740
    %v1744 = vpop.xlane.xlu0 %1743
    %v1745 = vmul.f32 %v1742, %v120
    %v1746 = vmul.f32 %v1744, %v120
    %v1747 = vadd.f32 %v1745, 1e-05
    %v1748 = vadd.f32 %v1746, 1e-05
    %v1749 = vrsqrt.pop %v1747
    %v1750 = vrsqrt.pop %v1748
    %v1751 = vmul.f32 %v1737, %v1749
    %v1752 = vmul.f32 %v1738, %v1750
    %v1753 = vmul.f32 %v1751, %v881
    %v1754 = vmul.f32 %v1752, %v881
    %v1755 = vadd.f32 %v1753, %v887
    %v1756 = vadd.f32 %v1754, %v887
    %v1757 = vpack.c.bf16 %v1756, %v1755
    %1758 = vmatprep.subr.bf16.mxu0 %v1037
    %1759 = vmatpush1.bf16.msra.mxu0 %v1036
    %1760 = vmatprep.subr.bf16.mxu0 %v1033
    %1761 = vmatpush1.bf16.msra.mxu0 %v1032
    %1762 = vmatprep.subr.bf16.mxu0 %v1029
    %1763 = vmatpush1.bf16.msra.mxu0 %v1028
    %1764 = vmatprep.subr.bf16.mxu0 %v1025
    %1765 = vmatpush1.bf16.msra.mxu0 %v1024
    %1766 = vmatprep.subr.bf16.mxu0 %v1021
    %1767 = vmatpush1.bf16.msra.mxu0 %v1020
    %1768 = vmatprep.subr.bf16.mxu0 %v1017
    %1769 = vmatpush1.bf16.msra.mxu0 %v1016
    %1770 = vmatprep.subr.bf16.mxu0 %v1013
    %1771 = vmatpush1.bf16.msra.mxu0 %v1012
    %1772 = vmatprep.subr.bf16.mxu0 %v1009
    %1773 = vmatpush1.bf16.msra.mxu0 %v1008
    %1774 = vmatprep.subr.bf16.mxu0 0
    %1775 = vmatpush2.bf16.msra.mxu0 0
    %1776 = vmatprep.subr.bf16.mxu0 0
    %1777 = vmatpush2.bf16.msra.mxu0 0
    %1778 = vmatprep.subr.bf16.mxu0 0
    %1779 = vmatpush2.bf16.msra.mxu0 0
    %1780 = vmatprep.subr.bf16.mxu0 0
    %1781 = vmatpush2.bf16.msra.mxu0 0
    %1782 = vmatprep.subr.bf16.mxu0 0
    %1783 = vmatpush2.bf16.msra.mxu0 0
    %1784 = vmatprep.subr.bf16.mxu0 0
    %1785 = vmatpush2.bf16.msra.mxu0 0
    %1786 = vmatprep.subr.bf16.mxu0 0
    %1787 = vmatpush2.bf16.msra.mxu0 0
    %1788 = vmatprep.subr.bf16.mxu0 0
    %1789 = vmatpush2.bf16.msra.mxu0 0
    %1790 = vmatprep.mubr.bf16.mxu0 0
    %1791 = vmatmul.mubr.bf16.gmra.mxu0 %v1757
    %v1792 = vpop.f32.mrf.mxu0
    %v1793 = vadd.f32 %v895, %v1792
    %v1794 = vpop.f32.mrf.mxu0
    %v1795 = vadd.f32 %v899, %v1794
    %v1796 = vpop.f32.mrf.mxu0
    %v1797 = vadd.f32 %v895, %v1796
    %v1798 = vpop.f32.mrf.mxu0
    %v1799 = vadd.f32 %v899, %v1798
    %1800 = vdwg.mxu0
    %1801 = vmatprep.subr.bf16.mxu0 %v1039
    %1802 = vmatpush1.bf16.msra.mxu0 %v1038
    %1803 = vmatprep.subr.bf16.mxu0 %v1035
    %1804 = vmatpush1.bf16.msra.mxu0 %v1034
    %1805 = vmatprep.subr.bf16.mxu0 %v1031
    %1806 = vmatpush1.bf16.msra.mxu0 %v1030
    %1807 = vmatprep.subr.bf16.mxu0 %v1027
    %1808 = vmatpush1.bf16.msra.mxu0 %v1026
    %1809 = vmatprep.subr.bf16.mxu0 %v1023
    %1810 = vmatpush1.bf16.msra.mxu0 %v1022
    %1811 = vmatprep.subr.bf16.mxu0 %v1019
    %1812 = vmatpush1.bf16.msra.mxu0 %v1018
    %1813 = vmatprep.subr.bf16.mxu0 %v1015
    %1814 = vmatpush1.bf16.msra.mxu0 %v1014
    %1815 = vmatprep.subr.bf16.mxu0 %v1011
    %1816 = vmatpush1.bf16.msra.mxu0 %v1010
    %1817 = vmatprep.subr.bf16.mxu0 0
    %1818 = vmatpush2.bf16.msra.mxu0 0
    %1819 = vmatprep.subr.bf16.mxu0 0
    %1820 = vmatpush2.bf16.msra.mxu0 0
    %1821 = vmatprep.subr.bf16.mxu0 0
    %1822 = vmatpush2.bf16.msra.mxu0 0
    %1823 = vmatprep.subr.bf16.mxu0 0
    %1824 = vmatpush2.bf16.msra.mxu0 0
    %1825 = vmatprep.subr.bf16.mxu0 0
    %1826 = vmatpush2.bf16.msra.mxu0 0
    %1827 = vmatprep.subr.bf16.mxu0 0
    %1828 = vmatpush2.bf16.msra.mxu0 0
    %1829 = vmatprep.subr.bf16.mxu0 0
    %1830 = vmatpush2.bf16.msra.mxu0 0
    %1831 = vmatprep.subr.bf16.mxu0 0
    %1832 = vmatpush2.bf16.msra.mxu0 0
    %1833 = vmatprep.mubr.bf16.mxu0 0
    %1834 = vmatmul.mubr.bf16.gmra.mxu0 %v1757
    %v1835 = vpop.f32.mrf.mxu0
    %v1836 = vadd.f32 %v903, %v1835
    %v1837 = vpop.f32.mrf.mxu0
    %v1838 = vadd.f32 %v907, %v1837
    %v1839 = vpop.f32.mrf.mxu0
    %v1840 = vadd.f32 %v903, %v1839
    %v1841 = vpop.f32.mrf.mxu0
    %v1842 = vadd.f32 %v907, %v1841
    %1843 = vdwg.mxu0
    %v1844 = vmul.f32 %v1793, 0.5
    %v1845 = vmul.f32 %v1795, 0.5
    %v1846 = vmul.f32 %v1836, 0.5
    %v1847 = vmul.f32 %v1838, 0.5
    %v1848 = vmul.f32 %v1797, 0.5
    %v1849 = vmul.f32 %v1799, 0.5
    %v1850 = vmul.f32 %v1840, 0.5
    %v1851 = vmul.f32 %v1842, 0.5
    %v1852 = vmul.f32 %v1793, 0.70710677
    %v1853 = vmul.f32 %v1795, 0.70710677
    %v1854 = vmul.f32 %v1836, 0.70710677
    %v1855 = vmul.f32 %v1838, 0.70710677
    %v1856 = vmul.f32 %v1797, 0.70710677
    %v1857 = vmul.f32 %v1799, 0.70710677
    %v1858 = vmul.f32 %v1840, 0.70710677
    %v1859 = vmul.f32 %v1842, 0.70710677
    %v1860 = verf.f32.pop %v1852
    %v1861 = verf.f32.pop %v1853
    %v1862 = verf.f32.pop %v1854
    %v1863 = verf.f32.pop %v1855
    %v1864 = verf.f32.pop %v1856
    %v1865 = verf.f32.pop %v1857
    %v1866 = verf.f32.pop %v1858
    %v1867 = verf.f32.pop %v1859
    %v1868 = vadd.f32 %v1860, 1.0
    %v1869 = vadd.f32 %v1861, 1.0
    %v1870 = vadd.f32 %v1862, 1.0
    %v1871 = vadd.f32 %v1863, 1.0
    %v1872 = vadd.f32 %v1864, 1.0
    %v1873 = vadd.f32 %v1865, 1.0
    %v1874 = vadd.f32 %v1866, 1.0
    %v1875 = vadd.f32 %v1867, 1.0
    %v1876 = vmul.f32 %v1844, %v1868
    %v1877 = vmul.f32 %v1845, %v1869
    %v1878 = vmul.f32 %v1846, %v1870
    %v1879 = vmul.f32 %v1847, %v1871
    %v1880 = vmul.f32 %v1848, %v1872
    %v1881 = vmul.f32 %v1849, %v1873
    %v1882 = vmul.f32 %v1850, %v1874
    %v1883 = vmul.f32 %v1851, %v1875
    %v1884 = vpack.c.bf16 %v1880, %v1876
    %v1885 = vpack.c.bf16 %v1881, %v1877
    %v1886 = vpack.c.bf16 %v1882, %v1878
    %v1887 = vpack.c.bf16 %v1883, %v1879
    %1888 = vmatprep.subr.bf16.mxu0 0
    %1889 = vmatpush1.bf16.msra.mxu0 %v1341
    %1890 = vmatprep.subr.bf16.mxu0 0
    %1891 = vmatpush1.bf16.msra.mxu0 %v1340
    %1892 = vmatprep.subr.bf16.mxu0 0
    %1893 = vmatpush1.bf16.msra.mxu0 %v1339
    %1894 = vmatprep.subr.bf16.mxu0 0
    %1895 = vmatpush1.bf16.msra.mxu0 %v1338
    %1896 = vmatprep.subr.bf16.mxu0 0
    %1897 = vmatpush1.bf16.msra.mxu0 %v1337
    %1898 = vmatprep.subr.bf16.mxu0 0
    %1899 = vmatpush1.bf16.msra.mxu0 %v1336
    %1900 = vmatprep.subr.bf16.mxu0 0
    %1901 = vmatpush1.bf16.msra.mxu0 %v1335
    %1902 = vmatprep.subr.bf16.mxu0 0
    %1903 = vmatpush1.bf16.msra.mxu0 %v1334
    %1904 = vmatprep.subr.bf16.mxu0 0
    %1905 = vmatpush2.bf16.msra.mxu0 %v1349
    %1906 = vmatprep.subr.bf16.mxu0 0
    %1907 = vmatpush2.bf16.msra.mxu0 %v1348
    %1908 = vmatprep.subr.bf16.mxu0 0
    %1909 = vmatpush2.bf16.msra.mxu0 %v1347
    %1910 = vmatprep.subr.bf16.mxu0 0
    %1911 = vmatpush2.bf16.msra.mxu0 %v1346
    %1912 = vmatprep.subr.bf16.mxu0 0
    %1913 = vmatpush2.bf16.msra.mxu0 %v1345
    %1914 = vmatprep.subr.bf16.mxu0 0
    %1915 = vmatpush2.bf16.msra.mxu0 %v1344
    %1916 = vmatprep.subr.bf16.mxu0 0
    %1917 = vmatpush2.bf16.msra.mxu0 %v1343
    %1918 = vmatprep.subr.bf16.mxu0 0
    %1919 = vmatpush2.bf16.msra.mxu0 %v1342
    %1920 = vmatprep.mubr.bf16.mxu0 %v1885
    %1921 = vmatmul.mubr.bf16.gmra.mxu0 %v1884
    %v1922 = vpop.f32.mrf.mxu0
    %v1923 = vadd.f32 %v1205, %v1922
    %v1924 = vpop.f32.mrf.mxu0
    %v1925 = vpop.f32.mrf.mxu0
    %v1926 = vadd.f32 %v1205, %v1925
    %v1927 = vpop.f32.mrf.mxu0
    %1928 = vdwg.mxu0
    %1929 = vmatprep.subr.bf16.mxu0 0
    %1930 = vmatpush1.bf16.msra.mxu0 %v1357
    %1931 = vmatprep.subr.bf16.mxu0 0
    %1932 = vmatpush1.bf16.msra.mxu0 %v1356
    %1933 = vmatprep.subr.bf16.mxu0 0
    %1934 = vmatpush1.bf16.msra.mxu0 %v1355
    %1935 = vmatprep.subr.bf16.mxu0 0
    %1936 = vmatpush1.bf16.msra.mxu0 %v1354
    %1937 = vmatprep.subr.bf16.mxu0 0
    %1938 = vmatpush1.bf16.msra.mxu0 %v1353
    %1939 = vmatprep.subr.bf16.mxu0 0
    %1940 = vmatpush1.bf16.msra.mxu0 %v1352
    %1941 = vmatprep.subr.bf16.mxu0 0
    %1942 = vmatpush1.bf16.msra.mxu0 %v1351
    %1943 = vmatprep.subr.bf16.mxu0 0
    %1944 = vmatpush1.bf16.msra.mxu0 %v1350
    %1945 = vmatprep.subr.bf16.mxu0 0
    %1946 = vmatpush2.bf16.msra.mxu0 %v1365
    %1947 = vmatprep.subr.bf16.mxu0 0
    %1948 = vmatpush2.bf16.msra.mxu0 %v1364
    %1949 = vmatprep.subr.bf16.mxu0 0
    %1950 = vmatpush2.bf16.msra.mxu0 %v1363
    %1951 = vmatprep.subr.bf16.mxu0 0
    %1952 = vmatpush2.bf16.msra.mxu0 %v1362
    %1953 = vmatprep.subr.bf16.mxu0 0
    %1954 = vmatpush2.bf16.msra.mxu0 %v1361
    %1955 = vmatprep.subr.bf16.mxu0 0
    %1956 = vmatpush2.bf16.msra.mxu0 %v1360
    %1957 = vmatprep.subr.bf16.mxu0 0
    %1958 = vmatpush2.bf16.msra.mxu0 %v1359
    %1959 = vmatprep.subr.bf16.mxu0 0
    %1960 = vmatpush2.bf16.msra.mxu0 %v1358
    %1961 = vmatprep.mubr.bf16.mxu0 %v1887
    %1962 = vmatmul.mubr.bf16.gmra.mxu0 %v1886
    %v1963 = vpop.f32.mrf.mxu0
    %v1964 = vadd.f32 %v1923, %v1963
    %v1965 = vpop.f32.mrf.mxu0
    %v1966 = vpop.f32.mrf.mxu0
    %v1967 = vadd.f32 %v1926, %v1966
    %v1968 = vpop.f32.mrf.mxu0
    %1969 = vdwg.mxu0
    %v1970 = vadd.f32 %v1964, %v1729
    %v1971 = vadd.f32 %v1967, %v1730
    %1972 = vst [vmem:[%s422] sm:$0xff] %v1970
    %1973 = vst [vmem:[%s422 + $0x8] sm:$0xff] %v1971
    %v1974 = vld [vmem:[%s431] sm:$0xff]
    %v1975 = vld [vmem:[%s431 + $0x8] sm:$0xff]
    %1976 = vadd.xlane.f32.xlu0 %v1974
    %v1977 = vpop.xlane.xlu0 %1976
    %1978 = vadd.xlane.f32.xlu0 %v1975
    %v1979 = vpop.xlane.xlu0 %1978
    %v1980 = vmul.f32 %v1977, %v120
    %v1981 = vmul.f32 %v1979, %v120
    %v1982 = vsub.f32 %v1974, %v1980
    %v1983 = vsub.f32 %v1975, %v1981
    %v1984 = vmul.f32 %v1982, %v1982
    %v1985 = vmul.f32 %v1983, %v1983
    %1986 = vadd.xlane.f32.xlu0 %v1984
    %v1987 = vpop.xlane.xlu0 %1986
    %1988 = vadd.xlane.f32.xlu0 %v1985
    %v1989 = vpop.xlane.xlu0 %1988
    %v1990 = vmul.f32 %v1987, %v120
    %v1991 = vmul.f32 %v1989, %v120
    %v1992 = vadd.f32 %v1990, 1e-05
    %v1993 = vadd.f32 %v1991, 1e-05
    %v1994 = vrsqrt.pop %v1992
    %v1995 = vrsqrt.pop %v1993
    %v1996 = vmul.f32 %v1982, %v1994
    %v1997 = vmul.f32 %v1983, %v1995
    %v1998 = vmul.f32 %v1996, %v881
    %v1999 = vmul.f32 %v1997, %v881
    %v2000 = vadd.f32 %v1998, %v887
    %v2001 = vadd.f32 %v1999, %v887
    %v2002 = vpack.c.bf16 %v2001, %v2000
    %2003 = vmatprep.subr.bf16.mxu0 %v1037
    %2004 = vmatpush1.bf16.msra.mxu0 %v1036
    %2005 = vmatprep.subr.bf16.mxu0 %v1033
    %2006 = vmatpush1.bf16.msra.mxu0 %v1032
    %2007 = vmatprep.subr.bf16.mxu0 %v1029
    %2008 = vmatpush1.bf16.msra.mxu0 %v1028
    %2009 = vmatprep.subr.bf16.mxu0 %v1025
    %2010 = vmatpush1.bf16.msra.mxu0 %v1024
    %2011 = vmatprep.subr.bf16.mxu0 %v1021
    %2012 = vmatpush1.bf16.msra.mxu0 %v1020
    %2013 = vmatprep.subr.bf16.mxu0 %v1017
    %2014 = vmatpush1.bf16.msra.mxu0 %v1016
    %2015 = vmatprep.subr.bf16.mxu0 %v1013
    %2016 = vmatpush1.bf16.msra.mxu0 %v1012
    %2017 = vmatprep.subr.bf16.mxu0 %v1009
    %2018 = vmatpush1.bf16.msra.mxu0 %v1008
    %2019 = vmatprep.subr.bf16.mxu0 0
    %2020 = vmatpush2.bf16.msra.mxu0 0
    %2021 = vmatprep.subr.bf16.mxu0 0
    %2022 = vmatpush2.bf16.msra.mxu0 0
    %2023 = vmatprep.subr.bf16.mxu0 0
    %2024 = vmatpush2.bf16.msra.mxu0 0
    %2025 = vmatprep.subr.bf16.mxu0 0
    %2026 = vmatpush2.bf16.msra.mxu0 0
    %2027 = vmatprep.subr.bf16.mxu0 0
    %2028 = vmatpush2.bf16.msra.mxu0 0
    %2029 = vmatprep.subr.bf16.mxu0 0
    %2030 = vmatpush2.bf16.msra.mxu0 0
    %2031 = vmatprep.subr.bf16.mxu0 0
    %2032 = vmatpush2.bf16.msra.mxu0 0
    %2033 = vmatprep.subr.bf16.mxu0 0
    %2034 = vmatpush2.bf16.msra.mxu0 0
    %2035 = vmatprep.mubr.bf16.mxu0 0
    %2036 = vmatmul.mubr.bf16.gmra.mxu0 %v2002
    %v2037 = vpop.f32.mrf.mxu0
    %v2038 = vadd.f32 %v895, %v2037
    %v2039 = vpop.f32.mrf.mxu0
    %v2040 = vadd.f32 %v899, %v2039
    %v2041 = vpop.f32.mrf.mxu0
    %v2042 = vadd.f32 %v895, %v2041
    %v2043 = vpop.f32.mrf.mxu0
    %v2044 = vadd.f32 %v899, %v2043
    %2045 = vdwg.mxu0
    %2046 = vmatprep.subr.bf16.mxu0 %v1039
    %2047 = vmatpush1.bf16.msra.mxu0 %v1038
    %2048 = vmatprep.subr.bf16.mxu0 %v1035
    %2049 = vmatpush1.bf16.msra.mxu0 %v1034
    %2050 = vmatprep.subr.bf16.mxu0 %v1031
    %2051 = vmatpush1.bf16.msra.mxu0 %v1030
    %2052 = vmatprep.subr.bf16.mxu0 %v1027
    %2053 = vmatpush1.bf16.msra.mxu0 %v1026
    %2054 = vmatprep.subr.bf16.mxu0 %v1023
    %2055 = vmatpush1.bf16.msra.mxu0 %v1022
    %2056 = vmatprep.subr.bf16.mxu0 %v1019
    %2057 = vmatpush1.bf16.msra.mxu0 %v1018
    %2058 = vmatprep.subr.bf16.mxu0 %v1015
    %2059 = vmatpush1.bf16.msra.mxu0 %v1014
    %2060 = vmatprep.subr.bf16.mxu0 %v1011
    %2061 = vmatpush1.bf16.msra.mxu0 %v1010
    %2062 = vmatprep.subr.bf16.mxu0 0
    %2063 = vmatpush2.bf16.msra.mxu0 0
    %2064 = vmatprep.subr.bf16.mxu0 0
    %2065 = vmatpush2.bf16.msra.mxu0 0
    %2066 = vmatprep.subr.bf16.mxu0 0
    %2067 = vmatpush2.bf16.msra.mxu0 0
    %2068 = vmatprep.subr.bf16.mxu0 0
    %2069 = vmatpush2.bf16.msra.mxu0 0
    %2070 = vmatprep.subr.bf16.mxu0 0
    %2071 = vmatpush2.bf16.msra.mxu0 0
    %2072 = vmatprep.subr.bf16.mxu0 0
    %2073 = vmatpush2.bf16.msra.mxu0 0
    %2074 = vmatprep.subr.bf16.mxu0 0
    %2075 = vmatpush2.bf16.msra.mxu0 0
    %2076 = vmatprep.subr.bf16.mxu0 0
    %2077 = vmatpush2.bf16.msra.mxu0 0
    %2078 = vmatprep.mubr.bf16.mxu0 0
    %2079 = vmatmul.mubr.bf16.gmra.mxu0 %v2002
    %v2080 = vpop.f32.mrf.mxu0
    %v2081 = vadd.f32 %v903, %v2080
    %v2082 = vpop.f32.mrf.mxu0
    %v2083 = vadd.f32 %v907, %v2082
    %v2084 = vpop.f32.mrf.mxu0
    %v2085 = vadd.f32 %v903, %v2084
    %v2086 = vpop.f32.mrf.mxu0
    %v2087 = vadd.f32 %v907, %v2086
    %2088 = vdwg.mxu0
    %v2089 = vmul.f32 %v2038, 0.5
    %v2090 = vmul.f32 %v2040, 0.5
    %v2091 = vmul.f32 %v2081, 0.5
    %v2092 = vmul.f32 %v2083, 0.5
    %v2093 = vmul.f32 %v2042, 0.5
    %v2094 = vmul.f32 %v2044, 0.5
    %v2095 = vmul.f32 %v2085, 0.5
    %v2096 = vmul.f32 %v2087, 0.5
    %v2097 = vmul.f32 %v2038, 0.70710677
    %v2098 = vmul.f32 %v2040, 0.70710677
    %v2099 = vmul.f32 %v2081, 0.70710677
    %v2100 = vmul.f32 %v2083, 0.70710677
    %v2101 = vmul.f32 %v2042, 0.70710677
    %v2102 = vmul.f32 %v2044, 0.70710677
    %v2103 = vmul.f32 %v2085, 0.70710677
    %v2104 = vmul.f32 %v2087, 0.70710677
    %v2105 = verf.f32.pop %v2097
    %v2106 = verf.f32.pop %v2098
    %v2107 = verf.f32.pop %v2099
    %v2108 = verf.f32.pop %v2100
    %v2109 = verf.f32.pop %v2101
    %v2110 = verf.f32.pop %v2102
    %v2111 = verf.f32.pop %v2103
    %v2112 = verf.f32.pop %v2104
    %v2113 = vadd.f32 %v2105, 1.0
    %v2114 = vadd.f32 %v2106, 1.0
    %v2115 = vadd.f32 %v2107, 1.0
    %v2116 = vadd.f32 %v2108, 1.0
    %v2117 = vadd.f32 %v2109, 1.0
    %v2118 = vadd.f32 %v2110, 1.0
    %v2119 = vadd.f32 %v2111, 1.0
    %v2120 = vadd.f32 %v2112, 1.0
    %v2121 = vmul.f32 %v2089, %v2113
    %v2122 = vmul.f32 %v2090, %v2114
    %v2123 = vmul.f32 %v2091, %v2115
    %v2124 = vmul.f32 %v2092, %v2116
    %v2125 = vmul.f32 %v2093, %v2117
    %v2126 = vmul.f32 %v2094, %v2118
    %v2127 = vmul.f32 %v2095, %v2119
    %v2128 = vmul.f32 %v2096, %v2120
    %v2129 = vpack.c.bf16 %v2125, %v2121
    %v2130 = vpack.c.bf16 %v2126, %v2122
    %v2131 = vpack.c.bf16 %v2127, %v2123
    %v2132 = vpack.c.bf16 %v2128, %v2124
    %2133 = vmatprep.subr.bf16.mxu0 0
    %2134 = vmatpush1.bf16.msra.mxu0 %v1341
    %2135 = vmatprep.subr.bf16.mxu0 0
    %2136 = vmatpush1.bf16.msra.mxu0 %v1340
    %2137 = vmatprep.subr.bf16.mxu0 0
    %2138 = vmatpush1.bf16.msra.mxu0 %v1339
    %2139 = vmatprep.subr.bf16.mxu0 0
    %2140 = vmatpush1.bf16.msra.mxu0 %v1338
    %2141 = vmatprep.subr.bf16.mxu0 0
    %2142 = vmatpush1.bf16.msra.mxu0 %v1337
    %2143 = vmatprep.subr.bf16.mxu0 0
    %2144 = vmatpush1.bf16.msra.mxu0 %v1336
    %2145 = vmatprep.subr.bf16.mxu0 0
    %2146 = vmatpush1.bf16.msra.mxu0 %v1335
    %2147 = vmatprep.subr.bf16.mxu0 0
    %2148 = vmatpush1.bf16.msra.mxu0 %v1334
    %2149 = vmatprep.subr.bf16.mxu0 0
    %2150 = vmatpush2.bf16.msra.mxu0 %v1349
    %2151 = vmatprep.subr.bf16.mxu0 0
    %2152 = vmatpush2.bf16.msra.mxu0 %v1348
    %2153 = vmatprep.subr.bf16.mxu0 0
    %2154 = vmatpush2.bf16.msra.mxu0 %v1347
    %2155 = vmatprep.subr.bf16.mxu0 0
    %2156 = vmatpush2.bf16.msra.mxu0 %v1346
    %2157 = vmatprep.subr.bf16.mxu0 0
    %2158 = vmatpush2.bf16.msra.mxu0 %v1345
    %2159 = vmatprep.subr.bf16.mxu0 0
    %2160 = vmatpush2.bf16.msra.mxu0 %v1344
    %2161 = vmatprep.subr.bf16.mxu0 0
    %2162 = vmatpush2.bf16.msra.mxu0 %v1343
    %2163 = vmatprep.subr.bf16.mxu0 0
    %2164 = vmatpush2.bf16.msra.mxu0 %v1342
    %2165 = vmatprep.mubr.bf16.mxu0 %v2130
    %2166 = vmatmul.mubr.bf16.gmra.mxu0 %v2129
    %v2167 = vpop.f32.mrf.mxu0
    %v2168 = vadd.f32 %v1205, %v2167
    %v2169 = vpop.f32.mrf.mxu0
    %v2170 = vpop.f32.mrf.mxu0
    %v2171 = vadd.f32 %v1205, %v2170
    %v2172 = vpop.f32.mrf.mxu0
    %2173 = vdwg.mxu0
    %2174 = vmatprep.subr.bf16.mxu0 0
    %2175 = vmatpush1.bf16.msra.mxu0 %v1357
    %2176 = vmatprep.subr.bf16.mxu0 0
    %2177 = vmatpush1.bf16.msra.mxu0 %v1356
    %2178 = vmatprep.subr.bf16.mxu0 0
    %2179 = vmatpush1.bf16.msra.mxu0 %v1355
    %2180 = vmatprep.subr.bf16.mxu0 0
    %2181 = vmatpush1.bf16.msra.mxu0 %v1354
    %2182 = vmatprep.subr.bf16.mxu0 0
    %2183 = vmatpush1.bf16.msra.mxu0 %v1353
    %2184 = vmatprep.subr.bf16.mxu0 0
    %2185 = vmatpush1.bf16.msra.mxu0 %v1352
    %2186 = vmatprep.subr.bf16.mxu0 0
    %2187 = vmatpush1.bf16.msra.mxu0 %v1351
    %2188 = vmatprep.subr.bf16.mxu0 0
    %2189 = vmatpush1.bf16.msra.mxu0 %v1350
    %2190 = vmatprep.subr.bf16.mxu0 0
    %2191 = vmatpush2.bf16.msra.mxu0 %v1365
    %2192 = vmatprep.subr.bf16.mxu0 0
    %2193 = vmatpush2.bf16.msra.mxu0 %v1364
    %2194 = vmatprep.subr.bf16.mxu0 0
    %2195 = vmatpush2.bf16.msra.mxu0 %v1363
    %2196 = vmatprep.subr.bf16.mxu0 0
    %2197 = vmatpush2.bf16.msra.mxu0 %v1362
    %2198 = vmatprep.subr.bf16.mxu0 0
    %2199 = vmatpush2.bf16.msra.mxu0 %v1361
    %2200 = vmatprep.subr.bf16.mxu0 0
    %2201 = vmatpush2.bf16.msra.mxu0 %v1360
    %2202 = vmatprep.subr.bf16.mxu0 0
    %2203 = vmatpush2.bf16.msra.mxu0 %v1359
    %2204 = vmatprep.subr.bf16.mxu0 0
    %2205 = vmatpush2.bf16.msra.mxu0 %v1358
    %2206 = vmatprep.mubr.bf16.mxu0 %v2132
    %2207 = vmatmul.mubr.bf16.gmra.mxu0 %v2131
    %v2208 = vpop.f32.mrf.mxu0
    %v2209 = vadd.f32 %v2168, %v2208
    %v2210 = vpop.f32.mrf.mxu0
    %v2211 = vpop.f32.mrf.mxu0
    %v2212 = vadd.f32 %v2171, %v2211
    %v2213 = vpop.f32.mrf.mxu0
    %2214 = vdwg.mxu0
    %v2215 = vadd.f32 %v2209, %v1974
    %v2216 = vadd.f32 %v2212, %v1975
    %2217 = vst [vmem:[%s431] sm:$0xff] %v2215
    %2218 = vst [vmem:[%s431 + $0x8] sm:$0xff] %v2216
    %v2219 = vld [vmem:[#allocation12] sm:$0xff]
    %v2220 = vld [vmem:[#allocation12 + $0x8] sm:$0xff]
    %2221 = vadd.xlane.f32.xlu0 %v2219
    %v2222 = vpop.xlane.xlu0 %2221
    %2223 = vadd.xlane.f32.xlu0 %v2220
    %v2224 = vpop.xlane.xlu0 %2223
    %v2225 = vmul.f32 %v2222, %v120
    %v2226 = vmul.f32 %v2224, %v120
    %v2227 = vsub.f32 %v2219, %v2225
    %v2228 = vsub.f32 %v2220, %v2226
    %v2229 = vmul.f32 %v2227, %v2227
    %v2230 = vmul.f32 %v2228, %v2228
    %2231 = vadd.xlane.f32.xlu0 %v2229
    %v2232 = vpop.xlane.xlu0 %2231
    %2233 = vadd.xlane.f32.xlu0 %v2230
    %v2234 = vpop.xlane.xlu0 %2233
    %v2235 = vmul.f32 %v2232, %v120
    %v2236 = vmul.f32 %v2234, %v120
    %v2237 = vadd.f32 %v2235, 1e-05
    %v2238 = vadd.f32 %v2236, 1e-05
    %v2239 = vrsqrt.pop %v2237
    %v2240 = vrsqrt.pop %v2238
    %v2241 = vmul.f32 %v2227, %v2239
    %v2242 = vmul.f32 %v2228, %v2240
    %v2243 = vmul.f32 %v2241, %v881
    %v2244 = vmul.f32 %v2242, %v881
    %v2245 = vadd.f32 %v2243, %v887
    %v2246 = vadd.f32 %v2244, %v887
    %v2247 = vpack.c.bf16 %v2246, %v2245
    %2248 = vmatprep.subr.bf16.mxu0 %v1037
    %2249 = vmatpush1.bf16.msra.mxu0 %v1036
    %2250 = vmatprep.subr.bf16.mxu0 %v1033
    %2251 = vmatpush1.bf16.msra.mxu0 %v1032
    %2252 = vmatprep.subr.bf16.mxu0 %v1029
    %2253 = vmatpush1.bf16.msra.mxu0 %v1028
    %2254 = vmatprep.subr.bf16.mxu0 %v1025
    %2255 = vmatpush1.bf16.msra.mxu0 %v1024
    %2256 = vmatprep.subr.bf16.mxu0 %v1021
    %2257 = vmatpush1.bf16.msra.mxu0 %v1020
    %2258 = vmatprep.subr.bf16.mxu0 %v1017
    %2259 = vmatpush1.bf16.msra.mxu0 %v1016
    %2260 = vmatprep.subr.bf16.mxu0 %v1013
    %2261 = vmatpush1.bf16.msra.mxu0 %v1012
    %2262 = vmatprep.subr.bf16.mxu0 %v1009
    %2263 = vmatpush1.bf16.msra.mxu0 %v1008
    %2264 = vmatprep.subr.bf16.mxu0 0
    %2265 = vmatpush2.bf16.msra.mxu0 0
    %2266 = vmatprep.subr.bf16.mxu0 0
    %2267 = vmatpush2.bf16.msra.mxu0 0
    %2268 = vmatprep.subr.bf16.mxu0 0
    %2269 = vmatpush2.bf16.msra.mxu0 0
    %2270 = vmatprep.subr.bf16.mxu0 0
    %2271 = vmatpush2.bf16.msra.mxu0 0
    %2272 = vmatprep.subr.bf16.mxu0 0
    %2273 = vmatpush2.bf16.msra.mxu0 0
    %2274 = vmatprep.subr.bf16.mxu0 0
    %2275 = vmatpush2.bf16.msra.mxu0 0
    %2276 = vmatprep.subr.bf16.mxu0 0
    %2277 = vmatpush2.bf16.msra.mxu0 0
    %2278 = vmatprep.subr.bf16.mxu0 0
    %2279 = vmatpush2.bf16.msra.mxu0 0
    %2280 = vmatprep.mubr.bf16.mxu0 0
    %2281 = vmatmul.mubr.bf16.gmra.mxu0 %v2247
    %v2282 = vpop.f32.mrf.mxu0
    %v2283 = vadd.f32 %v895, %v2282
    %v2284 = vpop.f32.mrf.mxu0
    %v2285 = vadd.f32 %v899, %v2284
    %v2286 = vpop.f32.mrf.mxu0
    %v2287 = vadd.f32 %v895, %v2286
    %v2288 = vpop.f32.mrf.mxu0
    %v2289 = vadd.f32 %v899, %v2288
    %2290 = vdwg.mxu0
    %2291 = vmatprep.subr.bf16.mxu0 %v1039
    %2292 = vmatpush1.bf16.msra.mxu0 %v1038
    %2293 = vmatprep.subr.bf16.mxu0 %v1035
    %2294 = vmatpush1.bf16.msra.mxu0 %v1034
    %2295 = vmatprep.subr.bf16.mxu0 %v1031
    %2296 = vmatpush1.bf16.msra.mxu0 %v1030
    %2297 = vmatprep.subr.bf16.mxu0 %v1027
    %2298 = vmatpush1.bf16.msra.mxu0 %v1026
    %2299 = vmatprep.subr.bf16.mxu0 %v1023
    %2300 = vmatpush1.bf16.msra.mxu0 %v1022
    %2301 = vmatprep.subr.bf16.mxu0 %v1019
    %2302 = vmatpush1.bf16.msra.mxu0 %v1018
    %2303 = vmatprep.subr.bf16.mxu0 %v1015
    %2304 = vmatpush1.bf16.msra.mxu0 %v1014
    %2305 = vmatprep.subr.bf16.mxu0 %v1011
    %2306 = vmatpush1.bf16.msra.mxu0 %v1010
    %2307 = vmatprep.subr.bf16.mxu0 0
    %2308 = vmatpush2.bf16.msra.mxu0 0
    %2309 = vmatprep.subr.bf16.mxu0 0
    %2310 = vmatpush2.bf16.msra.mxu0 0
    %2311 = vmatprep.subr.bf16.mxu0 0
    %2312 = vmatpush2.bf16.msra.mxu0 0
    %2313 = vmatprep.subr.bf16.mxu0 0
    %2314 = vmatpush2.bf16.msra.mxu0 0
    %2315 = vmatprep.subr.bf16.mxu0 0
    %2316 = vmatpush2.bf16.msra.mxu0 0
    %2317 = vmatprep.subr.bf16.mxu0 0
    %2318 = vmatpush2.bf16.msra.mxu0 0
    %2319 = vmatprep.subr.bf16.mxu0 0
    %2320 = vmatpush2.bf16.msra.mxu0 0
    %2321 = vmatprep.subr.bf16.mxu0 0
    %2322 = vmatpush2.bf16.msra.mxu0 0
    %2323 = vmatprep.mubr.bf16.mxu0 0
    %2324 = vmatmul.mubr.bf16.gmra.mxu0 %v2247
    %v2325 = vpop.f32.mrf.mxu0
    %v2326 = vadd.f32 %v903, %v2325
    %v2327 = vpop.f32.mrf.mxu0
    %v2328 = vadd.f32 %v907, %v2327
    %v2329 = vpop.f32.mrf.mxu0
    %v2330 = vadd.f32 %v903, %v2329
    %v2331 = vpop.f32.mrf.mxu0
    %v2332 = vadd.f32 %v907, %v2331
    %2333 = vdwg.mxu0
    %v2334 = vmul.f32 %v2283, 0.5
    %v2335 = vmul.f32 %v2285, 0.5
    %v2336 = vmul.f32 %v2326, 0.5
    %v2337 = vmul.f32 %v2328, 0.5
    %v2338 = vmul.f32 %v2287, 0.5
    %v2339 = vmul.f32 %v2289, 0.5
    %v2340 = vmul.f32 %v2330, 0.5
    %v2341 = vmul.f32 %v2332, 0.5
    %v2342 = vmul.f32 %v2283, 0.70710677
    %v2343 = vmul.f32 %v2285, 0.70710677
    %v2344 = vmul.f32 %v2326, 0.70710677
    %v2345 = vmul.f32 %v2328, 0.70710677
    %v2346 = vmul.f32 %v2287, 0.70710677
    %v2347 = vmul.f32 %v2289, 0.70710677
    %v2348 = vmul.f32 %v2330, 0.70710677
    %v2349 = vmul.f32 %v2332, 0.70710677
    %v2350 = verf.f32.pop %v2342
    %v2351 = verf.f32.pop %v2343
    %v2352 = verf.f32.pop %v2344
    %v2353 = verf.f32.pop %v2345
    %v2354 = verf.f32.pop %v2346
    %v2355 = verf.f32.pop %v2347
    %v2356 = verf.f32.pop %v2348
    %v2357 = verf.f32.pop %v2349
    %v2358 = vadd.f32 %v2350, 1.0
    %v2359 = vadd.f32 %v2351, 1.0
    %v2360 = vadd.f32 %v2352, 1.0
    %v2361 = vadd.f32 %v2353, 1.0
    %v2362 = vadd.f32 %v2354, 1.0
    %v2363 = vadd.f32 %v2355, 1.0
    %v2364 = vadd.f32 %v2356, 1.0
    %v2365 = vadd.f32 %v2357, 1.0
    %v2366 = vmul.f32 %v2334, %v2358
    %v2367 = vmul.f32 %v2335, %v2359
    %v2368 = vmul.f32 %v2336, %v2360
    %v2369 = vmul.f32 %v2337, %v2361
    %v2370 = vmul.f32 %v2338, %v2362
    %v2371 = vmul.f32 %v2339, %v2363
    %v2372 = vmul.f32 %v2340, %v2364
    %v2373 = vmul.f32 %v2341, %v2365
    %v2374 = vpack.c.bf16 %v2370, %v2366
    %v2375 = vpack.c.bf16 %v2371, %v2367
    %v2376 = vpack.c.bf16 %v2372, %v2368
    %v2377 = vpack.c.bf16 %v2373, %v2369
    %2378 = vmatprep.subr.bf16.mxu0 0
    %2379 = vmatpush1.bf16.msra.mxu0 %v1341
    %2380 = vmatprep.subr.bf16.mxu0 0
    %2381 = vmatpush1.bf16.msra.mxu0 %v1340
    %2382 = vmatprep.subr.bf16.mxu0 0
    %2383 = vmatpush1.bf16.msra.mxu0 %v1339
    %2384 = vmatprep.subr.bf16.mxu0 0
    %2385 = vmatpush1.bf16.msra.mxu0 %v1338
    %2386 = vmatprep.subr.bf16.mxu0 0
    %2387 = vmatpush1.bf16.msra.mxu0 %v1337
    %2388 = vmatprep.subr.bf16.mxu0 0
    %2389 = vmatpush1.bf16.msra.mxu0 %v1336
    %2390 = vmatprep.subr.bf16.mxu0 0
    %2391 = vmatpush1.bf16.msra.mxu0 %v1335
    %2392 = vmatprep.subr.bf16.mxu0 0
    %2393 = vmatpush1.bf16.msra.mxu0 %v1334
    %2394 = vmatprep.subr.bf16.mxu0 0
    %2395 = vmatpush2.bf16.msra.mxu0 %v1349
    %2396 = vmatprep.subr.bf16.mxu0 0
    %2397 = vmatpush2.bf16.msra.mxu0 %v1348
    %2398 = vmatprep.subr.bf16.mxu0 0
    %2399 = vmatpush2.bf16.msra.mxu0 %v1347
    %2400 = vmatprep.subr.bf16.mxu0 0
    %2401 = vmatpush2.bf16.msra.mxu0 %v1346
    %2402 = vmatprep.subr.bf16.mxu0 0
    %2403 = vmatpush2.bf16.msra.mxu0 %v1345
    %2404 = vmatprep.subr.bf16.mxu0 0
    %2405 = vmatpush2.bf16.msra.mxu0 %v1344
    %2406 = vmatprep.subr.bf16.mxu0 0
    %2407 = vmatpush2.bf16.msra.mxu0 %v1343
    %2408 = vmatprep.subr.bf16.mxu0 0
    %2409 = vmatpush2.bf16.msra.mxu0 %v1342
    %2410 = vmatprep.mubr.bf16.mxu0 %v2375
    %2411 = vmatmul.mubr.bf16.gmra.mxu0 %v2374
    %v2412 = vpop.f32.mrf.mxu0
    %v2413 = vadd.f32 %v1205, %v2412
    %v2414 = vpop.f32.mrf.mxu0
    %v2415 = vpop.f32.mrf.mxu0
    %v2416 = vadd.f32 %v1205, %v2415
    %v2417 = vpop.f32.mrf.mxu0
    %2418 = vdwg.mxu0
    %2419 = vmatprep.subr.bf16.mxu0 0
    %2420 = vmatpush1.bf16.msra.mxu0 %v1357
    %2421 = vmatprep.subr.bf16.mxu0 0
    %2422 = vmatpush1.bf16.msra.mxu0 %v1356
    %2423 = vmatprep.subr.bf16.mxu0 0
    %2424 = vmatpush1.bf16.msra.mxu0 %v1355
    %2425 = vmatprep.subr.bf16.mxu0 0
    %2426 = vmatpush1.bf16.msra.mxu0 %v1354
    %2427 = vmatprep.subr.bf16.mxu0 0
    %2428 = vmatpush1.bf16.msra.mxu0 %v1353
    %2429 = vmatprep.subr.bf16.mxu0 0
    %2430 = vmatpush1.bf16.msra.mxu0 %v1352
    %2431 = vmatprep.subr.bf16.mxu0 0
    %2432 = vmatpush1.bf16.msra.mxu0 %v1351
    %2433 = vmatprep.subr.bf16.mxu0 0
    %2434 = vmatpush1.bf16.msra.mxu0 %v1350
    %2435 = vmatprep.subr.bf16.mxu0 0
    %2436 = vmatpush2.bf16.msra.mxu0 %v1365
    %2437 = vmatprep.subr.bf16.mxu0 0
    %2438 = vmatpush2.bf16.msra.mxu0 %v1364
    %2439 = vmatprep.subr.bf16.mxu0 0
    %2440 = vmatpush2.bf16.msra.mxu0 %v1363
    %2441 = vmatprep.subr.bf16.mxu0 0
    %2442 = vmatpush2.bf16.msra.mxu0 %v1362
    %2443 = vmatprep.subr.bf16.mxu0 0
    %2444 = vmatpush2.bf16.msra.mxu0 %v1361
    %2445 = vmatprep.subr.bf16.mxu0 0
    %2446 = vmatpush2.bf16.msra.mxu0 %v1360
    %2447 = vmatprep.subr.bf16.mxu0 0
    %2448 = vmatpush2.bf16.msra.mxu0 %v1359
    %2449 = vmatprep.subr.bf16.mxu0 0
    %2450 = vmatpush2.bf16.msra.mxu0 %v1358
    %2451 = vmatprep.mubr.bf16.mxu0 %v2377
    %2452 = vmatmul.mubr.bf16.gmra.mxu0 %v2376
    %v2453 = vpop.f32.mrf.mxu0
    %v2454 = vadd.f32 %v2413, %v2453
    %v2455 = vpop.f32.mrf.mxu0
    %v2456 = vpop.f32.mrf.mxu0
    %v2457 = vadd.f32 %v2416, %v2456
    %v2458 = vpop.f32.mrf.mxu0
    %2459 = vdwg.mxu0
    %v2460 = vadd.f32 %v2454, %v2219
    %v2461 = vadd.f32 %v2457, %v2220
    %2462 = vst [vmem:[#allocation12] sm:$0xff] %v2460
    %2463 = vst [vmem:[#allocation12 + $0x8] sm:$0xff] %v2461
    %v2464 = vld [vmem:[%s733] sm:$0xff]
    %v2465 = vld [vmem:[%s733 + $0x8] sm:$0xff]
    %2466 = vadd.xlane.f32.xlu0 %v2464
    %v2467 = vpop.xlane.xlu0 %2466
    %2468 = vadd.xlane.f32.xlu0 %v2465
    %v2469 = vpop.xlane.xlu0 %2468
    %v2470 = vmul.f32 %v2467, %v120
    %v2471 = vmul.f32 %v2469, %v120
    %v2472 = vsub.f32 %v2464, %v2470
    %v2473 = vsub.f32 %v2465, %v2471
    %v2474 = vmul.f32 %v2472, %v2472
    %v2475 = vmul.f32 %v2473, %v2473
    %2476 = vadd.xlane.f32.xlu0 %v2474
    %v2477 = vpop.xlane.xlu0 %2476
    %2478 = vadd.xlane.f32.xlu0 %v2475
    %v2479 = vpop.xlane.xlu0 %2478
    %v2480 = vmul.f32 %v2477, %v120
    %v2481 = vmul.f32 %v2479, %v120
    %v2482 = vadd.f32 %v2480, 1e-05
    %v2483 = vadd.f32 %v2481, 1e-05
    %v2484 = vrsqrt.pop %v2482
    %v2485 = vrsqrt.pop %v2483
    %v2486 = vmul.f32 %v2472, %v2484
    %v2487 = vmul.f32 %v2473, %v2485
    %v2488 = vmul.f32 %v2486, %v881
    %v2489 = vmul.f32 %v2487, %v881
    %v2490 = vadd.f32 %v2488, %v887
    %v2491 = vadd.f32 %v2489, %v887
    %v2492 = vpack.c.bf16 %v2491, %v2490
    %2493 = vmatprep.subr.bf16.mxu0 %v1037
    %2494 = vmatpush1.bf16.msra.mxu0 %v1036
    %2495 = vmatprep.subr.bf16.mxu0 %v1033
    %2496 = vmatpush1.bf16.msra.mxu0 %v1032
    %2497 = vmatprep.subr.bf16.mxu0 %v1029
    %2498 = vmatpush1.bf16.msra.mxu0 %v1028
    %2499 = vmatprep.subr.bf16.mxu0 %v1025
    %2500 = vmatpush1.bf16.msra.mxu0 %v1024
    %2501 = vmatprep.subr.bf16.mxu0 %v1021
    %2502 = vmatpush1.bf16.msra.mxu0 %v1020
    %2503 = vmatprep.subr.bf16.mxu0 %v1017
    %2504 = vmatpush1.bf16.msra.mxu0 %v1016
    %2505 = vmatprep.subr.bf16.mxu0 %v1013
    %2506 = vmatpush1.bf16.msra.mxu0 %v1012
    %2507 = vmatprep.subr.bf16.mxu0 %v1009
    %2508 = vmatpush1.bf16.msra.mxu0 %v1008
    %2509 = vmatprep.subr.bf16.mxu0 0
    %2510 = vmatpush2.bf16.msra.mxu0 0
    %2511 = vmatprep.subr.bf16.mxu0 0
    %2512 = vmatpush2.bf16.msra.mxu0 0
    %2513 = vmatprep.subr.bf16.mxu0 0
    %2514 = vmatpush2.bf16.msra.mxu0 0
    %2515 = vmatprep.subr.bf16.mxu0 0
    %2516 = vmatpush2.bf16.msra.mxu0 0
    %2517 = vmatprep.subr.bf16.mxu0 0
    %2518 = vmatpush2.bf16.msra.mxu0 0
    %2519 = vmatprep.subr.bf16.mxu0 0
    %2520 = vmatpush2.bf16.msra.mxu0 0
    %2521 = vmatprep.subr.bf16.mxu0 0
    %2522 = vmatpush2.bf16.msra.mxu0 0
    %2523 = vmatprep.subr.bf16.mxu0 0
    %2524 = vmatpush2.bf16.msra.mxu0 0
    %2525 = vmatprep.mubr.bf16.mxu0 0
    %2526 = vmatmul.mubr.bf16.gmra.mxu0 %v2492
    %v2527 = vpop.f32.mrf.mxu0
    %v2528 = vadd.f32 %v895, %v2527
    %v2529 = vpop.f32.mrf.mxu0
    %v2530 = vadd.f32 %v899, %v2529
    %v2531 = vpop.f32.mrf.mxu0
    %v2532 = vadd.f32 %v895, %v2531
    %v2533 = vpop.f32.mrf.mxu0
    %v2534 = vadd.f32 %v899, %v2533
    %2535 = vdwg.mxu0
    %2536 = vmatprep.subr.bf16.mxu0 %v1039
    %2537 = vmatpush1.bf16.msra.mxu0 %v1038
    %2538 = vmatprep.subr.bf16.mxu0 %v1035
    %2539 = vmatpush1.bf16.msra.mxu0 %v1034
    %2540 = vmatprep.subr.bf16.mxu0 %v1031
    %2541 = vmatpush1.bf16.msra.mxu0 %v1030
    %2542 = vmatprep.subr.bf16.mxu0 %v1027
    %2543 = vmatpush1.bf16.msra.mxu0 %v1026
    %2544 = vmatprep.subr.bf16.mxu0 %v1023
    %2545 = vmatpush1.bf16.msra.mxu0 %v1022
    %2546 = vmatprep.subr.bf16.mxu0 %v1019
    %2547 = vmatpush1.bf16.msra.mxu0 %v1018
    %2548 = vmatprep.subr.bf16.mxu0 %v1015
    %2549 = vmatpush1.bf16.msra.mxu0 %v1014
    %2550 = vmatprep.subr.bf16.mxu0 %v1011
    %2551 = vmatpush1.bf16.msra.mxu0 %v1010
    %2552 = vmatprep.subr.bf16.mxu0 0
    %2553 = vmatpush2.bf16.msra.mxu0 0
    %2554 = vmatprep.subr.bf16.mxu0 0
    %2555 = vmatpush2.bf16.msra.mxu0 0
    %2556 = vmatprep.subr.bf16.mxu0 0
    %2557 = vmatpush2.bf16.msra.mxu0 0
    %2558 = vmatprep.subr.bf16.mxu0 0
    %2559 = vmatpush2.bf16.msra.mxu0 0
    %2560 = vmatprep.subr.bf16.mxu0 0
    %2561 = vmatpush2.bf16.msra.mxu0 0
    %2562 = vmatprep.subr.bf16.mxu0 0
    %2563 = vmatpush2.bf16.msra.mxu0 0
    %2564 = vmatprep.subr.bf16.mxu0 0
    %2565 = vmatpush2.bf16.msra.mxu0 0
    %2566 = vmatprep.subr.bf16.mxu0 0
    %2567 = vmatpush2.bf16.msra.mxu0 0
    %2568 = vmatprep.mubr.bf16.mxu0 0
    %2569 = vmatmul.mubr.bf16.gmra.mxu0 %v2492
    %v2570 = vpop.f32.mrf.mxu0
    %v2571 = vadd.f32 %v903, %v2570
    %v2572 = vpop.f32.mrf.mxu0
    %v2573 = vadd.f32 %v907, %v2572
    %v2574 = vpop.f32.mrf.mxu0
    %v2575 = vadd.f32 %v903, %v2574
    %v2576 = vpop.f32.mrf.mxu0
    %v2577 = vadd.f32 %v907, %v2576
    %2578 = vdwg.mxu0
    %v2579 = vmul.f32 %v2528, 0.5
    %v2580 = vmul.f32 %v2530, 0.5
    %v2581 = vmul.f32 %v2571, 0.5
    %v2582 = vmul.f32 %v2573, 0.5
    %v2583 = vmul.f32 %v2532, 0.5
    %v2584 = vmul.f32 %v2534, 0.5
    %v2585 = vmul.f32 %v2575, 0.5
    %v2586 = vmul.f32 %v2577, 0.5
    %v2587 = vmul.f32 %v2528, 0.70710677
    %v2588 = vmul.f32 %v2530, 0.70710677
    %v2589 = vmul.f32 %v2571, 0.70710677
    %v2590 = vmul.f32 %v2573, 0.70710677
    %v2591 = vmul.f32 %v2532, 0.70710677
    %v2592 = vmul.f32 %v2534, 0.70710677
    %v2593 = vmul.f32 %v2575, 0.70710677
    %v2594 = vmul.f32 %v2577, 0.70710677
    %v2595 = verf.f32.pop %v2587
    %v2596 = verf.f32.pop %v2588
    %v2597 = verf.f32.pop %v2589
    %v2598 = verf.f32.pop %v2590
    %v2599 = verf.f32.pop %v2591
    %v2600 = verf.f32.pop %v2592
    %v2601 = verf.f32.pop %v2593
    %v2602 = verf.f32.pop %v2594
    %v2603 = vadd.f32 %v2595, 1.0
    %v2604 = vadd.f32 %v2596, 1.0
    %v2605 = vadd.f32 %v2597, 1.0
    %v2606 = vadd.f32 %v2598, 1.0
    %v2607 = vadd.f32 %v2599, 1.0
    %v2608 = vadd.f32 %v2600, 1.0
    %v2609 = vadd.f32 %v2601, 1.0
    %v2610 = vadd.f32 %v2602, 1.0
    %v2611 = vmul.f32 %v2579, %v2603
    %v2612 = vmul.f32 %v2580, %v2604
    %v2613 = vmul.f32 %v2581, %v2605
    %v2614 = vmul.f32 %v2582, %v2606
    %v2615 = vmul.f32 %v2583, %v2607
    %v2616 = vmul.f32 %v2584, %v2608
    %v2617 = vmul.f32 %v2585, %v2609
    %v2618 = vmul.f32 %v2586, %v2610
    %v2619 = vpack.c.bf16 %v2615, %v2611
    %v2620 = vpack.c.bf16 %v2616, %v2612
    %v2621 = vpack.c.bf16 %v2617, %v2613
    %v2622 = vpack.c.bf16 %v2618, %v2614
    %2623 = vmatprep.subr.bf16.mxu0 0
    %2624 = vmatpush1.bf16.msra.mxu0 %v1341
    %2625 = vmatprep.subr.bf16.mxu0 0
    %2626 = vmatpush1.bf16.msra.mxu0 %v1340
    %2627 = vmatprep.subr.bf16.mxu0 0
    %2628 = vmatpush1.bf16.msra.mxu0 %v1339
    %2629 = vmatprep.subr.bf16.mxu0 0
    %2630 = vmatpush1.bf16.msra.mxu0 %v1338
    %2631 = vmatprep.subr.bf16.mxu0 0
    %2632 = vmatpush1.bf16.msra.mxu0 %v1337
    %2633 = vmatprep.subr.bf16.mxu0 0
    %2634 = vmatpush1.bf16.msra.mxu0 %v1336
    %2635 = vmatprep.subr.bf16.mxu0 0
    %2636 = vmatpush1.bf16.msra.mxu0 %v1335
    %2637 = vmatprep.subr.bf16.mxu0 0
    %2638 = vmatpush1.bf16.msra.mxu0 %v1334
    %2639 = vmatprep.subr.bf16.mxu0 0
    %2640 = vmatpush2.bf16.msra.mxu0 %v1349
    %2641 = vmatprep.subr.bf16.mxu0 0
    %2642 = vmatpush2.bf16.msra.mxu0 %v1348
    %2643 = vmatprep.subr.bf16.mxu0 0
    %2644 = vmatpush2.bf16.msra.mxu0 %v1347
    %2645 = vmatprep.subr.bf16.mxu0 0
    %2646 = vmatpush2.bf16.msra.mxu0 %v1346
    %2647 = vmatprep.subr.bf16.mxu0 0
    %2648 = vmatpush2.bf16.msra.mxu0 %v1345
    %2649 = vmatprep.subr.bf16.mxu0 0
    %2650 = vmatpush2.bf16.msra.mxu0 %v1344
    %2651 = vmatprep.subr.bf16.mxu0 0
    %2652 = vmatpush2.bf16.msra.mxu0 %v1343
    %2653 = vmatprep.subr.bf16.mxu0 0
    %2654 = vmatpush2.bf16.msra.mxu0 %v1342
    %2655 = vmatprep.mubr.bf16.mxu0 %v2620
    %2656 = vmatmul.mubr.bf16.gmra.mxu0 %v2619
    %v2657 = vpop.f32.mrf.mxu0
    %v2658 = vadd.f32 %v1205, %v2657
    %v2659 = vpop.f32.mrf.mxu0
    %v2660 = vpop.f32.mrf.mxu0
    %v2661 = vadd.f32 %v1205, %v2660
    %v2662 = vpop.f32.mrf.mxu0
    %2663 = vdwg.mxu0
    %2664 = vmatprep.subr.bf16.mxu0 0
    %2665 = vmatpush1.bf16.msra.mxu0 %v1357
    %2666 = vmatprep.subr.bf16.mxu0 0
    %2667 = vmatpush1.bf16.msra.mxu0 %v1356
    %2668 = vmatprep.subr.bf16.mxu0 0
    %2669 = vmatpush1.bf16.msra.mxu0 %v1355
    %2670 = vmatprep.subr.bf16.mxu0 0
    %2671 = vmatpush1.bf16.msra.mxu0 %v1354
    %2672 = vmatprep.subr.bf16.mxu0 0
    %2673 = vmatpush1.bf16.msra.mxu0 %v1353
    %2674 = vmatprep.subr.bf16.mxu0 0
    %2675 = vmatpush1.bf16.msra.mxu0 %v1352
    %2676 = vmatprep.subr.bf16.mxu0 0
    %2677 = vmatpush1.bf16.msra.mxu0 %v1351
    %2678 = vmatprep.subr.bf16.mxu0 0
    %2679 = vmatpush1.bf16.msra.mxu0 %v1350
    %2680 = vmatprep.subr.bf16.mxu0 0
    %2681 = vmatpush2.bf16.msra.mxu0 %v1365
    %2682 = vmatprep.subr.bf16.mxu0 0
    %2683 = vmatpush2.bf16.msra.mxu0 %v1364
    %2684 = vmatprep.subr.bf16.mxu0 0
    %2685 = vmatpush2.bf16.msra.mxu0 %v1363
    %2686 = vmatprep.subr.bf16.mxu0 0
    %2687 = vmatpush2.bf16.msra.mxu0 %v1362
    %2688 = vmatprep.subr.bf16.mxu0 0
    %2689 = vmatpush2.bf16.msra.mxu0 %v1361
    %2690 = vmatprep.subr.bf16.mxu0 0
    %2691 = vmatpush2.bf16.msra.mxu0 %v1360
    %2692 = vmatprep.subr.bf16.mxu0 0
    %2693 = vmatpush2.bf16.msra.mxu0 %v1359
    %2694 = vmatprep.subr.bf16.mxu0 0
    %2695 = vmatpush2.bf16.msra.mxu0 %v1358
    %2696 = vmatprep.mubr.bf16.mxu0 %v2622
    %2697 = vmatmul.mubr.bf16.gmra.mxu0 %v2621
    %v2698 = vpop.f32.mrf.mxu0
    %v2699 = vadd.f32 %v2658, %v2698
    %v2700 = vpop.f32.mrf.mxu0
    %v2701 = vpop.f32.mrf.mxu0
    %v2702 = vadd.f32 %v2661, %v2701
    %v2703 = vpop.f32.mrf.mxu0
    %2704 = vdwg.mxu0
    %v2705 = vadd.f32 %v2699, %v2464
    %v2706 = vadd.f32 %v2702, %v2465
    %2707 = vst [vmem:[%s733] sm:$0xff] %v2705
    %2708 = vst [vmem:[%s733 + $0x8] sm:$0xff] %v2706
    %v2709 = vld [vmem:[%s742] sm:$0xff]
    %v2710 = vld [vmem:[%s742 + $0x8] sm:$0xff]
    %2711 = vadd.xlane.f32.xlu0 %v2709
    %v2712 = vpop.xlane.xlu0 %2711
    %2713 = vadd.xlane.f32.xlu0 %v2710
    %v2714 = vpop.xlane.xlu0 %2713
    %v2715 = vmul.f32 %v2712, %v120
    %v2716 = vmul.f32 %v2714, %v120
    %v2717 = vsub.f32 %v2709, %v2715
    %v2718 = vsub.f32 %v2710, %v2716
    %v2719 = vmul.f32 %v2717, %v2717
    %v2720 = vmul.f32 %v2718, %v2718
    %2721 = vadd.xlane.f32.xlu0 %v2719
    %v2722 = vpop.xlane.xlu0 %2721
    %2723 = vadd.xlane.f32.xlu0 %v2720
    %v2724 = vpop.xlane.xlu0 %2723
    %v2725 = vmul.f32 %v2722, %v120
    %v2726 = vmul.f32 %v2724, %v120
    %v2727 = vadd.f32 %v2725, 1e-05
    %v2728 = vadd.f32 %v2726, 1e-05
    %v2729 = vrsqrt.pop %v2727
    %v2730 = vrsqrt.pop %v2728
    %v2731 = vmul.f32 %v2717, %v2729
    %v2732 = vmul.f32 %v2718, %v2730
    %v2733 = vmul.f32 %v2731, %v881
    %v2734 = vmul.f32 %v2732, %v881
    %v2735 = vadd.f32 %v2733, %v887
    %v2736 = vadd.f32 %v2734, %v887
    %v2737 = vpack.c.bf16 %v2736, %v2735
    %2738 = vmatprep.subr.bf16.mxu0 %v1037
    %2739 = vmatpush1.bf16.msra.mxu0 %v1036
    %2740 = vmatprep.subr.bf16.mxu0 %v1033
    %2741 = vmatpush1.bf16.msra.mxu0 %v1032
    %2742 = vmatprep.subr.bf16.mxu0 %v1029
    %2743 = vmatpush1.bf16.msra.mxu0 %v1028
    %2744 = vmatprep.subr.bf16.mxu0 %v1025
    %2745 = vmatpush1.bf16.msra.mxu0 %v1024
    %2746 = vmatprep.subr.bf16.mxu0 %v1021
    %2747 = vmatpush1.bf16.msra.mxu0 %v1020
    %2748 = vmatprep.subr.bf16.mxu0 %v1017
    %2749 = vmatpush1.bf16.msra.mxu0 %v1016
    %2750 = vmatprep.subr.bf16.mxu0 %v1013
    %2751 = vmatpush1.bf16.msra.mxu0 %v1012
    %2752 = vmatprep.subr.bf16.mxu0 %v1009
    %2753 = vmatpush1.bf16.msra.mxu0 %v1008
    %2754 = vmatprep.subr.bf16.mxu0 0
    %2755 = vmatpush2.bf16.msra.mxu0 0
    %2756 = vmatprep.subr.bf16.mxu0 0
    %2757 = vmatpush2.bf16.msra.mxu0 0
    %2758 = vmatprep.subr.bf16.mxu0 0
    %2759 = vmatpush2.bf16.msra.mxu0 0
    %2760 = vmatprep.subr.bf16.mxu0 0
    %2761 = vmatpush2.bf16.msra.mxu0 0
    %2762 = vmatprep.subr.bf16.mxu0 0
    %2763 = vmatpush2.bf16.msra.mxu0 0
    %2764 = vmatprep.subr.bf16.mxu0 0
    %2765 = vmatpush2.bf16.msra.mxu0 0
    %2766 = vmatprep.subr.bf16.mxu0 0
    %2767 = vmatpush2.bf16.msra.mxu0 0
    %2768 = vmatprep.subr.bf16.mxu0 0
    %2769 = vmatpush2.bf16.msra.mxu0 0
    %2770 = vmatprep.mubr.bf16.mxu0 0
    %2771 = vmatmul.mubr.bf16.gmra.mxu0 %v2737
    %v2772 = vpop.f32.mrf.mxu0
    %v2773 = vadd.f32 %v895, %v2772
    %v2774 = vpop.f32.mrf.mxu0
    %v2775 = vadd.f32 %v899, %v2774
    %v2776 = vpop.f32.mrf.mxu0
    %v2777 = vadd.f32 %v895, %v2776
    %v2778 = vpop.f32.mrf.mxu0
    %v2779 = vadd.f32 %v899, %v2778
    %2780 = vdwg.mxu0
    %2781 = vmatprep.subr.bf16.mxu0 %v1039
    %2782 = vmatpush1.bf16.msra.mxu0 %v1038
    %2783 = vmatprep.subr.bf16.mxu0 %v1035
    %2784 = vmatpush1.bf16.msra.mxu0 %v1034
    %2785 = vmatprep.subr.bf16.mxu0 %v1031
    %2786 = vmatpush1.bf16.msra.mxu0 %v1030
    %2787 = vmatprep.subr.bf16.mxu0 %v1027
    %2788 = vmatpush1.bf16.msra.mxu0 %v1026
    %2789 = vmatprep.subr.bf16.mxu0 %v1023
    %2790 = vmatpush1.bf16.msra.mxu0 %v1022
    %2791 = vmatprep.subr.bf16.mxu0 %v1019
    %2792 = vmatpush1.bf16.msra.mxu0 %v1018
    %2793 = vmatprep.subr.bf16.mxu0 %v1015
    %2794 = vmatpush1.bf16.msra.mxu0 %v1014
    %2795 = vmatprep.subr.bf16.mxu0 %v1011
    %2796 = vmatpush1.bf16.msra.mxu0 %v1010
    %2797 = vmatprep.subr.bf16.mxu0 0
    %2798 = vmatpush2.bf16.msra.mxu0 0
    %2799 = vmatprep.subr.bf16.mxu0 0
    %2800 = vmatpush2.bf16.msra.mxu0 0
    %2801 = vmatprep.subr.bf16.mxu0 0
    %2802 = vmatpush2.bf16.msra.mxu0 0
    %2803 = vmatprep.subr.bf16.mxu0 0
    %2804 = vmatpush2.bf16.msra.mxu0 0
    %2805 = vmatprep.subr.bf16.mxu0 0
    %2806 = vmatpush2.bf16.msra.mxu0 0
    %2807 = vmatprep.subr.bf16.mxu0 0
    %2808 = vmatpush2.bf16.msra.mxu0 0
    %2809 = vmatprep.subr.bf16.mxu0 0
    %2810 = vmatpush2.bf16.msra.mxu0 0
    %2811 = vmatprep.subr.bf16.mxu0 0
    %2812 = vmatpush2.bf16.msra.mxu0 0
    %2813 = vmatprep.mubr.bf16.mxu0 0
    %2814 = vmatmul.mubr.bf16.gmra.mxu0 %v2737
    %v2815 = vpop.f32.mrf.mxu0
    %v2816 = vadd.f32 %v903, %v2815
    %v2817 = vpop.f32.mrf.mxu0
    %v2818 = vadd.f32 %v907, %v2817
    %v2819 = vpop.f32.mrf.mxu0
    %v2820 = vadd.f32 %v903, %v2819
    %v2821 = vpop.f32.mrf.mxu0
    %v2822 = vadd.f32 %v907, %v2821
    %2823 = vdwg.mxu0
    %v2824 = vmul.f32 %v2773, 0.5
    %v2825 = vmul.f32 %v2775, 0.5
    %v2826 = vmul.f32 %v2816, 0.5
    %v2827 = vmul.f32 %v2818, 0.5
    %v2828 = vmul.f32 %v2777, 0.5
    %v2829 = vmul.f32 %v2779, 0.5
    %v2830 = vmul.f32 %v2820, 0.5
    %v2831 = vmul.f32 %v2822, 0.5
    %v2832 = vmul.f32 %v2773, 0.70710677
    %v2833 = vmul.f32 %v2775, 0.70710677
    %v2834 = vmul.f32 %v2816, 0.70710677
    %v2835 = vmul.f32 %v2818, 0.70710677
    %v2836 = vmul.f32 %v2777, 0.70710677
    %v2837 = vmul.f32 %v2779, 0.70710677
    %v2838 = vmul.f32 %v2820, 0.70710677
    %v2839 = vmul.f32 %v2822, 0.70710677
    %v2840 = verf.f32.pop %v2832
    %v2841 = verf.f32.pop %v2833
    %v2842 = verf.f32.pop %v2834
    %v2843 = verf.f32.pop %v2835
    %v2844 = verf.f32.pop %v2836
    %v2845 = verf.f32.pop %v2837
    %v2846 = verf.f32.pop %v2838
    %v2847 = verf.f32.pop %v2839
    %v2848 = vadd.f32 %v2840, 1.0
    %v2849 = vadd.f32 %v2841, 1.0
    %v2850 = vadd.f32 %v2842, 1.0
    %v2851 = vadd.f32 %v2843, 1.0
    %v2852 = vadd.f32 %v2844, 1.0
    %v2853 = vadd.f32 %v2845, 1.0
    %v2854 = vadd.f32 %v2846, 1.0
    %v2855 = vadd.f32 %v2847, 1.0
    %v2856 = vmul.f32 %v2824, %v2848
    %v2857 = vmul.f32 %v2825, %v2849
    %v2858 = vmul.f32 %v2826, %v2850
    %v2859 = vmul.f32 %v2827, %v2851
    %v2860 = vmul.f32 %v2828, %v2852
    %v2861 = vmul.f32 %v2829, %v2853
    %v2862 = vmul.f32 %v2830, %v2854
    %v2863 = vmul.f32 %v2831, %v2855
    %v2864 = vpack.c.bf16 %v2860, %v2856
    %v2865 = vpack.c.bf16 %v2861, %v2857
    %v2866 = vpack.c.bf16 %v2862, %v2858
    %v2867 = vpack.c.bf16 %v2863, %v2859
    %2868 = vmatprep.subr.bf16.mxu0 0
    %2869 = vmatpush1.bf16.msra.mxu0 %v1341
    %2870 = vmatprep.subr.bf16.mxu0 0
    %2871 = vmatpush1.bf16.msra.mxu0 %v1340
    %2872 = vmatprep.subr.bf16.mxu0 0
    %2873 = vmatpush1.bf16.msra.mxu0 %v1339
    %2874 = vmatprep.subr.bf16.mxu0 0
    %2875 = vmatpush1.bf16.msra.mxu0 %v1338
    %2876 = vmatprep.subr.bf16.mxu0 0
    %2877 = vmatpush1.bf16.msra.mxu0 %v1337
    %2878 = vmatprep.subr.bf16.mxu0 0
    %2879 = vmatpush1.bf16.msra.mxu0 %v1336
    %2880 = vmatprep.subr.bf16.mxu0 0
    %2881 = vmatpush1.bf16.msra.mxu0 %v1335
    %2882 = vmatprep.subr.bf16.mxu0 0
    %2883 = vmatpush1.bf16.msra.mxu0 %v1334
    %2884 = vmatprep.subr.bf16.mxu0 0
    %2885 = vmatpush2.bf16.msra.mxu0 %v1349
    %2886 = vmatprep.subr.bf16.mxu0 0
    %2887 = vmatpush2.bf16.msra.mxu0 %v1348
    %2888 = vmatprep.subr.bf16.mxu0 0
    %2889 = vmatpush2.bf16.msra.mxu0 %v1347
    %2890 = vmatprep.subr.bf16.mxu0 0
    %2891 = vmatpush2.bf16.msra.mxu0 %v1346
    %2892 = vmatprep.subr.bf16.mxu0 0
    %2893 = vmatpush2.bf16.msra.mxu0 %v1345
    %2894 = vmatprep.subr.bf16.mxu0 0
    %2895 = vmatpush2.bf16.msra.mxu0 %v1344
    %2896 = vmatprep.subr.bf16.mxu0 0
    %2897 = vmatpush2.bf16.msra.mxu0 %v1343
    %2898 = vmatprep.subr.bf16.mxu0 0
    %2899 = vmatpush2.bf16.msra.mxu0 %v1342
    %2900 = vmatprep.mubr.bf16.mxu0 %v2865
    %2901 = vmatmul.mubr.bf16.gmra.mxu0 %v2864
    %v2902 = vpop.f32.mrf.mxu0
    %v2903 = vadd.f32 %v1205, %v2902
    %v2904 = vpop.f32.mrf.mxu0
    %v2905 = vpop.f32.mrf.mxu0
    %v2906 = vadd.f32 %v1205, %v2905
    %v2907 = vpop.f32.mrf.mxu0
    %2908 = vdwg.mxu0
    %2909 = vmatprep.subr.bf16.mxu0 0
    %2910 = vmatpush1.bf16.msra.mxu0 %v1357
    %2911 = vmatprep.subr.bf16.mxu0 0
    %2912 = vmatpush1.bf16.msra.mxu0 %v1356
    %2913 = vmatprep.subr.bf16.mxu0 0
    %2914 = vmatpush1.bf16.msra.mxu0 %v1355
    %2915 = vmatprep.subr.bf16.mxu0 0
    %2916 = vmatpush1.bf16.msra.mxu0 %v1354
    %2917 = vmatprep.subr.bf16.mxu0 0
    %2918 = vmatpush1.bf16.msra.mxu0 %v1353
    %2919 = vmatprep.subr.bf16.mxu0 0
    %2920 = vmatpush1.bf16.msra.mxu0 %v1352
    %2921 = vmatprep.subr.bf16.mxu0 0
    %2922 = vmatpush1.bf16.msra.mxu0 %v1351
    %2923 = vmatprep.subr.bf16.mxu0 0
    %2924 = vmatpush1.bf16.msra.mxu0 %v1350
    %2925 = vmatprep.subr.bf16.mxu0 0
    %2926 = vmatpush2.bf16.msra.mxu0 %v1365
    %2927 = vmatprep.subr.bf16.mxu0 0
    %2928 = vmatpush2.bf16.msra.mxu0 %v1364
    %2929 = vmatprep.subr.bf16.mxu0 0
    %2930 = vmatpush2.bf16.msra.mxu0 %v1363
    %2931 = vmatprep.subr.bf16.mxu0 0
    %2932 = vmatpush2.bf16.msra.mxu0 %v1362
    %2933 = vmatprep.subr.bf16.mxu0 0
    %2934 = vmatpush2.bf16.msra.mxu0 %v1361
    %2935 = vmatprep.subr.bf16.mxu0 0
    %2936 = vmatpush2.bf16.msra.mxu0 %v1360
    %2937 = vmatprep.subr.bf16.mxu0 0
    %2938 = vmatpush2.bf16.msra.mxu0 %v1359
    %2939 = vmatprep.subr.bf16.mxu0 0
    %2940 = vmatpush2.bf16.msra.mxu0 %v1358
    %2941 = vmatprep.mubr.bf16.mxu0 %v2867
    %2942 = vmatmul.mubr.bf16.gmra.mxu0 %v2866
    %v2943 = vpop.f32.mrf.mxu0
    %v2944 = vadd.f32 %v2903, %v2943
    %v2945 = vpop.f32.mrf.mxu0
    %v2946 = vpop.f32.mrf.mxu0
    %v2947 = vadd.f32 %v2906, %v2946
    %v2948 = vpop.f32.mrf.mxu0
    %2949 = vdwg.mxu0
    %v2950 = vadd.f32 %v2944, %v2709
    %v2951 = vadd.f32 %v2947, %v2710
    %2952 = vst [vmem:[%s742] sm:$0xff] %v2950
    %2953 = vst [vmem:[%s742 + $0x8] sm:$0xff] %v2951
    %v2954 = vld [vmem:[%s751] sm:$0xff]
    %v2955 = vld [vmem:[%s751 + $0x8] sm:$0xff]
    %2956 = vadd.xlane.f32.xlu0 %v2954
    %v2957 = vpop.xlane.xlu0 %2956
    %2958 = vadd.xlane.f32.xlu0 %v2955
    %v2959 = vpop.xlane.xlu0 %2958
    %v2960 = vmul.f32 %v2957, %v120
    %v2961 = vmul.f32 %v2959, %v120
    %v2962 = vsub.f32 %v2954, %v2960
    %v2963 = vsub.f32 %v2955, %v2961
    %v2964 = vmul.f32 %v2962, %v2962
    %v2965 = vmul.f32 %v2963, %v2963
    %2966 = vadd.xlane.f32.xlu0 %v2964
    %v2967 = vpop.xlane.xlu0 %2966
    %2968 = vadd.xlane.f32.xlu0 %v2965
    %v2969 = vpop.xlane.xlu0 %2968
    %v2970 = vmul.f32 %v2967, %v120
    %v2971 = vmul.f32 %v2969, %v120
    %v2972 = vadd.f32 %v2970, 1e-05
    %v2973 = vadd.f32 %v2971, 1e-05
    %v2974 = vrsqrt.pop %v2972
    %v2975 = vrsqrt.pop %v2973
    %v2976 = vmul.f32 %v2962, %v2974
    %v2977 = vmul.f32 %v2963, %v2975
    %v2978 = vmul.f32 %v2976, %v881
    %v2979 = vmul.f32 %v2977, %v881
    %v2980 = vadd.f32 %v2978, %v887
    %v2981 = vadd.f32 %v2979, %v887
    %v2982 = vpack.c.bf16 %v2981, %v2980
    %2983 = vmatprep.subr.bf16.mxu0 %v1037
    %2984 = vmatpush1.bf16.msra.mxu0 %v1036
    %2985 = vmatprep.subr.bf16.mxu0 %v1033
    %2986 = vmatpush1.bf16.msra.mxu0 %v1032
    %2987 = vmatprep.subr.bf16.mxu0 %v1029
    %2988 = vmatpush1.bf16.msra.mxu0 %v1028
    %2989 = vmatprep.subr.bf16.mxu0 %v1025
    %2990 = vmatpush1.bf16.msra.mxu0 %v1024
    %2991 = vmatprep.subr.bf16.mxu0 %v1021
    %2992 = vmatpush1.bf16.msra.mxu0 %v1020
    %2993 = vmatprep.subr.bf16.mxu0 %v1017
    %2994 = vmatpush1.bf16.msra.mxu0 %v1016
    %2995 = vmatprep.subr.bf16.mxu0 %v1013
    %2996 = vmatpush1.bf16.msra.mxu0 %v1012
    %2997 = vmatprep.subr.bf16.mxu0 %v1009
    %2998 = vmatpush1.bf16.msra.mxu0 %v1008
    %2999 = vmatprep.subr.bf16.mxu0 0
    %3000 = vmatpush2.bf16.msra.mxu0 0
    %3001 = vmatprep.subr.bf16.mxu0 0
    %3002 = vmatpush2.bf16.msra.mxu0 0
    %3003 = vmatprep.subr.bf16.mxu0 0
    %3004 = vmatpush2.bf16.msra.mxu0 0
    %3005 = vmatprep.subr.bf16.mxu0 0
    %3006 = vmatpush2.bf16.msra.mxu0 0
    %3007 = vmatprep.subr.bf16.mxu0 0
    %3008 = vmatpush2.bf16.msra.mxu0 0
    %3009 = vmatprep.subr.bf16.mxu0 0
    %3010 = vmatpush2.bf16.msra.mxu0 0
    %3011 = vmatprep.subr.bf16.mxu0 0
    %3012 = vmatpush2.bf16.msra.mxu0 0
    %3013 = vmatprep.subr.bf16.mxu0 0
    %3014 = vmatpush2.bf16.msra.mxu0 0
    %3015 = vmatprep.mubr.bf16.mxu0 0
    %3016 = vmatmul.mubr.bf16.gmra.mxu0 %v2982
    %v3017 = vpop.f32.mrf.mxu0
    %v3018 = vadd.f32 %v895, %v3017
    %v3019 = vpop.f32.mrf.mxu0
    %v3020 = vadd.f32 %v899, %v3019
    %v3021 = vpop.f32.mrf.mxu0
    %v3022 = vadd.f32 %v895, %v3021
    %v3023 = vpop.f32.mrf.mxu0
    %v3024 = vadd.f32 %v899, %v3023
    %3025 = vdwg.mxu0
    %3026 = vmatprep.subr.bf16.mxu0 %v1039
    %3027 = vmatpush1.bf16.msra.mxu0 %v1038
    %3028 = vmatprep.subr.bf16.mxu0 %v1035
    %3029 = vmatpush1.bf16.msra.mxu0 %v1034
    %3030 = vmatprep.subr.bf16.mxu0 %v1031
    %3031 = vmatpush1.bf16.msra.mxu0 %v1030
    %3032 = vmatprep.subr.bf16.mxu0 %v1027
    %3033 = vmatpush1.bf16.msra.mxu0 %v1026
    %3034 = vmatprep.subr.bf16.mxu0 %v1023
    %3035 = vmatpush1.bf16.msra.mxu0 %v1022
    %3036 = vmatprep.subr.bf16.mxu0 %v1019
    %3037 = vmatpush1.bf16.msra.mxu0 %v1018
    %3038 = vmatprep.subr.bf16.mxu0 %v1015
    %3039 = vmatpush1.bf16.msra.mxu0 %v1014
    %3040 = vmatprep.subr.bf16.mxu0 %v1011
    %3041 = vmatpush1.bf16.msra.mxu0 %v1010
    %3042 = vmatprep.subr.bf16.mxu0 0
    %3043 = vmatpush2.bf16.msra.mxu0 0
    %3044 = vmatprep.subr.bf16.mxu0 0
    %3045 = vmatpush2.bf16.msra.mxu0 0
    %3046 = vmatprep.subr.bf16.mxu0 0
    %3047 = vmatpush2.bf16.msra.mxu0 0
    %3048 = vmatprep.subr.bf16.mxu0 0
    %3049 = vmatpush2.bf16.msra.mxu0 0
    %3050 = vmatprep.subr.bf16.mxu0 0
    %3051 = vmatpush2.bf16.msra.mxu0 0
    %3052 = vmatprep.subr.bf16.mxu0 0
    %3053 = vmatpush2.bf16.msra.mxu0 0
    %3054 = vmatprep.subr.bf16.mxu0 0
    %3055 = vmatpush2.bf16.msra.mxu0 0
    %3056 = vmatprep.subr.bf16.mxu0 0
    %3057 = vmatpush2.bf16.msra.mxu0 0
    %3058 = vmatprep.mubr.bf16.mxu0 0
    %3059 = vmatmul.mubr.bf16.gmra.mxu0 %v2982
    %v3060 = vpop.f32.mrf.mxu0
    %v3061 = vadd.f32 %v903, %v3060
    %v3062 = vpop.f32.mrf.mxu0
    %v3063 = vadd.f32 %v907, %v3062
    %v3064 = vpop.f32.mrf.mxu0
    %v3065 = vadd.f32 %v903, %v3064
    %v3066 = vpop.f32.mrf.mxu0
    %v3067 = vadd.f32 %v907, %v3066
    %3068 = vdwg.mxu0
    %v3069 = vmul.f32 %v3018, 0.5
    %v3070 = vmul.f32 %v3020, 0.5
    %v3071 = vmul.f32 %v3061, 0.5
    %v3072 = vmul.f32 %v3063, 0.5
    %v3073 = vmul.f32 %v3022, 0.5
    %v3074 = vmul.f32 %v3024, 0.5
    %v3075 = vmul.f32 %v3065, 0.5
    %v3076 = vmul.f32 %v3067, 0.5
    %v3077 = vmul.f32 %v3018, 0.70710677
    %v3078 = vmul.f32 %v3020, 0.70710677
    %v3079 = vmul.f32 %v3061, 0.70710677
    %v3080 = vmul.f32 %v3063, 0.70710677
    %v3081 = vmul.f32 %v3022, 0.70710677
    %v3082 = vmul.f32 %v3024, 0.70710677
    %v3083 = vmul.f32 %v3065, 0.70710677
    %v3084 = vmul.f32 %v3067, 0.70710677
    %v3085 = verf.f32.pop %v3077
    %v3086 = verf.f32.pop %v3078
    %v3087 = verf.f32.pop %v3079
    %v3088 = verf.f32.pop %v3080
    %v3089 = verf.f32.pop %v3081
    %v3090 = verf.f32.pop %v3082
    %v3091 = verf.f32.pop %v3083
    %v3092 = verf.f32.pop %v3084
    %v3093 = vadd.f32 %v3085, 1.0
    %v3094 = vadd.f32 %v3086, 1.0
    %v3095 = vadd.f32 %v3087, 1.0
    %v3096 = vadd.f32 %v3088, 1.0
    %v3097 = vadd.f32 %v3089, 1.0
    %v3098 = vadd.f32 %v3090, 1.0
    %v3099 = vadd.f32 %v3091, 1.0
    %v3100 = vadd.f32 %v3092, 1.0
    %v3101 = vmul.f32 %v3069, %v3093
    %v3102 = vmul.f32 %v3070, %v3094
    %v3103 = vmul.f32 %v3071, %v3095
    %v3104 = vmul.f32 %v3072, %v3096
    %v3105 = vmul.f32 %v3073, %v3097
    %v3106 = vmul.f32 %v3074, %v3098
    %v3107 = vmul.f32 %v3075, %v3099
    %v3108 = vmul.f32 %v3076, %v3100
    %v3109 = vpack.c.bf16 %v3105, %v3101
    %v3110 = vpack.c.bf16 %v3106, %v3102
    %v3111 = vpack.c.bf16 %v3107, %v3103
    %v3112 = vpack.c.bf16 %v3108, %v3104
    %3113 = vmatprep.subr.bf16.mxu0 0
    %3114 = vmatpush1.bf16.msra.mxu0 %v1341
    %3115 = vmatprep.subr.bf16.mxu0 0
    %3116 = vmatpush1.bf16.msra.mxu0 %v1340
    %3117 = vmatprep.subr.bf16.mxu0 0
    %3118 = vmatpush1.bf16.msra.mxu0 %v1339
    %3119 = vmatprep.subr.bf16.mxu0 0
    %3120 = vmatpush1.bf16.msra.mxu0 %v1338
    %3121 = vmatprep.subr.bf16.mxu0 0
    %3122 = vmatpush1.bf16.msra.mxu0 %v1337
    %3123 = vmatprep.subr.bf16.mxu0 0
    %3124 = vmatpush1.bf16.msra.mxu0 %v1336
    %3125 = vmatprep.subr.bf16.mxu0 0
    %3126 = vmatpush1.bf16.msra.mxu0 %v1335
    %3127 = vmatprep.subr.bf16.mxu0 0
    %3128 = vmatpush1.bf16.msra.mxu0 %v1334
    %3129 = vmatprep.subr.bf16.mxu0 0
    %3130 = vmatpush2.bf16.msra.mxu0 %v1349
    %3131 = vmatprep.subr.bf16.mxu0 0
    %3132 = vmatpush2.bf16.msra.mxu0 %v1348
    %3133 = vmatprep.subr.bf16.mxu0 0
    %3134 = vmatpush2.bf16.msra.mxu0 %v1347
    %3135 = vmatprep.subr.bf16.mxu0 0
    %3136 = vmatpush2.bf16.msra.mxu0 %v1346
    %3137 = vmatprep.subr.bf16.mxu0 0
    %3138 = vmatpush2.bf16.msra.mxu0 %v1345
    %3139 = vmatprep.subr.bf16.mxu0 0
    %3140 = vmatpush2.bf16.msra.mxu0 %v1344
    %3141 = vmatprep.subr.bf16.mxu0 0
    %3142 = vmatpush2.bf16.msra.mxu0 %v1343
    %3143 = vmatprep.subr.bf16.mxu0 0
    %3144 = vmatpush2.bf16.msra.mxu0 %v1342
    %3145 = vmatprep.mubr.bf16.mxu0 %v3110
    %3146 = vmatmul.mubr.bf16.gmra.mxu0 %v3109
    %v3147 = vpop.f32.mrf.mxu0
    %v3148 = vadd.f32 %v1205, %v3147
    %v3149 = vpop.f32.mrf.mxu0
    %v3150 = vpop.f32.mrf.mxu0
    %v3151 = vadd.f32 %v1205, %v3150
    %v3152 = vpop.f32.mrf.mxu0
    %3153 = vdwg.mxu0
    %3154 = vmatprep.subr.bf16.mxu0 0
    %3155 = vmatpush1.bf16.msra.mxu0 %v1357
    %3156 = vmatprep.subr.bf16.mxu0 0
    %3157 = vmatpush1.bf16.msra.mxu0 %v1356
    %3158 = vmatprep.subr.bf16.mxu0 0
    %3159 = vmatpush1.bf16.msra.mxu0 %v1355
    %3160 = vmatprep.subr.bf16.mxu0 0
    %3161 = vmatpush1.bf16.msra.mxu0 %v1354
    %3162 = vmatprep.subr.bf16.mxu0 0
    %3163 = vmatpush1.bf16.msra.mxu0 %v1353
    %3164 = vmatprep.subr.bf16.mxu0 0
    %3165 = vmatpush1.bf16.msra.mxu0 %v1352
    %3166 = vmatprep.subr.bf16.mxu0 0
    %3167 = vmatpush1.bf16.msra.mxu0 %v1351
    %3168 = vmatprep.subr.bf16.mxu0 0
    %3169 = vmatpush1.bf16.msra.mxu0 %v1350
    %3170 = vmatprep.subr.bf16.mxu0 0
    %3171 = vmatpush2.bf16.msra.mxu0 %v1365
    %3172 = vmatprep.subr.bf16.mxu0 0
    %3173 = vmatpush2.bf16.msra.mxu0 %v1364
    %3174 = vmatprep.subr.bf16.mxu0 0
    %3175 = vmatpush2.bf16.msra.mxu0 %v1363
    %3176 = vmatprep.subr.bf16.mxu0 0
    %3177 = vmatpush2.bf16.msra.mxu0 %v1362
    %3178 = vmatprep.subr.bf16.mxu0 0
    %3179 = vmatpush2.bf16.msra.mxu0 %v1361
    %3180 = vmatprep.subr.bf16.mxu0 0
    %3181 = vmatpush2.bf16.msra.mxu0 %v1360
    %3182 = vmatprep.subr.bf16.mxu0 0
    %3183 = vmatpush2.bf16.msra.mxu0 %v1359
    %3184 = vmatprep.subr.bf16.mxu0 0
    %3185 = vmatpush2.bf16.msra.mxu0 %v1358
    %3186 = vmatprep.mubr.bf16.mxu0 %v3112
    %3187 = vmatmul.mubr.bf16.gmra.mxu0 %v3111
    %v3188 = vpop.f32.mrf.mxu0
    %v3189 = vadd.f32 %v3148, %v3188
    %v3190 = vpop.f32.mrf.mxu0
    %v3191 = vpop.f32.mrf.mxu0
    %v3192 = vadd.f32 %v3151, %v3191
    %v3193 = vpop.f32.mrf.mxu0
    %3194 = vdwg.mxu0
    %v3195 = vadd.f32 %v3189, %v2954
    %v3196 = vadd.f32 %v3192, %v2955
    %3197 = vst [vmem:[%s751] sm:$0xff] %v3195
    %3198 = vst [vmem:[%s751 + $0x8] sm:$0xff] %v3196
    // Predicated region
    $region54: #{tpu_custom_call.1} parent=1 // pred_check
      _
    $region55: #{tpu_custom_call.1} parent=1 // pred_check_branch
      %3200 = sbr.rel (0) target = $region57
    $region56: #{tpu_custom_call.1} parent=1 // pred_region
      %s3202 = ssub.s32 1024, 1024
      %3203 = vsyncadd [#allocation5], %s3202
      %s3204 = sshll.u32 [#allocation11], 4
      %s3205 = int_to_ptr.vmem [resolvable:$true] %s3204
      %3210 = dma.vmem_to_hbm [thread:$0]  %s3205, 1024, %s9, [#allocation5], 128, 128, 8
    $region57: #{tpu_custom_call.1} parent=1 // pred_fallthru
      _
    // Predicated region
    $region58: #{tpu_custom_call.1} parent=1 // pred_check
      _
    $region59: #{tpu_custom_call.1} parent=1 // pred_check_branch
      %3212 = sbr.rel (0) target = $region61
    $region60: #{tpu_custom_call.1} parent=1 // pred_region
      %s3214 = ssub.s32 1024, 1024
      %3215 = vsyncadd [#allocation13], %s3214
      %s3216 = sshll.u32 [#allocation12], 4
      %s3217 = int_to_ptr.vmem [resolvable:$true] %s3216
      %3222 = dma.vmem_to_hbm [thread:$0]  %s3217, 1024, %s10, [#allocation13], 128, 128, 8
    $region61: #{tpu_custom_call.1} parent=1 // pred_fallthru
      _
    // Predicated region
    $region62: #{tpu_custom_call.1} parent=1 // pred_check
      _
    $region63: #{tpu_custom_call.1} parent=1 // pred_check_branch
      %3224 = sbr.rel (0) target = $region65
    $region64: #{tpu_custom_call.1} parent=1 // pred_region
      %3225 = dma.done [#allocation5], 1024
    $region65: #{tpu_custom_call.1} parent=1 // pred_fallthru
      _
    // Predicated region
    $region66: #{tpu_custom_call.1} parent=1 // pred_check
      _
    $region67: #{tpu_custom_call.1} parent=1 // pred_check_branch
      %3227 = sbr.rel (0) target = $region69
    $region68: #{tpu_custom_call.1} parent=1 // pred_region
      %3228 = dma.done [#allocation13], 1024
    $region69: #{tpu_custom_call.1} parent=1 // pred_fallthru
      _
    %3229 = vsyncpa [#allocation4], 1
    %3230 = vsyncpa [#allocation7], 1
    %3231 = vsyncpa [#allocation10], 1
    %3232 = vsyncpa [#allocation5], 1
    %3233 = vsyncpa [#allocation13], 1

</llo_original>
